<compile_context>
chip_gen: v7x
topology: tpu7x:2x2x1
jax: 0.10.0
libtpu: 0.0.40
codegen_flags: <defaults>
</compile_context>

<pallas_src>
import functools
import math

import jax
import jax.numpy as jnp
from jax.experimental import pallas as pl
from jax.experimental.pallas import tpu as pltpu


_VMEM_LIMIT = 32 * 1024 * 1024      # explicit scoped-VMEM budget


def _rows_tile(M):
    """Whole-M single grid step for small M (an (8,128) tile is one vreg of work, so
    multi-step grids only add per-step fixed cost); pipelined tiles for large M."""
    if M <= 512:
        return M
    for t in (512, 256, 128, 64, 32, 16, 8):
        if M % t == 0:
            return t
    return M


def _cparams(steps):
    return pltpu.CompilerParams(
        dimension_semantics=(("parallel",) if steps > 1 else ("arbitrary",)),
        vmem_limit_bytes=_VMEM_LIMIT)


# ----------------------------------------------------------------- generic fused matmul

def _linear_act_kernel(x_ref, w_ref, b_ref, o_ref, *, act):
    y = jnp.dot(x_ref[...].astype(jnp.bfloat16), w_ref[...],
                preferred_element_type=jnp.float32) + b_ref[...]
    if act == "relu":
        y = jnp.maximum(y, 0.0)
    o_ref[...] = y


def linear_act(x, w, b, act="none"):
    """y = act(x @ w + b); x:(M,K) f32, w:(K,N) bf16, b:(1,N) f32 -> (M,N) f32."""
    M, K = x.shape
    _, N = w.shape
    tm = _rows_tile(M)
    steps = M // tm
    kern = functools.partial(_linear_act_kernel, act=act)
    return pl.pallas_call(
        kern,
        out_shape=jax.ShapeDtypeStruct((M, N), jnp.float32),
        grid=(steps,),
        in_specs=[pl.BlockSpec((tm, K), lambda i: (i, 0)),
                  pl.BlockSpec((K, N), lambda i: (0, 0)),
                  pl.BlockSpec((1, N), lambda i: (0, 0))],
        out_specs=pl.BlockSpec((tm, N), lambda i: (i, 0)),
        compiler_params=_cparams(steps),
    )(x, w, b)


# -------------------------------------------------------- fused conformer block (1 call)

def _conformer_block_kernel(
        x_ref,
        ln_ff1_g, ln_ff1_b, ff1_w1, ff1_b1, ff1_w2, ff1_b2,
        ln_att_g, ln_att_b, wqkv, bqkv, wo, bo,
        ln_conv_g, ln_conv_b, pw1_w, pw1_b, dw_w, dw_b, pw2_w, pw2_b,
        ln_ff2_g, ln_ff2_b, ff2_w1, ff2_b1, ff2_w2, ff2_b2,
        ln_out_g, ln_out_b,
        o_ref, *, n_heads):
    """Whole conformer block for one batch element:
       x + 0.5*FFN1 -> +MHSA -> +ConvModule -> +0.5*FFN2 -> LayerNorm."""
    x = x_ref[0]                                        # (T, D) f32
    T, D = x.shape
    dh = D // n_heads

    def layer_norm(z, g_ref, b_ref):
        mu = jnp.mean(z, axis=-1, keepdims=True)
        var = jnp.mean(jnp.square(z - mu), axis=-1, keepdims=True)
        return (z - mu) * jax.lax.rsqrt(var + 1e-5) * g_ref[...] + b_ref[...]

    def mm(a, w_ref_):                                  # bf16 MXU matmul, f32 accumulate
        return jnp.dot(a.astype(jnp.bfloat16), w_ref_[...],
                       preferred_element_type=jnp.float32)

    # ---- feed-forward module 1 (half-step residual)
    h = layer_norm(x, ln_ff1_g, ln_ff1_b)
    h1 = mm(h, ff1_w1) + ff1_b1[...]
    h1 = h1 * jax.nn.sigmoid(h1)                        # swish
    x = x + 0.5 * (mm(h1, ff1_w2) + ff1_b2[...])

    # ---- multi-head self-attention (fused QKV weight; scale folded into Q columns)
    # TODO(synk): Conformer relative positional encoding / padding mask omitted.
    h = layer_norm(x, ln_att_g, ln_att_b)
    qkv = mm(h, wqkv) + bqkv[...]                       # (T, 3D); splits are 128-aligned

    def heads(z2d):                                     # (T, D) f32 -> (H, T, dh) bf16
        return jnp.transpose(z2d.reshape(T, n_heads, dh), (1, 0, 2)).astype(jnp.bfloat16)

    q3 = heads(qkv[:, :D])
    k3 = heads(qkv[:, D:2 * D])
    v3 = heads(qkv[:, 2 * D:])
    s = jnp.einsum('htd,hsd->hts', q3, k3, preferred_element_type=jnp.float32)
    m = jnp.max(s, axis=-1, keepdims=True)
    p = jnp.exp(s - m)
    p = p * pl.reciprocal(jnp.sum(p, axis=-1, keepdims=True), approx=True)
    o3 = jnp.einsum('hts,hsd->htd', p.astype(jnp.bfloat16), v3,
                    preferred_element_type=jnp.float32)             # (H, T, dh)
    o2 = jnp.transpose(o3, (1, 0, 2)).reshape(T, D)                 # (T, D)
    x = x + mm(o2, wo) + bo[...]

    # ---- convolution module (fused GLU weights; depthwise time-conv via XLU roll)
    # TODO(synk): BatchNorm folded as eval-mode identity running stats.
    h = layer_norm(x, ln_conv_g, ln_conv_b)
    vg = mm(h, pw1_w) + pw1_b[...]                      # (T, 2D)
    u = vg[:, :D] * jax.nn.sigmoid(vg[:, D:])           # GLU (lane-aligned split)
    ksize = dw_w.shape[0]
    pad = (ksize - 1) // 2
    wdw = dw_w[...]                                     # (K, D) f32
    t_idx = jax.lax.broadcasted_iota(jnp.int32, (T, 1), 0)
    acc = u * wdw[pad, :]                               # centre tap
    for kk in range(ksize):                             # static unroll over taps
        off = kk - pad
        if off == 0:
            continue
        shifted = pltpu.roll(u, shift=(-off) % T, axis=0)           # XLU shift
        src = t_idx + off
        shifted = jnp.where(jnp.logical_and(src >= 0, src < T), shifted, 0.0)
        acc = acc + shifted * wdw[kk, :]
    y = (acc + dw_b[...]) * (1.0 / math.sqrt(1.0 + 1e-5))           # eval-mode BatchNorm
    y = y * jax.nn.sigmoid(y)                           # swish
    x = x + mm(y, pw2_w) + pw2_b[...]

    # ---- feed-forward module 2 (half-step residual) + final LayerNorm
    h = layer_norm(x, ln_ff2_g, ln_ff2_b)
    h1 = mm(h, ff2_w1) + ff2_b1[...]
    h1 = h1 * jax.nn.sigmoid(h1)
    x = x + 0.5 * (mm(h1, ff2_w2) + ff2_b2[...])
    o_ref[0] = layer_norm(x, ln_out_g, ln_out_b)


def conformer_block(x, p, n_heads):
    B, T, D = x.shape
    assert (p["dw_w"].shape[0] - 1) // 2 < T
    weights = (p["ln_ff1_g"], p["ln_ff1_b"], p["ff1_w1"], p["ff1_b1"],
               p["ff1_w2"], p["ff1_b2"],
               p["ln_att_g"], p["ln_att_b"], p["wqkv"], p["bqkv"], p["wo"], p["bo"],
               p["ln_conv_g"], p["ln_conv_b"], p["pw1_w"], p["pw1_b"],
               p["dw_w"], p["dw_b"], p["pw2_w"], p["pw2_b"],
               p["ln_ff2_g"], p["ln_ff2_b"], p["ff2_w1"], p["ff2_b1"],
               p["ff2_w2"], p["ff2_b2"],
               p["ln_out_g"], p["ln_out_b"])
    bx = pl.BlockSpec((1, T, D), lambda b: (b, 0, 0))
    in_specs = [bx] + [pl.BlockSpec(w.shape, lambda b: (0, 0)) for w in weights]
    kern = functools.partial(_conformer_block_kernel, n_heads=n_heads)
    return pl.pallas_call(
        kern,
        out_shape=jax.ShapeDtypeStruct((B, T, D), jnp.float32),
        grid=(B,),
        in_specs=in_specs,
        out_specs=bx,
        compiler_params=_cparams(B),
    )(x, *weights)


# -------------------------------------------------------------- CTC head, (T, B, V) out

def _ctc_head_kernel(x_ref, w_ref, b_ref, o_ref):
    """Linear -> log_softmax, written directly in (T, B, V) layout."""
    n_b = x_ref.shape[0]
    for bi in range(n_b):                               # static unroll over batch
        logits = jnp.dot(x_ref[bi].astype(jnp.bfloat16), w_ref[...],
                         preferred_element_type=jnp.float32) + b_ref[...]
        m = jnp.max(logits, axis=-1, keepdims=True)
        z = logits - m
        lse = jnp.log(jnp.sum(jnp.exp(z), axis=-1, keepdims=True))
        o_ref[:, bi, :] = z - lse


def ctc_head_tbv(x, w, b):
    """CTC log-probs head; emits (T, B, V) directly via a transposed out_spec."""
    B, T, D = x.shape
    V = w.shape[1]
    tt = _rows_tile(T)
    steps = T // tt
    return pl.pallas_call(
        _ctc_head_kernel,
        out_shape=jax.ShapeDtypeStruct((T, B, V), jnp.float32),
        grid=(steps,),
        in_specs=[pl.BlockSpec((B, tt, D), lambda i: (0, i, 0)),
                  pl.BlockSpec((D, V), lambda i: (0, 0)),
                  pl.BlockSpec((1, V), lambda i: (0, 0))],
        out_specs=pl.BlockSpec((tt, B, V), lambda i: (i, 0, 0)),
        compiler_params=_cparams(steps),
    )(x, w, b)


# ------------------------------------------------------------------------------- model

def conv2d_im2col_nhwc(x, w, b, stride, pad, act):
    """3x3 Conv2d, channels-last: im2col (XLA pads/slices/concat only, no transposes)
    followed by a fused Pallas matmul+bias+act.  x:(B,H,W,Cin) -> (B,Ho,Wo,Cout)."""
    # TODO(synk): patch extraction stays XLA glue; conv1's Cin*9=9 contraction is
    # lane-sparse but tiny, so it is left un-padded.
    B, H, W, Cin = x.shape
    kh = kw = 3
    Cout = w.shape[1]
    xp = jnp.pad(x, ((0, 0), (pad, pad), (pad, pad), (0, 0)))
    Ho = (H + 2 * pad - kh) // stride + 1
    Wo = (W + 2 * pad - kw) // stride + 1
    patches = []
    for i in range(kh):
        for j in range(kw):
            patches.append(xp[:, i:i + stride * Ho:stride, j:j + stride * Wo:stride, :])
    cols = jnp.concatenate(patches, axis=-1).reshape(B * Ho * Wo, kh * kw * Cin)
    out = linear_act(cols, w, b, act=act)               # Pallas matmul+bias+act
    return out.reshape(B, Ho, Wo, Cout)


def downsampler_forward(x, p):
    """Conv2d(1,C,3,s2,p1)+ReLU -> Conv2d(C,C,3,s2,p1)+ReLU -> Linear to d_model,
    all channels-last (no NCHW transposes anywhere)."""
    B, T, M = x.shape
    h = x[:, :, :, None]                                # (B, T, n_mels, 1) NHWC
    h = conv2d_im2col_nhwc(h, p["conv1_w"], p["conv1_b"], stride=2, pad=1, act="relu")
    h = conv2d_im2col_nhwc(h, p["conv2_w"], p["conv2_b"], stride=2, pad=1, act="relu")
    _, To, Mo, C = h.shape
    h = h.reshape(B * To, Mo * C)                       # contiguous flatten, no transpose
    h = linear_act(h, p["proj_w"], p["proj_b"], act="none")
    return h.reshape(B, To, -1)


def encoder_forward(x, ep, cfg):
    y_inter = []
    for li, lp in enumerate(ep["layers"]):
        x = conformer_block(x, lp, cfg["n_heads"])
        if li in cfg["inter_layers"]:
            idx = cfg["inter_layers"].index(li)
            y_inter.append(ctc_head_tbv(x, ep["inter_w"][idx], ep["inter_b"][idx]))
    y = ctc_head_tbv(x, ep["out_w"], ep["out_b"])       # (T, B, vocab)
    return y, None, None, y_inter


def base_ctc_forward(speechB, params, cfg):
    """baseCTC.forward: x = downsampler(batch.speechB); y,_,_,y_inter = encoder(x)."""
    x = downsampler_forward(speechB, params["downsampler"])
    y, _, _, y_inter = encoder_forward(x, params["encoder"], cfg)
    return y, y_inter


# ------------------------------------------------------------------------------ params

def init_params(key, cfg):
    keys = iter(jax.random.split(key, 128))

    def wgt(shape, scale=0.02):          # matmul weights stored bf16 (MXU inputs)
        return (jax.random.normal(next(keys), shape, jnp.float32) * scale
                ).astype(jnp.bfloat16)

    def wgt_f32(shape, scale=0.02):      # elementwise-path weights stay f32
        return jax.random.normal(next(keys), shape, jnp.float32) * scale

    def zeros(*shape):
        return jnp.zeros(shape, jnp.float32)

    def ones(*shape):
        return jnp.ones(shape, jnp.float32)

    D = cfg["d_model"]
    F = cfg["ff_dim"]
    C = cfg["conv_channels"]
    V = cfg["vocab_size"]
    K = cfg["dw_kernel"]
    Mo = cfg["n_mels"] // 4
    att_scale = 1.0 / math.sqrt(D // cfg["n_heads"])

    ds = dict(
        conv1_w=wgt((1 * 9, C)), conv1_b=zeros(1, C),
        conv2_w=wgt((C * 9, C)), conv2_b=zeros(1, C),
        proj_w=wgt((Mo * C, D)), proj_b=zeros(1, D),
    )

    def block():
        wqkv = jax.random.normal(next(keys), (D, 3 * D), jnp.float32) * 0.02
        wqkv = wqkv.at[:, :D].multiply(att_scale)       # fold 1/sqrt(dh) into Q proj
        return dict(
            ln_ff1_g=ones(1, D), ln_ff1_b=zeros(1, D),
            ff1_w1=wgt((D, F)), ff1_b1=zeros(1, F),
            ff1_w2=wgt((F, D)), ff1_b2=zeros(1, D),
            ln_att_g=ones(1, D), ln_att_b=zeros(1, D),
            wqkv=wqkv.astype(jnp.bfloat16), bqkv=zeros(1, 3 * D),
            wo=wgt((D, D)), bo=zeros(1, D),
            ln_conv_g=ones(1, D), ln_conv_b=zeros(1, D),
            pw1_w=wgt((D, 2 * D)), pw1_b=zeros(1, 2 * D),
            dw_w=wgt_f32((K, D)), dw_b=zeros(1, D),
            pw2_w=wgt((D, D)), pw2_b=zeros(1, D),
            ln_ff2_g=ones(1, D), ln_ff2_b=zeros(1, D),
            ff2_w1=wgt((D, F)), ff2_b1=zeros(1, F),
            ff2_w2=wgt((F, D)), ff2_b2=zeros(1, D),
            ln_out_g=ones(1, D), ln_out_b=zeros(1, D),
        )

    enc = dict(
        layers=[block() for _ in range(cfg["n_layers"])],
        out_w=wgt((D, V)), out_b=zeros(1, V),
        inter_w=[wgt((D, V)) for _ in cfg["inter_layers"]],
        inter_b=[zeros(1, V) for _ in cfg["inter_layers"]],
    )
    return dict(downsampler=ds, encoder=enc)


# -------------------------------------------------------------------------------- main

if __name__ == "__main__":
    cfg = dict(
        n_mels=16, conv_channels=128, d_model=128, n_heads=4, ff_dim=256,
        dw_kernel=7, n_layers=2, vocab_size=128, inter_layers=(0,),
    )
    key = jax.random.PRNGKey(0)
    pkey, xkey = jax.random.split(key)
    params = init_params(pkey, cfg)

    B, T = 2, 32
    speechB = jax.random.normal(xkey, (B, T, cfg["n_mels"]), jnp.float32)

    fwd = jax.jit(functools.partial(base_ctc_forward, cfg=cfg))
    y, y_inter = fwd(speechB, params)
    jax.block_until_ready(y)
    jax.block_until_ready(y_inter)

    T_out = T // 4  # two stride-2 convs
    assert y.shape == (T_out, B, cfg["vocab_size"]), y.shape
    assert len(y_inter) == len(cfg["inter_layers"])
    assert y_inter[0].shape == (T_out, B, cfg["vocab_size"]), y_inter[0].shape
    assert bool(jnp.all(jnp.isfinite(y)))
    assert bool(jnp.all(jnp.isfinite(y_inter[0])))
    # log-softmax rows sum to ~1 in prob space
    assert bool(jnp.allclose(jnp.exp(y).sum(-1), 1.0, atol=1e-4))

    print("KERNEL_OK")
</pallas_src>

<mosaic_0001>
module attributes {stable_mosaic.version = 11 : i64} {
  func.func @_linear_act_kernel(%arg0: i32, %arg1: memref<256x9xf32, #tpu.memory_space<vmem>>, %arg2: memref<9x128xbf16, #tpu.memory_space<vmem>>, %arg3: memref<1x128xf32, #tpu.memory_space<vmem>>, %arg4: memref<256x128xf32, #tpu.memory_space<vmem>>) attributes {dimension_semantics = [#tpu.dimension_semantics<arbitrary>], iteration_bounds = array<i64: 1>, scalar_prefetch = 0 : i64, scratch_operands = 0 : i64, tpu.core_type = #tpu.core_type<tc>, window_params = [{transform_indices = @transform_0, window_bounds = array<i64: 256, 9>}, {pipeline_mode = #tpu.pipeline_mode<synchronous>, transform_indices = @transform_1, window_bounds = array<i64: 9, 128>}, {pipeline_mode = #tpu.pipeline_mode<synchronous>, transform_indices = @transform_2, window_bounds = array<i64: 1, 128>}, {transform_indices = @transform_3, window_bounds = array<i64: 256, 128>}]} {
    %c0 = arith.constant 0 : index
    %c0_0 = arith.constant 0 : index
    %0 = vector.load %arg1[%c0, %c0_0] : memref<256x9xf32, #tpu.memory_space<vmem>>, vector<256x9xf32>
    %1 = arith.truncf %0 : vector<256x9xf32> to vector<256x9xbf16>
    %c0_1 = arith.constant 0 : index
    %c0_2 = arith.constant 0 : index
    %2 = vector.load %arg2[%c0_1, %c0_2] : memref<9x128xbf16, #tpu.memory_space<vmem>>, vector<9x128xbf16>
    %cst = arith.constant dense<0.000000e+00> : vector<256x128xf32>
    %3 = tpu.matmul %1, %2, %cst {dimension_numbers = #tpu.dot_dimension_numbers<[1], [0], [0], [1], [0, 0, 1, 1], [], []>} : vector<256x9xbf16>, vector<9x128xbf16>, vector<256x128xf32> -> vector<256x128xf32>
    %c0_3 = arith.constant 0 : index
    %c0_4 = arith.constant 0 : index
    %4 = vector.load %arg3[%c0_3, %c0_4] : memref<1x128xf32, #tpu.memory_space<vmem>>, vector<1x128xf32>
    %5 = vector.broadcast %4 : vector<1x128xf32> to vector<256x128xf32>
    %6 = arith.addf %3, %5 : vector<256x128xf32>
    %cst_5 = arith.constant 0.000000e+00 : f32
    %7 = vector.broadcast %cst_5 : f32 to vector<256x128xf32>
    %8 = arith.maximumf %6, %7 : vector<256x128xf32>
    %c0_6 = arith.constant 0 : index
    %c0_7 = arith.constant 0 : index
    %9 = vector.load %arg4[%c0_6, %c0_7] : memref<256x128xf32, #tpu.memory_space<vmem>>, vector<256x128xf32>
    tpu.vector_store %arg4[%c0_6, %c0_7], %8 {strides = array<i32>} : memref<256x128xf32, #tpu.memory_space<vmem>>, vector<256x128xf32>,
    return
  }
  func.func @transform_0(%arg0: i32) -> (i32, i32) {
    %c0_i32 = arith.constant 0 : i32
    %c0_i32_0 = arith.constant 0 : i32
    return %arg0, %c0_i32 : i32, i32
  }
  func.func @transform_1(%arg0: i32) -> (i32, i32) {
    %c0_i32 = arith.constant 0 : i32
    %c0_i32_0 = arith.constant 0 : i32
    %c0_i32_1 = arith.constant 0 : i32
    return %c0_i32, %c0_i32_0 : i32, i32
  }
  func.func @transform_2(%arg0: i32) -> (i32, i32) {
    %c0_i32 = arith.constant 0 : i32
    %c0_i32_0 = arith.constant 0 : i32
    %c0_i32_1 = arith.constant 0 : i32
    return %c0_i32, %c0_i32_0 : i32, i32
  }
  func.func @transform_3(%arg0: i32) -> (i32, i32) {
    %c0_i32 = arith.constant 0 : i32
    %c0_i32_0 = arith.constant 0 : i32
    return %arg0, %c0_i32 : i32, i32
  }
}

module attributes {stable_mosaic.version = 11 : i64} {
  func.func @_linear_act_kernel(%arg0: i32, %arg1: memref<64x1152xf32, #tpu.memory_space<vmem>>, %arg2: memref<1152x128xbf16, #tpu.memory_space<vmem>>, %arg3: memref<1x128xf32, #tpu.memory_space<vmem>>, %arg4: memref<64x128xf32, #tpu.memory_space<vmem>>) attributes {dimension_semantics = [#tpu.dimension_semantics<arbitrary>], iteration_bounds = array<i64: 1>, scalar_prefetch = 0 : i64, scratch_operands = 0 : i64, tpu.core_type = #tpu.core_type<tc>, window_params = [{transform_indices = @transform_0, window_bounds = array<i64: 64, 1152>}, {pipeline_mode = #tpu.pipeline_mode<synchronous>, transform_indices = @transform_1, window_bounds = array<i64: 1152, 128>}, {pipeline_mode = #tpu.pipeline_mode<synchronous>, transform_indices = @transform_2, window_bounds = array<i64: 1, 128>}, {transform_indices = @transform_3, window_bounds = array<i64: 64, 128>}]} {
    %c0 = arith.constant 0 : index
    %c0_0 = arith.constant 0 : index
    %0 = vector.load %arg1[%c0, %c0_0] : memref<64x1152xf32, #tpu.memory_space<vmem>>, vector<64x1152xf32>
    %1 = arith.truncf %0 : vector<64x1152xf32> to vector<64x1152xbf16>
    %c0_1 = arith.constant 0 : index
    %c0_2 = arith.constant 0 : index
    %2 = vector.load %arg2[%c0_1, %c0_2] : memref<1152x128xbf16, #tpu.memory_space<vmem>>, vector<1152x128xbf16>
    %cst = arith.constant dense<0.000000e+00> : vector<64x128xf32>
    %3 = tpu.matmul %1, %2, %cst {dimension_numbers = #tpu.dot_dimension_numbers<[1], [0], [0], [1], [0, 0, 1, 1], [], []>} : vector<64x1152xbf16>, vector<1152x128xbf16>, vector<64x128xf32> -> vector<64x128xf32>
    %c0_3 = arith.constant 0 : index
    %c0_4 = arith.constant 0 : index
    %4 = vector.load %arg3[%c0_3, %c0_4] : memref<1x128xf32, #tpu.memory_space<vmem>>, vector<1x128xf32>
    %5 = vector.broadcast %4 : vector<1x128xf32> to vector<64x128xf32>
    %6 = arith.addf %3, %5 : vector<64x128xf32>
    %cst_5 = arith.constant 0.000000e+00 : f32
    %7 = vector.broadcast %cst_5 : f32 to vector<64x128xf32>
    %8 = arith.maximumf %6, %7 : vector<64x128xf32>
    %c0_6 = arith.constant 0 : index
    %c0_7 = arith.constant 0 : index
    %9 = vector.load %arg4[%c0_6, %c0_7] : memref<64x128xf32, #tpu.memory_space<vmem>>, vector<64x128xf32>
    tpu.vector_store %arg4[%c0_6, %c0_7], %8 {strides = array<i32>} : memref<64x128xf32, #tpu.memory_space<vmem>>, vector<64x128xf32>,
    return
  }
  func.func @transform_0(%arg0: i32) -> (i32, i32) {
    %c0_i32 = arith.constant 0 : i32
    %c0_i32_0 = arith.constant 0 : i32
    return %arg0, %c0_i32 : i32, i32
  }
  func.func @transform_1(%arg0: i32) -> (i32, i32) {
    %c0_i32 = arith.constant 0 : i32
    %c0_i32_0 = arith.constant 0 : i32
    %c0_i32_1 = arith.constant 0 : i32
    return %c0_i32, %c0_i32_0 : i32, i32
  }
  func.func @transform_2(%arg0: i32) -> (i32, i32) {
    %c0_i32 = arith.constant 0 : i32
    %c0_i32_0 = arith.constant 0 : i32
    %c0_i32_1 = arith.constant 0 : i32
    return %c0_i32, %c0_i32_0 : i32, i32
  }
  func.func @transform_3(%arg0: i32) -> (i32, i32) {
    %c0_i32 = arith.constant 0 : i32
    %c0_i32_0 = arith.constant 0 : i32
    return %arg0, %c0_i32 : i32, i32
  }
}

module attributes {stable_mosaic.version = 11 : i64} {
  func.func @_linear_act_kernel(%arg0: i32, %arg1: memref<16x512xf32, #tpu.memory_space<vmem>>, %arg2: memref<512x128xbf16, #tpu.memory_space<vmem>>, %arg3: memref<1x128xf32, #tpu.memory_space<vmem>>, %arg4: memref<16x128xf32, #tpu.memory_space<vmem>>) attributes {dimension_semantics = [#tpu.dimension_semantics<arbitrary>], iteration_bounds = array<i64: 1>, scalar_prefetch = 0 : i64, scratch_operands = 0 : i64, tpu.core_type = #tpu.core_type<tc>, window_params = [{transform_indices = @transform_0, window_bounds = array<i64: 16, 512>}, {pipeline_mode = #tpu.pipeline_mode<synchronous>, transform_indices = @transform_1, window_bounds = array<i64: 512, 128>}, {pipeline_mode = #tpu.pipeline_mode<synchronous>, transform_indices = @transform_2, window_bounds = array<i64: 1, 128>}, {transform_indices = @transform_3, window_bounds = array<i64: 16, 128>}]} {
    %c0 = arith.constant 0 : index
    %c0_0 = arith.constant 0 : index
    %0 = vector.load %arg1[%c0, %c0_0] : memref<16x512xf32, #tpu.memory_space<vmem>>, vector<16x512xf32>
    %1 = arith.truncf %0 : vector<16x512xf32> to vector<16x512xbf16>
    %c0_1 = arith.constant 0 : index
    %c0_2 = arith.constant 0 : index
    %2 = vector.load %arg2[%c0_1, %c0_2] : memref<512x128xbf16, #tpu.memory_space<vmem>>, vector<512x128xbf16>
    %cst = arith.constant dense<0.000000e+00> : vector<16x128xf32>
    %3 = tpu.matmul %1, %2, %cst {dimension_numbers = #tpu.dot_dimension_numbers<[1], [0], [0], [1], [0, 0, 1, 1], [], []>} : vector<16x512xbf16>, vector<512x128xbf16>, vector<16x128xf32> -> vector<16x128xf32>
    %c0_3 = arith.constant 0 : index
    %c0_4 = arith.constant 0 : index
    %4 = vector.load %arg3[%c0_3, %c0_4] : memref<1x128xf32, #tpu.memory_space<vmem>>, vector<1x128xf32>
    %5 = vector.broadcast %4 : vector<1x128xf32> to vector<16x128xf32>
    %6 = arith.addf %3, %5 : vector<16x128xf32>
    %c0_5 = arith.constant 0 : index
    %c0_6 = arith.constant 0 : index
    %7 = vector.load %arg4[%c0_5, %c0_6] : memref<16x128xf32, #tpu.memory_space<vmem>>, vector<16x128xf32>
    tpu.vector_store %arg4[%c0_5, %c0_6], %6 {strides = array<i32>} : memref<16x128xf32, #tpu.memory_space<vmem>>, vector<16x128xf32>,
    return
  }
  func.func @transform_0(%arg0: i32) -> (i32, i32) {
    %c0_i32 = arith.constant 0 : i32
    %c0_i32_0 = arith.constant 0 : i32
    return %arg0, %c0_i32 : i32, i32
  }
  func.func @transform_1(%arg0: i32) -> (i32, i32) {
    %c0_i32 = arith.constant 0 : i32
    %c0_i32_0 = arith.constant 0 : i32
    %c0_i32_1 = arith.constant 0 : i32
    return %c0_i32, %c0_i32_0 : i32, i32
  }
  func.func @transform_2(%arg0: i32) -> (i32, i32) {
    %c0_i32 = arith.constant 0 : i32
    %c0_i32_0 = arith.constant 0 : i32
    %c0_i32_1 = arith.constant 0 : i32
    return %c0_i32, %c0_i32_0 : i32, i32
  }
  func.func @transform_3(%arg0: i32) -> (i32, i32) {
    %c0_i32 = arith.constant 0 : i32
    %c0_i32_0 = arith.constant 0 : i32
    return %arg0, %c0_i32 : i32, i32
  }
}

module attributes {stable_mosaic.version = 11 : i64} {
  func.func @_ctc_head_kernel(%arg0: i32, %arg1: memref<2x8x128xf32, #tpu.memory_space<vmem>>, %arg2: memref<128x128xbf16, #tpu.memory_space<vmem>>, %arg3: memref<1x128xf32, #tpu.memory_space<vmem>>, %arg4: memref<8x2x128xf32, #tpu.memory_space<vmem>>) attributes {dimension_semantics = [#tpu.dimension_semantics<arbitrary>], iteration_bounds = array<i64: 1>, scalar_prefetch = 0 : i64, scratch_operands = 0 : i64, tpu.core_type = #tpu.core_type<tc>, window_params = [{transform_indices = @transform_0, window_bounds = array<i64: 2, 8, 128>}, {pipeline_mode = #tpu.pipeline_mode<synchronous>, transform_indices = @transform_1, window_bounds = array<i64: 128, 128>}, {pipeline_mode = #tpu.pipeline_mode<synchronous>, transform_indices = @transform_2, window_bounds = array<i64: 1, 128>}, {transform_indices = @transform_3, window_bounds = array<i64: 8, 2, 128>}]} {
    %c0 = arith.constant 0 : index
    %c0_0 = arith.constant 0 : index
    %c0_1 = arith.constant 0 : index
    %0 = vector.load %arg1[%c0, %c0_0, %c0_1] : memref<2x8x128xf32, #tpu.memory_space<vmem>>, vector<1x8x128xf32>
    %1 = vector.shape_cast %0 : vector<1x8x128xf32> to vector<8x128xf32>
    %2 = arith.truncf %1 : vector<8x128xf32> to vector<8x128xbf16>
    %c0_2 = arith.constant 0 : index
    %c0_3 = arith.constant 0 : index
    %3 = vector.load %arg2[%c0_2, %c0_3] : memref<128x128xbf16, #tpu.memory_space<vmem>>, vector<128x128xbf16>
    %cst = arith.constant dense<0.000000e+00> : vector<8x128xf32>
    %4 = tpu.matmul %2, %3, %cst {dimension_numbers = #tpu.dot_dimension_numbers<[1], [0], [0], [1], [0, 0, 1, 1], [], []>} : vector<8x128xbf16>, vector<128x128xbf16>, vector<8x128xf32> -> vector<8x128xf32>
    %c0_4 = arith.constant 0 : index
    %c0_5 = arith.constant 0 : index
    %5 = vector.load %arg3[%c0_4, %c0_5] : memref<1x128xf32, #tpu.memory_space<vmem>>, vector<1x128xf32>
    %6 = vector.broadcast %5 : vector<1x128xf32> to vector<8x128xf32>
    %7 = arith.addf %4, %6 : vector<8x128xf32>
    %cst_6 = arith.constant dense<0xFF800000> : vector<8xf32>
    %8 = vector.multi_reduction <maximumf>, %7, %cst_6 [1] : vector<8x128xf32> to vector<8xf32>
    %9 = vector.shape_cast %8 : vector<8xf32> to vector<8x1xf32>
    %10 = vector.broadcast %9 : vector<8x1xf32> to vector<8x128xf32>
    %11 = arith.subf %7, %10 : vector<8x128xf32>
    %12 = math.exp %11 : vector<8x128xf32>
    %cst_7 = arith.constant dense<0.000000e+00> : vector<8xf32>
    %13 = vector.multi_reduction <add>, %12, %cst_7 [1] : vector<8x128xf32> to vector<8xf32>
    %14 = vector.shape_cast %13 : vector<8xf32> to vector<8x1xf32>
    %15 = math.log %14 : vector<8x1xf32>
    %16 = vector.broadcast %15 : vector<8x1xf32> to vector<8x128xf32>
    %17 = arith.subf %11, %16 : vector<8x128xf32>
    %c0_8 = arith.constant 0 : index
    %c0_9 = arith.constant 0 : index
    %c0_10 = arith.constant 0 : index
    %18 = vector.load %arg4[%c0_8, %c0_9, %c0_10] : memref<8x2x128xf32, #tpu.memory_space<vmem>>, vector<8x1x128xf32>
    %19 = vector.shape_cast %18 : vector<8x1x128xf32> to vector<8x128xf32>
    %20 = vector.shape_cast %17 : vector<8x128xf32> to vector<8x1x128xf32>
    tpu.vector_store %arg4[%c0_8, %c0_9, %c0_10], %20 {strides = array<i32>} : memref<8x2x128xf32, #tpu.memory_space<vmem>>, vector<8x1x128xf32>,
    %c1 = arith.constant 1 : index
    %c0_11 = arith.constant 0 : index
    %c0_12 = arith.constant 0 : index
    %21 = vector.load %arg1[%c1, %c0_11, %c0_12] : memref<2x8x128xf32, #tpu.memory_space<vmem>>, vector<1x8x128xf32>
    %22 = vector.shape_cast %21 : vector<1x8x128xf32> to vector<8x128xf32>
    %23 = arith.truncf %22 : vector<8x128xf32> to vector<8x128xbf16>
    %c0_13 = arith.constant 0 : index
    %c0_14 = arith.constant 0 : index
    %24 = vector.load %arg2[%c0_13, %c0_14] : memref<128x128xbf16, #tpu.memory_space<vmem>>, vector<128x128xbf16>
    %cst_15 = arith.constant dense<0.000000e+00> : vector<8x128xf32>
    %25 = tpu.matmul %23, %24, %cst_15 {dimension_numbers = #tpu.dot_dimension_numbers<[1], [0], [0], [1], [0, 0, 1, 1], [], []>} : vector<8x128xbf16>, vector<128x128xbf16>, vector<8x128xf32> -> vector<8x128xf32>
    %c0_16 = arith.constant 0 : index
    %c0_17 = arith.constant 0 : index
    %26 = vector.load %arg3[%c0_16, %c0_17] : memref<1x128xf32, #tpu.memory_space<vmem>>, vector<1x128xf32>
    %27 = vector.broadcast %26 : vector<1x128xf32> to vector<8x128xf32>
    %28 = arith.addf %25, %27 : vector<8x128xf32>
    %cst_18 = arith.constant dense<0xFF800000> : vector<8xf32>
    %29 = vector.multi_reduction <maximumf>, %28, %cst_18 [1] : vector<8x128xf32> to vector<8xf32>
    %30 = vector.shape_cast %29 : vector<8xf32> to vector<8x1xf32>
    %31 = vector.broadcast %30 : vector<8x1xf32> to vector<8x128xf32>
    %32 = arith.subf %28, %31 : vector<8x128xf32>
    %33 = math.exp %32 : vector<8x128xf32>
    %cst_19 = arith.constant dense<0.000000e+00> : vector<8xf32>
    %34 = vector.multi_reduction <add>, %33, %cst_19 [1] : vector<8x128xf32> to vector<8xf32>
    %35 = vector.shape_cast %34 : vector<8xf32> to vector<8x1xf32>
    %36 = math.log %35 : vector<8x1xf32>
    %37 = vector.broadcast %36 : vector<8x1xf32> to vector<8x128xf32>
    %38 = arith.subf %32, %37 : vector<8x128xf32>
    %c0_20 = arith.constant 0 : index
    %c1_21 = arith.constant 1 : index
    %c0_22 = arith.constant 0 : index
    %39 = vector.load %arg4[%c0_20, %c1_21, %c0_22] : memref<8x2x128xf32, #tpu.memory_space<vmem>>, vector<8x1x128xf32>
    %40 = vector.shape_cast %39 : vector<8x1x128xf32> to vector<8x128xf32>
    %41 = vector.shape_cast %38 : vector<8x128xf32> to vector<8x1x128xf32>
    tpu.vector_store %arg4[%c0_20, %c1_21, %c0_22], %41 {strides = array<i32>} : memref<8x2x128xf32, #tpu.memory_space<vmem>>, vector<8x1x128xf32>,
    return
  }
  func.func @transform_0(%arg0: i32) -> (i32, i32, i32) {
    %c0_i32 = arith.constant 0 : i32
    %c0_i32_0 = arith.constant 0 : i32
    %c0_i32_1 = arith.constant 0 : i32
    return %c0_i32, %arg0, %c0_i32_0 : i32, i32, i32
  }
  func.func @transform_1(%arg0: i32) -> (i32, i32) {
    %c0_i32 = arith.constant 0 : i32
    %c0_i32_0 = arith.constant 0 : i32
    %c0_i32_1 = arith.constant 0 : i32
    return %c0_i32, %c0_i32_0 : i32, i32
  }
  func.func @transform_2(%arg0: i32) -> (i32, i32) {
    %c0_i32 = arith.constant 0 : i32
    %c0_i32_0 = arith.constant 0 : i32
    %c0_i32_1 = arith.constant 0 : i32
    return %c0_i32, %c0_i32_0 : i32, i32
  }
  func.func @transform_3(%arg0: i32) -> (i32, i32, i32) {
    %c0_i32 = arith.constant 0 : i32
    %c0_i32_0 = arith.constant 0 : i32
    %c0_i32_1 = arith.constant 0 : i32
    return %arg0, %c0_i32, %c0_i32_0 : i32, i32, i32
  }
}

module attributes {stable_mosaic.version = 11 : i64} {
  func.func @_conformer_block_kernel(%arg0: i32, %arg1: memref<1x8x128xf32, #tpu.memory_space<vmem>>, %arg2: memref<1x128xf32, #tpu.memory_space<vmem>>, %arg3: memref<1x128xf32, #tpu.memory_space<vmem>>, %arg4: memref<128x256xbf16, #tpu.memory_space<vmem>>, %arg5: memref<1x256xf32, #tpu.memory_space<vmem>>, %arg6: memref<256x128xbf16, #tpu.memory_space<vmem>>, %arg7: memref<1x128xf32, #tpu.memory_space<vmem>>, %arg8: memref<1x128xf32, #tpu.memory_space<vmem>>, %arg9: memref<1x128xf32, #tpu.memory_space<vmem>>, %arg10: memref<128x384xbf16, #tpu.memory_space<vmem>>, %arg11: memref<1x384xf32, #tpu.memory_space<vmem>>, %arg12: memref<128x128xbf16, #tpu.memory_space<vmem>>, %arg13: memref<1x128xf32, #tpu.memory_space<vmem>>, %arg14: memref<1x128xf32, #tpu.memory_space<vmem>>, %arg15: memref<1x128xf32, #tpu.memory_space<vmem>>, %arg16: memref<128x256xbf16, #tpu.memory_space<vmem>>, %arg17: memref<1x256xf32, #tpu.memory_space<vmem>>, %arg18: memref<7x128xf32, #tpu.memory_space<vmem>>, %arg19: memref<1x128xf32, #tpu.memory_space<vmem>>, %arg20: memref<128x128xbf16, #tpu.memory_space<vmem>>, %arg21: memref<1x128xf32, #tpu.memory_space<vmem>>, %arg22: memref<1x128xf32, #tpu.memory_space<vmem>>, %arg23: memref<1x128xf32, #tpu.memory_space<vmem>>, %arg24: memref<128x256xbf16, #tpu.memory_space<vmem>>, %arg25: memref<1x256xf32, #tpu.memory_space<vmem>>, %arg26: memref<256x128xbf16, #tpu.memory_space<vmem>>, %arg27: memref<1x128xf32, #tpu.memory_space<vmem>>, %arg28: memref<1x128xf32, #tpu.memory_space<vmem>>, %arg29: memref<1x128xf32, #tpu.memory_space<vmem>>, %arg30: memref<1x8x128xf32, #tpu.memory_space<vmem>>) attributes {dimension_semantics = [#tpu.dimension_semantics<parallel>], iteration_bounds = array<i64: 2>, scalar_prefetch = 0 : i64, scratch_operands = 0 : i64, tpu.core_type = #tpu.core_type<tc>, window_params = [{transform_indices = @transform_0, window_bounds = array<i64: 1, 8, 128>}, {pipeline_mode = #tpu.pipeline_mode<synchronous>, transform_indices = @transform_1, window_bounds = array<i64: 1, 128>}, {pipeline_mode = #tpu.pipeline_mode<synchronous>, transform_indices = @transform_2, window_bounds = array<i64: 1, 128>}, {pipeline_mode = #tpu.pipeline_mode<synchronous>, transform_indices = @transform_3, window_bounds = array<i64: 128, 256>}, {pipeline_mode = #tpu.pipeline_mode<synchronous>, transform_indices = @transform_4, window_bounds = array<i64: 1, 256>}, {pipeline_mode = #tpu.pipeline_mode<synchronous>, transform_indices = @transform_5, window_bounds = array<i64: 256, 128>}, {pipeline_mode = #tpu.pipeline_mode<synchronous>, transform_indices = @transform_6, window_bounds = array<i64: 1, 128>}, {pipeline_mode = #tpu.pipeline_mode<synchronous>, transform_indices = @transform_7, window_bounds = array<i64: 1, 128>}, {pipeline_mode = #tpu.pipeline_mode<synchronous>, transform_indices = @transform_8, window_bounds = array<i64: 1, 128>}, {pipeline_mode = #tpu.pipeline_mode<synchronous>, transform_indices = @transform_9, window_bounds = array<i64: 128, 384>}, {pipeline_mode = #tpu.pipeline_mode<synchronous>, transform_indices = @transform_10, window_bounds = array<i64: 1, 384>}, {pipeline_mode = #tpu.pipeline_mode<synchronous>, transform_indices = @transform_11, window_bounds = array<i64: 128, 128>}, {pipeline_mode = #tpu.pipeline_mode<synchronous>, transform_indices = @transform_12, window_bounds = array<i64: 1, 128>}, {pipeline_mode = #tpu.pipeline_mode<synchronous>, transform_indices = @transform_13, window_bounds = array<i64: 1, 128>}, {pipeline_mode = #tpu.pipeline_mode<synchronous>, transform_indices = @transform_14, window_bounds = array<i64: 1, 128>}, {pipeline_mode = #tpu.pipeline_mode<synchronous>, transform_indices = @transform_15, window_bounds = array<i64: 128, 256>}, {pipeline_mode = #tpu.pipeline_mode<synchronous>, transform_indices = @transform_16, window_bounds = array<i64: 1, 256>}, {pipeline_mode = #tpu.pipeline_mode<synchronous>, transform_indices = @transform_17, window_bounds = array<i64: 7, 128>}, {pipeline_mode = #tpu.pipeline_mode<synchronous>, transform_indices = @transform_18, window_bounds = array<i64: 1, 128>}, {pipeline_mode = #tpu.pipeline_mode<synchronous>, transform_indices = @transform_19, window_bounds = array<i64: 128, 128>}, {pipeline_mode = #tpu.pipeline_mode<synchronous>, transform_indices = @transform_20, window_bounds = array<i64: 1, 128>}, {pipeline_mode = #tpu.pipeline_mode<synchronous>, transform_indices = @transform_21, window_bounds = array<i64: 1, 128>}, {pipeline_mode = #tpu.pipeline_mode<synchronous>, transform_indices = @transform_22, window_bounds = array<i64: 1, 128>}, {pipeline_mode = #tpu.pipeline_mode<synchronous>, transform_indices = @transform_23, window_bounds = array<i64: 128, 256>}, {pipeline_mode = #tpu.pipeline_mode<synchronous>, transform_indices = @transform_24, window_bounds = array<i64: 1, 256>}, {pipeline_mode = #tpu.pipeline_mode<synchronous>, transform_indices = @transform_25, window_bounds = array<i64: 256, 128>}, {pipeline_mode = #tpu.pipeline_mode<synchronous>, transform_indices = @transform_26, window_bounds = array<i64: 1, 128>}, {pipeline_mode = #tpu.pipeline_mode<synchronous>, transform_indices = @transform_27, window_bounds = array<i64: 1, 128>}, {pipeline_mode = #tpu.pipeline_mode<synchronous>, transform_indices = @transform_28, window_bounds = array<i64: 1, 128>}, {transform_indices = @transform_29, window_bounds = array<i64: 1, 8, 128>}]} {
    %c0 = arith.constant 0 : index
    %c0_0 = arith.constant 0 : index
    %c0_1 = arith.constant 0 : index
    %0 = vector.load %arg1[%c0, %c0_0, %c0_1] : memref<1x8x128xf32, #tpu.memory_space<vmem>>, vector<1x8x128xf32>
    %1 = vector.shape_cast %0 : vector<1x8x128xf32> to vector<8x128xf32>
    %cst = arith.constant dense<0.000000e+00> : vector<8xf32>
    %2 = vector.multi_reduction <add>, %1, %cst [1] : vector<8x128xf32> to vector<8xf32>
    %3 = vector.shape_cast %2 : vector<8xf32> to vector<8x1xf32>
    %cst_2 = arith.constant 1.280000e+02 : f32
    %4 = vector.broadcast %cst_2 : f32 to vector<8x1xf32>
    %5 = arith.divf %3, %4 : vector<8x1xf32>
    %6 = vector.broadcast %5 : vector<8x1xf32> to vector<8x128xf32>
    %7 = arith.subf %1, %6 : vector<8x128xf32>
    %8 = arith.mulf %7, %7 : vector<8x128xf32>
    %cst_3 = arith.constant dense<0.000000e+00> : vector<8xf32>
    %9 = vector.multi_reduction <add>, %8, %cst_3 [1] : vector<8x128xf32> to vector<8xf32>
    %10 = vector.shape_cast %9 : vector<8xf32> to vector<8x1xf32>
    %cst_4 = arith.constant 1.280000e+02 : f32
    %11 = vector.broadcast %cst_4 : f32 to vector<8x1xf32>
    %12 = arith.divf %10, %11 : vector<8x1xf32>
    %13 = vector.broadcast %5 : vector<8x1xf32> to vector<8x128xf32>
    %14 = arith.subf %1, %13 : vector<8x128xf32>
    %cst_5 = arith.constant 9.99999974E-6 : f32
    %15 = vector.broadcast %cst_5 : f32 to vector<8x1xf32>
    %16 = arith.addf %12, %15 : vector<8x1xf32>
    %17 = math.rsqrt %16 : vector<8x1xf32>
    %18 = vector.broadcast %17 : vector<8x1xf32> to vector<8x128xf32>
    %19 = arith.mulf %14, %18 : vector<8x128xf32>
    %c0_6 = arith.constant 0 : index
    %c0_7 = arith.constant 0 : index
    %20 = vector.load %arg2[%c0_6, %c0_7] : memref<1x128xf32, #tpu.memory_space<vmem>>, vector<1x128xf32>
    %21 = vector.broadcast %20 : vector<1x128xf32> to vector<8x128xf32>
    %22 = arith.mulf %19, %21 : vector<8x128xf32>
    %c0_8 = arith.constant 0 : index
    %c0_9 = arith.constant 0 : index
    %23 = vector.load %arg3[%c0_8, %c0_9] : memref<1x128xf32, #tpu.memory_space<vmem>>, vector<1x128xf32>
    %24 = vector.broadcast %23 : vector<1x128xf32> to vector<8x128xf32>
    %25 = arith.addf %22, %24 : vector<8x128xf32>
    %26 = arith.truncf %25 : vector<8x128xf32> to vector<8x128xbf16>
    %c0_10 = arith.constant 0 : index
    %c0_11 = arith.constant 0 : index
    %27 = vector.load %arg4[%c0_10, %c0_11] : memref<128x256xbf16, #tpu.memory_space<vmem>>, vector<128x256xbf16>
    %cst_12 = arith.constant dense<0.000000e+00> : vector<8x256xf32>
    %28 = tpu.matmul %26, %27, %cst_12 {dimension_numbers = #tpu.dot_dimension_numbers<[1], [0], [0], [1], [0, 0, 1, 1], [], []>} : vector<8x128xbf16>, vector<128x256xbf16>, vector<8x256xf32> -> vector<8x256xf32>
    %c0_13 = arith.constant 0 : index
    %c0_14 = arith.constant 0 : index
    %29 = vector.load %arg5[%c0_13, %c0_14] : memref<1x256xf32, #tpu.memory_space<vmem>>, vector<1x256xf32>
    %30 = vector.broadcast %29 : vector<1x256xf32> to vector<8x256xf32>
    %31 = arith.addf %28, %30 : vector<8x256xf32>
    %32 = arith.negf %31 : vector<8x256xf32>
    %33 = math.exp %32 : vector<8x256xf32>
    %cst_15 = arith.constant 1.000000e+00 : f32
    %34 = vector.broadcast %cst_15 : f32 to vector<8x256xf32>
    %35 = arith.addf %34, %33 : vector<8x256xf32>
    %36 = arith.divf %34, %35 : vector<8x256xf32>
    %37 = arith.mulf %31, %36 : vector<8x256xf32>
    %38 = arith.truncf %37 : vector<8x256xf32> to vector<8x256xbf16>
    %c0_16 = arith.constant 0 : index
    %c0_17 = arith.constant 0 : index
    %39 = vector.load %arg6[%c0_16, %c0_17] : memref<256x128xbf16, #tpu.memory_space<vmem>>, vector<256x128xbf16>
    %cst_18 = arith.constant dense<0.000000e+00> : vector<8x128xf32>
    %40 = tpu.matmul %38, %39, %cst_18 {dimension_numbers = #tpu.dot_dimension_numbers<[1], [0], [0], [1], [0, 0, 1, 1], [], []>} : vector<8x256xbf16>, vector<256x128xbf16>, vector<8x128xf32> -> vector<8x128xf32>
    %c0_19 = arith.constant 0 : index
    %c0_20 = arith.constant 0 : index
    %41 = vector.load %arg7[%c0_19, %c0_20] : memref<1x128xf32, #tpu.memory_space<vmem>>, vector<1x128xf32>
    %42 = vector.broadcast %41 : vector<1x128xf32> to vector<8x128xf32>
    %43 = arith.addf %40, %42 : vector<8x128xf32>
    %cst_21 = arith.constant 5.000000e-01 : f32
    %44 = vector.broadcast %cst_21 : f32 to vector<8x128xf32>
    %45 = arith.mulf %44, %43 : vector<8x128xf32>
    %46 = arith.addf %1, %45 : vector<8x128xf32>
    %cst_22 = arith.constant dense<0.000000e+00> : vector<8xf32>
    %47 = vector.multi_reduction <add>, %46, %cst_22 [1] : vector<8x128xf32> to vector<8xf32>
    %48 = vector.shape_cast %47 : vector<8xf32> to vector<8x1xf32>
    %cst_23 = arith.constant 1.280000e+02 : f32
    %49 = vector.broadcast %cst_23 : f32 to vector<8x1xf32>
    %50 = arith.divf %48, %49 : vector<8x1xf32>
    %51 = vector.broadcast %50 : vector<8x1xf32> to vector<8x128xf32>
    %52 = arith.subf %46, %51 : vector<8x128xf32>
    %53 = arith.mulf %52, %52 : vector<8x128xf32>
    %cst_24 = arith.constant dense<0.000000e+00> : vector<8xf32>
    %54 = vector.multi_reduction <add>, %53, %cst_24 [1] : vector<8x128xf32> to vector<8xf32>
    %55 = vector.shape_cast %54 : vector<8xf32> to vector<8x1xf32>
    %cst_25 = arith.constant 1.280000e+02 : f32
    %56 = vector.broadcast %cst_25 : f32 to vector<8x1xf32>
    %57 = arith.divf %55, %56 : vector<8x1xf32>
    %58 = vector.broadcast %50 : vector<8x1xf32> to vector<8x128xf32>
    %59 = arith.subf %46, %58 : vector<8x128xf32>
    %cst_26 = arith.constant 9.99999974E-6 : f32
    %60 = vector.broadcast %cst_26 : f32 to vector<8x1xf32>
    %61 = arith.addf %57, %60 : vector<8x1xf32>
    %62 = math.rsqrt %61 : vector<8x1xf32>
    %63 = vector.broadcast %62 : vector<8x1xf32> to vector<8x128xf32>
    %64 = arith.mulf %59, %63 : vector<8x128xf32>
    %c0_27 = arith.constant 0 : index
    %c0_28 = arith.constant 0 : index
    %65 = vector.load %arg8[%c0_27, %c0_28] : memref<1x128xf32, #tpu.memory_space<vmem>>, vector<1x128xf32>
    %66 = vector.broadcast %65 : vector<1x128xf32> to vector<8x128xf32>
    %67 = arith.mulf %64, %66 : vector<8x128xf32>
    %c0_29 = arith.constant 0 : index
    %c0_30 = arith.constant 0 : index
    %68 = vector.load %arg9[%c0_29, %c0_30] : memref<1x128xf32, #tpu.memory_space<vmem>>, vector<1x128xf32>
    %69 = vector.broadcast %68 : vector<1x128xf32> to vector<8x128xf32>
    %70 = arith.addf %67, %69 : vector<8x128xf32>
    %71 = arith.truncf %70 : vector<8x128xf32> to vector<8x128xbf16>
    %c0_31 = arith.constant 0 : index
    %c0_32 = arith.constant 0 : index
    %72 = vector.load %arg10[%c0_31, %c0_32] : memref<128x384xbf16, #tpu.memory_space<vmem>>, vector<128x384xbf16>
    %cst_33 = arith.constant dense<0.000000e+00> : vector<8x384xf32>
    %73 = tpu.matmul %71, %72, %cst_33 {dimension_numbers = #tpu.dot_dimension_numbers<[1], [0], [0], [1], [0, 0, 1, 1], [], []>} : vector<8x128xbf16>, vector<128x384xbf16>, vector<8x384xf32> -> vector<8x384xf32>
    %c0_34 = arith.constant 0 : index
    %c0_35 = arith.constant 0 : index
    %74 = vector.load %arg11[%c0_34, %c0_35] : memref<1x384xf32, #tpu.memory_space<vmem>>, vector<1x384xf32>
    %75 = vector.broadcast %74 : vector<1x384xf32> to vector<8x384xf32>
    %76 = arith.addf %73, %75 : vector<8x384xf32>
    %77 = vector.extract_strided_slice %76 {offsets = [0, 0], sizes = [8, 128], strides = [1, 1]} : vector<8x384xf32> to vector<8x128xf32>
    %78 = vector.shape_cast %77 : vector<8x128xf32> to vector<8x4x32xf32>
    %79 = tpu.transpose %78, [1, 0, 2] : vector<8x4x32xf32> -> vector<4x8x32xf32>
    %80 = arith.truncf %79 : vector<4x8x32xf32> to vector<4x8x32xbf16>
    %81 = vector.extract_strided_slice %76 {offsets = [0, 128], sizes = [8, 128], strides = [1, 1]} : vector<8x384xf32> to vector<8x128xf32>
    %82 = vector.shape_cast %81 : vector<8x128xf32> to vector<8x4x32xf32>
    %83 = tpu.transpose %82, [1, 0, 2] : vector<8x4x32xf32> -> vector<4x8x32xf32>
    %84 = arith.truncf %83 : vector<4x8x32xf32> to vector<4x8x32xbf16>
    %85 = vector.extract_strided_slice %76 {offsets = [0, 256], sizes = [8, 128], strides = [1, 1]} : vector<8x384xf32> to vector<8x128xf32>
    %86 = vector.shape_cast %85 : vector<8x128xf32> to vector<8x4x32xf32>
    %87 = tpu.transpose %86, [1, 0, 2] : vector<8x4x32xf32> -> vector<4x8x32xf32>
    %88 = arith.truncf %87 : vector<4x8x32xf32> to vector<4x8x32xbf16>
    "tpu.trace_start"() <{level = 10 : i32, message = "htd,hsd->hts"}> : () -> ()
    %cst_36 = arith.constant dense<0.000000e+00> : vector<4x8x8xf32>
    %89 = tpu.matmul %80, %84, %cst_36 {dimension_numbers = #tpu.dot_dimension_numbers<[2], [2], [1], [1], [0, 0, 0, 1, 1, 1], [0], [0]>} : vector<4x8x32xbf16>, vector<4x8x32xbf16>, vector<4x8x8xf32> -> vector<4x8x8xf32>
    "tpu.trace_stop"() : () -> ()
    %cst_37 = arith.constant dense<0xFF800000> : vector<4x8xf32>
    %90 = vector.multi_reduction <maximumf>, %89, %cst_37 [2] : vector<4x8x8xf32> to vector<4x8xf32>
    %91 = vector.shape_cast %90 : vector<4x8xf32> to vector<4x8x1xf32>
    %92 = vector.broadcast %91 : vector<4x8x1xf32> to vector<4x8x8xf32>
    %93 = arith.subf %89, %92 : vector<4x8x8xf32>
    %94 = math.exp %93 : vector<4x8x8xf32>
    %cst_38 = arith.constant dense<0.000000e+00> : vector<4x8xf32>
    %95 = vector.multi_reduction <add>, %94, %cst_38 [2] : vector<4x8x8xf32> to vector<4x8xf32>
    %96 = vector.shape_cast %95 : vector<4x8xf32> to vector<4x8x1xf32>
    %97 = tpu.reciprocal %96 {approx = true} : vector<4x8x1xf32> -> vector<4x8x1xf32>
    %98 = vector.broadcast %97 : vector<4x8x1xf32> to vector<4x8x8xf32>
    %99 = arith.mulf %94, %98 : vector<4x8x8xf32>
    %100 = arith.truncf %99 : vector<4x8x8xf32> to vector<4x8x8xbf16>
    "tpu.trace_start"() <{level = 10 : i32, message = "hts,hsd->htd"}> : () -> ()
    %cst_39 = arith.constant dense<0.000000e+00> : vector<4x8x32xf32>
    %101 = tpu.matmul %100, %88, %cst_39 {dimension_numbers = #tpu.dot_dimension_numbers<[2], [1], [1], [2], [0, 0, 0, 1, 1, 2], [0], [0]>} : vector<4x8x8xbf16>, vector<4x8x32xbf16>, vector<4x8x32xf32> -> vector<4x8x32xf32>
    "tpu.trace_stop"() : () -> ()
    %102 = tpu.transpose %101, [1, 0, 2] : vector<4x8x32xf32> -> vector<8x4x32xf32>
    %103 = vector.shape_cast %102 : vector<8x4x32xf32> to vector<8x128xf32>
    %104 = arith.truncf %103 : vector<8x128xf32> to vector<8x128xbf16>
    %c0_40 = arith.constant 0 : index
    %c0_41 = arith.constant 0 : index
    %105 = vector.load %arg12[%c0_40, %c0_41] : memref<128x128xbf16, #tpu.memory_space<vmem>>, vector<128x128xbf16>
    %cst_42 = arith.constant dense<0.000000e+00> : vector<8x128xf32>
    %106 = tpu.matmul %104, %105, %cst_42 {dimension_numbers = #tpu.dot_dimension_numbers<[1], [0], [0], [1], [0, 0, 1, 1], [], []>} : vector<8x128xbf16>, vector<128x128xbf16>, vector<8x128xf32> -> vector<8x128xf32>
    %107 = arith.addf %46, %106 : vector<8x128xf32>
    %c0_43 = arith.constant 0 : index
    %c0_44 = arith.constant 0 : index
    %108 = vector.load %arg13[%c0_43, %c0_44] : memref<1x128xf32, #tpu.memory_space<vmem>>, vector<1x128xf32>
    %109 = vector.broadcast %108 : vector<1x128xf32> to vector<8x128xf32>
    %110 = arith.addf %107, %109 : vector<8x128xf32>
    %cst_45 = arith.constant dense<0.000000e+00> : vector<8xf32>
    %111 = vector.multi_reduction <add>, %110, %cst_45 [1] : vector<8x128xf32> to vector<8xf32>
    %112 = vector.shape_cast %111 : vector<8xf32> to vector<8x1xf32>
    %cst_46 = arith.constant 1.280000e+02 : f32
    %113 = vector.broadcast %cst_46 : f32 to vector<8x1xf32>
    %114 = arith.divf %112, %113 : vector<8x1xf32>
    %115 = vector.broadcast %114 : vector<8x1xf32> to vector<8x128xf32>
    %116 = arith.subf %110, %115 : vector<8x128xf32>
    %117 = arith.mulf %116, %116 : vector<8x128xf32>
    %cst_47 = arith.constant dense<0.000000e+00> : vector<8xf32>
    %118 = vector.multi_reduction <add>, %117, %cst_47 [1] : vector<8x128xf32> to vector<8xf32>
    %119 = vector.shape_cast %118 : vector<8xf32> to vector<8x1xf32>
    %cst_48 = arith.constant 1.280000e+02 : f32
    %120 = vector.broadcast %cst_48 : f32 to vector<8x1xf32>
    %121 = arith.divf %119, %120 : vector<8x1xf32>
    %122 = vector.broadcast %114 : vector<8x1xf32> to vector<8x128xf32>
    %123 = arith.subf %110, %122 : vector<8x128xf32>
    %cst_49 = arith.constant 9.99999974E-6 : f32
    %124 = vector.broadcast %cst_49 : f32 to vector<8x1xf32>
    %125 = arith.addf %121, %124 : vector<8x1xf32>
    %126 = math.rsqrt %125 : vector<8x1xf32>
    %127 = vector.broadcast %126 : vector<8x1xf32> to vector<8x128xf32>
    %128 = arith.mulf %123, %127 : vector<8x128xf32>
    %c0_50 = arith.constant 0 : index
    %c0_51 = arith.constant 0 : index
    %129 = vector.load %arg14[%c0_50, %c0_51] : memref<1x128xf32, #tpu.memory_space<vmem>>, vector<1x128xf32>
    %130 = vector.broadcast %129 : vector<1x128xf32> to vector<8x128xf32>
    %131 = arith.mulf %128, %130 : vector<8x128xf32>
    %c0_52 = arith.constant 0 : index
    %c0_53 = arith.constant 0 : index
    %132 = vector.load %arg15[%c0_52, %c0_53] : memref<1x128xf32, #tpu.memory_space<vmem>>, vector<1x128xf32>
    %133 = vector.broadcast %132 : vector<1x128xf32> to vector<8x128xf32>
    %134 = arith.addf %131, %133 : vector<8x128xf32>
    %135 = arith.truncf %134 : vector<8x128xf32> to vector<8x128xbf16>
    %c0_54 = arith.constant 0 : index
    %c0_55 = arith.constant 0 : index
    %136 = vector.load %arg16[%c0_54, %c0_55] : memref<128x256xbf16, #tpu.memory_space<vmem>>, vector<128x256xbf16>
    %cst_56 = arith.constant dense<0.000000e+00> : vector<8x256xf32>
    %137 = tpu.matmul %135, %136, %cst_56 {dimension_numbers = #tpu.dot_dimension_numbers<[1], [0], [0], [1], [0, 0, 1, 1], [], []>} : vector<8x128xbf16>, vector<128x256xbf16>, vector<8x256xf32> -> vector<8x256xf32>
    %c0_57 = arith.constant 0 : index
    %c0_58 = arith.constant 0 : index
    %138 = vector.load %arg17[%c0_57, %c0_58] : memref<1x256xf32, #tpu.memory_space<vmem>>, vector<1x256xf32>
    %139 = vector.broadcast %138 : vector<1x256xf32> to vector<8x256xf32>
    %140 = arith.addf %137, %139 : vector<8x256xf32>
    %141 = vector.extract_strided_slice %140 {offsets = [0, 0], sizes = [8, 128], strides = [1, 1]} : vector<8x256xf32> to vector<8x128xf32>
    %142 = vector.extract_strided_slice %140 {offsets = [0, 128], sizes = [8, 128], strides = [1, 1]} : vector<8x256xf32> to vector<8x128xf32>
    %143 = arith.negf %142 : vector<8x128xf32>
    %144 = math.exp %143 : vector<8x128xf32>
    %cst_59 = arith.constant 1.000000e+00 : f32
    %145 = vector.broadcast %cst_59 : f32 to vector<8x128xf32>
    %146 = arith.addf %145, %144 : vector<8x128xf32>
    %147 = arith.divf %145, %146 : vector<8x128xf32>
    %148 = arith.mulf %141, %147 : vector<8x128xf32>
    %c0_60 = arith.constant 0 : index
    %c0_61 = arith.constant 0 : index
    %149 = vector.load %arg18[%c0_60, %c0_61] : memref<7x128xf32, #tpu.memory_space<vmem>>, vector<7x128xf32>
    %150 = tpu.iota {dimensions = array<i32: 0>} : vector<8x1xi32>
    %151 = vector.extract_strided_slice %149 {offsets = [3, 0], sizes = [1, 128], strides = [1, 1]} : vector<7x128xf32> to vector<1x128xf32>
    %152 = vector.shape_cast %151 : vector<1x128xf32> to vector<128xf32>
    %153 = vector.shape_cast %152 : vector<128xf32> to vector<1x128xf32>
    %154 = vector.broadcast %153 : vector<1x128xf32> to vector<8x128xf32>
    %155 = arith.mulf %148, %154 : vector<8x128xf32>
    %c3_i32 = arith.constant 3 : i32
    %156 = tpu.dynamic_rotate %148 by %c3_i32 dim 0 : vector<8x128xf32>, i32 -> vector<8x128xf32>
    %c-3_i32 = arith.constant -3 : i32
    %157 = vector.broadcast %c-3_i32 : i32 to vector<8x1xi32>
    %158 = arith.addi %150, %157 : vector<8x1xi32>
    %c0_i32 = arith.constant 0 : i32
    %159 = vector.broadcast %c0_i32 : i32 to vector<8x1xi32>
    %160 = arith.cmpi sge, %158, %159 : vector<8x1xi32>
    %c8_i32 = arith.constant 8 : i32
    %161 = vector.broadcast %c8_i32 : i32 to vector<8x1xi32>
    %162 = arith.cmpi slt, %158, %161 : vector<8x1xi32>
    %163 = arith.andi %160, %162 : vector<8x1xi1>
    %cst_62 = arith.constant 0.000000e+00 : f32
    %164 = vector.shape_cast %163 : vector<8x1xi1> to vector<8x1xi1>
    %165 = vector.broadcast %164 : vector<8x1xi1> to vector<8x128xi1>
    %166 = vector.broadcast %cst_62 : f32 to vector<8x128xf32>
    %167 = arith.select %165, %156, %166 : vector<8x128xi1>, vector<8x128xf32>
    %168 = vector.extract_strided_slice %149 {offsets = [0, 0], sizes = [1, 128], strides = [1, 1]} : vector<7x128xf32> to vector<1x128xf32>
    %169 = vector.shape_cast %168 : vector<1x128xf32> to vector<128xf32>
    %170 = vector.shape_cast %169 : vector<128xf32> to vector<1x128xf32>
    %171 = vector.broadcast %170 : vector<1x128xf32> to vector<8x128xf32>
    %172 = arith.mulf %167, %171 : vector<8x128xf32>
    %173 = arith.addf %155, %172 : vector<8x128xf32>
    %c2_i32 = arith.constant 2 : i32
    %174 = tpu.dynamic_rotate %148 by %c2_i32 dim 0 : vector<8x128xf32>, i32 -> vector<8x128xf32>
    %c-2_i32 = arith.constant -2 : i32
    %175 = vector.broadcast %c-2_i32 : i32 to vector<8x1xi32>
    %176 = arith.addi %150, %175 : vector<8x1xi32>
    %c0_i32_63 = arith.constant 0 : i32
    %177 = vector.broadcast %c0_i32_63 : i32 to vector<8x1xi32>
    %178 = arith.cmpi sge, %176, %177 : vector<8x1xi32>
    %c8_i32_64 = arith.constant 8 : i32
    %179 = vector.broadcast %c8_i32_64 : i32 to vector<8x1xi32>
    %180 = arith.cmpi slt, %176, %179 : vector<8x1xi32>
    %181 = arith.andi %178, %180 : vector<8x1xi1>
    %cst_65 = arith.constant 0.000000e+00 : f32
    %182 = vector.shape_cast %181 : vector<8x1xi1> to vector<8x1xi1>
    %183 = vector.broadcast %182 : vector<8x1xi1> to vector<8x128xi1>
    %184 = vector.broadcast %cst_65 : f32 to vector<8x128xf32>
    %185 = arith.select %183, %174, %184 : vector<8x128xi1>, vector<8x128xf32>
    %186 = vector.extract_strided_slice %149 {offsets = [1, 0], sizes = [1, 128], strides = [1, 1]} : vector<7x128xf32> to vector<1x128xf32>
    %187 = vector.shape_cast %186 : vector<1x128xf32> to vector<128xf32>
    %188 = vector.shape_cast %187 : vector<128xf32> to vector<1x128xf32>
    %189 = vector.broadcast %188 : vector<1x128xf32> to vector<8x128xf32>
    %190 = arith.mulf %185, %189 : vector<8x128xf32>
    %191 = arith.addf %173, %190 : vector<8x128xf32>
    %c1_i32 = arith.constant 1 : i32
    %192 = tpu.dynamic_rotate %148 by %c1_i32 dim 0 : vector<8x128xf32>, i32 -> vector<8x128xf32>
    %c-1_i32 = arith.constant -1 : i32
    %193 = vector.broadcast %c-1_i32 : i32 to vector<8x1xi32>
    %194 = arith.addi %150, %193 : vector<8x1xi32>
    %c0_i32_66 = arith.constant 0 : i32
    %195 = vector.broadcast %c0_i32_66 : i32 to vector<8x1xi32>
    %196 = arith.cmpi sge, %194, %195 : vector<8x1xi32>
    %c8_i32_67 = arith.constant 8 : i32
    %197 = vector.broadcast %c8_i32_67 : i32 to vector<8x1xi32>
    %198 = arith.cmpi slt, %194, %197 : vector<8x1xi32>
    %199 = arith.andi %196, %198 : vector<8x1xi1>
    %cst_68 = arith.constant 0.000000e+00 : f32
    %200 = vector.shape_cast %199 : vector<8x1xi1> to vector<8x1xi1>
    %201 = vector.broadcast %200 : vector<8x1xi1> to vector<8x128xi1>
    %202 = vector.broadcast %cst_68 : f32 to vector<8x128xf32>
    %203 = arith.select %201, %192, %202 : vector<8x128xi1>, vector<8x128xf32>
    %204 = vector.extract_strided_slice %149 {offsets = [2, 0], sizes = [1, 128], strides = [1, 1]} : vector<7x128xf32> to vector<1x128xf32>
    %205 = vector.shape_cast %204 : vector<1x128xf32> to vector<128xf32>
    %206 = vector.shape_cast %205 : vector<128xf32> to vector<1x128xf32>
    %207 = vector.broadcast %206 : vector<1x128xf32> to vector<8x128xf32>
    %208 = arith.mulf %203, %207 : vector<8x128xf32>
    %209 = arith.addf %191, %208 : vector<8x128xf32>
    %c7_i32 = arith.constant 7 : i32
    %210 = tpu.dynamic_rotate %148 by %c7_i32 dim 0 : vector<8x128xf32>, i32 -> vector<8x128xf32>
    %c1_i32_69 = arith.constant 1 : i32
    %211 = vector.broadcast %c1_i32_69 : i32 to vector<8x1xi32>
    %212 = arith.addi %150, %211 : vector<8x1xi32>
    %c0_i32_70 = arith.constant 0 : i32
    %213 = vector.broadcast %c0_i32_70 : i32 to vector<8x1xi32>
    %214 = arith.cmpi sge, %212, %213 : vector<8x1xi32>
    %c8_i32_71 = arith.constant 8 : i32
    %215 = vector.broadcast %c8_i32_71 : i32 to vector<8x1xi32>
    %216 = arith.cmpi slt, %212, %215 : vector<8x1xi32>
    %217 = arith.andi %214, %216 : vector<8x1xi1>
    %cst_72 = arith.constant 0.000000e+00 : f32
    %218 = vector.shape_cast %217 : vector<8x1xi1> to vector<8x1xi1>
    %219 = vector.broadcast %218 : vector<8x1xi1> to vector<8x128xi1>
    %220 = vector.broadcast %cst_72 : f32 to vector<8x128xf32>
    %221 = arith.select %219, %210, %220 : vector<8x128xi1>, vector<8x128xf32>
    %222 = vector.extract_strided_slice %149 {offsets = [4, 0], sizes = [1, 128], strides = [1, 1]} : vector<7x128xf32> to vector<1x128xf32>
    %223 = vector.shape_cast %222 : vector<1x128xf32> to vector<128xf32>
    %224 = vector.shape_cast %223 : vector<128xf32> to vector<1x128xf32>
    %225 = vector.broadcast %224 : vector<1x128xf32> to vector<8x128xf32>
    %226 = arith.mulf %221, %225 : vector<8x128xf32>
    %227 = arith.addf %209, %226 : vector<8x128xf32>
    %c6_i32 = arith.constant 6 : i32
    %228 = tpu.dynamic_rotate %148 by %c6_i32 dim 0 : vector<8x128xf32>, i32 -> vector<8x128xf32>
    %c2_i32_73 = arith.constant 2 : i32
    %229 = vector.broadcast %c2_i32_73 : i32 to vector<8x1xi32>
    %230 = arith.addi %150, %229 : vector<8x1xi32>
    %c0_i32_74 = arith.constant 0 : i32
    %231 = vector.broadcast %c0_i32_74 : i32 to vector<8x1xi32>
    %232 = arith.cmpi sge, %230, %231 : vector<8x1xi32>
    %c8_i32_75 = arith.constant 8 : i32
    %233 = vector.broadcast %c8_i32_75 : i32 to vector<8x1xi32>
    %234 = arith.cmpi slt, %230, %233 : vector<8x1xi32>
    %235 = arith.andi %232, %234 : vector<8x1xi1>
    %cst_76 = arith.constant 0.000000e+00 : f32
    %236 = vector.shape_cast %235 : vector<8x1xi1> to vector<8x1xi1>
    %237 = vector.broadcast %236 : vector<8x1xi1> to vector<8x128xi1>
    %238 = vector.broadcast %cst_76 : f32 to vector<8x128xf32>
    %239 = arith.select %237, %228, %238 : vector<8x128xi1>, vector<8x128xf32>
    %240 = vector.extract_strided_slice %149 {offsets = [5, 0], sizes = [1, 128], strides = [1, 1]} : vector<7x128xf32> to vector<1x128xf32>
    %241 = vector.shape_cast %240 : vector<1x128xf32> to vector<128xf32>
    %242 = vector.shape_cast %241 : vector<128xf32> to vector<1x128xf32>
    %243 = vector.broadcast %242 : vector<1x128xf32> to vector<8x128xf32>
    %244 = arith.mulf %239, %243 : vector<8x128xf32>
    %245 = arith.addf %227, %244 : vector<8x128xf32>
    %c5_i32 = arith.constant 5 : i32
    %246 = tpu.dynamic_rotate %148 by %c5_i32 dim 0 : vector<8x128xf32>, i32 -> vector<8x128xf32>
    %c3_i32_77 = arith.constant 3 : i32
    %247 = vector.broadcast %c3_i32_77 : i32 to vector<8x1xi32>
    %248 = arith.addi %150, %247 : vector<8x1xi32>
    %c0_i32_78 = arith.constant 0 : i32
    %249 = vector.broadcast %c0_i32_78 : i32 to vector<8x1xi32>
    %250 = arith.cmpi sge, %248, %249 : vector<8x1xi32>
    %c8_i32_79 = arith.constant 8 : i32
    %251 = vector.broadcast %c8_i32_79 : i32 to vector<8x1xi32>
    %252 = arith.cmpi slt, %248, %251 : vector<8x1xi32>
    %253 = arith.andi %250, %252 : vector<8x1xi1>
    %cst_80 = arith.constant 0.000000e+00 : f32
    %254 = vector.shape_cast %253 : vector<8x1xi1> to vector<8x1xi1>
    %255 = vector.broadcast %254 : vector<8x1xi1> to vector<8x128xi1>
    %256 = vector.broadcast %cst_80 : f32 to vector<8x128xf32>
    %257 = arith.select %255, %246, %256 : vector<8x128xi1>, vector<8x128xf32>
    %258 = vector.extract_strided_slice %149 {offsets = [6, 0], sizes = [1, 128], strides = [1, 1]} : vector<7x128xf32> to vector<1x128xf32>
    %259 = vector.shape_cast %258 : vector<1x128xf32> to vector<128xf32>
    %260 = vector.shape_cast %259 : vector<128xf32> to vector<1x128xf32>
    %261 = vector.broadcast %260 : vector<1x128xf32> to vector<8x128xf32>
    %262 = arith.mulf %257, %261 : vector<8x128xf32>
    %263 = arith.addf %245, %262 : vector<8x128xf32>
    %c0_81 = arith.constant 0 : index
    %c0_82 = arith.constant 0 : index
    %264 = vector.load %arg19[%c0_81, %c0_82] : memref<1x128xf32, #tpu.memory_space<vmem>>, vector<1x128xf32>
    %265 = vector.broadcast %264 : vector<1x128xf32> to vector<8x128xf32>
    %266 = arith.addf %263, %265 : vector<8x128xf32>
    %cst_83 = arith.constant 0.999994993 : f32
    %267 = vector.broadcast %cst_83 : f32 to vector<8x128xf32>
    %268 = arith.mulf %266, %267 : vector<8x128xf32>
    %269 = arith.negf %268 : vector<8x128xf32>
    %270 = math.exp %269 : vector<8x128xf32>
    %cst_84 = arith.constant 1.000000e+00 : f32
    %271 = vector.broadcast %cst_84 : f32 to vector<8x128xf32>
    %272 = arith.addf %271, %270 : vector<8x128xf32>
    %273 = arith.divf %271, %272 : vector<8x128xf32>
    %274 = arith.mulf %268, %273 : vector<8x128xf32>
    %275 = arith.truncf %274 : vector<8x128xf32> to vector<8x128xbf16>
    %c0_85 = arith.constant 0 : index
    %c0_86 = arith.constant 0 : index
    %276 = vector.load %arg20[%c0_85, %c0_86] : memref<128x128xbf16, #tpu.memory_space<vmem>>, vector<128x128xbf16>
    %cst_87 = arith.constant dense<0.000000e+00> : vector<8x128xf32>
    %277 = tpu.matmul %275, %276, %cst_87 {dimension_numbers = #tpu.dot_dimension_numbers<[1], [0], [0], [1], [0, 0, 1, 1], [], []>} : vector<8x128xbf16>, vector<128x128xbf16>, vector<8x128xf32> -> vector<8x128xf32>
    %278 = arith.addf %110, %277 : vector<8x128xf32>
    %c0_88 = arith.constant 0 : index
    %c0_89 = arith.constant 0 : index
    %279 = vector.load %arg21[%c0_88, %c0_89] : memref<1x128xf32, #tpu.memory_space<vmem>>, vector<1x128xf32>
    %280 = vector.broadcast %279 : vector<1x128xf32> to vector<8x128xf32>
    %281 = arith.addf %278, %280 : vector<8x128xf32>
    %cst_90 = arith.constant dense<0.000000e+00> : vector<8xf32>
    %282 = vector.multi_reduction <add>, %281, %cst_90 [1] : vector<8x128xf32> to vector<8xf32>
    %283 = vector.shape_cast %282 : vector<8xf32> to vector<8x1xf32>
    %cst_91 = arith.constant 1.280000e+02 : f32
    %284 = vector.broadcast %cst_91 : f32 to vector<8x1xf32>
    %285 = arith.divf %283, %284 : vector<8x1xf32>
    %286 = vector.broadcast %285 : vector<8x1xf32> to vector<8x128xf32>
    %287 = arith.subf %281, %286 : vector<8x128xf32>
    %288 = arith.mulf %287, %287 : vector<8x128xf32>
    %cst_92 = arith.constant dense<0.000000e+00> : vector<8xf32>
    %289 = vector.multi_reduction <add>, %288, %cst_92 [1] : vector<8x128xf32> to vector<8xf32>
    %290 = vector.shape_cast %289 : vector<8xf32> to vector<8x1xf32>
    %cst_93 = arith.constant 1.280000e+02 : f32
    %291 = vector.broadcast %cst_93 : f32 to vector<8x1xf32>
    %292 = arith.divf %290, %291 : vector<8x1xf32>
    %293 = vector.broadcast %285 : vector<8x1xf32> to vector<8x128xf32>
    %294 = arith.subf %281, %293 : vector<8x128xf32>
    %cst_94 = arith.constant 9.99999974E-6 : f32
    %295 = vector.broadcast %cst_94 : f32 to vector<8x1xf32>
    %296 = arith.addf %292, %295 : vector<8x1xf32>
    %297 = math.rsqrt %296 : vector<8x1xf32>
    %298 = vector.broadcast %297 : vector<8x1xf32> to vector<8x128xf32>
    %299 = arith.mulf %294, %298 : vector<8x128xf32>
    %c0_95 = arith.constant 0 : index
    %c0_96 = arith.constant 0 : index
    %300 = vector.load %arg22[%c0_95, %c0_96] : memref<1x128xf32, #tpu.memory_space<vmem>>, vector<1x128xf32>
    %301 = vector.broadcast %300 : vector<1x128xf32> to vector<8x128xf32>
    %302 = arith.mulf %299, %301 : vector<8x128xf32>
    %c0_97 = arith.constant 0 : index
    %c0_98 = arith.constant 0 : index
    %303 = vector.load %arg23[%c0_97, %c0_98] : memref<1x128xf32, #tpu.memory_space<vmem>>, vector<1x128xf32>
    %304 = vector.broadcast %303 : vector<1x128xf32> to vector<8x128xf32>
    %305 = arith.addf %302, %304 : vector<8x128xf32>
    %306 = arith.truncf %305 : vector<8x128xf32> to vector<8x128xbf16>
    %c0_99 = arith.constant 0 : index
    %c0_100 = arith.constant 0 : index
    %307 = vector.load %arg24[%c0_99, %c0_100] : memref<128x256xbf16, #tpu.memory_space<vmem>>, vector<128x256xbf16>
    %cst_101 = arith.constant dense<0.000000e+00> : vector<8x256xf32>
    %308 = tpu.matmul %306, %307, %cst_101 {dimension_numbers = #tpu.dot_dimension_numbers<[1], [0], [0], [1], [0, 0, 1, 1], [], []>} : vector<8x128xbf16>, vector<128x256xbf16>, vector<8x256xf32> -> vector<8x256xf32>
    %c0_102 = arith.constant 0 : index
    %c0_103 = arith.constant 0 : index
    %309 = vector.load %arg25[%c0_102, %c0_103] : memref<1x256xf32, #tpu.memory_space<vmem>>, vector<1x256xf32>
    %310 = vector.broadcast %309 : vector<1x256xf32> to vector<8x256xf32>
    %311 = arith.addf %308, %310 : vector<8x256xf32>
    %312 = arith.negf %311 : vector<8x256xf32>
    %313 = math.exp %312 : vector<8x256xf32>
    %cst_104 = arith.constant 1.000000e+00 : f32
    %314 = vector.broadcast %cst_104 : f32 to vector<8x256xf32>
    %315 = arith.addf %314, %313 : vector<8x256xf32>
    %316 = arith.divf %314, %315 : vector<8x256xf32>
    %317 = arith.mulf %311, %316 : vector<8x256xf32>
    %318 = arith.truncf %317 : vector<8x256xf32> to vector<8x256xbf16>
    %c0_105 = arith.constant 0 : index
    %c0_106 = arith.constant 0 : index
    %319 = vector.load %arg26[%c0_105, %c0_106] : memref<256x128xbf16, #tpu.memory_space<vmem>>, vector<256x128xbf16>
    %cst_107 = arith.constant dense<0.000000e+00> : vector<8x128xf32>
    %320 = tpu.matmul %318, %319, %cst_107 {dimension_numbers = #tpu.dot_dimension_numbers<[1], [0], [0], [1], [0, 0, 1, 1], [], []>} : vector<8x256xbf16>, vector<256x128xbf16>, vector<8x128xf32> -> vector<8x128xf32>
    %c0_108 = arith.constant 0 : index
    %c0_109 = arith.constant 0 : index
    %321 = vector.load %arg27[%c0_108, %c0_109] : memref<1x128xf32, #tpu.memory_space<vmem>>, vector<1x128xf32>
    %322 = vector.broadcast %321 : vector<1x128xf32> to vector<8x128xf32>
    %323 = arith.addf %320, %322 : vector<8x128xf32>
    %cst_110 = arith.constant 5.000000e-01 : f32
    %324 = vector.broadcast %cst_110 : f32 to vector<8x128xf32>
    %325 = arith.mulf %324, %323 : vector<8x128xf32>
    %326 = arith.addf %281, %325 : vector<8x128xf32>
    %cst_111 = arith.constant dense<0.000000e+00> : vector<8xf32>
    %327 = vector.multi_reduction <add>, %326, %cst_111 [1] : vector<8x128xf32> to vector<8xf32>
    %328 = vector.shape_cast %327 : vector<8xf32> to vector<8x1xf32>
    %cst_112 = arith.constant 1.280000e+02 : f32
    %329 = vector.broadcast %cst_112 : f32 to vector<8x1xf32>
    %330 = arith.divf %328, %329 : vector<8x1xf32>
    %331 = vector.broadcast %330 : vector<8x1xf32> to vector<8x128xf32>
    %332 = arith.subf %326, %331 : vector<8x128xf32>
    %333 = arith.mulf %332, %332 : vector<8x128xf32>
    %cst_113 = arith.constant dense<0.000000e+00> : vector<8xf32>
    %334 = vector.multi_reduction <add>, %333, %cst_113 [1] : vector<8x128xf32> to vector<8xf32>
    %335 = vector.shape_cast %334 : vector<8xf32> to vector<8x1xf32>
    %cst_114 = arith.constant 1.280000e+02 : f32
    %336 = vector.broadcast %cst_114 : f32 to vector<8x1xf32>
    %337 = arith.divf %335, %336 : vector<8x1xf32>
    %338 = vector.broadcast %330 : vector<8x1xf32> to vector<8x128xf32>
    %339 = arith.subf %326, %338 : vector<8x128xf32>
    %cst_115 = arith.constant 9.99999974E-6 : f32
    %340 = vector.broadcast %cst_115 : f32 to vector<8x1xf32>
    %341 = arith.addf %337, %340 : vector<8x1xf32>
    %342 = math.rsqrt %341 : vector<8x1xf32>
    %343 = vector.broadcast %342 : vector<8x1xf32> to vector<8x128xf32>
    %344 = arith.mulf %339, %343 : vector<8x128xf32>
    %c0_116 = arith.constant 0 : index
    %c0_117 = arith.constant 0 : index
    %345 = vector.load %arg28[%c0_116, %c0_117] : memref<1x128xf32, #tpu.memory_space<vmem>>, vector<1x128xf32>
    %346 = vector.broadcast %345 : vector<1x128xf32> to vector<8x128xf32>
    %347 = arith.mulf %344, %346 : vector<8x128xf32>
    %c0_118 = arith.constant 0 : index
    %c0_119 = arith.constant 0 : index
    %348 = vector.load %arg29[%c0_118, %c0_119] : memref<1x128xf32, #tpu.memory_space<vmem>>, vector<1x128xf32>
    %349 = vector.broadcast %348 : vector<1x128xf32> to vector<8x128xf32>
    %350 = arith.addf %347, %349 : vector<8x128xf32>
    %c0_120 = arith.constant 0 : index
    %c0_121 = arith.constant 0 : index
    %c0_122 = arith.constant 0 : index
    %351 = vector.load %arg30[%c0_120, %c0_121, %c0_122] : memref<1x8x128xf32, #tpu.memory_space<vmem>>, vector<1x8x128xf32>
    %352 = vector.shape_cast %351 : vector<1x8x128xf32> to vector<8x128xf32>
    %353 = vector.shape_cast %350 : vector<8x128xf32> to vector<1x8x128xf32>
    tpu.vector_store %arg30[%c0_120, %c0_121, %c0_122], %353 {strides = array<i32>} : memref<1x8x128xf32, #tpu.memory_space<vmem>>, vector<1x8x128xf32>,
    return
  }
  func.func @transform_0(%arg0: i32) -> (i32, i32, i32) {
    %c0_i32 = arith.constant 0 : i32
    %c0_i32_0 = arith.constant 0 : i32
    %c0_i32_1 = arith.constant 0 : i32
    return %arg0, %c0_i32, %c0_i32_0 : i32, i32, i32
  }
  func.func @transform_1(%arg0: i32) -> (i32, i32) {
    %c0_i32 = arith.constant 0 : i32
    %c0_i32_0 = arith.constant 0 : i32
    %c0_i32_1 = arith.constant 0 : i32
    return %c0_i32, %c0_i32_0 : i32, i32
  }
  func.func @transform_2(%arg0: i32) -> (i32, i32) {
    %c0_i32 = arith.constant 0 : i32
    %c0_i32_0 = arith.constant 0 : i32
    %c0_i32_1 = arith.constant 0 : i32
    return %c0_i32, %c0_i32_0 : i32, i32
  }
  func.func @transform_3(%arg0: i32) -> (i32, i32) {
    %c0_i32 = arith.constant 0 : i32
    %c0_i32_0 = arith.constant 0 : i32
    %c0_i32_1 = arith.constant 0 : i32
    return %c0_i32, %c0_i32_0 : i32, i32
  }
  func.func @transform_4(%arg0: i32) -> (i32, i32) {
    %c0_i32 = arith.constant 0 : i32
    %c0_i32_0 = arith.constant 0 : i32
    %c0_i32_1 = arith.constant 0 : i32
    return %c0_i32, %c0_i32_0 : i32, i32
  }
  func.func @transform_5(%arg0: i32) -> (i32, i32) {
    %c0_i32 = arith.constant 0 : i32
    %c0_i32_0 = arith.constant 0 : i32
    %c0_i32_1 = arith.constant 0 : i32
    return %c0_i32, %c0_i32_0 : i32, i32
  }
  func.func @transform_6(%arg0: i32) -> (i32, i32) {
    %c0_i32 = arith.constant 0 : i32
    %c0_i32_0 = arith.constant 0 : i32
    %c0_i32_1 = arith.constant 0 : i32
    return %c0_i32, %c0_i32_0 : i32, i32
  }
  func.func @transform_7(%arg0: i32) -> (i32, i32) {
    %c0_i32 = arith.constant 0 : i32
    %c0_i32_0 = arith.constant 0 : i32
    %c0_i32_1 = arith.constant 0 : i32
    return %c0_i32, %c0_i32_0 : i32, i32
  }
  func.func @transform_8(%arg0: i32) -> (i32, i32) {
    %c0_i32 = arith.constant 0 : i32
    %c0_i32_0 = arith.constant 0 : i32
    %c0_i32_1 = arith.constant 0 : i32
    return %c0_i32, %c0_i32_0 : i32, i32
  }
  func.func @transform_9(%arg0: i32) -> (i32, i32) {
    %c0_i32 = arith.constant 0 : i32
    %c0_i32_0 = arith.constant 0 : i32
    %c0_i32_1 = arith.constant 0 : i32
    return %c0_i32, %c0_i32_0 : i32, i32
  }
  func.func @transform_10(%arg0: i32) -> (i32, i32) {
    %c0_i32 = arith.constant 0 : i32
    %c0_i32_0 = arith.constant 0 : i32
    %c0_i32_1 = arith.constant 0 : i32
    return %c0_i32, %c0_i32_0 : i32, i32
  }
  func.func @transform_11(%arg0: i32) -> (i32, i32) {
    %c0_i32 = arith.constant 0 : i32
    %c0_i32_0 = arith.constant 0 : i32
    %c0_i32_1 = arith.constant 0 : i32
    return %c0_i32, %c0_i32_0 : i32, i32
  }
  func.func @transform_12(%arg0: i32) -> (i32, i32) {
    %c0_i32 = arith.constant 0 : i32
    %c0_i32_0 = arith.constant 0 : i32
    %c0_i32_1 = arith.constant 0 : i32
    return %c0_i32, %c0_i32_0 : i32, i32
  }
  func.func @transform_13(%arg0: i32) -> (i32, i32) {
    %c0_i32 = arith.constant 0 : i32
    %c0_i32_0 = arith.constant 0 : i32
    %c0_i32_1 = arith.constant 0 : i32
    return %c0_i32, %c0_i32_0 : i32, i32
  }
  func.func @transform_14(%arg0: i32) -> (i32, i32) {
    %c0_i32 = arith.constant 0 : i32
    %c0_i32_0 = arith.constant 0 : i32
    %c0_i32_1 = arith.constant 0 : i32
    return %c0_i32, %c0_i32_0 : i32, i32
  }
  func.func @transform_15(%arg0: i32) -> (i32, i32) {
    %c0_i32 = arith.constant 0 : i32
    %c0_i32_0 = arith.constant 0 : i32
    %c0_i32_1 = arith.constant 0 : i32
    return %c0_i32, %c0_i32_0 : i32, i32
  }
  func.func @transform_16(%arg0: i32) -> (i32, i32) {
    %c0_i32 = arith.constant 0 : i32
    %c0_i32_0 = arith.constant 0 : i32
    %c0_i32_1 = arith.constant 0 : i32
    return %c0_i32, %c0_i32_0 : i32, i32
  }
  func.func @transform_17(%arg0: i32) -> (i32, i32) {
    %c0_i32 = arith.constant 0 : i32
    %c0_i32_0 = arith.constant 0 : i32
    %c0_i32_1 = arith.constant 0 : i32
    return %c0_i32, %c0_i32_0 : i32, i32
  }
  func.func @transform_18(%arg0: i32) -> (i32, i32) {
    %c0_i32 = arith.constant 0 : i32
    %c0_i32_0 = arith.constant 0 : i32
    %c0_i32_1 = arith.constant 0 : i32
    return %c0_i32, %c0_i32_0 : i32, i32
  }
  func.func @transform_19(%arg0: i32) -> (i32, i32) {
    %c0_i32 = arith.constant 0 : i32
    %c0_i32_0 = arith.constant 0 : i32
    %c0_i32_1 = arith.constant 0 : i32
    return %c0_i32, %c0_i32_0 : i32, i32
  }
  func.func @transform_20(%arg0: i32) -> (i32, i32) {
    %c0_i32 = arith.constant 0 : i32
    %c0_i32_0 = arith.constant 0 : i32
    %c0_i32_1 = arith.constant 0 : i32
    return %c0_i32, %c0_i32_0 : i32, i32
  }
  func.func @transform_21(%arg0: i32) -> (i32, i32) {
    %c0_i32 = arith.constant 0 : i32
    %c0_i32_0 = arith.constant 0 : i32
    %c0_i32_1 = arith.constant 0 : i32
    return %c0_i32, %c0_i32_0 : i32, i32
  }
  func.func @transform_22(%arg0: i32) -> (i32, i32) {
    %c0_i32 = arith.constant 0 : i32
    %c0_i32_0 = arith.constant 0 : i32
    %c0_i32_1 = arith.constant 0 : i32
    return %c0_i32, %c0_i32_0 : i32, i32
  }
  func.func @transform_23(%arg0: i32) -> (i32, i32) {
    %c0_i32 = arith.constant 0 : i32
    %c0_i32_0 = arith.constant 0 : i32
    %c0_i32_1 = arith.constant 0 : i32
    return %c0_i32, %c0_i32_0 : i32, i32
  }
  func.func @transform_24(%arg0: i32) -> (i32, i32) {
    %c0_i32 = arith.constant 0 : i32
    %c0_i32_0 = arith.constant 0 : i32
    %c0_i32_1 = arith.constant 0 : i32
    return %c0_i32, %c0_i32_0 : i32, i32
  }
  func.func @transform_25(%arg0: i32) -> (i32, i32) {
    %c0_i32 = arith.constant 0 : i32
    %c0_i32_0 = arith.constant 0 : i32
    %c0_i32_1 = arith.constant 0 : i32
    return %c0_i32, %c0_i32_0 : i32, i32
  }
  func.func @transform_26(%arg0: i32) -> (i32, i32) {
    %c0_i32 = arith.constant 0 : i32
    %c0_i32_0 = arith.constant 0 : i32
    %c0_i32_1 = arith.constant 0 : i32
    return %c0_i32, %c0_i32_0 : i32, i32
  }
  func.func @transform_27(%arg0: i32) -> (i32, i32) {
    %c0_i32 = arith.constant 0 : i32
    %c0_i32_0 = arith.constant 0 : i32
    %c0_i32_1 = arith.constant 0 : i32
    return %c0_i32, %c0_i32_0 : i32, i32
  }
  func.func @transform_28(%arg0: i32) -> (i32, i32) {
    %c0_i32 = arith.constant 0 : i32
    %c0_i32_0 = arith.constant 0 : i32
    %c0_i32_1 = arith.constant 0 : i32
    return %c0_i32, %c0_i32_0 : i32, i32
  }
  func.func @transform_29(%arg0: i32) -> (i32, i32, i32) {
    %c0_i32 = arith.constant 0 : i32
    %c0_i32_0 = arith.constant 0 : i32
    %c0_i32_1 = arith.constant 0 : i32
    return %arg0, %c0_i32, %c0_i32_0 : i32, i32, i32
  }
}

module attributes {stable_mosaic.version = 11 : i64} {
  func.func @_conformer_block_kernel(%arg0: i32, %arg1: memref<1x8x128xf32, #tpu.memory_space<vmem>>, %arg2: memref<1x128xf32, #tpu.memory_space<vmem>>, %arg3: memref<1x128xf32, #tpu.memory_space<vmem>>, %arg4: memref<128x256xbf16, #tpu.memory_space<vmem>>, %arg5: memref<1x256xf32, #tpu.memory_space<vmem>>, %arg6: memref<256x128xbf16, #tpu.memory_space<vmem>>, %arg7: memref<1x128xf32, #tpu.memory_space<vmem>>, %arg8: memref<1x128xf32, #tpu.memory_space<vmem>>, %arg9: memref<1x128xf32, #tpu.memory_space<vmem>>, %arg10: memref<128x384xbf16, #tpu.memory_space<vmem>>, %arg11: memref<1x384xf32, #tpu.memory_space<vmem>>, %arg12: memref<128x128xbf16, #tpu.memory_space<vmem>>, %arg13: memref<1x128xf32, #tpu.memory_space<vmem>>, %arg14: memref<1x128xf32, #tpu.memory_space<vmem>>, %arg15: memref<1x128xf32, #tpu.memory_space<vmem>>, %arg16: memref<128x256xbf16, #tpu.memory_space<vmem>>, %arg17: memref<1x256xf32, #tpu.memory_space<vmem>>, %arg18: memref<7x128xf32, #tpu.memory_space<vmem>>, %arg19: memref<1x128xf32, #tpu.memory_space<vmem>>, %arg20: memref<128x128xbf16, #tpu.memory_space<vmem>>, %arg21: memref<1x128xf32, #tpu.memory_space<vmem>>, %arg22: memref<1x128xf32, #tpu.memory_space<vmem>>, %arg23: memref<1x128xf32, #tpu.memory_space<vmem>>, %arg24: memref<128x256xbf16, #tpu.memory_space<vmem>>, %arg25: memref<1x256xf32, #tpu.memory_space<vmem>>, %arg26: memref<256x128xbf16, #tpu.memory_space<vmem>>, %arg27: memref<1x128xf32, #tpu.memory_space<vmem>>, %arg28: memref<1x128xf32, #tpu.memory_space<vmem>>, %arg29: memref<1x128xf32, #tpu.memory_space<vmem>>, %arg30: memref<1x8x128xf32, #tpu.memory_space<vmem>>) attributes {dimension_semantics = [#tpu.dimension_semantics<parallel>], iteration_bounds = array<i64: 2>, scalar_prefetch = 0 : i64, scratch_operands = 0 : i64, tpu.core_type = #tpu.core_type<tc>, window_params = [{transform_indices = @transform_0, window_bounds = array<i64: 1, 8, 128>}, {pipeline_mode = #tpu.pipeline_mode<synchronous>, transform_indices = @transform_1, window_bounds = array<i64: 1, 128>}, {pipeline_mode = #tpu.pipeline_mode<synchronous>, transform_indices = @transform_2, window_bounds = array<i64: 1, 128>}, {pipeline_mode = #tpu.pipeline_mode<synchronous>, transform_indices = @transform_3, window_bounds = array<i64: 128, 256>}, {pipeline_mode = #tpu.pipeline_mode<synchronous>, transform_indices = @transform_4, window_bounds = array<i64: 1, 256>}, {pipeline_mode = #tpu.pipeline_mode<synchronous>, transform_indices = @transform_5, window_bounds = array<i64: 256, 128>}, {pipeline_mode = #tpu.pipeline_mode<synchronous>, transform_indices = @transform_6, window_bounds = array<i64: 1, 128>}, {pipeline_mode = #tpu.pipeline_mode<synchronous>, transform_indices = @transform_7, window_bounds = array<i64: 1, 128>}, {pipeline_mode = #tpu.pipeline_mode<synchronous>, transform_indices = @transform_8, window_bounds = array<i64: 1, 128>}, {pipeline_mode = #tpu.pipeline_mode<synchronous>, transform_indices = @transform_9, window_bounds = array<i64: 128, 384>}, {pipeline_mode = #tpu.pipeline_mode<synchronous>, transform_indices = @transform_10, window_bounds = array<i64: 1, 384>}, {pipeline_mode = #tpu.pipeline_mode<synchronous>, transform_indices = @transform_11, window_bounds = array<i64: 128, 128>}, {pipeline_mode = #tpu.pipeline_mode<synchronous>, transform_indices = @transform_12, window_bounds = array<i64: 1, 128>}, {pipeline_mode = #tpu.pipeline_mode<synchronous>, transform_indices = @transform_13, window_bounds = array<i64: 1, 128>}, {pipeline_mode = #tpu.pipeline_mode<synchronous>, transform_indices = @transform_14, window_bounds = array<i64: 1, 128>}, {pipeline_mode = #tpu.pipeline_mode<synchronous>, transform_indices = @transform_15, window_bounds = array<i64: 128, 256>}, {pipeline_mode = #tpu.pipeline_mode<synchronous>, transform_indices = @transform_16, window_bounds = array<i64: 1, 256>}, {pipeline_mode = #tpu.pipeline_mode<synchronous>, transform_indices = @transform_17, window_bounds = array<i64: 7, 128>}, {pipeline_mode = #tpu.pipeline_mode<synchronous>, transform_indices = @transform_18, window_bounds = array<i64: 1, 128>}, {pipeline_mode = #tpu.pipeline_mode<synchronous>, transform_indices = @transform_19, window_bounds = array<i64: 128, 128>}, {pipeline_mode = #tpu.pipeline_mode<synchronous>, transform_indices = @transform_20, window_bounds = array<i64: 1, 128>}, {pipeline_mode = #tpu.pipeline_mode<synchronous>, transform_indices = @transform_21, window_bounds = array<i64: 1, 128>}, {pipeline_mode = #tpu.pipeline_mode<synchronous>, transform_indices = @transform_22, window_bounds = array<i64: 1, 128>}, {pipeline_mode = #tpu.pipeline_mode<synchronous>, transform_indices = @transform_23, window_bounds = array<i64: 128, 256>}, {pipeline_mode = #tpu.pipeline_mode<synchronous>, transform_indices = @transform_24, window_bounds = array<i64: 1, 256>}, {pipeline_mode = #tpu.pipeline_mode<synchronous>, transform_indices = @transform_25, window_bounds = array<i64: 256, 128>}, {pipeline_mode = #tpu.pipeline_mode<synchronous>, transform_indices = @transform_26, window_bounds = array<i64: 1, 128>}, {pipeline_mode = #tpu.pipeline_mode<synchronous>, transform_indices = @transform_27, window_bounds = array<i64: 1, 128>}, {pipeline_mode = #tpu.pipeline_mode<synchronous>, transform_indices = @transform_28, window_bounds = array<i64: 1, 128>}, {transform_indices = @transform_29, window_bounds = array<i64: 1, 8, 128>}]} {
    %c0 = arith.constant 0 : index
    %c0_0 = arith.constant 0 : index
    %c0_1 = arith.constant 0 : index
    %0 = vector.load %arg1[%c0, %c0_0, %c0_1] : memref<1x8x128xf32, #tpu.memory_space<vmem>>, vector<1x8x128xf32>
    %1 = vector.shape_cast %0 : vector<1x8x128xf32> to vector<8x128xf32>
    %cst = arith.constant dense<0.000000e+00> : vector<8xf32>
    %2 = vector.multi_reduction <add>, %1, %cst [1] : vector<8x128xf32> to vector<8xf32>
    %3 = vector.shape_cast %2 : vector<8xf32> to vector<8x1xf32>
    %cst_2 = arith.constant 1.280000e+02 : f32
    %4 = vector.broadcast %cst_2 : f32 to vector<8x1xf32>
    %5 = arith.divf %3, %4 : vector<8x1xf32>
    %6 = vector.broadcast %5 : vector<8x1xf32> to vector<8x128xf32>
    %7 = arith.subf %1, %6 : vector<8x128xf32>
    %8 = arith.mulf %7, %7 : vector<8x128xf32>
    %cst_3 = arith.constant dense<0.000000e+00> : vector<8xf32>
    %9 = vector.multi_reduction <add>, %8, %cst_3 [1] : vector<8x128xf32> to vector<8xf32>
    %10 = vector.shape_cast %9 : vector<8xf32> to vector<8x1xf32>
    %cst_4 = arith.constant 1.280000e+02 : f32
    %11 = vector.broadcast %cst_4 : f32 to vector<8x1xf32>
    %12 = arith.divf %10, %11 : vector<8x1xf32>
    %13 = vector.broadcast %5 : vector<8x1xf32> to vector<8x128xf32>
    %14 = arith.subf %1, %13 : vector<8x128xf32>
    %cst_5 = arith.constant 9.99999974E-6 : f32
    %15 = vector.broadcast %cst_5 : f32 to vector<8x1xf32>
    %16 = arith.addf %12, %15 : vector<8x1xf32>
    %17 = math.rsqrt %16 : vector<8x1xf32>
    %18 = vector.broadcast %17 : vector<8x1xf32> to vector<8x128xf32>
    %19 = arith.mulf %14, %18 : vector<8x128xf32>
    %c0_6 = arith.constant 0 : index
    %c0_7 = arith.constant 0 : index
    %20 = vector.load %arg2[%c0_6, %c0_7] : memref<1x128xf32, #tpu.memory_space<vmem>>, vector<1x128xf32>
    %21 = vector.broadcast %20 : vector<1x128xf32> to vector<8x128xf32>
    %22 = arith.mulf %19, %21 : vector<8x128xf32>
    %c0_8 = arith.constant 0 : index
    %c0_9 = arith.constant 0 : index
    %23 = vector.load %arg3[%c0_8, %c0_9] : memref<1x128xf32, #tpu.memory_space<vmem>>, vector<1x128xf32>
    %24 = vector.broadcast %23 : vector<1x128xf32> to vector<8x128xf32>
    %25 = arith.addf %22, %24 : vector<8x128xf32>
    %26 = arith.truncf %25 : vector<8x128xf32> to vector<8x128xbf16>
    %c0_10 = arith.constant 0 : index
    %c0_11 = arith.constant 0 : index
    %27 = vector.load %arg4[%c0_10, %c0_11] : memref<128x256xbf16, #tpu.memory_space<vmem>>, vector<128x256xbf16>
    %cst_12 = arith.constant dense<0.000000e+00> : vector<8x256xf32>
    %28 = tpu.matmul %26, %27, %cst_12 {dimension_numbers = #tpu.dot_dimension_numbers<[1], [0], [0], [1], [0, 0, 1, 1], [], []>} : vector<8x128xbf16>, vector<128x256xbf16>, vector<8x256xf32> -> vector<8x256xf32>
    %c0_13 = arith.constant 0 : index
    %c0_14 = arith.constant 0 : index
    %29 = vector.load %arg5[%c0_13, %c0_14] : memref<1x256xf32, #tpu.memory_space<vmem>>, vector<1x256xf32>
    %30 = vector.broadcast %29 : vector<1x256xf32> to vector<8x256xf32>
    %31 = arith.addf %28, %30 : vector<8x256xf32>
    %32 = arith.negf %31 : vector<8x256xf32>
    %33 = math.exp %32 : vector<8x256xf32>
    %cst_15 = arith.constant 1.000000e+00 : f32
    %34 = vector.broadcast %cst_15 : f32 to vector<8x256xf32>
    %35 = arith.addf %34, %33 : vector<8x256xf32>
    %36 = arith.divf %34, %35 : vector<8x256xf32>
    %37 = arith.mulf %31, %36 : vector<8x256xf32>
    %38 = arith.truncf %37 : vector<8x256xf32> to vector<8x256xbf16>
    %c0_16 = arith.constant 0 : index
    %c0_17 = arith.constant 0 : index
    %39 = vector.load %arg6[%c0_16, %c0_17] : memref<256x128xbf16, #tpu.memory_space<vmem>>, vector<256x128xbf16>
    %cst_18 = arith.constant dense<0.000000e+00> : vector<8x128xf32>
    %40 = tpu.matmul %38, %39, %cst_18 {dimension_numbers = #tpu.dot_dimension_numbers<[1], [0], [0], [1], [0, 0, 1, 1], [], []>} : vector<8x256xbf16>, vector<256x128xbf16>, vector<8x128xf32> -> vector<8x128xf32>
    %c0_19 = arith.constant 0 : index
    %c0_20 = arith.constant 0 : index
    %41 = vector.load %arg7[%c0_19, %c0_20] : memref<1x128xf32, #tpu.memory_space<vmem>>, vector<1x128xf32>
    %42 = vector.broadcast %41 : vector<1x128xf32> to vector<8x128xf32>
    %43 = arith.addf %40, %42 : vector<8x128xf32>
    %cst_21 = arith.constant 5.000000e-01 : f32
    %44 = vector.broadcast %cst_21 : f32 to vector<8x128xf32>
    %45 = arith.mulf %44, %43 : vector<8x128xf32>
    %46 = arith.addf %1, %45 : vector<8x128xf32>
    %cst_22 = arith.constant dense<0.000000e+00> : vector<8xf32>
    %47 = vector.multi_reduction <add>, %46, %cst_22 [1] : vector<8x128xf32> to vector<8xf32>
    %48 = vector.shape_cast %47 : vector<8xf32> to vector<8x1xf32>
    %cst_23 = arith.constant 1.280000e+02 : f32
    %49 = vector.broadcast %cst_23 : f32 to vector<8x1xf32>
    %50 = arith.divf %48, %49 : vector<8x1xf32>
    %51 = vector.broadcast %50 : vector<8x1xf32> to vector<8x128xf32>
    %52 = arith.subf %46, %51 : vector<8x128xf32>
    %53 = arith.mulf %52, %52 : vector<8x128xf32>
    %cst_24 = arith.constant dense<0.000000e+00> : vector<8xf32>
    %54 = vector.multi_reduction <add>, %53, %cst_24 [1] : vector<8x128xf32> to vector<8xf32>
    %55 = vector.shape_cast %54 : vector<8xf32> to vector<8x1xf32>
    %cst_25 = arith.constant 1.280000e+02 : f32
    %56 = vector.broadcast %cst_25 : f32 to vector<8x1xf32>
    %57 = arith.divf %55, %56 : vector<8x1xf32>
    %58 = vector.broadcast %50 : vector<8x1xf32> to vector<8x128xf32>
    %59 = arith.subf %46, %58 : vector<8x128xf32>
    %cst_26 = arith.constant 9.99999974E-6 : f32
    %60 = vector.broadcast %cst_26 : f32 to vector<8x1xf32>
    %61 = arith.addf %57, %60 : vector<8x1xf32>
    %62 = math.rsqrt %61 : vector<8x1xf32>
    %63 = vector.broadcast %62 : vector<8x1xf32> to vector<8x128xf32>
    %64 = arith.mulf %59, %63 : vector<8x128xf32>
    %c0_27 = arith.constant 0 : index
    %c0_28 = arith.constant 0 : index
    %65 = vector.load %arg8[%c0_27, %c0_28] : memref<1x128xf32, #tpu.memory_space<vmem>>, vector<1x128xf32>
    %66 = vector.broadcast %65 : vector<1x128xf32> to vector<8x128xf32>
    %67 = arith.mulf %64, %66 : vector<8x128xf32>
    %c0_29 = arith.constant 0 : index
    %c0_30 = arith.constant 0 : index
    %68 = vector.load %arg9[%c0_29, %c0_30] : memref<1x128xf32, #tpu.memory_space<vmem>>, vector<1x128xf32>
    %69 = vector.broadcast %68 : vector<1x128xf32> to vector<8x128xf32>
    %70 = arith.addf %67, %69 : vector<8x128xf32>
    %71 = arith.truncf %70 : vector<8x128xf32> to vector<8x128xbf16>
    %c0_31 = arith.constant 0 : index
    %c0_32 = arith.constant 0 : index
    %72 = vector.load %arg10[%c0_31, %c0_32] : memref<128x384xbf16, #tpu.memory_space<vmem>>, vector<128x384xbf16>
    %cst_33 = arith.constant dense<0.000000e+00> : vector<8x384xf32>
    %73 = tpu.matmul %71, %72, %cst_33 {dimension_numbers = #tpu.dot_dimension_numbers<[1], [0], [0], [1], [0, 0, 1, 1], [], []>} : vector<8x128xbf16>, vector<128x384xbf16>, vector<8x384xf32> -> vector<8x384xf32>
    %c0_34 = arith.constant 0 : index
    %c0_35 = arith.constant 0 : index
    %74 = vector.load %arg11[%c0_34, %c0_35] : memref<1x384xf32, #tpu.memory_space<vmem>>, vector<1x384xf32>
    %75 = vector.broadcast %74 : vector<1x384xf32> to vector<8x384xf32>
    %76 = arith.addf %73, %75 : vector<8x384xf32>
    %77 = vector.extract_strided_slice %76 {offsets = [0, 0], sizes = [8, 128], strides = [1, 1]} : vector<8x384xf32> to vector<8x128xf32>
    %78 = vector.shape_cast %77 : vector<8x128xf32> to vector<8x4x32xf32>
    %79 = tpu.transpose %78, [1, 0, 2] : vector<8x4x32xf32> -> vector<4x8x32xf32>
    %80 = arith.truncf %79 : vector<4x8x32xf32> to vector<4x8x32xbf16>
    %81 = vector.extract_strided_slice %76 {offsets = [0, 128], sizes = [8, 128], strides = [1, 1]} : vector<8x384xf32> to vector<8x128xf32>
    %82 = vector.shape_cast %81 : vector<8x128xf32> to vector<8x4x32xf32>
    %83 = tpu.transpose %82, [1, 0, 2] : vector<8x4x32xf32> -> vector<4x8x32xf32>
    %84 = arith.truncf %83 : vector<4x8x32xf32> to vector<4x8x32xbf16>
    %85 = vector.extract_strided_slice %76 {offsets = [0, 256], sizes = [8, 128], strides = [1, 1]} : vector<8x384xf32> to vector<8x128xf32>
    %86 = vector.shape_cast %85 : vector<8x128xf32> to vector<8x4x32xf32>
    %87 = tpu.transpose %86, [1, 0, 2] : vector<8x4x32xf32> -> vector<4x8x32xf32>
    %88 = arith.truncf %87 : vector<4x8x32xf32> to vector<4x8x32xbf16>
    "tpu.trace_start"() <{level = 10 : i32, message = "htd,hsd->hts"}> : () -> ()
    %cst_36 = arith.constant dense<0.000000e+00> : vector<4x8x8xf32>
    %89 = tpu.matmul %80, %84, %cst_36 {dimension_numbers = #tpu.dot_dimension_numbers<[2], [2], [1], [1], [0, 0, 0, 1, 1, 1], [0], [0]>} : vector<4x8x32xbf16>, vector<4x8x32xbf16>, vector<4x8x8xf32> -> vector<4x8x8xf32>
    "tpu.trace_stop"() : () -> ()
    %cst_37 = arith.constant dense<0xFF800000> : vector<4x8xf32>
    %90 = vector.multi_reduction <maximumf>, %89, %cst_37 [2] : vector<4x8x8xf32> to vector<4x8xf32>
    %91 = vector.shape_cast %90 : vector<4x8xf32> to vector<4x8x1xf32>
    %92 = vector.broadcast %91 : vector<4x8x1xf32> to vector<4x8x8xf32>
    %93 = arith.subf %89, %92 : vector<4x8x8xf32>
    %94 = math.exp %93 : vector<4x8x8xf32>
    %cst_38 = arith.constant dense<0.000000e+00> : vector<4x8xf32>
    %95 = vector.multi_reduction <add>, %94, %cst_38 [2] : vector<4x8x8xf32> to vector<4x8xf32>
    %96 = vector.shape_cast %95 : vector<4x8xf32> to vector<4x8x1xf32>
    %97 = tpu.reciprocal %96 {approx = true} : vector<4x8x1xf32> -> vector<4x8x1xf32>
    %98 = vector.broadcast %97 : vector<4x8x1xf32> to vector<4x8x8xf32>
    %99 = arith.mulf %94, %98 : vector<4x8x8xf32>
    %100 = arith.truncf %99 : vector<4x8x8xf32> to vector<4x8x8xbf16>
    "tpu.trace_start"() <{level = 10 : i32, message = "hts,hsd->htd"}> : () -> ()
    %cst_39 = arith.constant dense<0.000000e+00> : vector<4x8x32xf32>
    %101 = tpu.matmul %100, %88, %cst_39 {dimension_numbers = #tpu.dot_dimension_numbers<[2], [1], [1], [2], [0, 0, 0, 1, 1, 2], [0], [0]>} : vector<4x8x8xbf16>, vector<4x8x32xbf16>, vector<4x8x32xf32> -> vector<4x8x32xf32>
    "tpu.trace_stop"() : () -> ()
    %102 = tpu.transpose %101, [1, 0, 2] : vector<4x8x32xf32> -> vector<8x4x32xf32>
    %103 = vector.shape_cast %102 : vector<8x4x32xf32> to vector<8x128xf32>
    %104 = arith.truncf %103 : vector<8x128xf32> to vector<8x128xbf16>
    %c0_40 = arith.constant 0 : index
    %c0_41 = arith.constant 0 : index
    %105 = vector.load %arg12[%c0_40, %c0_41] : memref<128x128xbf16, #tpu.memory_space<vmem>>, vector<128x128xbf16>
    %cst_42 = arith.constant dense<0.000000e+00> : vector<8x128xf32>
    %106 = tpu.matmul %104, %105, %cst_42 {dimension_numbers = #tpu.dot_dimension_numbers<[1], [0], [0], [1], [0, 0, 1, 1], [], []>} : vector<8x128xbf16>, vector<128x128xbf16>, vector<8x128xf32> -> vector<8x128xf32>
    %107 = arith.addf %46, %106 : vector<8x128xf32>
    %c0_43 = arith.constant 0 : index
    %c0_44 = arith.constant 0 : index
    %108 = vector.load %arg13[%c0_43, %c0_44] : memref<1x128xf32, #tpu.memory_space<vmem>>, vector<1x128xf32>
    %109 = vector.broadcast %108 : vector<1x128xf32> to vector<8x128xf32>
    %110 = arith.addf %107, %109 : vector<8x128xf32>
    %cst_45 = arith.constant dense<0.000000e+00> : vector<8xf32>
    %111 = vector.multi_reduction <add>, %110, %cst_45 [1] : vector<8x128xf32> to vector<8xf32>
    %112 = vector.shape_cast %111 : vector<8xf32> to vector<8x1xf32>
    %cst_46 = arith.constant 1.280000e+02 : f32
    %113 = vector.broadcast %cst_46 : f32 to vector<8x1xf32>
    %114 = arith.divf %112, %113 : vector<8x1xf32>
    %115 = vector.broadcast %114 : vector<8x1xf32> to vector<8x128xf32>
    %116 = arith.subf %110, %115 : vector<8x128xf32>
    %117 = arith.mulf %116, %116 : vector<8x128xf32>
    %cst_47 = arith.constant dense<0.000000e+00> : vector<8xf32>
    %118 = vector.multi_reduction <add>, %117, %cst_47 [1] : vector<8x128xf32> to vector<8xf32>
    %119 = vector.shape_cast %118 : vector<8xf32> to vector<8x1xf32>
    %cst_48 = arith.constant 1.280000e+02 : f32
    %120 = vector.broadcast %cst_48 : f32 to vector<8x1xf32>
    %121 = arith.divf %119, %120 : vector<8x1xf32>
    %122 = vector.broadcast %114 : vector<8x1xf32> to vector<8x128xf32>
    %123 = arith.subf %110, %122 : vector<8x128xf32>
    %cst_49 = arith.constant 9.99999974E-6 : f32
    %124 = vector.broadcast %cst_49 : f32 to vector<8x1xf32>
    %125 = arith.addf %121, %124 : vector<8x1xf32>
    %126 = math.rsqrt %125 : vector<8x1xf32>
    %127 = vector.broadcast %126 : vector<8x1xf32> to vector<8x128xf32>
    %128 = arith.mulf %123, %127 : vector<8x128xf32>
    %c0_50 = arith.constant 0 : index
    %c0_51 = arith.constant 0 : index
    %129 = vector.load %arg14[%c0_50, %c0_51] : memref<1x128xf32, #tpu.memory_space<vmem>>, vector<1x128xf32>
    %130 = vector.broadcast %129 : vector<1x128xf32> to vector<8x128xf32>
    %131 = arith.mulf %128, %130 : vector<8x128xf32>
    %c0_52 = arith.constant 0 : index
    %c0_53 = arith.constant 0 : index
    %132 = vector.load %arg15[%c0_52, %c0_53] : memref<1x128xf32, #tpu.memory_space<vmem>>, vector<1x128xf32>
    %133 = vector.broadcast %132 : vector<1x128xf32> to vector<8x128xf32>
    %134 = arith.addf %131, %133 : vector<8x128xf32>
    %135 = arith.truncf %134 : vector<8x128xf32> to vector<8x128xbf16>
    %c0_54 = arith.constant 0 : index
    %c0_55 = arith.constant 0 : index
    %136 = vector.load %arg16[%c0_54, %c0_55] : memref<128x256xbf16, #tpu.memory_space<vmem>>, vector<128x256xbf16>
    %cst_56 = arith.constant dense<0.000000e+00> : vector<8x256xf32>
    %137 = tpu.matmul %135, %136, %cst_56 {dimension_numbers = #tpu.dot_dimension_numbers<[1], [0], [0], [1], [0, 0, 1, 1], [], []>} : vector<8x128xbf16>, vector<128x256xbf16>, vector<8x256xf32> -> vector<8x256xf32>
    %c0_57 = arith.constant 0 : index
    %c0_58 = arith.constant 0 : index
    %138 = vector.load %arg17[%c0_57, %c0_58] : memref<1x256xf32, #tpu.memory_space<vmem>>, vector<1x256xf32>
    %139 = vector.broadcast %138 : vector<1x256xf32> to vector<8x256xf32>
    %140 = arith.addf %137, %139 : vector<8x256xf32>
    %141 = vector.extract_strided_slice %140 {offsets = [0, 0], sizes = [8, 128], strides = [1, 1]} : vector<8x256xf32> to vector<8x128xf32>
    %142 = vector.extract_strided_slice %140 {offsets = [0, 128], sizes = [8, 128], strides = [1, 1]} : vector<8x256xf32> to vector<8x128xf32>
    %143 = arith.negf %142 : vector<8x128xf32>
    %144 = math.exp %143 : vector<8x128xf32>
    %cst_59 = arith.constant 1.000000e+00 : f32
    %145 = vector.broadcast %cst_59 : f32 to vector<8x128xf32>
    %146 = arith.addf %145, %144 : vector<8x128xf32>
    %147 = arith.divf %145, %146 : vector<8x128xf32>
    %148 = arith.mulf %141, %147 : vector<8x128xf32>
    %c0_60 = arith.constant 0 : index
    %c0_61 = arith.constant 0 : index
    %149 = vector.load %arg18[%c0_60, %c0_61] : memref<7x128xf32, #tpu.memory_space<vmem>>, vector<7x128xf32>
    %150 = tpu.iota {dimensions = array<i32: 0>} : vector<8x1xi32>
    %151 = vector.extract_strided_slice %149 {offsets = [3, 0], sizes = [1, 128], strides = [1, 1]} : vector<7x128xf32> to vector<1x128xf32>
    %152 = vector.shape_cast %151 : vector<1x128xf32> to vector<128xf32>
    %153 = vector.shape_cast %152 : vector<128xf32> to vector<1x128xf32>
    %154 = vector.broadcast %153 : vector<1x128xf32> to vector<8x128xf32>
    %155 = arith.mulf %148, %154 : vector<8x128xf32>
    %c3_i32 = arith.constant 3 : i32
    %156 = tpu.dynamic_rotate %148 by %c3_i32 dim 0 : vector<8x128xf32>, i32 -> vector<8x128xf32>
    %c-3_i32 = arith.constant -3 : i32
    %157 = vector.broadcast %c-3_i32 : i32 to vector<8x1xi32>
    %158 = arith.addi %150, %157 : vector<8x1xi32>
    %c0_i32 = arith.constant 0 : i32
    %159 = vector.broadcast %c0_i32 : i32 to vector<8x1xi32>
    %160 = arith.cmpi sge, %158, %159 : vector<8x1xi32>
    %c8_i32 = arith.constant 8 : i32
    %161 = vector.broadcast %c8_i32 : i32 to vector<8x1xi32>
    %162 = arith.cmpi slt, %158, %161 : vector<8x1xi32>
    %163 = arith.andi %160, %162 : vector<8x1xi1>
    %cst_62 = arith.constant 0.000000e+00 : f32
    %164 = vector.shape_cast %163 : vector<8x1xi1> to vector<8x1xi1>
    %165 = vector.broadcast %164 : vector<8x1xi1> to vector<8x128xi1>
    %166 = vector.broadcast %cst_62 : f32 to vector<8x128xf32>
    %167 = arith.select %165, %156, %166 : vector<8x128xi1>, vector<8x128xf32>
    %168 = vector.extract_strided_slice %149 {offsets = [0, 0], sizes = [1, 128], strides = [1, 1]} : vector<7x128xf32> to vector<1x128xf32>
    %169 = vector.shape_cast %168 : vector<1x128xf32> to vector<128xf32>
    %170 = vector.shape_cast %169 : vector<128xf32> to vector<1x128xf32>
    %171 = vector.broadcast %170 : vector<1x128xf32> to vector<8x128xf32>
    %172 = arith.mulf %167, %171 : vector<8x128xf32>
    %173 = arith.addf %155, %172 : vector<8x128xf32>
    %c2_i32 = arith.constant 2 : i32
    %174 = tpu.dynamic_rotate %148 by %c2_i32 dim 0 : vector<8x128xf32>, i32 -> vector<8x128xf32>
    %c-2_i32 = arith.constant -2 : i32
    %175 = vector.broadcast %c-2_i32 : i32 to vector<8x1xi32>
    %176 = arith.addi %150, %175 : vector<8x1xi32>
    %c0_i32_63 = arith.constant 0 : i32
    %177 = vector.broadcast %c0_i32_63 : i32 to vector<8x1xi32>
    %178 = arith.cmpi sge, %176, %177 : vector<8x1xi32>
    %c8_i32_64 = arith.constant 8 : i32
    %179 = vector.broadcast %c8_i32_64 : i32 to vector<8x1xi32>
    %180 = arith.cmpi slt, %176, %179 : vector<8x1xi32>
    %181 = arith.andi %178, %180 : vector<8x1xi1>
    %cst_65 = arith.constant 0.000000e+00 : f32
    %182 = vector.shape_cast %181 : vector<8x1xi1> to vector<8x1xi1>
    %183 = vector.broadcast %182 : vector<8x1xi1> to vector<8x128xi1>
    %184 = vector.broadcast %cst_65 : f32 to vector<8x128xf32>
    %185 = arith.select %183, %174, %184 : vector<8x128xi1>, vector<8x128xf32>
    %186 = vector.extract_strided_slice %149 {offsets = [1, 0], sizes = [1, 128], strides = [1, 1]} : vector<7x128xf32> to vector<1x128xf32>
    %187 = vector.shape_cast %186 : vector<1x128xf32> to vector<128xf32>
    %188 = vector.shape_cast %187 : vector<128xf32> to vector<1x128xf32>
    %189 = vector.broadcast %188 : vector<1x128xf32> to vector<8x128xf32>
    %190 = arith.mulf %185, %189 : vector<8x128xf32>
    %191 = arith.addf %173, %190 : vector<8x128xf32>
    %c1_i32 = arith.constant 1 : i32
    %192 = tpu.dynamic_rotate %148 by %c1_i32 dim 0 : vector<8x128xf32>, i32 -> vector<8x128xf32>
    %c-1_i32 = arith.constant -1 : i32
    %193 = vector.broadcast %c-1_i32 : i32 to vector<8x1xi32>
    %194 = arith.addi %150, %193 : vector<8x1xi32>
    %c0_i32_66 = arith.constant 0 : i32
    %195 = vector.broadcast %c0_i32_66 : i32 to vector<8x1xi32>
    %196 = arith.cmpi sge, %194, %195 : vector<8x1xi32>
    %c8_i32_67 = arith.constant 8 : i32
    %197 = vector.broadcast %c8_i32_67 : i32 to vector<8x1xi32>
    %198 = arith.cmpi slt, %194, %197 : vector<8x1xi32>
    %199 = arith.andi %196, %198 : vector<8x1xi1>
    %cst_68 = arith.constant 0.000000e+00 : f32
    %200 = vector.shape_cast %199 : vector<8x1xi1> to vector<8x1xi1>
    %201 = vector.broadcast %200 : vector<8x1xi1> to vector<8x128xi1>
    %202 = vector.broadcast %cst_68 : f32 to vector<8x128xf32>
    %203 = arith.select %201, %192, %202 : vector<8x128xi1>, vector<8x128xf32>
    %204 = vector.extract_strided_slice %149 {offsets = [2, 0], sizes = [1, 128], strides = [1, 1]} : vector<7x128xf32> to vector<1x128xf32>
    %205 = vector.shape_cast %204 : vector<1x128xf32> to vector<128xf32>
    %206 = vector.shape_cast %205 : vector<128xf32> to vector<1x128xf32>
    %207 = vector.broadcast %206 : vector<1x128xf32> to vector<8x128xf32>
    %208 = arith.mulf %203, %207 : vector<8x128xf32>
    %209 = arith.addf %191, %208 : vector<8x128xf32>
    %c7_i32 = arith.constant 7 : i32
    %210 = tpu.dynamic_rotate %148 by %c7_i32 dim 0 : vector<8x128xf32>, i32 -> vector<8x128xf32>
    %c1_i32_69 = arith.constant 1 : i32
    %211 = vector.broadcast %c1_i32_69 : i32 to vector<8x1xi32>
    %212 = arith.addi %150, %211 : vector<8x1xi32>
    %c0_i32_70 = arith.constant 0 : i32
    %213 = vector.broadcast %c0_i32_70 : i32 to vector<8x1xi32>
    %214 = arith.cmpi sge, %212, %213 : vector<8x1xi32>
    %c8_i32_71 = arith.constant 8 : i32
    %215 = vector.broadcast %c8_i32_71 : i32 to vector<8x1xi32>
    %216 = arith.cmpi slt, %212, %215 : vector<8x1xi32>
    %217 = arith.andi %214, %216 : vector<8x1xi1>
    %cst_72 = arith.constant 0.000000e+00 : f32
    %218 = vector.shape_cast %217 : vector<8x1xi1> to vector<8x1xi1>
    %219 = vector.broadcast %218 : vector<8x1xi1> to vector<8x128xi1>
    %220 = vector.broadcast %cst_72 : f32 to vector<8x128xf32>
    %221 = arith.select %219, %210, %220 : vector<8x128xi1>, vector<8x128xf32>
    %222 = vector.extract_strided_slice %149 {offsets = [4, 0], sizes = [1, 128], strides = [1, 1]} : vector<7x128xf32> to vector<1x128xf32>
    %223 = vector.shape_cast %222 : vector<1x128xf32> to vector<128xf32>
    %224 = vector.shape_cast %223 : vector<128xf32> to vector<1x128xf32>
    %225 = vector.broadcast %224 : vector<1x128xf32> to vector<8x128xf32>
    %226 = arith.mulf %221, %225 : vector<8x128xf32>
    %227 = arith.addf %209, %226 : vector<8x128xf32>
    %c6_i32 = arith.constant 6 : i32
    %228 = tpu.dynamic_rotate %148 by %c6_i32 dim 0 : vector<8x128xf32>, i32 -> vector<8x128xf32>
    %c2_i32_73 = arith.constant 2 : i32
    %229 = vector.broadcast %c2_i32_73 : i32 to vector<8x1xi32>
    %230 = arith.addi %150, %229 : vector<8x1xi32>
    %c0_i32_74 = arith.constant 0 : i32
    %231 = vector.broadcast %c0_i32_74 : i32 to vector<8x1xi32>
    %232 = arith.cmpi sge, %230, %231 : vector<8x1xi32>
    %c8_i32_75 = arith.constant 8 : i32
    %233 = vector.broadcast %c8_i32_75 : i32 to vector<8x1xi32>
    %234 = arith.cmpi slt, %230, %233 : vector<8x1xi32>
    %235 = arith.andi %232, %234 : vector<8x1xi1>
    %cst_76 = arith.constant 0.000000e+00 : f32
    %236 = vector.shape_cast %235 : vector<8x1xi1> to vector<8x1xi1>
    %237 = vector.broadcast %236 : vector<8x1xi1> to vector<8x128xi1>
    %238 = vector.broadcast %cst_76 : f32 to vector<8x128xf32>
    %239 = arith.select %237, %228, %238 : vector<8x128xi1>, vector<8x128xf32>
    %240 = vector.extract_strided_slice %149 {offsets = [5, 0], sizes = [1, 128], strides = [1, 1]} : vector<7x128xf32> to vector<1x128xf32>
    %241 = vector.shape_cast %240 : vector<1x128xf32> to vector<128xf32>
    %242 = vector.shape_cast %241 : vector<128xf32> to vector<1x128xf32>
    %243 = vector.broadcast %242 : vector<1x128xf32> to vector<8x128xf32>
    %244 = arith.mulf %239, %243 : vector<8x128xf32>
    %245 = arith.addf %227, %244 : vector<8x128xf32>
    %c5_i32 = arith.constant 5 : i32
    %246 = tpu.dynamic_rotate %148 by %c5_i32 dim 0 : vector<8x128xf32>, i32 -> vector<8x128xf32>
    %c3_i32_77 = arith.constant 3 : i32
    %247 = vector.broadcast %c3_i32_77 : i32 to vector<8x1xi32>
    %248 = arith.addi %150, %247 : vector<8x1xi32>
    %c0_i32_78 = arith.constant 0 : i32
    %249 = vector.broadcast %c0_i32_78 : i32 to vector<8x1xi32>
    %250 = arith.cmpi sge, %248, %249 : vector<8x1xi32>
    %c8_i32_79 = arith.constant 8 : i32
    %251 = vector.broadcast %c8_i32_79 : i32 to vector<8x1xi32>
    %252 = arith.cmpi slt, %248, %251 : vector<8x1xi32>
    %253 = arith.andi %250, %252 : vector<8x1xi1>
    %cst_80 = arith.constant 0.000000e+00 : f32
    %254 = vector.shape_cast %253 : vector<8x1xi1> to vector<8x1xi1>
    %255 = vector.broadcast %254 : vector<8x1xi1> to vector<8x128xi1>
    %256 = vector.broadcast %cst_80 : f32 to vector<8x128xf32>
    %257 = arith.select %255, %246, %256 : vector<8x128xi1>, vector<8x128xf32>
    %258 = vector.extract_strided_slice %149 {offsets = [6, 0], sizes = [1, 128], strides = [1, 1]} : vector<7x128xf32> to vector<1x128xf32>
    %259 = vector.shape_cast %258 : vector<1x128xf32> to vector<128xf32>
    %260 = vector.shape_cast %259 : vector<128xf32> to vector<1x128xf32>
    %261 = vector.broadcast %260 : vector<1x128xf32> to vector<8x128xf32>
    %262 = arith.mulf %257, %261 : vector<8x128xf32>
    %263 = arith.addf %245, %262 : vector<8x128xf32>
    %c0_81 = arith.constant 0 : index
    %c0_82 = arith.constant 0 : index
    %264 = vector.load %arg19[%c0_81, %c0_82] : memref<1x128xf32, #tpu.memory_space<vmem>>, vector<1x128xf32>
    %265 = vector.broadcast %264 : vector<1x128xf32> to vector<8x128xf32>
    %266 = arith.addf %263, %265 : vector<8x128xf32>
    %cst_83 = arith.constant 0.999994993 : f32
    %267 = vector.broadcast %cst_83 : f32 to vector<8x128xf32>
    %268 = arith.mulf %266, %267 : vector<8x128xf32>
    %269 = arith.negf %268 : vector<8x128xf32>
    %270 = math.exp %269 : vector<8x128xf32>
    %cst_84 = arith.constant 1.000000e+00 : f32
    %271 = vector.broadcast %cst_84 : f32 to vector<8x128xf32>
    %272 = arith.addf %271, %270 : vector<8x128xf32>
    %273 = arith.divf %271, %272 : vector<8x128xf32>
    %274 = arith.mulf %268, %273 : vector<8x128xf32>
    %275 = arith.truncf %274 : vector<8x128xf32> to vector<8x128xbf16>
    %c0_85 = arith.constant 0 : index
    %c0_86 = arith.constant 0 : index
    %276 = vector.load %arg20[%c0_85, %c0_86] : memref<128x128xbf16, #tpu.memory_space<vmem>>, vector<128x128xbf16>
    %cst_87 = arith.constant dense<0.000000e+00> : vector<8x128xf32>
    %277 = tpu.matmul %275, %276, %cst_87 {dimension_numbers = #tpu.dot_dimension_numbers<[1], [0], [0], [1], [0, 0, 1, 1], [], []>} : vector<8x128xbf16>, vector<128x128xbf16>, vector<8x128xf32> -> vector<8x128xf32>
    %278 = arith.addf %110, %277 : vector<8x128xf32>
    %c0_88 = arith.constant 0 : index
    %c0_89 = arith.constant 0 : index
    %279 = vector.load %arg21[%c0_88, %c0_89] : memref<1x128xf32, #tpu.memory_space<vmem>>, vector<1x128xf32>
    %280 = vector.broadcast %279 : vector<1x128xf32> to vector<8x128xf32>
    %281 = arith.addf %278, %280 : vector<8x128xf32>
    %cst_90 = arith.constant dense<0.000000e+00> : vector<8xf32>
    %282 = vector.multi_reduction <add>, %281, %cst_90 [1] : vector<8x128xf32> to vector<8xf32>
    %283 = vector.shape_cast %282 : vector<8xf32> to vector<8x1xf32>
    %cst_91 = arith.constant 1.280000e+02 : f32
    %284 = vector.broadcast %cst_91 : f32 to vector<8x1xf32>
    %285 = arith.divf %283, %284 : vector<8x1xf32>
    %286 = vector.broadcast %285 : vector<8x1xf32> to vector<8x128xf32>
    %287 = arith.subf %281, %286 : vector<8x128xf32>
    %288 = arith.mulf %287, %287 : vector<8x128xf32>
    %cst_92 = arith.constant dense<0.000000e+00> : vector<8xf32>
    %289 = vector.multi_reduction <add>, %288, %cst_92 [1] : vector<8x128xf32> to vector<8xf32>
    %290 = vector.shape_cast %289 : vector<8xf32> to vector<8x1xf32>
    %cst_93 = arith.constant 1.280000e+02 : f32
    %291 = vector.broadcast %cst_93 : f32 to vector<8x1xf32>
    %292 = arith.divf %290, %291 : vector<8x1xf32>
    %293 = vector.broadcast %285 : vector<8x1xf32> to vector<8x128xf32>
    %294 = arith.subf %281, %293 : vector<8x128xf32>
    %cst_94 = arith.constant 9.99999974E-6 : f32
    %295 = vector.broadcast %cst_94 : f32 to vector<8x1xf32>
    %296 = arith.addf %292, %295 : vector<8x1xf32>
    %297 = math.rsqrt %296 : vector<8x1xf32>
    %298 = vector.broadcast %297 : vector<8x1xf32> to vector<8x128xf32>
    %299 = arith.mulf %294, %298 : vector<8x128xf32>
    %c0_95 = arith.constant 0 : index
    %c0_96 = arith.constant 0 : index
    %300 = vector.load %arg22[%c0_95, %c0_96] : memref<1x128xf32, #tpu.memory_space<vmem>>, vector<1x128xf32>
    %301 = vector.broadcast %300 : vector<1x128xf32> to vector<8x128xf32>
    %302 = arith.mulf %299, %301 : vector<8x128xf32>
    %c0_97 = arith.constant 0 : index
    %c0_98 = arith.constant 0 : index
    %303 = vector.load %arg23[%c0_97, %c0_98] : memref<1x128xf32, #tpu.memory_space<vmem>>, vector<1x128xf32>
    %304 = vector.broadcast %303 : vector<1x128xf32> to vector<8x128xf32>
    %305 = arith.addf %302, %304 : vector<8x128xf32>
    %306 = arith.truncf %305 : vector<8x128xf32> to vector<8x128xbf16>
    %c0_99 = arith.constant 0 : index
    %c0_100 = arith.constant 0 : index
    %307 = vector.load %arg24[%c0_99, %c0_100] : memref<128x256xbf16, #tpu.memory_space<vmem>>, vector<128x256xbf16>
    %cst_101 = arith.constant dense<0.000000e+00> : vector<8x256xf32>
    %308 = tpu.matmul %306, %307, %cst_101 {dimension_numbers = #tpu.dot_dimension_numbers<[1], [0], [0], [1], [0, 0, 1, 1], [], []>} : vector<8x128xbf16>, vector<128x256xbf16>, vector<8x256xf32> -> vector<8x256xf32>
    %c0_102 = arith.constant 0 : index
    %c0_103 = arith.constant 0 : index
    %309 = vector.load %arg25[%c0_102, %c0_103] : memref<1x256xf32, #tpu.memory_space<vmem>>, vector<1x256xf32>
    %310 = vector.broadcast %309 : vector<1x256xf32> to vector<8x256xf32>
    %311 = arith.addf %308, %310 : vector<8x256xf32>
    %312 = arith.negf %311 : vector<8x256xf32>
    %313 = math.exp %312 : vector<8x256xf32>
    %cst_104 = arith.constant 1.000000e+00 : f32
    %314 = vector.broadcast %cst_104 : f32 to vector<8x256xf32>
    %315 = arith.addf %314, %313 : vector<8x256xf32>
    %316 = arith.divf %314, %315 : vector<8x256xf32>
    %317 = arith.mulf %311, %316 : vector<8x256xf32>
    %318 = arith.truncf %317 : vector<8x256xf32> to vector<8x256xbf16>
    %c0_105 = arith.constant 0 : index
    %c0_106 = arith.constant 0 : index
    %319 = vector.load %arg26[%c0_105, %c0_106] : memref<256x128xbf16, #tpu.memory_space<vmem>>, vector<256x128xbf16>
    %cst_107 = arith.constant dense<0.000000e+00> : vector<8x128xf32>
    %320 = tpu.matmul %318, %319, %cst_107 {dimension_numbers = #tpu.dot_dimension_numbers<[1], [0], [0], [1], [0, 0, 1, 1], [], []>} : vector<8x256xbf16>, vector<256x128xbf16>, vector<8x128xf32> -> vector<8x128xf32>
    %c0_108 = arith.constant 0 : index
    %c0_109 = arith.constant 0 : index
    %321 = vector.load %arg27[%c0_108, %c0_109] : memref<1x128xf32, #tpu.memory_space<vmem>>, vector<1x128xf32>
    %322 = vector.broadcast %321 : vector<1x128xf32> to vector<8x128xf32>
    %323 = arith.addf %320, %322 : vector<8x128xf32>
    %cst_110 = arith.constant 5.000000e-01 : f32
    %324 = vector.broadcast %cst_110 : f32 to vector<8x128xf32>
    %325 = arith.mulf %324, %323 : vector<8x128xf32>
    %326 = arith.addf %281, %325 : vector<8x128xf32>
    %cst_111 = arith.constant dense<0.000000e+00> : vector<8xf32>
    %327 = vector.multi_reduction <add>, %326, %cst_111 [1] : vector<8x128xf32> to vector<8xf32>
    %328 = vector.shape_cast %327 : vector<8xf32> to vector<8x1xf32>
    %cst_112 = arith.constant 1.280000e+02 : f32
    %329 = vector.broadcast %cst_112 : f32 to vector<8x1xf32>
    %330 = arith.divf %328, %329 : vector<8x1xf32>
    %331 = vector.broadcast %330 : vector<8x1xf32> to vector<8x128xf32>
    %332 = arith.subf %326, %331 : vector<8x128xf32>
    %333 = arith.mulf %332, %332 : vector<8x128xf32>
    %cst_113 = arith.constant dense<0.000000e+00> : vector<8xf32>
    %334 = vector.multi_reduction <add>, %333, %cst_113 [1] : vector<8x128xf32> to vector<8xf32>
    %335 = vector.shape_cast %334 : vector<8xf32> to vector<8x1xf32>
    %cst_114 = arith.constant 1.280000e+02 : f32
    %336 = vector.broadcast %cst_114 : f32 to vector<8x1xf32>
    %337 = arith.divf %335, %336 : vector<8x1xf32>
    %338 = vector.broadcast %330 : vector<8x1xf32> to vector<8x128xf32>
    %339 = arith.subf %326, %338 : vector<8x128xf32>
    %cst_115 = arith.constant 9.99999974E-6 : f32
    %340 = vector.broadcast %cst_115 : f32 to vector<8x1xf32>
    %341 = arith.addf %337, %340 : vector<8x1xf32>
    %342 = math.rsqrt %341 : vector<8x1xf32>
    %343 = vector.broadcast %342 : vector<8x1xf32> to vector<8x128xf32>
    %344 = arith.mulf %339, %343 : vector<8x128xf32>
    %c0_116 = arith.constant 0 : index
    %c0_117 = arith.constant 0 : index
    %345 = vector.load %arg28[%c0_116, %c0_117] : memref<1x128xf32, #tpu.memory_space<vmem>>, vector<1x128xf32>
    %346 = vector.broadcast %345 : vector<1x128xf32> to vector<8x128xf32>
    %347 = arith.mulf %344, %346 : vector<8x128xf32>
    %c0_118 = arith.constant 0 : index
    %c0_119 = arith.constant 0 : index
    %348 = vector.load %arg29[%c0_118, %c0_119] : memref<1x128xf32, #tpu.memory_space<vmem>>, vector<1x128xf32>
    %349 = vector.broadcast %348 : vector<1x128xf32> to vector<8x128xf32>
    %350 = arith.addf %347, %349 : vector<8x128xf32>
    %c0_120 = arith.constant 0 : index
    %c0_121 = arith.constant 0 : index
    %c0_122 = arith.constant 0 : index
    %351 = vector.load %arg30[%c0_120, %c0_121, %c0_122] : memref<1x8x128xf32, #tpu.memory_space<vmem>>, vector<1x8x128xf32>
    %352 = vector.shape_cast %351 : vector<1x8x128xf32> to vector<8x128xf32>
    %353 = vector.shape_cast %350 : vector<8x128xf32> to vector<1x8x128xf32>
    tpu.vector_store %arg30[%c0_120, %c0_121, %c0_122], %353 {strides = array<i32>} : memref<1x8x128xf32, #tpu.memory_space<vmem>>, vector<1x8x128xf32>,
    return
  }
  func.func @transform_0(%arg0: i32) -> (i32, i32, i32) {
    %c0_i32 = arith.constant 0 : i32
    %c0_i32_0 = arith.constant 0 : i32
    %c0_i32_1 = arith.constant 0 : i32
    return %arg0, %c0_i32, %c0_i32_0 : i32, i32, i32
  }
  func.func @transform_1(%arg0: i32) -> (i32, i32) {
    %c0_i32 = arith.constant 0 : i32
    %c0_i32_0 = arith.constant 0 : i32
    %c0_i32_1 = arith.constant 0 : i32
    return %c0_i32, %c0_i32_0 : i32, i32
  }
  func.func @transform_2(%arg0: i32) -> (i32, i32) {
    %c0_i32 = arith.constant 0 : i32
    %c0_i32_0 = arith.constant 0 : i32
    %c0_i32_1 = arith.constant 0 : i32
    return %c0_i32, %c0_i32_0 : i32, i32
  }
  func.func @transform_3(%arg0: i32) -> (i32, i32) {
    %c0_i32 = arith.constant 0 : i32
    %c0_i32_0 = arith.constant 0 : i32
    %c0_i32_1 = arith.constant 0 : i32
    return %c0_i32, %c0_i32_0 : i32, i32
  }
  func.func @transform_4(%arg0: i32) -> (i32, i32) {
    %c0_i32 = arith.constant 0 : i32
    %c0_i32_0 = arith.constant 0 : i32
    %c0_i32_1 = arith.constant 0 : i32
    return %c0_i32, %c0_i32_0 : i32, i32
  }
  func.func @transform_5(%arg0: i32) -> (i32, i32) {
    %c0_i32 = arith.constant 0 : i32
    %c0_i32_0 = arith.constant 0 : i32
    %c0_i32_1 = arith.constant 0 : i32
    return %c0_i32, %c0_i32_0 : i32, i32
  }
  func.func @transform_6(%arg0: i32) -> (i32, i32) {
    %c0_i32 = arith.constant 0 : i32
    %c0_i32_0 = arith.constant 0 : i32
    %c0_i32_1 = arith.constant 0 : i32
    return %c0_i32, %c0_i32_0 : i32, i32
  }
  func.func @transform_7(%arg0: i32) -> (i32, i32) {
    %c0_i32 = arith.constant 0 : i32
    %c0_i32_0 = arith.constant 0 : i32
    %c0_i32_1 = arith.constant 0 : i32
    return %c0_i32, %c0_i32_0 : i32, i32
  }
  func.func @transform_8(%arg0: i32) -> (i32, i32) {
    %c0_i32 = arith.constant 0 : i32
    %c0_i32_0 = arith.constant 0 : i32
    %c0_i32_1 = arith.constant 0 : i32
    return %c0_i32, %c0_i32_0 : i32, i32
  }
  func.func @transform_9(%arg0: i32) -> (i32, i32) {
    %c0_i32 = arith.constant 0 : i32
    %c0_i32_0 = arith.constant 0 : i32
    %c0_i32_1 = arith.constant 0 : i32
    return %c0_i32, %c0_i32_0 : i32, i32
  }
  func.func @transform_10(%arg0: i32) -> (i32, i32) {
    %c0_i32 = arith.constant 0 : i32
    %c0_i32_0 = arith.constant 0 : i32
    %c0_i32_1 = arith.constant 0 : i32
    return %c0_i32, %c0_i32_0 : i32, i32
  }
  func.func @transform_11(%arg0: i32) -> (i32, i32) {
    %c0_i32 = arith.constant 0 : i32
    %c0_i32_0 = arith.constant 0 : i32
    %c0_i32_1 = arith.constant 0 : i32
    return %c0_i32, %c0_i32_0 : i32, i32
  }
  func.func @transform_12(%arg0: i32) -> (i32, i32) {
    %c0_i32 = arith.constant 0 : i32
    %c0_i32_0 = arith.constant 0 : i32
    %c0_i32_1 = arith.constant 0 : i32
    return %c0_i32, %c0_i32_0 : i32, i32
  }
  func.func @transform_13(%arg0: i32) -> (i32, i32) {
    %c0_i32 = arith.constant 0 : i32
    %c0_i32_0 = arith.constant 0 : i32
    %c0_i32_1 = arith.constant 0 : i32
    return %c0_i32, %c0_i32_0 : i32, i32
  }
  func.func @transform_14(%arg0: i32) -> (i32, i32) {
    %c0_i32 = arith.constant 0 : i32
    %c0_i32_0 = arith.constant 0 : i32
    %c0_i32_1 = arith.constant 0 : i32
    return %c0_i32, %c0_i32_0 : i32, i32
  }
  func.func @transform_15(%arg0: i32) -> (i32, i32) {
    %c0_i32 = arith.constant 0 : i32
    %c0_i32_0 = arith.constant 0 : i32
    %c0_i32_1 = arith.constant 0 : i32
    return %c0_i32, %c0_i32_0 : i32, i32
  }
  func.func @transform_16(%arg0: i32) -> (i32, i32) {
    %c0_i32 = arith.constant 0 : i32
    %c0_i32_0 = arith.constant 0 : i32
    %c0_i32_1 = arith.constant 0 : i32
    return %c0_i32, %c0_i32_0 : i32, i32
  }
  func.func @transform_17(%arg0: i32) -> (i32, i32) {
    %c0_i32 = arith.constant 0 : i32
    %c0_i32_0 = arith.constant 0 : i32
    %c0_i32_1 = arith.constant 0 : i32
    return %c0_i32, %c0_i32_0 : i32, i32
  }
  func.func @transform_18(%arg0: i32) -> (i32, i32) {
    %c0_i32 = arith.constant 0 : i32
    %c0_i32_0 = arith.constant 0 : i32
    %c0_i32_1 = arith.constant 0 : i32
    return %c0_i32, %c0_i32_0 : i32, i32
  }
  func.func @transform_19(%arg0: i32) -> (i32, i32) {
    %c0_i32 = arith.constant 0 : i32
    %c0_i32_0 = arith.constant 0 : i32
    %c0_i32_1 = arith.constant 0 : i32
    return %c0_i32, %c0_i32_0 : i32, i32
  }
  func.func @transform_20(%arg0: i32) -> (i32, i32) {
    %c0_i32 = arith.constant 0 : i32
    %c0_i32_0 = arith.constant 0 : i32
    %c0_i32_1 = arith.constant 0 : i32
    return %c0_i32, %c0_i32_0 : i32, i32
  }
  func.func @transform_21(%arg0: i32) -> (i32, i32) {
    %c0_i32 = arith.constant 0 : i32
    %c0_i32_0 = arith.constant 0 : i32
    %c0_i32_1 = arith.constant 0 : i32
    return %c0_i32, %c0_i32_0 : i32, i32
  }
  func.func @transform_22(%arg0: i32) -> (i32, i32) {
    %c0_i32 = arith.constant 0 : i32
    %c0_i32_0 = arith.constant 0 : i32
    %c0_i32_1 = arith.constant 0 : i32
    return %c0_i32, %c0_i32_0 : i32, i32
  }
  func.func @transform_23(%arg0: i32) -> (i32, i32) {
    %c0_i32 = arith.constant 0 : i32
    %c0_i32_0 = arith.constant 0 : i32
    %c0_i32_1 = arith.constant 0 : i32
    return %c0_i32, %c0_i32_0 : i32, i32
  }
  func.func @transform_24(%arg0: i32) -> (i32, i32) {
    %c0_i32 = arith.constant 0 : i32
    %c0_i32_0 = arith.constant 0 : i32
    %c0_i32_1 = arith.constant 0 : i32
    return %c0_i32, %c0_i32_0 : i32, i32
  }
  func.func @transform_25(%arg0: i32) -> (i32, i32) {
    %c0_i32 = arith.constant 0 : i32
    %c0_i32_0 = arith.constant 0 : i32
    %c0_i32_1 = arith.constant 0 : i32
    return %c0_i32, %c0_i32_0 : i32, i32
  }
  func.func @transform_26(%arg0: i32) -> (i32, i32) {
    %c0_i32 = arith.constant 0 : i32
    %c0_i32_0 = arith.constant 0 : i32
    %c0_i32_1 = arith.constant 0 : i32
    return %c0_i32, %c0_i32_0 : i32, i32
  }
  func.func @transform_27(%arg0: i32) -> (i32, i32) {
    %c0_i32 = arith.constant 0 : i32
    %c0_i32_0 = arith.constant 0 : i32
    %c0_i32_1 = arith.constant 0 : i32
    return %c0_i32, %c0_i32_0 : i32, i32
  }
  func.func @transform_28(%arg0: i32) -> (i32, i32) {
    %c0_i32 = arith.constant 0 : i32
    %c0_i32_0 = arith.constant 0 : i32
    %c0_i32_1 = arith.constant 0 : i32
    return %c0_i32, %c0_i32_0 : i32, i32
  }
  func.func @transform_29(%arg0: i32) -> (i32, i32, i32) {
    %c0_i32 = arith.constant 0 : i32
    %c0_i32_0 = arith.constant 0 : i32
    %c0_i32_1 = arith.constant 0 : i32
    return %arg0, %c0_i32, %c0_i32_0 : i32, i32, i32
  }
}

</mosaic_0001>

<llo_original>
// kernel: base_ctc_forward.7
$region0: #{base_ctc_forward.7}
  #allocation0 [shape = 'u32[]', space=smem, size = 0x4, offset = 0x4, fixed_abs, tag = 'smem constant byte address 0x4 - core index']
  #allocation1 [shape = 'u32[144,128]{1,0:T(1,128)}', space=vmem, size = 0x12000, scoped, tag = 'internal scratch']
  %s0 = inlined_call_operand.vmem [shape: f32[256,9], index: 0, kind: input, shape index: {}]
  %s1 = inlined_call_operand.vmem [shape: bf16[9,128], index: 1, kind: input, shape index: {}]
  %s2 = inlined_call_operand.vmem [shape: f32[1,128], index: 2, kind: input, shape index: {}]
  %s3 = inlined_call_operand.vmem [shape: f32[256,128], index: 3, kind: output, shape index: {}]
  %s4 = sld [smem:[#allocation0]]
  $region22: #{base_ctc_forward.7} parent=0
    _
  %s6 = ssub.s32 1, %s4
  %s7 = scalar_select 0, %s6, %s4
  // Predicated region
  $region2: #{base_ctc_forward.7} parent=0 // pred_check
    _
  $region3: #{base_ctc_forward.7} parent=0 // pred_check_branch
    %9 = sbr.rel (0) target = $region5
  $region4: #{base_ctc_forward.7} parent=0 // pred_region
    _
  $region5: #{base_ctc_forward.7} parent=0 // pred_fallthru
    _
  // Predicated region
  $region6: #{base_ctc_forward.7} parent=0 // pred_check
    _
  $region7: #{base_ctc_forward.7} parent=0 // pred_check_branch
    %11 = sbr.rel (0) target = $region9
  $region8: #{base_ctc_forward.7} parent=0 // pred_region
    _
  $region9: #{base_ctc_forward.7} parent=0 // pred_fallthru
    _
  // Predicated region
  $region10: #{base_ctc_forward.7} parent=0 // pred_check
    _
  $region11: #{base_ctc_forward.7} parent=0 // pred_check_branch
    %13 = sbr.rel (0) target = $region13
  $region12: #{base_ctc_forward.7} parent=0 // pred_region
    _
  $region13: #{base_ctc_forward.7} parent=0 // pred_fallthru
    _
  %v15 = vld [vmem:[%s0] sm:$0xff]
  %v16 = vld [vmem:[%s0 + $0x8] sm:$0xff]
  %v17 = vld [vmem:[%s0 + $0x10] sm:$0xff]
  %v18 = vld [vmem:[%s0 + $0x18] sm:$0xff]
  %v19 = vld [vmem:[%s0 + $0x20] sm:$0xff]
  %v20 = vld [vmem:[%s0 + $0x28] sm:$0xff]
  %v21 = vld [vmem:[%s0 + $0x30] sm:$0xff]
  %v22 = vld [vmem:[%s0 + $0x38] sm:$0xff]
  %v23 = vld [vmem:[%s0 + $0x40] sm:$0xff]
  %v24 = vld [vmem:[%s0 + $0x48] sm:$0xff]
  %v25 = vld [vmem:[%s0 + $0x50] sm:$0xff]
  %v26 = vld [vmem:[%s0 + $0x58] sm:$0xff]
  %v27 = vld [vmem:[%s0 + $0x60] sm:$0xff]
  %v28 = vld [vmem:[%s0 + $0x68] sm:$0xff]
  %v29 = vld [vmem:[%s0 + $0x70] sm:$0xff]
  %v30 = vld [vmem:[%s0 + $0x78] sm:$0xff]
  %v31 = vld [vmem:[%s0 + $0x80] sm:$0xff]
  %v32 = vld [vmem:[%s0 + $0x88] sm:$0xff]
  %v33 = vld [vmem:[%s0 + $0x90] sm:$0xff]
  %v34 = vld [vmem:[%s0 + $0x98] sm:$0xff]
  %v35 = vld [vmem:[%s0 + $0xa0] sm:$0xff]
  %v36 = vld [vmem:[%s0 + $0xa8] sm:$0xff]
  %v37 = vld [vmem:[%s0 + $0xb0] sm:$0xff]
  %v38 = vld [vmem:[%s0 + $0xb8] sm:$0xff]
  %v39 = vld [vmem:[%s0 + $0xc0] sm:$0xff]
  %v40 = vld [vmem:[%s0 + $0xc8] sm:$0xff]
  %v41 = vld [vmem:[%s0 + $0xd0] sm:$0xff]
  %v42 = vld [vmem:[%s0 + $0xd8] sm:$0xff]
  %v43 = vld [vmem:[%s0 + $0xe0] sm:$0xff]
  %v44 = vld [vmem:[%s0 + $0xe8] sm:$0xff]
  %v45 = vld [vmem:[%s0 + $0xf0] sm:$0xff]
  %v46 = vld [vmem:[%s0 + $0xf8] sm:$0xff]
  %v47 = vpack.c.bf16 %v16, %v15
  %v48 = vpack.c.bf16 %v18, %v17
  %v49 = vpack.c.bf16 %v20, %v19
  %v50 = vpack.c.bf16 %v22, %v21
  %v51 = vpack.c.bf16 %v24, %v23
  %v52 = vpack.c.bf16 %v26, %v25
  %v53 = vpack.c.bf16 %v28, %v27
  %v54 = vpack.c.bf16 %v30, %v29
  %v55 = vpack.c.bf16 %v32, %v31
  %v56 = vpack.c.bf16 %v34, %v33
  %v57 = vpack.c.bf16 %v36, %v35
  %v58 = vpack.c.bf16 %v38, %v37
  %v59 = vpack.c.bf16 %v40, %v39
  %v60 = vpack.c.bf16 %v42, %v41
  %v61 = vpack.c.bf16 %v44, %v43
  %v62 = vpack.c.bf16 %v46, %v45
  %v63 = vld [vmem:[%s1] sm:$0xf]
  %v64 = vld [vmem:[%s1 + $0x4] sm:$0x1]
  %v65 = vld [vmem:[%s2] sm:$0x1]
  %v67 = vlaneseq
  %v68 = vshrl.u32 %v67, 7
  %v69 = vsub.s32 0, %v68
  %v70 = vrot.slane %v65, %v69
  %v74 = vunpack.c.l.b16 %v63
  %v75 = vunpack.c.l.b16 %v64
  %v76 = vpack.c.b16 %v75, %v74
  %vm77 = vcmask 72704
  %v79 = vsel %vm77, %v47, 0
  %v82 = vsel %vm77, %v48, 0
  %v85 = vsel %vm77, %v49, 0
  %v88 = vsel %vm77, %v50, 0
  %v91 = vsel %vm77, %v51, 0
  %v94 = vsel %vm77, %v52, 0
  %v97 = vsel %vm77, %v53, 0
  %v100 = vsel %vm77, %v54, 0
  %v103 = vsel %vm77, %v55, 0
  %v106 = vsel %vm77, %v56, 0
  %v109 = vsel %vm77, %v57, 0
  %v112 = vsel %vm77, %v58, 0
  %v115 = vsel %vm77, %v59, 0
  %v118 = vsel %vm77, %v60, 0
  %v121 = vsel %vm77, %v61, 0
  %v124 = vsel %vm77, %v62, 0
  %vm126 = vcmask 1043456
  %vm127 = vcmask 1044480
  %v128 = vsel %vm126, 4294967295, 65535
  %v129 = vsel %vm127, %v128, 0
  %v131 = vand.u32 %v76, %v129
  %133 = vmatprep.subr.bf16.mxu0 0
  %134 = vmatpush1.bf16.msra.mxu0 %v131
  %135 = vmatprep.subr.bf16.mxu0 0
  %136 = vmatpush1.bf16.msra.mxu0 0
  %137 = vmatprep.subr.bf16.mxu0 0
  %138 = vmatpush1.bf16.msra.mxu0 0
  %139 = vmatprep.subr.bf16.mxu0 0
  %140 = vmatpush1.bf16.msra.mxu0 0
  %141 = vmatprep.subr.bf16.mxu0 0
  %142 = vmatpush1.bf16.msra.mxu0 0
  %143 = vmatprep.subr.bf16.mxu0 0
  %144 = vmatpush1.bf16.msra.mxu0 0
  %145 = vmatprep.subr.bf16.mxu0 0
  %146 = vmatpush1.bf16.msra.mxu0 0
  %147 = vmatprep.subr.bf16.mxu0 0
  %148 = vmatpush1.bf16.msra.mxu0 0
  %149 = vmatprep.subr.bf16.mxu0 0
  %150 = vmatpush1.bf16.msra.mxu0 0
  %151 = vmatprep.subr.bf16.mxu0 0
  %152 = vmatpush1.bf16.msra.mxu0 0
  %153 = vmatprep.subr.bf16.mxu0 0
  %154 = vmatpush1.bf16.msra.mxu0 0
  %155 = vmatprep.subr.bf16.mxu0 0
  %156 = vmatpush1.bf16.msra.mxu0 0
  %157 = vmatprep.subr.bf16.mxu0 0
  %158 = vmatpush1.bf16.msra.mxu0 0
  %159 = vmatprep.subr.bf16.mxu0 0
  %160 = vmatpush1.bf16.msra.mxu0 0
  %161 = vmatprep.subr.bf16.mxu0 0
  %162 = vmatpush1.bf16.msra.mxu0 0
  %163 = vmatprep.subr.bf16.mxu0 0
  %164 = vmatpush1.bf16.msra.mxu0 0
  %165 = vmatprep.mubr.bf16.mxu0 0
  %166 = vmatmul.mubr.bf16.gmra.mrb[0].mxu0 %v79
  %v167 = vpop.f32.mrb[0].mxu0
  %v168 = vadd.f32 %v70, %v167
  %v169 = vpop.f32.mrb[0].mxu0
  %v170 = vpop.f32.mrb[0].mxu0
  %v171 = vadd.f32 %v70, %v170
  %v172 = vpop.f32.mrb[0].mxu0
  %173 = vmatprep.mubr.bf16.mxu0 0
  %174 = vmatmul.mubr.bf16.gmra.mrb[0].mxu0 %v82
  %v175 = vpop.f32.mrb[0].mxu0
  %v176 = vadd.f32 %v70, %v175
  %v177 = vpop.f32.mrb[0].mxu0
  %v178 = vpop.f32.mrb[0].mxu0
  %v179 = vadd.f32 %v70, %v178
  %v180 = vpop.f32.mrb[0].mxu0
  %181 = vmatprep.mubr.bf16.mxu0 0
  %182 = vmatmul.mubr.bf16.gmra.mrb[0].mxu0 %v85
  %v183 = vpop.f32.mrb[0].mxu0
  %v184 = vadd.f32 %v70, %v183
  %v185 = vpop.f32.mrb[0].mxu0
  %v186 = vpop.f32.mrb[0].mxu0
  %v187 = vadd.f32 %v70, %v186
  %v188 = vpop.f32.mrb[0].mxu0
  %189 = vmatprep.mubr.bf16.mxu0 0
  %190 = vmatmul.mubr.bf16.gmra.mrb[0].mxu0 %v88
  %v191 = vpop.f32.mrb[0].mxu0
  %v192 = vadd.f32 %v70, %v191
  %v193 = vpop.f32.mrb[0].mxu0
  %v194 = vpop.f32.mrb[0].mxu0
  %v195 = vadd.f32 %v70, %v194
  %v196 = vpop.f32.mrb[0].mxu0
  %197 = vmatprep.mubr.bf16.mxu0 0
  %198 = vmatmul.mubr.bf16.gmra.mrb[0].mxu0 %v91
  %v199 = vpop.f32.mrb[0].mxu0
  %v200 = vadd.f32 %v70, %v199
  %v201 = vpop.f32.mrb[0].mxu0
  %v202 = vpop.f32.mrb[0].mxu0
  %v203 = vadd.f32 %v70, %v202
  %v204 = vpop.f32.mrb[0].mxu0
  %205 = vmatprep.mubr.bf16.mxu0 0
  %206 = vmatmul.mubr.bf16.gmra.mrb[0].mxu0 %v94
  %v207 = vpop.f32.mrb[0].mxu0
  %v208 = vadd.f32 %v70, %v207
  %v209 = vpop.f32.mrb[0].mxu0
  %v210 = vpop.f32.mrb[0].mxu0
  %v211 = vadd.f32 %v70, %v210
  %v212 = vpop.f32.mrb[0].mxu0
  %213 = vmatprep.mubr.bf16.mxu0 0
  %214 = vmatmul.mubr.bf16.gmra.mrb[0].mxu0 %v97
  %v215 = vpop.f32.mrb[0].mxu0
  %v216 = vadd.f32 %v70, %v215
  %v217 = vpop.f32.mrb[0].mxu0
  %v218 = vpop.f32.mrb[0].mxu0
  %v219 = vadd.f32 %v70, %v218
  %v220 = vpop.f32.mrb[0].mxu0
  %221 = vmatprep.mubr.bf16.mxu0 0
  %222 = vmatmul.mubr.bf16.gmra.mrb[0].mxu0 %v100
  %v223 = vpop.f32.mrb[0].mxu0
  %v224 = vadd.f32 %v70, %v223
  %v225 = vpop.f32.mrb[0].mxu0
  %v226 = vpop.f32.mrb[0].mxu0
  %v227 = vadd.f32 %v70, %v226
  %v228 = vpop.f32.mrb[0].mxu0
  %229 = vmatprep.mubr.bf16.mxu0 0
  %230 = vmatmul.mubr.bf16.gmra.mrb[0].mxu0 %v103
  %v231 = vpop.f32.mrb[0].mxu0
  %v232 = vadd.f32 %v70, %v231
  %v233 = vpop.f32.mrb[0].mxu0
  %v234 = vpop.f32.mrb[0].mxu0
  %v235 = vadd.f32 %v70, %v234
  %v236 = vpop.f32.mrb[0].mxu0
  %237 = vmatprep.mubr.bf16.mxu0 0
  %238 = vmatmul.mubr.bf16.gmra.mrb[0].mxu0 %v106
  %v239 = vpop.f32.mrb[0].mxu0
  %v240 = vadd.f32 %v70, %v239
  %v241 = vpop.f32.mrb[0].mxu0
  %v242 = vpop.f32.mrb[0].mxu0
  %v243 = vadd.f32 %v70, %v242
  %v244 = vpop.f32.mrb[0].mxu0
  %245 = vmatprep.mubr.bf16.mxu0 0
  %246 = vmatmul.mubr.bf16.gmra.mrb[0].mxu0 %v109
  %v247 = vpop.f32.mrb[0].mxu0
  %v248 = vadd.f32 %v70, %v247
  %v249 = vpop.f32.mrb[0].mxu0
  %v250 = vpop.f32.mrb[0].mxu0
  %v251 = vadd.f32 %v70, %v250
  %v252 = vpop.f32.mrb[0].mxu0
  %253 = vmatprep.mubr.bf16.mxu0 0
  %254 = vmatmul.mubr.bf16.gmra.mrb[0].mxu0 %v112
  %v255 = vpop.f32.mrb[0].mxu0
  %v256 = vadd.f32 %v70, %v255
  %v257 = vpop.f32.mrb[0].mxu0
  %v258 = vpop.f32.mrb[0].mxu0
  %v259 = vadd.f32 %v70, %v258
  %v260 = vpop.f32.mrb[0].mxu0
  %261 = vmatprep.mubr.bf16.mxu0 0
  %262 = vmatmul.mubr.bf16.gmra.mrb[0].mxu0 %v115
  %v263 = vpop.f32.mrb[0].mxu0
  %v264 = vadd.f32 %v70, %v263
  %v265 = vpop.f32.mrb[0].mxu0
  %v266 = vpop.f32.mrb[0].mxu0
  %v267 = vadd.f32 %v70, %v266
  %v268 = vpop.f32.mrb[0].mxu0
  %269 = vmatprep.mubr.bf16.mxu0 0
  %270 = vmatmul.mubr.bf16.gmra.mrb[0].mxu0 %v118
  %v271 = vpop.f32.mrb[0].mxu0
  %v272 = vadd.f32 %v70, %v271
  %v273 = vpop.f32.mrb[0].mxu0
  %v274 = vpop.f32.mrb[0].mxu0
  %v275 = vadd.f32 %v70, %v274
  %v276 = vpop.f32.mrb[0].mxu0
  %277 = vmatprep.mubr.bf16.mxu0 0
  %278 = vmatmul.mubr.bf16.gmra.mrb[0].mxu0 %v121
  %v279 = vpop.f32.mrb[0].mxu0
  %v280 = vadd.f32 %v70, %v279
  %v281 = vpop.f32.mrb[0].mxu0
  %v282 = vpop.f32.mrb[0].mxu0
  %v283 = vadd.f32 %v70, %v282
  %v284 = vpop.f32.mrb[0].mxu0
  %285 = vmatprep.mubr.bf16.mxu0 0
  %286 = vmatmul.mubr.bf16.gmra.mrb[0].mxu0 %v124
  %v287 = vpop.f32.mrb[0].mxu0
  %v288 = vadd.f32 %v70, %v287
  %v289 = vpop.f32.mrb[0].mxu0
  %v290 = vpop.f32.mrb[0].mxu0
  %v291 = vadd.f32 %v70, %v290
  %v292 = vpop.f32.mrb[0].mxu0
  %293 = vdwg.mxu0
  %v294 = vmax.f32 %v168, 0.0
  %v295 = vmax.f32 %v171, 0.0
  %v296 = vmax.f32 %v176, 0.0
  %v297 = vmax.f32 %v179, 0.0
  %v298 = vmax.f32 %v184, 0.0
  %v299 = vmax.f32 %v187, 0.0
  %v300 = vmax.f32 %v192, 0.0
  %v301 = vmax.f32 %v195, 0.0
  %v302 = vmax.f32 %v200, 0.0
  %v303 = vmax.f32 %v203, 0.0
  %v304 = vmax.f32 %v208, 0.0
  %v305 = vmax.f32 %v211, 0.0
  %v306 = vmax.f32 %v216, 0.0
  %v307 = vmax.f32 %v219, 0.0
  %v308 = vmax.f32 %v224, 0.0
  %v309 = vmax.f32 %v227, 0.0
  %v310 = vmax.f32 %v232, 0.0
  %v311 = vmax.f32 %v235, 0.0
  %v312 = vmax.f32 %v240, 0.0
  %v313 = vmax.f32 %v243, 0.0
  %v314 = vmax.f32 %v248, 0.0
  %v315 = vmax.f32 %v251, 0.0
  %v316 = vmax.f32 %v256, 0.0
  %v317 = vmax.f32 %v259, 0.0
  %v318 = vmax.f32 %v264, 0.0
  %v319 = vmax.f32 %v267, 0.0
  %v320 = vmax.f32 %v272, 0.0
  %v321 = vmax.f32 %v275, 0.0
  %v322 = vmax.f32 %v280, 0.0
  %v323 = vmax.f32 %v283, 0.0
  %v324 = vmax.f32 %v288, 0.0
  %v325 = vmax.f32 %v291, 0.0
  %326 = vst [vmem:[%s3] sm:$0xff] %v294
  %327 = vst [vmem:[%s3 + $0x8] sm:$0xff] %v295
  %328 = vst [vmem:[%s3 + $0x10] sm:$0xff] %v296
  %329 = vst [vmem:[%s3 + $0x18] sm:$0xff] %v297
  %330 = vst [vmem:[%s3 + $0x20] sm:$0xff] %v298
  %331 = vst [vmem:[%s3 + $0x28] sm:$0xff] %v299
  %332 = vst [vmem:[%s3 + $0x30] sm:$0xff] %v300
  %333 = vst [vmem:[%s3 + $0x38] sm:$0xff] %v301
  %334 = vst [vmem:[%s3 + $0x40] sm:$0xff] %v302
  %335 = vst [vmem:[%s3 + $0x48] sm:$0xff] %v303
  %336 = vst [vmem:[%s3 + $0x50] sm:$0xff] %v304
  %337 = vst [vmem:[%s3 + $0x58] sm:$0xff] %v305
  %338 = vst [vmem:[%s3 + $0x60] sm:$0xff] %v306
  %339 = vst [vmem:[%s3 + $0x68] sm:$0xff] %v307
  %340 = vst [vmem:[%s3 + $0x70] sm:$0xff] %v308
  %341 = vst [vmem:[%s3 + $0x78] sm:$0xff] %v309
  %342 = vst [vmem:[%s3 + $0x80] sm:$0xff] %v310
  %343 = vst [vmem:[%s3 + $0x88] sm:$0xff] %v311
  %344 = vst [vmem:[%s3 + $0x90] sm:$0xff] %v312
  %345 = vst [vmem:[%s3 + $0x98] sm:$0xff] %v313
  %346 = vst [vmem:[%s3 + $0xa0] sm:$0xff] %v314
  %347 = vst [vmem:[%s3 + $0xa8] sm:$0xff] %v315
  %348 = vst [vmem:[%s3 + $0xb0] sm:$0xff] %v316
  %349 = vst [vmem:[%s3 + $0xb8] sm:$0xff] %v317
  %350 = vst [vmem:[%s3 + $0xc0] sm:$0xff] %v318
  %351 = vst [vmem:[%s3 + $0xc8] sm:$0xff] %v319
  %352 = vst [vmem:[%s3 + $0xd0] sm:$0xff] %v320
  %353 = vst [vmem:[%s3 + $0xd8] sm:$0xff] %v321
  %354 = vst [vmem:[%s3 + $0xe0] sm:$0xff] %v322
  %355 = vst [vmem:[%s3 + $0xe8] sm:$0xff] %v323
  %356 = vst [vmem:[%s3 + $0xf0] sm:$0xff] %v324
  %357 = vst [vmem:[%s3 + $0xf8] sm:$0xff] %v325
  // Predicated region
  $region14: #{base_ctc_forward.7} parent=0 // pred_check
    _
  $region15: #{base_ctc_forward.7} parent=0 // pred_check_branch
    %359 = sbr.rel (0) target = $region17
  $region16: #{base_ctc_forward.7} parent=0 // pred_region
    _
  $region17: #{base_ctc_forward.7} parent=0 // pred_fallthru
    _
  // Predicated region
  $region18: #{base_ctc_forward.7} parent=0 // pred_check
    _
  $region19: #{base_ctc_forward.7} parent=0 // pred_check_branch
    %361 = sbr.rel (0) target = $region21
  $region20: #{base_ctc_forward.7} parent=0 // pred_region
    _
  $region21: #{base_ctc_forward.7} parent=0 // pred_fallthru
    _

// kernel: base_ctc_forward.9
$region0: #{base_ctc_forward.9}
  #allocation0 [shape = 'u32[]', space=smem, size = 0x4, offset = 0x4, fixed_abs, tag = 'smem constant byte address 0x4 - core index']
  #allocation1 [shape = 'u32[144,128]{1,0:T(1,128)}', space=vmem, size = 0x12000, scoped, tag = 'internal scratch']
  %s0 = inlined_call_operand.vmem [shape: f32[16,512], index: 0, kind: input, shape index: {}]
  %s1 = inlined_call_operand.vmem [shape: bf16[512,128], index: 1, kind: input, shape index: {}]
  %s2 = inlined_call_operand.vmem [shape: f32[1,128], index: 2, kind: input, shape index: {}]
  %s3 = inlined_call_operand.vmem [shape: f32[16,128], index: 3, kind: output, shape index: {}]
  %s4 = sld [smem:[#allocation0]]
  $region22: #{base_ctc_forward.9} parent=0
    _
  %s6 = ssub.s32 1, %s4
  %s7 = scalar_select 0, %s6, %s4
  // Predicated region
  $region2: #{base_ctc_forward.9} parent=0 // pred_check
    _
  $region3: #{base_ctc_forward.9} parent=0 // pred_check_branch
    %9 = sbr.rel (0) target = $region5
  $region4: #{base_ctc_forward.9} parent=0 // pred_region
    _
  $region5: #{base_ctc_forward.9} parent=0 // pred_fallthru
    _
  // Predicated region
  $region6: #{base_ctc_forward.9} parent=0 // pred_check
    _
  $region7: #{base_ctc_forward.9} parent=0 // pred_check_branch
    %11 = sbr.rel (0) target = $region9
  $region8: #{base_ctc_forward.9} parent=0 // pred_region
    _
  $region9: #{base_ctc_forward.9} parent=0 // pred_fallthru
    _
  // Predicated region
  $region10: #{base_ctc_forward.9} parent=0 // pred_check
    _
  $region11: #{base_ctc_forward.9} parent=0 // pred_check_branch
    %13 = sbr.rel (0) target = $region13
  $region12: #{base_ctc_forward.9} parent=0 // pred_region
    _
  $region13: #{base_ctc_forward.9} parent=0 // pred_fallthru
    _
  %v15 = vld [vmem:[%s0] sm:$0xff]
  %v16 = vld [vmem:[%s0 + $0x8] sm:$0xff]
  %v17 = vld [vmem:[%s0 + $0x10] sm:$0xff]
  %v18 = vld [vmem:[%s0 + $0x18] sm:$0xff]
  %v19 = vld [vmem:[%s0 + $0x20] sm:$0xff]
  %v20 = vld [vmem:[%s0 + $0x28] sm:$0xff]
  %v21 = vld [vmem:[%s0 + $0x30] sm:$0xff]
  %v22 = vld [vmem:[%s0 + $0x38] sm:$0xff]
  %v23 = vpack.c.bf16 %v19, %v15
  %v24 = vpack.c.bf16 %v20, %v16
  %v25 = vpack.c.bf16 %v21, %v17
  %v26 = vpack.c.bf16 %v22, %v18
  %v27 = vld [vmem:[%s1] sm:$0xf]
  %v28 = vld [vmem:[%s1 + $0x4] sm:$0xf]
  %v29 = vld [vmem:[%s1 + $0x8] sm:$0xf]
  %v30 = vld [vmem:[%s1 + $0xc] sm:$0xf]
  %v31 = vld [vmem:[%s1 + $0x10] sm:$0xf]
  %v32 = vld [vmem:[%s1 + $0x14] sm:$0xf]
  %v33 = vld [vmem:[%s1 + $0x18] sm:$0xf]
  %v34 = vld [vmem:[%s1 + $0x1c] sm:$0xf]
  %v35 = vld [vmem:[%s1 + $0x20] sm:$0xf]
  %v36 = vld [vmem:[%s1 + $0x24] sm:$0xf]
  %v37 = vld [vmem:[%s1 + $0x28] sm:$0xf]
  %v38 = vld [vmem:[%s1 + $0x2c] sm:$0xf]
  %v39 = vld [vmem:[%s1 + $0x30] sm:$0xf]
  %v40 = vld [vmem:[%s1 + $0x34] sm:$0xf]
  %v41 = vld [vmem:[%s1 + $0x38] sm:$0xf]
  %v42 = vld [vmem:[%s1 + $0x3c] sm:$0xf]
  %v43 = vld [vmem:[%s1 + $0x40] sm:$0xf]
  %v44 = vld [vmem:[%s1 + $0x44] sm:$0xf]
  %v45 = vld [vmem:[%s1 + $0x48] sm:$0xf]
  %v46 = vld [vmem:[%s1 + $0x4c] sm:$0xf]
  %v47 = vld [vmem:[%s1 + $0x50] sm:$0xf]
  %v48 = vld [vmem:[%s1 + $0x54] sm:$0xf]
  %v49 = vld [vmem:[%s1 + $0x58] sm:$0xf]
  %v50 = vld [vmem:[%s1 + $0x5c] sm:$0xf]
  %v51 = vld [vmem:[%s1 + $0x60] sm:$0xf]
  %v52 = vld [vmem:[%s1 + $0x64] sm:$0xf]
  %v53 = vld [vmem:[%s1 + $0x68] sm:$0xf]
  %v54 = vld [vmem:[%s1 + $0x6c] sm:$0xf]
  %v55 = vld [vmem:[%s1 + $0x70] sm:$0xf]
  %v56 = vld [vmem:[%s1 + $0x74] sm:$0xf]
  %v57 = vld [vmem:[%s1 + $0x78] sm:$0xf]
  %v58 = vld [vmem:[%s1 + $0x7c] sm:$0xf]
  %v59 = vld [vmem:[%s1 + $0x80] sm:$0xf]
  %v60 = vld [vmem:[%s1 + $0x84] sm:$0xf]
  %v61 = vld [vmem:[%s1 + $0x88] sm:$0xf]
  %v62 = vld [vmem:[%s1 + $0x8c] sm:$0xf]
  %v63 = vld [vmem:[%s1 + $0x90] sm:$0xf]
  %v64 = vld [vmem:[%s1 + $0x94] sm:$0xf]
  %v65 = vld [vmem:[%s1 + $0x98] sm:$0xf]
  %v66 = vld [vmem:[%s1 + $0x9c] sm:$0xf]
  %v67 = vld [vmem:[%s1 + $0xa0] sm:$0xf]
  %v68 = vld [vmem:[%s1 + $0xa4] sm:$0xf]
  %v69 = vld [vmem:[%s1 + $0xa8] sm:$0xf]
  %v70 = vld [vmem:[%s1 + $0xac] sm:$0xf]
  %v71 = vld [vmem:[%s1 + $0xb0] sm:$0xf]
  %v72 = vld [vmem:[%s1 + $0xb4] sm:$0xf]
  %v73 = vld [vmem:[%s1 + $0xb8] sm:$0xf]
  %v74 = vld [vmem:[%s1 + $0xbc] sm:$0xf]
  %v75 = vld [vmem:[%s1 + $0xc0] sm:$0xf]
  %v76 = vld [vmem:[%s1 + $0xc4] sm:$0xf]
  %v77 = vld [vmem:[%s1 + $0xc8] sm:$0xf]
  %v78 = vld [vmem:[%s1 + $0xcc] sm:$0xf]
  %v79 = vld [vmem:[%s1 + $0xd0] sm:$0xf]
  %v80 = vld [vmem:[%s1 + $0xd4] sm:$0xf]
  %v81 = vld [vmem:[%s1 + $0xd8] sm:$0xf]
  %v82 = vld [vmem:[%s1 + $0xdc] sm:$0xf]
  %v83 = vld [vmem:[%s1 + $0xe0] sm:$0xf]
  %v84 = vld [vmem:[%s1 + $0xe4] sm:$0xf]
  %v85 = vld [vmem:[%s1 + $0xe8] sm:$0xf]
  %v86 = vld [vmem:[%s1 + $0xec] sm:$0xf]
  %v87 = vld [vmem:[%s1 + $0xf0] sm:$0xf]
  %v88 = vld [vmem:[%s1 + $0xf4] sm:$0xf]
  %v89 = vld [vmem:[%s1 + $0xf8] sm:$0xf]
  %v90 = vld [vmem:[%s1 + $0xfc] sm:$0xf]
  %v91 = vld [vmem:[%s2] sm:$0x1]
  %v93 = vlaneseq
  %v94 = vshrl.u32 %v93, 7
  %v95 = vsub.s32 0, %v94
  %v96 = vrot.slane %v91, %v95
  %v162 = vunpack.c.l.b16 %v27
  %v163 = vunpack.c.l.b16 %v28
  %v164 = vunpack.c.l.b16 %v29
  %v165 = vunpack.c.l.b16 %v30
  %v166 = vunpack.c.l.b16 %v31
  %v167 = vunpack.c.l.b16 %v32
  %v168 = vunpack.c.l.b16 %v33
  %v169 = vunpack.c.l.b16 %v34
  %v170 = vunpack.c.l.b16 %v35
  %v171 = vunpack.c.l.b16 %v36
  %v172 = vunpack.c.l.b16 %v37
  %v173 = vunpack.c.l.b16 %v38
  %v174 = vunpack.c.l.b16 %v39
  %v175 = vunpack.c.l.b16 %v40
  %v176 = vunpack.c.l.b16 %v41
  %v177 = vunpack.c.l.b16 %v42
  %v178 = vunpack.c.l.b16 %v43
  %v179 = vunpack.c.l.b16 %v44
  %v180 = vunpack.c.l.b16 %v45
  %v181 = vunpack.c.l.b16 %v46
  %v182 = vunpack.c.l.b16 %v47
  %v183 = vunpack.c.l.b16 %v48
  %v184 = vunpack.c.l.b16 %v49
  %v185 = vunpack.c.l.b16 %v50
  %v186 = vunpack.c.l.b16 %v51
  %v187 = vunpack.c.l.b16 %v52
  %v188 = vunpack.c.l.b16 %v53
  %v189 = vunpack.c.l.b16 %v54
  %v190 = vunpack.c.l.b16 %v55
  %v191 = vunpack.c.l.b16 %v56
  %v192 = vunpack.c.l.b16 %v57
  %v193 = vunpack.c.l.b16 %v58
  %v194 = vunpack.c.l.b16 %v59
  %v195 = vunpack.c.l.b16 %v60
  %v196 = vunpack.c.l.b16 %v61
  %v197 = vunpack.c.l.b16 %v62
  %v198 = vunpack.c.l.b16 %v63
  %v199 = vunpack.c.l.b16 %v64
  %v200 = vunpack.c.l.b16 %v65
  %v201 = vunpack.c.l.b16 %v66
  %v202 = vunpack.c.l.b16 %v67
  %v203 = vunpack.c.l.b16 %v68
  %v204 = vunpack.c.l.b16 %v69
  %v205 = vunpack.c.l.b16 %v70
  %v206 = vunpack.c.l.b16 %v71
  %v207 = vunpack.c.l.b16 %v72
  %v208 = vunpack.c.l.b16 %v73
  %v209 = vunpack.c.l.b16 %v74
  %v210 = vunpack.c.l.b16 %v75
  %v211 = vunpack.c.l.b16 %v76
  %v212 = vunpack.c.l.b16 %v77
  %v213 = vunpack.c.l.b16 %v78
  %v214 = vunpack.c.l.b16 %v79
  %v215 = vunpack.c.l.b16 %v80
  %v216 = vunpack.c.l.b16 %v81
  %v217 = vunpack.c.l.b16 %v82
  %v218 = vunpack.c.l.b16 %v83
  %v219 = vunpack.c.l.b16 %v84
  %v220 = vunpack.c.l.b16 %v85
  %v221 = vunpack.c.l.b16 %v86
  %v222 = vunpack.c.l.b16 %v87
  %v223 = vunpack.c.l.b16 %v88
  %v224 = vunpack.c.l.b16 %v89
  %v225 = vunpack.c.l.b16 %v90
  %v226 = vpack.c.b16 %v163, %v162
  %v227 = vpack.c.b16 %v165, %v164
  %v228 = vpack.c.b16 %v167, %v166
  %v229 = vpack.c.b16 %v169, %v168
  %v230 = vpack.c.b16 %v171, %v170
  %v231 = vpack.c.b16 %v173, %v172
  %v232 = vpack.c.b16 %v175, %v174
  %v233 = vpack.c.b16 %v177, %v176
  %v234 = vpack.c.b16 %v179, %v178
  %v235 = vpack.c.b16 %v181, %v180
  %v236 = vpack.c.b16 %v183, %v182
  %v237 = vpack.c.b16 %v185, %v184
  %v238 = vpack.c.b16 %v187, %v186
  %v239 = vpack.c.b16 %v189, %v188
  %v240 = vpack.c.b16 %v191, %v190
  %v241 = vpack.c.b16 %v193, %v192
  %v242 = vpack.c.b16 %v195, %v194
  %v243 = vpack.c.b16 %v197, %v196
  %v244 = vpack.c.b16 %v199, %v198
  %v245 = vpack.c.b16 %v201, %v200
  %v246 = vpack.c.b16 %v203, %v202
  %v247 = vpack.c.b16 %v205, %v204
  %v248 = vpack.c.b16 %v207, %v206
  %v249 = vpack.c.b16 %v209, %v208
  %v250 = vpack.c.b16 %v211, %v210
  %v251 = vpack.c.b16 %v213, %v212
  %v252 = vpack.c.b16 %v215, %v214
  %v253 = vpack.c.b16 %v217, %v216
  %v254 = vpack.c.b16 %v219, %v218
  %v255 = vpack.c.b16 %v221, %v220
  %v256 = vpack.c.b16 %v223, %v222
  %v257 = vpack.c.b16 %v225, %v224
  %290 = vmatprep.subr.bf16.mxu0 0
  %291 = vmatpush1.bf16.msra.mxu0 %v226
  %292 = vmatprep.subr.bf16.mxu0 0
  %293 = vmatpush1.bf16.msra.mxu0 %v227
  %294 = vmatprep.subr.bf16.mxu0 0
  %295 = vmatpush1.bf16.msra.mxu0 %v228
  %296 = vmatprep.subr.bf16.mxu0 0
  %297 = vmatpush1.bf16.msra.mxu0 %v229
  %298 = vmatprep.subr.bf16.mxu0 0
  %299 = vmatpush1.bf16.msra.mxu0 %v230
  %300 = vmatprep.subr.bf16.mxu0 0
  %301 = vmatpush1.bf16.msra.mxu0 %v231
  %302 = vmatprep.subr.bf16.mxu0 0
  %303 = vmatpush1.bf16.msra.mxu0 %v232
  %304 = vmatprep.subr.bf16.mxu0 0
  %305 = vmatpush1.bf16.msra.mxu0 %v233
  %306 = vmatprep.subr.bf16.mxu0 0
  %307 = vmatpush1.bf16.msra.mxu0 %v234
  %308 = vmatprep.subr.bf16.mxu0 0
  %309 = vmatpush1.bf16.msra.mxu0 %v235
  %310 = vmatprep.subr.bf16.mxu0 0
  %311 = vmatpush1.bf16.msra.mxu0 %v236
  %312 = vmatprep.subr.bf16.mxu0 0
  %313 = vmatpush1.bf16.msra.mxu0 %v237
  %314 = vmatprep.subr.bf16.mxu0 0
  %315 = vmatpush1.bf16.msra.mxu0 %v238
  %316 = vmatprep.subr.bf16.mxu0 0
  %317 = vmatpush1.bf16.msra.mxu0 %v239
  %318 = vmatprep.subr.bf16.mxu0 0
  %319 = vmatpush1.bf16.msra.mxu0 %v240
  %320 = vmatprep.subr.bf16.mxu0 0
  %321 = vmatpush1.bf16.msra.mxu0 %v241
  %322 = vmatprep.mubr.bf16.mxu0 %v24
  %323 = vmatmul.mubr.bf16.gmra.mrb[0].mxu0 %v23
  %v324 = vpop.f32.mrb[0].mxu0
  %v325 = vadd.f32 %v96, %v324
  %v326 = vpop.f32.mrb[0].mxu0
  %v327 = vpop.f32.mrb[0].mxu0
  %v328 = vadd.f32 %v96, %v327
  %v329 = vpop.f32.mrb[0].mxu0
  %330 = vdwg.mxu0
  %331 = vmatprep.subr.bf16.mxu0 0
  %332 = vmatpush1.bf16.msra.mxu0 %v242
  %333 = vmatprep.subr.bf16.mxu0 0
  %334 = vmatpush1.bf16.msra.mxu0 %v243
  %335 = vmatprep.subr.bf16.mxu0 0
  %336 = vmatpush1.bf16.msra.mxu0 %v244
  %337 = vmatprep.subr.bf16.mxu0 0
  %338 = vmatpush1.bf16.msra.mxu0 %v245
  %339 = vmatprep.subr.bf16.mxu0 0
  %340 = vmatpush1.bf16.msra.mxu0 %v246
  %341 = vmatprep.subr.bf16.mxu0 0
  %342 = vmatpush1.bf16.msra.mxu0 %v247
  %343 = vmatprep.subr.bf16.mxu0 0
  %344 = vmatpush1.bf16.msra.mxu0 %v248
  %345 = vmatprep.subr.bf16.mxu0 0
  %346 = vmatpush1.bf16.msra.mxu0 %v249
  %347 = vmatprep.subr.bf16.mxu0 0
  %348 = vmatpush1.bf16.msra.mxu0 %v250
  %349 = vmatprep.subr.bf16.mxu0 0
  %350 = vmatpush1.bf16.msra.mxu0 %v251
  %351 = vmatprep.subr.bf16.mxu0 0
  %352 = vmatpush1.bf16.msra.mxu0 %v252
  %353 = vmatprep.subr.bf16.mxu0 0
  %354 = vmatpush1.bf16.msra.mxu0 %v253
  %355 = vmatprep.subr.bf16.mxu0 0
  %356 = vmatpush1.bf16.msra.mxu0 %v254
  %357 = vmatprep.subr.bf16.mxu0 0
  %358 = vmatpush1.bf16.msra.mxu0 %v255
  %359 = vmatprep.subr.bf16.mxu0 0
  %360 = vmatpush1.bf16.msra.mxu0 %v256
  %361 = vmatprep.subr.bf16.mxu0 0
  %362 = vmatpush1.bf16.msra.mxu0 %v257
  %363 = vmatprep.mubr.bf16.mxu0 %v26
  %364 = vmatmul.mubr.bf16.gmra.mrb[0].mxu0 %v25
  %v365 = vpop.f32.mrb[0].mxu0
  %v366 = vadd.f32 %v325, %v365
  %v367 = vpop.f32.mrb[0].mxu0
  %v368 = vpop.f32.mrb[0].mxu0
  %v369 = vadd.f32 %v328, %v368
  %v370 = vpop.f32.mrb[0].mxu0
  %371 = vdwg.mxu0
  %372 = vst [vmem:[%s3] sm:$0xff] %v366
  %373 = vst [vmem:[%s3 + $0x8] sm:$0xff] %v369
  // Predicated region
  $region14: #{base_ctc_forward.9} parent=0 // pred_check
    _
  $region15: #{base_ctc_forward.9} parent=0 // pred_check_branch
    %375 = sbr.rel (0) target = $region17
  $region16: #{base_ctc_forward.9} parent=0 // pred_region
    _
  $region17: #{base_ctc_forward.9} parent=0 // pred_fallthru
    _
  // Predicated region
  $region18: #{base_ctc_forward.9} parent=0 // pred_check
    _
  $region19: #{base_ctc_forward.9} parent=0 // pred_check_branch
    %377 = sbr.rel (0) target = $region21
  $region20: #{base_ctc_forward.9} parent=0 // pred_region
    _
  $region21: #{base_ctc_forward.9} parent=0 // pred_fallthru
    _

// kernel: base_ctc_forward.8
$region0: #{base_ctc_forward.8}
  #allocation0 [shape = 'u32[]', space=smem, size = 0x4, offset = 0x4, fixed_abs, tag = 'smem constant byte address 0x4 - core index']
  #allocation1 [shape = 'u32[144,128]{1,0:T(1,128)}', space=vmem, size = 0x12000, scoped, tag = 'internal scratch']
  %s0 = inlined_call_operand.vmem [shape: f32[64,1152], index: 0, kind: input, shape index: {}]
  %s1 = inlined_call_operand.vmem [shape: bf16[1152,128], index: 1, kind: input, shape index: {}]
  %s2 = inlined_call_operand.vmem [shape: f32[1,128], index: 2, kind: input, shape index: {}]
  %s3 = inlined_call_operand.vmem [shape: f32[64,128], index: 3, kind: output, shape index: {}]
  %s4 = sld [smem:[#allocation0]]
  $region22: #{base_ctc_forward.8} parent=0
    _
  %s6 = ssub.s32 1, %s4
  %s7 = scalar_select 0, %s6, %s4
  // Predicated region
  $region2: #{base_ctc_forward.8} parent=0 // pred_check
    _
  $region3: #{base_ctc_forward.8} parent=0 // pred_check_branch
    %9 = sbr.rel (0) target = $region5
  $region4: #{base_ctc_forward.8} parent=0 // pred_region
    _
  $region5: #{base_ctc_forward.8} parent=0 // pred_fallthru
    _
  // Predicated region
  $region6: #{base_ctc_forward.8} parent=0 // pred_check
    _
  $region7: #{base_ctc_forward.8} parent=0 // pred_check_branch
    %11 = sbr.rel (0) target = $region9
  $region8: #{base_ctc_forward.8} parent=0 // pred_region
    _
  $region9: #{base_ctc_forward.8} parent=0 // pred_fallthru
    _
  // Predicated region
  $region10: #{base_ctc_forward.8} parent=0 // pred_check
    _
  $region11: #{base_ctc_forward.8} parent=0 // pred_check_branch
    %13 = sbr.rel (0) target = $region13
  $region12: #{base_ctc_forward.8} parent=0 // pred_region
    _
  $region13: #{base_ctc_forward.8} parent=0 // pred_fallthru
    _
  %v15 = vld [vmem:[%s0] sm:$0xff]
  %v16 = vld [vmem:[%s0 + $0x8] sm:$0xff]
  %v17 = vld [vmem:[%s0 + $0x10] sm:$0xff]
  %v18 = vld [vmem:[%s0 + $0x18] sm:$0xff]
  %v19 = vld [vmem:[%s0 + $0x20] sm:$0xff]
  %v20 = vld [vmem:[%s0 + $0x28] sm:$0xff]
  %v21 = vld [vmem:[%s0 + $0x30] sm:$0xff]
  %v22 = vld [vmem:[%s0 + $0x38] sm:$0xff]
  %v23 = vld [vmem:[%s0 + $0x40] sm:$0xff]
  %v24 = vld [vmem:[%s0 + $0x48] sm:$0xff]
  %v25 = vld [vmem:[%s0 + $0x50] sm:$0xff]
  %v26 = vld [vmem:[%s0 + $0x58] sm:$0xff]
  %v27 = vld [vmem:[%s0 + $0x60] sm:$0xff]
  %v28 = vld [vmem:[%s0 + $0x68] sm:$0xff]
  %v29 = vld [vmem:[%s0 + $0x70] sm:$0xff]
  %v30 = vld [vmem:[%s0 + $0x78] sm:$0xff]
  %v31 = vld [vmem:[%s0 + $0x80] sm:$0xff]
  %v32 = vld [vmem:[%s0 + $0x88] sm:$0xff]
  %v33 = vld [vmem:[%s0 + $0x90] sm:$0xff]
  %v34 = vld [vmem:[%s0 + $0x98] sm:$0xff]
  %v35 = vld [vmem:[%s0 + $0xa0] sm:$0xff]
  %v36 = vld [vmem:[%s0 + $0xa8] sm:$0xff]
  %v37 = vld [vmem:[%s0 + $0xb0] sm:$0xff]
  %v38 = vld [vmem:[%s0 + $0xb8] sm:$0xff]
  %v39 = vld [vmem:[%s0 + $0xc0] sm:$0xff]
  %v40 = vld [vmem:[%s0 + $0xc8] sm:$0xff]
  %v41 = vld [vmem:[%s0 + $0xd0] sm:$0xff]
  %v42 = vld [vmem:[%s0 + $0xd8] sm:$0xff]
  %v43 = vld [vmem:[%s0 + $0xe0] sm:$0xff]
  %v44 = vld [vmem:[%s0 + $0xe8] sm:$0xff]
  %v45 = vld [vmem:[%s0 + $0xf0] sm:$0xff]
  %v46 = vld [vmem:[%s0 + $0xf8] sm:$0xff]
  %v47 = vld [vmem:[%s0 + $0x100] sm:$0xff]
  %v48 = vld [vmem:[%s0 + $0x108] sm:$0xff]
  %v49 = vld [vmem:[%s0 + $0x110] sm:$0xff]
  %v50 = vld [vmem:[%s0 + $0x118] sm:$0xff]
  %v51 = vld [vmem:[%s0 + $0x120] sm:$0xff]
  %v52 = vld [vmem:[%s0 + $0x128] sm:$0xff]
  %v53 = vld [vmem:[%s0 + $0x130] sm:$0xff]
  %v54 = vld [vmem:[%s0 + $0x138] sm:$0xff]
  %v55 = vld [vmem:[%s0 + $0x140] sm:$0xff]
  %v56 = vld [vmem:[%s0 + $0x148] sm:$0xff]
  %v57 = vld [vmem:[%s0 + $0x150] sm:$0xff]
  %v58 = vld [vmem:[%s0 + $0x158] sm:$0xff]
  %v59 = vld [vmem:[%s0 + $0x160] sm:$0xff]
  %v60 = vld [vmem:[%s0 + $0x168] sm:$0xff]
  %v61 = vld [vmem:[%s0 + $0x170] sm:$0xff]
  %v62 = vld [vmem:[%s0 + $0x178] sm:$0xff]
  %v63 = vld [vmem:[%s0 + $0x180] sm:$0xff]
  %v64 = vld [vmem:[%s0 + $0x188] sm:$0xff]
  %v65 = vld [vmem:[%s0 + $0x190] sm:$0xff]
  %v66 = vld [vmem:[%s0 + $0x198] sm:$0xff]
  %v67 = vld [vmem:[%s0 + $0x1a0] sm:$0xff]
  %v68 = vld [vmem:[%s0 + $0x1a8] sm:$0xff]
  %v69 = vld [vmem:[%s0 + $0x1b0] sm:$0xff]
  %v70 = vld [vmem:[%s0 + $0x1b8] sm:$0xff]
  %v71 = vld [vmem:[%s0 + $0x1c0] sm:$0xff]
  %v72 = vld [vmem:[%s0 + $0x1c8] sm:$0xff]
  %v73 = vld [vmem:[%s0 + $0x1d0] sm:$0xff]
  %v74 = vld [vmem:[%s0 + $0x1d8] sm:$0xff]
  %v75 = vld [vmem:[%s0 + $0x1e0] sm:$0xff]
  %v76 = vld [vmem:[%s0 + $0x1e8] sm:$0xff]
  %v77 = vld [vmem:[%s0 + $0x1f0] sm:$0xff]
  %v78 = vld [vmem:[%s0 + $0x1f8] sm:$0xff]
  %v79 = vld [vmem:[%s0 + $0x200] sm:$0xff]
  %v80 = vld [vmem:[%s0 + $0x208] sm:$0xff]
  %v81 = vld [vmem:[%s0 + $0x210] sm:$0xff]
  %v82 = vld [vmem:[%s0 + $0x218] sm:$0xff]
  %v83 = vld [vmem:[%s0 + $0x220] sm:$0xff]
  %v84 = vld [vmem:[%s0 + $0x228] sm:$0xff]
  %v85 = vld [vmem:[%s0 + $0x230] sm:$0xff]
  %v86 = vld [vmem:[%s0 + $0x238] sm:$0xff]
  %v87 = vpack.c.bf16 %v24, %v15
  %v88 = vpack.c.bf16 %v25, %v16
  %v89 = vpack.c.bf16 %v26, %v17
  %v90 = vpack.c.bf16 %v27, %v18
  %v91 = vpack.c.bf16 %v28, %v19
  %v92 = vpack.c.bf16 %v29, %v20
  %v93 = vpack.c.bf16 %v30, %v21
  %v94 = vpack.c.bf16 %v31, %v22
  %v95 = vpack.c.bf16 %v32, %v23
  %v96 = vpack.c.bf16 %v42, %v33
  %v97 = vpack.c.bf16 %v43, %v34
  %v98 = vpack.c.bf16 %v44, %v35
  %v99 = vpack.c.bf16 %v45, %v36
  %v100 = vpack.c.bf16 %v46, %v37
  %v101 = vpack.c.bf16 %v47, %v38
  %v102 = vpack.c.bf16 %v48, %v39
  %v103 = vpack.c.bf16 %v49, %v40
  %v104 = vpack.c.bf16 %v50, %v41
  %v105 = vpack.c.bf16 %v60, %v51
  %v106 = vpack.c.bf16 %v61, %v52
  %v107 = vpack.c.bf16 %v62, %v53
  %v108 = vpack.c.bf16 %v63, %v54
  %v109 = vpack.c.bf16 %v64, %v55
  %v110 = vpack.c.bf16 %v65, %v56
  %v111 = vpack.c.bf16 %v66, %v57
  %v112 = vpack.c.bf16 %v67, %v58
  %v113 = vpack.c.bf16 %v68, %v59
  %v114 = vpack.c.bf16 %v78, %v69
  %v115 = vpack.c.bf16 %v79, %v70
  %v116 = vpack.c.bf16 %v80, %v71
  %v117 = vpack.c.bf16 %v81, %v72
  %v118 = vpack.c.bf16 %v82, %v73
  %v119 = vpack.c.bf16 %v83, %v74
  %v120 = vpack.c.bf16 %v84, %v75
  %v121 = vpack.c.bf16 %v85, %v76
  %v122 = vpack.c.bf16 %v86, %v77
  %v123 = vld [vmem:[%s1] sm:$0xf]
  %v124 = vld [vmem:[%s1 + $0x4] sm:$0xf]
  %v125 = vld [vmem:[%s1 + $0x8] sm:$0xf]
  %v126 = vld [vmem:[%s1 + $0xc] sm:$0xf]
  %v127 = vld [vmem:[%s1 + $0x10] sm:$0xf]
  %v128 = vld [vmem:[%s1 + $0x14] sm:$0xf]
  %v129 = vld [vmem:[%s1 + $0x18] sm:$0xf]
  %v130 = vld [vmem:[%s1 + $0x1c] sm:$0xf]
  %v131 = vld [vmem:[%s1 + $0x20] sm:$0xf]
  %v132 = vld [vmem:[%s1 + $0x24] sm:$0xf]
  %v133 = vld [vmem:[%s1 + $0x28] sm:$0xf]
  %v134 = vld [vmem:[%s1 + $0x2c] sm:$0xf]
  %v135 = vld [vmem:[%s1 + $0x30] sm:$0xf]
  %v136 = vld [vmem:[%s1 + $0x34] sm:$0xf]
  %v137 = vld [vmem:[%s1 + $0x38] sm:$0xf]
  %v138 = vld [vmem:[%s1 + $0x3c] sm:$0xf]
  %v139 = vld [vmem:[%s1 + $0x40] sm:$0xf]
  %v140 = vld [vmem:[%s1 + $0x44] sm:$0xf]
  %v141 = vld [vmem:[%s1 + $0x48] sm:$0xf]
  %v142 = vld [vmem:[%s1 + $0x4c] sm:$0xf]
  %v143 = vld [vmem:[%s1 + $0x50] sm:$0xf]
  %v144 = vld [vmem:[%s1 + $0x54] sm:$0xf]
  %v145 = vld [vmem:[%s1 + $0x58] sm:$0xf]
  %v146 = vld [vmem:[%s1 + $0x5c] sm:$0xf]
  %v147 = vld [vmem:[%s1 + $0x60] sm:$0xf]
  %v148 = vld [vmem:[%s1 + $0x64] sm:$0xf]
  %v149 = vld [vmem:[%s1 + $0x68] sm:$0xf]
  %v150 = vld [vmem:[%s1 + $0x6c] sm:$0xf]
  %v151 = vld [vmem:[%s1 + $0x70] sm:$0xf]
  %v152 = vld [vmem:[%s1 + $0x74] sm:$0xf]
  %v153 = vld [vmem:[%s1 + $0x78] sm:$0xf]
  %v154 = vld [vmem:[%s1 + $0x7c] sm:$0xf]
  %v155 = vld [vmem:[%s1 + $0x80] sm:$0xf]
  %v156 = vld [vmem:[%s1 + $0x84] sm:$0xf]
  %v157 = vld [vmem:[%s1 + $0x88] sm:$0xf]
  %v158 = vld [vmem:[%s1 + $0x8c] sm:$0xf]
  %v159 = vld [vmem:[%s1 + $0x90] sm:$0xf]
  %v160 = vld [vmem:[%s1 + $0x94] sm:$0xf]
  %v161 = vld [vmem:[%s1 + $0x98] sm:$0xf]
  %v162 = vld [vmem:[%s1 + $0x9c] sm:$0xf]
  %v163 = vld [vmem:[%s1 + $0xa0] sm:$0xf]
  %v164 = vld [vmem:[%s1 + $0xa4] sm:$0xf]
  %v165 = vld [vmem:[%s1 + $0xa8] sm:$0xf]
  %v166 = vld [vmem:[%s1 + $0xac] sm:$0xf]
  %v167 = vld [vmem:[%s1 + $0xb0] sm:$0xf]
  %v168 = vld [vmem:[%s1 + $0xb4] sm:$0xf]
  %v169 = vld [vmem:[%s1 + $0xb8] sm:$0xf]
  %v170 = vld [vmem:[%s1 + $0xbc] sm:$0xf]
  %v171 = vld [vmem:[%s1 + $0xc0] sm:$0xf]
  %v172 = vld [vmem:[%s1 + $0xc4] sm:$0xf]
  %v173 = vld [vmem:[%s1 + $0xc8] sm:$0xf]
  %v174 = vld [vmem:[%s1 + $0xcc] sm:$0xf]
  %v175 = vld [vmem:[%s1 + $0xd0] sm:$0xf]
  %v176 = vld [vmem:[%s1 + $0xd4] sm:$0xf]
  %v177 = vld [vmem:[%s1 + $0xd8] sm:$0xf]
  %v178 = vld [vmem:[%s1 + $0xdc] sm:$0xf]
  %v179 = vld [vmem:[%s1 + $0xe0] sm:$0xf]
  %v180 = vld [vmem:[%s1 + $0xe4] sm:$0xf]
  %v181 = vld [vmem:[%s1 + $0xe8] sm:$0xf]
  %v182 = vld [vmem:[%s1 + $0xec] sm:$0xf]
  %v183 = vld [vmem:[%s1 + $0xf0] sm:$0xf]
  %v184 = vld [vmem:[%s1 + $0xf4] sm:$0xf]
  %v185 = vld [vmem:[%s1 + $0xf8] sm:$0xf]
  %v186 = vld [vmem:[%s1 + $0xfc] sm:$0xf]
  %v187 = vld [vmem:[%s1 + $0x100] sm:$0xf]
  %v188 = vld [vmem:[%s1 + $0x104] sm:$0xf]
  %v189 = vld [vmem:[%s1 + $0x108] sm:$0xf]
  %v190 = vld [vmem:[%s1 + $0x10c] sm:$0xf]
  %v191 = vld [vmem:[%s1 + $0x110] sm:$0xf]
  %v192 = vld [vmem:[%s1 + $0x114] sm:$0xf]
  %v193 = vld [vmem:[%s1 + $0x118] sm:$0xf]
  %v194 = vld [vmem:[%s1 + $0x11c] sm:$0xf]
  %v195 = vld [vmem:[%s1 + $0x120] sm:$0xf]
  %v196 = vld [vmem:[%s1 + $0x124] sm:$0xf]
  %v197 = vld [vmem:[%s1 + $0x128] sm:$0xf]
  %v198 = vld [vmem:[%s1 + $0x12c] sm:$0xf]
  %v199 = vld [vmem:[%s1 + $0x130] sm:$0xf]
  %v200 = vld [vmem:[%s1 + $0x134] sm:$0xf]
  %v201 = vld [vmem:[%s1 + $0x138] sm:$0xf]
  %v202 = vld [vmem:[%s1 + $0x13c] sm:$0xf]
  %v203 = vld [vmem:[%s1 + $0x140] sm:$0xf]
  %v204 = vld [vmem:[%s1 + $0x144] sm:$0xf]
  %v205 = vld [vmem:[%s1 + $0x148] sm:$0xf]
  %v206 = vld [vmem:[%s1 + $0x14c] sm:$0xf]
  %v207 = vld [vmem:[%s1 + $0x150] sm:$0xf]
  %v208 = vld [vmem:[%s1 + $0x154] sm:$0xf]
  %v209 = vld [vmem:[%s1 + $0x158] sm:$0xf]
  %v210 = vld [vmem:[%s1 + $0x15c] sm:$0xf]
  %v211 = vld [vmem:[%s1 + $0x160] sm:$0xf]
  %v212 = vld [vmem:[%s1 + $0x164] sm:$0xf]
  %v213 = vld [vmem:[%s1 + $0x168] sm:$0xf]
  %v214 = vld [vmem:[%s1 + $0x16c] sm:$0xf]
  %v215 = vld [vmem:[%s1 + $0x170] sm:$0xf]
  %v216 = vld [vmem:[%s1 + $0x174] sm:$0xf]
  %v217 = vld [vmem:[%s1 + $0x178] sm:$0xf]
  %v218 = vld [vmem:[%s1 + $0x17c] sm:$0xf]
  %v219 = vld [vmem:[%s1 + $0x180] sm:$0xf]
  %v220 = vld [vmem:[%s1 + $0x184] sm:$0xf]
  %v221 = vld [vmem:[%s1 + $0x188] sm:$0xf]
  %v222 = vld [vmem:[%s1 + $0x18c] sm:$0xf]
  %v223 = vld [vmem:[%s1 + $0x190] sm:$0xf]
  %v224 = vld [vmem:[%s1 + $0x194] sm:$0xf]
  %v225 = vld [vmem:[%s1 + $0x198] sm:$0xf]
  %v226 = vld [vmem:[%s1 + $0x19c] sm:$0xf]
  %v227 = vld [vmem:[%s1 + $0x1a0] sm:$0xf]
  %v228 = vld [vmem:[%s1 + $0x1a4] sm:$0xf]
  %v229 = vld [vmem:[%s1 + $0x1a8] sm:$0xf]
  %v230 = vld [vmem:[%s1 + $0x1ac] sm:$0xf]
  %v231 = vld [vmem:[%s1 + $0x1b0] sm:$0xf]
  %v232 = vld [vmem:[%s1 + $0x1b4] sm:$0xf]
  %v233 = vld [vmem:[%s1 + $0x1b8] sm:$0xf]
  %v234 = vld [vmem:[%s1 + $0x1bc] sm:$0xf]
  %v235 = vld [vmem:[%s1 + $0x1c0] sm:$0xf]
  %v236 = vld [vmem:[%s1 + $0x1c4] sm:$0xf]
  %v237 = vld [vmem:[%s1 + $0x1c8] sm:$0xf]
  %v238 = vld [vmem:[%s1 + $0x1cc] sm:$0xf]
  %v239 = vld [vmem:[%s1 + $0x1d0] sm:$0xf]
  %v240 = vld [vmem:[%s1 + $0x1d4] sm:$0xf]
  %v241 = vld [vmem:[%s1 + $0x1d8] sm:$0xf]
  %v242 = vld [vmem:[%s1 + $0x1dc] sm:$0xf]
  %v243 = vld [vmem:[%s1 + $0x1e0] sm:$0xf]
  %v244 = vld [vmem:[%s1 + $0x1e4] sm:$0xf]
  %v245 = vld [vmem:[%s1 + $0x1e8] sm:$0xf]
  %v246 = vld [vmem:[%s1 + $0x1ec] sm:$0xf]
  %v247 = vld [vmem:[%s1 + $0x1f0] sm:$0xf]
  %v248 = vld [vmem:[%s1 + $0x1f4] sm:$0xf]
  %v249 = vld [vmem:[%s1 + $0x1f8] sm:$0xf]
  %v250 = vld [vmem:[%s1 + $0x1fc] sm:$0xf]
  %v251 = vld [vmem:[%s1 + $0x200] sm:$0xf]
  %v252 = vld [vmem:[%s1 + $0x204] sm:$0xf]
  %v253 = vld [vmem:[%s1 + $0x208] sm:$0xf]
  %v254 = vld [vmem:[%s1 + $0x20c] sm:$0xf]
  %v255 = vld [vmem:[%s1 + $0x210] sm:$0xf]
  %v256 = vld [vmem:[%s1 + $0x214] sm:$0xf]
  %v257 = vld [vmem:[%s1 + $0x218] sm:$0xf]
  %v258 = vld [vmem:[%s1 + $0x21c] sm:$0xf]
  %v259 = vld [vmem:[%s1 + $0x220] sm:$0xf]
  %v260 = vld [vmem:[%s1 + $0x224] sm:$0xf]
  %v261 = vld [vmem:[%s1 + $0x228] sm:$0xf]
  %v262 = vld [vmem:[%s1 + $0x22c] sm:$0xf]
  %v263 = vld [vmem:[%s1 + $0x230] sm:$0xf]
  %v264 = vld [vmem:[%s1 + $0x234] sm:$0xf]
  %v265 = vld [vmem:[%s1 + $0x238] sm:$0xf]
  %v266 = vld [vmem:[%s1 + $0x23c] sm:$0xf]
  %v267 = vld [vmem:[%s2] sm:$0x1]
  %v269 = vlaneseq
  %v270 = vshrl.u32 %v269, 7
  %v271 = vsub.s32 0, %v270
  %v272 = vrot.slane %v267, %v271
  %v418 = vunpack.c.l.b16 %v123
  %v419 = vunpack.c.l.b16 %v124
  %v420 = vunpack.c.l.b16 %v125
  %v421 = vunpack.c.l.b16 %v126
  %v422 = vunpack.c.l.b16 %v127
  %v423 = vunpack.c.l.b16 %v128
  %v424 = vunpack.c.l.b16 %v129
  %v425 = vunpack.c.l.b16 %v130
  %v426 = vunpack.c.l.b16 %v131
  %v427 = vunpack.c.l.b16 %v132
  %v428 = vunpack.c.l.b16 %v133
  %v429 = vunpack.c.l.b16 %v134
  %v430 = vunpack.c.l.b16 %v135
  %v431 = vunpack.c.l.b16 %v136
  %v432 = vunpack.c.l.b16 %v137
  %v433 = vunpack.c.l.b16 %v138
  %v434 = vunpack.c.l.b16 %v139
  %v435 = vunpack.c.l.b16 %v140
  %v436 = vunpack.c.l.b16 %v141
  %v437 = vunpack.c.l.b16 %v142
  %v438 = vunpack.c.l.b16 %v143
  %v439 = vunpack.c.l.b16 %v144
  %v440 = vunpack.c.l.b16 %v145
  %v441 = vunpack.c.l.b16 %v146
  %v442 = vunpack.c.l.b16 %v147
  %v443 = vunpack.c.l.b16 %v148
  %v444 = vunpack.c.l.b16 %v149
  %v445 = vunpack.c.l.b16 %v150
  %v446 = vunpack.c.l.b16 %v151
  %v447 = vunpack.c.l.b16 %v152
  %v448 = vunpack.c.l.b16 %v153
  %v449 = vunpack.c.l.b16 %v154
  %v450 = vunpack.c.l.b16 %v155
  %v451 = vunpack.c.l.b16 %v156
  %v452 = vunpack.c.l.b16 %v157
  %v453 = vunpack.c.l.b16 %v158
  %v454 = vunpack.c.l.b16 %v159
  %v455 = vunpack.c.l.b16 %v160
  %v456 = vunpack.c.l.b16 %v161
  %v457 = vunpack.c.l.b16 %v162
  %v458 = vunpack.c.l.b16 %v163
  %v459 = vunpack.c.l.b16 %v164
  %v460 = vunpack.c.l.b16 %v165
  %v461 = vunpack.c.l.b16 %v166
  %v462 = vunpack.c.l.b16 %v167
  %v463 = vunpack.c.l.b16 %v168
  %v464 = vunpack.c.l.b16 %v169
  %v465 = vunpack.c.l.b16 %v170
  %v466 = vunpack.c.l.b16 %v171
  %v467 = vunpack.c.l.b16 %v172
  %v468 = vunpack.c.l.b16 %v173
  %v469 = vunpack.c.l.b16 %v174
  %v470 = vunpack.c.l.b16 %v175
  %v471 = vunpack.c.l.b16 %v176
  %v472 = vunpack.c.l.b16 %v177
  %v473 = vunpack.c.l.b16 %v178
  %v474 = vunpack.c.l.b16 %v179
  %v475 = vunpack.c.l.b16 %v180
  %v476 = vunpack.c.l.b16 %v181
  %v477 = vunpack.c.l.b16 %v182
  %v478 = vunpack.c.l.b16 %v183
  %v479 = vunpack.c.l.b16 %v184
  %v480 = vunpack.c.l.b16 %v185
  %v481 = vunpack.c.l.b16 %v186
  %v482 = vunpack.c.l.b16 %v187
  %v483 = vunpack.c.l.b16 %v188
  %v484 = vunpack.c.l.b16 %v189
  %v485 = vunpack.c.l.b16 %v190
  %v486 = vunpack.c.l.b16 %v191
  %v487 = vunpack.c.l.b16 %v192
  %v488 = vunpack.c.l.b16 %v193
  %v489 = vunpack.c.l.b16 %v194
  %v490 = vunpack.c.l.b16 %v195
  %v491 = vunpack.c.l.b16 %v196
  %v492 = vunpack.c.l.b16 %v197
  %v493 = vunpack.c.l.b16 %v198
  %v494 = vunpack.c.l.b16 %v199
  %v495 = vunpack.c.l.b16 %v200
  %v496 = vunpack.c.l.b16 %v201
  %v497 = vunpack.c.l.b16 %v202
  %v498 = vunpack.c.l.b16 %v203
  %v499 = vunpack.c.l.b16 %v204
  %v500 = vunpack.c.l.b16 %v205
  %v501 = vunpack.c.l.b16 %v206
  %v502 = vunpack.c.l.b16 %v207
  %v503 = vunpack.c.l.b16 %v208
  %v504 = vunpack.c.l.b16 %v209
  %v505 = vunpack.c.l.b16 %v210
  %v506 = vunpack.c.l.b16 %v211
  %v507 = vunpack.c.l.b16 %v212
  %v508 = vunpack.c.l.b16 %v213
  %v509 = vunpack.c.l.b16 %v214
  %v510 = vunpack.c.l.b16 %v215
  %v511 = vunpack.c.l.b16 %v216
  %v512 = vunpack.c.l.b16 %v217
  %v513 = vunpack.c.l.b16 %v218
  %v514 = vunpack.c.l.b16 %v219
  %v515 = vunpack.c.l.b16 %v220
  %v516 = vunpack.c.l.b16 %v221
  %v517 = vunpack.c.l.b16 %v222
  %v518 = vunpack.c.l.b16 %v223
  %v519 = vunpack.c.l.b16 %v224
  %v520 = vunpack.c.l.b16 %v225
  %v521 = vunpack.c.l.b16 %v226
  %v522 = vunpack.c.l.b16 %v227
  %v523 = vunpack.c.l.b16 %v228
  %v524 = vunpack.c.l.b16 %v229
  %v525 = vunpack.c.l.b16 %v230
  %v526 = vunpack.c.l.b16 %v231
  %v527 = vunpack.c.l.b16 %v232
  %v528 = vunpack.c.l.b16 %v233
  %v529 = vunpack.c.l.b16 %v234
  %v530 = vunpack.c.l.b16 %v235
  %v531 = vunpack.c.l.b16 %v236
  %v532 = vunpack.c.l.b16 %v237
  %v533 = vunpack.c.l.b16 %v238
  %v534 = vunpack.c.l.b16 %v239
  %v535 = vunpack.c.l.b16 %v240
  %v536 = vunpack.c.l.b16 %v241
  %v537 = vunpack.c.l.b16 %v242
  %v538 = vunpack.c.l.b16 %v243
  %v539 = vunpack.c.l.b16 %v244
  %v540 = vunpack.c.l.b16 %v245
  %v541 = vunpack.c.l.b16 %v246
  %v542 = vunpack.c.l.b16 %v247
  %v543 = vunpack.c.l.b16 %v248
  %v544 = vunpack.c.l.b16 %v249
  %v545 = vunpack.c.l.b16 %v250
  %v546 = vunpack.c.l.b16 %v251
  %v547 = vunpack.c.l.b16 %v252
  %v548 = vunpack.c.l.b16 %v253
  %v549 = vunpack.c.l.b16 %v254
  %v550 = vunpack.c.l.b16 %v255
  %v551 = vunpack.c.l.b16 %v256
  %v552 = vunpack.c.l.b16 %v257
  %v553 = vunpack.c.l.b16 %v258
  %v554 = vunpack.c.l.b16 %v259
  %v555 = vunpack.c.l.b16 %v260
  %v556 = vunpack.c.l.b16 %v261
  %v557 = vunpack.c.l.b16 %v262
  %v558 = vunpack.c.l.b16 %v263
  %v559 = vunpack.c.l.b16 %v264
  %v560 = vunpack.c.l.b16 %v265
  %v561 = vunpack.c.l.b16 %v266
  %v562 = vpack.c.b16 %v419, %v418
  %v563 = vpack.c.b16 %v421, %v420
  %v564 = vpack.c.b16 %v423, %v422
  %v565 = vpack.c.b16 %v425, %v424
  %v566 = vpack.c.b16 %v427, %v426
  %v567 = vpack.c.b16 %v429, %v428
  %v568 = vpack.c.b16 %v431, %v430
  %v569 = vpack.c.b16 %v433, %v432
  %v570 = vpack.c.b16 %v435, %v434
  %v571 = vpack.c.b16 %v437, %v436
  %v572 = vpack.c.b16 %v439, %v438
  %v573 = vpack.c.b16 %v441, %v440
  %v574 = vpack.c.b16 %v443, %v442
  %v575 = vpack.c.b16 %v445, %v444
  %v576 = vpack.c.b16 %v447, %v446
  %v577 = vpack.c.b16 %v449, %v448
  %v578 = vpack.c.b16 %v451, %v450
  %v579 = vpack.c.b16 %v453, %v452
  %v580 = vpack.c.b16 %v455, %v454
  %v581 = vpack.c.b16 %v457, %v456
  %v582 = vpack.c.b16 %v459, %v458
  %v583 = vpack.c.b16 %v461, %v460
  %v584 = vpack.c.b16 %v463, %v462
  %v585 = vpack.c.b16 %v465, %v464
  %v586 = vpack.c.b16 %v467, %v466
  %v587 = vpack.c.b16 %v469, %v468
  %v588 = vpack.c.b16 %v471, %v470
  %v589 = vpack.c.b16 %v473, %v472
  %v590 = vpack.c.b16 %v475, %v474
  %v591 = vpack.c.b16 %v477, %v476
  %v592 = vpack.c.b16 %v479, %v478
  %v593 = vpack.c.b16 %v481, %v480
  %v594 = vpack.c.b16 %v483, %v482
  %v595 = vpack.c.b16 %v485, %v484
  %v596 = vpack.c.b16 %v487, %v486
  %v597 = vpack.c.b16 %v489, %v488
  %v598 = vpack.c.b16 %v491, %v490
  %v599 = vpack.c.b16 %v493, %v492
  %v600 = vpack.c.b16 %v495, %v494
  %v601 = vpack.c.b16 %v497, %v496
  %v602 = vpack.c.b16 %v499, %v498
  %v603 = vpack.c.b16 %v501, %v500
  %v604 = vpack.c.b16 %v503, %v502
  %v605 = vpack.c.b16 %v505, %v504
  %v606 = vpack.c.b16 %v507, %v506
  %v607 = vpack.c.b16 %v509, %v508
  %v608 = vpack.c.b16 %v511, %v510
  %v609 = vpack.c.b16 %v513, %v512
  %v610 = vpack.c.b16 %v515, %v514
  %v611 = vpack.c.b16 %v517, %v516
  %v612 = vpack.c.b16 %v519, %v518
  %v613 = vpack.c.b16 %v521, %v520
  %v614 = vpack.c.b16 %v523, %v522
  %v615 = vpack.c.b16 %v525, %v524
  %v616 = vpack.c.b16 %v527, %v526
  %v617 = vpack.c.b16 %v529, %v528
  %v618 = vpack.c.b16 %v531, %v530
  %v619 = vpack.c.b16 %v533, %v532
  %v620 = vpack.c.b16 %v535, %v534
  %v621 = vpack.c.b16 %v537, %v536
  %v622 = vpack.c.b16 %v539, %v538
  %v623 = vpack.c.b16 %v541, %v540
  %v624 = vpack.c.b16 %v543, %v542
  %v625 = vpack.c.b16 %v545, %v544
  %v626 = vpack.c.b16 %v547, %v546
  %v627 = vpack.c.b16 %v549, %v548
  %v628 = vpack.c.b16 %v551, %v550
  %v629 = vpack.c.b16 %v553, %v552
  %v630 = vpack.c.b16 %v555, %v554
  %v631 = vpack.c.b16 %v557, %v556
  %v632 = vpack.c.b16 %v559, %v558
  %v633 = vpack.c.b16 %v561, %v560
  %706 = vmatprep.subr.bf16.mxu0 0
  %707 = vmatpush1.bf16.msra.mxu0 %v562
  %708 = vmatprep.subr.bf16.mxu0 0
  %709 = vmatpush1.bf16.msra.mxu0 %v563
  %710 = vmatprep.subr.bf16.mxu0 0
  %711 = vmatpush1.bf16.msra.mxu0 %v564
  %712 = vmatprep.subr.bf16.mxu0 0
  %713 = vmatpush1.bf16.msra.mxu0 %v565
  %714 = vmatprep.subr.bf16.mxu0 0
  %715 = vmatpush1.bf16.msra.mxu0 %v566
  %716 = vmatprep.subr.bf16.mxu0 0
  %717 = vmatpush1.bf16.msra.mxu0 %v567
  %718 = vmatprep.subr.bf16.mxu0 0
  %719 = vmatpush1.bf16.msra.mxu0 %v568
  %720 = vmatprep.subr.bf16.mxu0 0
  %721 = vmatpush1.bf16.msra.mxu0 %v569
  %722 = vmatprep.subr.bf16.mxu0 0
  %723 = vmatpush1.bf16.msra.mxu0 %v570
  %724 = vmatprep.subr.bf16.mxu0 0
  %725 = vmatpush1.bf16.msra.mxu0 %v571
  %726 = vmatprep.subr.bf16.mxu0 0
  %727 = vmatpush1.bf16.msra.mxu0 %v572
  %728 = vmatprep.subr.bf16.mxu0 0
  %729 = vmatpush1.bf16.msra.mxu0 %v573
  %730 = vmatprep.subr.bf16.mxu0 0
  %731 = vmatpush1.bf16.msra.mxu0 %v574
  %732 = vmatprep.subr.bf16.mxu0 0
  %733 = vmatpush1.bf16.msra.mxu0 %v575
  %734 = vmatprep.subr.bf16.mxu0 0
  %735 = vmatpush1.bf16.msra.mxu0 %v576
  %736 = vmatprep.subr.bf16.mxu0 0
  %737 = vmatpush1.bf16.msra.mxu0 %v577
  %738 = vmatprep.mubr.bf16.mxu0 %v88
  %739 = vmatmul.mubr.bf16.gmra.mrb[0].mxu0 %v87
  %v740 = vpop.f32.mrb[0].mxu0
  %v741 = vadd.f32 %v272, %v740
  %v742 = vpop.f32.mrb[0].mxu0
  %v743 = vpop.f32.mrb[0].mxu0
  %v744 = vadd.f32 %v272, %v743
  %v745 = vpop.f32.mrb[0].mxu0
  %746 = vmatprep.mubr.bf16.mxu0 %v97
  %747 = vmatmul.mubr.bf16.gmra.mrb[0].mxu0 %v96
  %v748 = vpop.f32.mrb[0].mxu0
  %v749 = vadd.f32 %v272, %v748
  %v750 = vpop.f32.mrb[0].mxu0
  %v751 = vpop.f32.mrb[0].mxu0
  %v752 = vadd.f32 %v272, %v751
  %v753 = vpop.f32.mrb[0].mxu0
  %754 = vmatprep.mubr.bf16.mxu0 %v106
  %755 = vmatmul.mubr.bf16.gmra.mrb[0].mxu0 %v105
  %v756 = vpop.f32.mrb[0].mxu0
  %v757 = vadd.f32 %v272, %v756
  %v758 = vpop.f32.mrb[0].mxu0
  %v759 = vpop.f32.mrb[0].mxu0
  %v760 = vadd.f32 %v272, %v759
  %v761 = vpop.f32.mrb[0].mxu0
  %762 = vmatprep.mubr.bf16.mxu0 %v115
  %763 = vmatmul.mubr.bf16.gmra.mrb[0].mxu0 %v114
  %v764 = vpop.f32.mrb[0].mxu0
  %v765 = vadd.f32 %v272, %v764
  %v766 = vpop.f32.mrb[0].mxu0
  %v767 = vpop.f32.mrb[0].mxu0
  %v768 = vadd.f32 %v272, %v767
  %v769 = vpop.f32.mrb[0].mxu0
  %770 = vdwg.mxu0
  %771 = vmatprep.subr.bf16.mxu0 0
  %772 = vmatpush1.bf16.msra.mxu0 %v578
  %773 = vmatprep.subr.bf16.mxu0 0
  %774 = vmatpush1.bf16.msra.mxu0 %v579
  %775 = vmatprep.subr.bf16.mxu0 0
  %776 = vmatpush1.bf16.msra.mxu0 %v580
  %777 = vmatprep.subr.bf16.mxu0 0
  %778 = vmatpush1.bf16.msra.mxu0 %v581
  %779 = vmatprep.subr.bf16.mxu0 0
  %780 = vmatpush1.bf16.msra.mxu0 %v582
  %781 = vmatprep.subr.bf16.mxu0 0
  %782 = vmatpush1.bf16.msra.mxu0 %v583
  %783 = vmatprep.subr.bf16.mxu0 0
  %784 = vmatpush1.bf16.msra.mxu0 %v584
  %785 = vmatprep.subr.bf16.mxu0 0
  %786 = vmatpush1.bf16.msra.mxu0 %v585
  %787 = vmatprep.subr.bf16.mxu0 0
  %788 = vmatpush1.bf16.msra.mxu0 %v586
  %789 = vmatprep.subr.bf16.mxu0 0
  %790 = vmatpush1.bf16.msra.mxu0 %v587
  %791 = vmatprep.subr.bf16.mxu0 0
  %792 = vmatpush1.bf16.msra.mxu0 %v588
  %793 = vmatprep.subr.bf16.mxu0 0
  %794 = vmatpush1.bf16.msra.mxu0 %v589
  %795 = vmatprep.subr.bf16.mxu0 0
  %796 = vmatpush1.bf16.msra.mxu0 %v590
  %797 = vmatprep.subr.bf16.mxu0 0
  %798 = vmatpush1.bf16.msra.mxu0 %v591
  %799 = vmatprep.subr.bf16.mxu0 0
  %800 = vmatpush1.bf16.msra.mxu0 %v592
  %801 = vmatprep.subr.bf16.mxu0 0
  %802 = vmatpush1.bf16.msra.mxu0 %v593
  %803 = vmatprep.mubr.bf16.mxu0 %v90
  %804 = vmatmul.mubr.bf16.gmra.mrb[0].mxu0 %v89
  %v805 = vpop.f32.mrb[0].mxu0
  %v806 = vadd.f32 %v741, %v805
  %v807 = vpop.f32.mrb[0].mxu0
  %v808 = vpop.f32.mrb[0].mxu0
  %v809 = vadd.f32 %v744, %v808
  %v810 = vpop.f32.mrb[0].mxu0
  %811 = vmatprep.mubr.bf16.mxu0 %v99
  %812 = vmatmul.mubr.bf16.gmra.mrb[0].mxu0 %v98
  %v813 = vpop.f32.mrb[0].mxu0
  %v814 = vadd.f32 %v749, %v813
  %v815 = vpop.f32.mrb[0].mxu0
  %v816 = vpop.f32.mrb[0].mxu0
  %v817 = vadd.f32 %v752, %v816
  %v818 = vpop.f32.mrb[0].mxu0
  %819 = vmatprep.mubr.bf16.mxu0 %v108
  %820 = vmatmul.mubr.bf16.gmra.mrb[0].mxu0 %v107
  %v821 = vpop.f32.mrb[0].mxu0
  %v822 = vadd.f32 %v757, %v821
  %v823 = vpop.f32.mrb[0].mxu0
  %v824 = vpop.f32.mrb[0].mxu0
  %v825 = vadd.f32 %v760, %v824
  %v826 = vpop.f32.mrb[0].mxu0
  %827 = vmatprep.mubr.bf16.mxu0 %v117
  %828 = vmatmul.mubr.bf16.gmra.mrb[0].mxu0 %v116
  %v829 = vpop.f32.mrb[0].mxu0
  %v830 = vadd.f32 %v765, %v829
  %v831 = vpop.f32.mrb[0].mxu0
  %v832 = vpop.f32.mrb[0].mxu0
  %v833 = vadd.f32 %v768, %v832
  %v834 = vpop.f32.mrb[0].mxu0
  %835 = vdwg.mxu0
  %836 = vmatprep.subr.bf16.mxu0 0
  %837 = vmatpush1.bf16.msra.mxu0 %v594
  %838 = vmatprep.subr.bf16.mxu0 0
  %839 = vmatpush1.bf16.msra.mxu0 %v595
  %840 = vmatprep.subr.bf16.mxu0 0
  %841 = vmatpush1.bf16.msra.mxu0 %v596
  %842 = vmatprep.subr.bf16.mxu0 0
  %843 = vmatpush1.bf16.msra.mxu0 %v597
  %844 = vmatprep.subr.bf16.mxu0 0
  %845 = vmatpush1.bf16.msra.mxu0 %v598
  %846 = vmatprep.subr.bf16.mxu0 0
  %847 = vmatpush1.bf16.msra.mxu0 %v599
  %848 = vmatprep.subr.bf16.mxu0 0
  %849 = vmatpush1.bf16.msra.mxu0 %v600
  %850 = vmatprep.subr.bf16.mxu0 0
  %851 = vmatpush1.bf16.msra.mxu0 %v601
  %852 = vmatprep.subr.bf16.mxu0 0
  %853 = vmatpush1.bf16.msra.mxu0 %v602
  %854 = vmatprep.subr.bf16.mxu0 0
  %855 = vmatpush1.bf16.msra.mxu0 %v603
  %856 = vmatprep.subr.bf16.mxu0 0
  %857 = vmatpush1.bf16.msra.mxu0 %v604
  %858 = vmatprep.subr.bf16.mxu0 0
  %859 = vmatpush1.bf16.msra.mxu0 %v605
  %860 = vmatprep.subr.bf16.mxu0 0
  %861 = vmatpush1.bf16.msra.mxu0 %v606
  %862 = vmatprep.subr.bf16.mxu0 0
  %863 = vmatpush1.bf16.msra.mxu0 %v607
  %864 = vmatprep.subr.bf16.mxu0 0
  %865 = vmatpush1.bf16.msra.mxu0 %v608
  %866 = vmatprep.subr.bf16.mxu0 0
  %867 = vmatpush1.bf16.msra.mxu0 %v609
  %868 = vmatprep.mubr.bf16.mxu0 %v92
  %869 = vmatmul.mubr.bf16.gmra.mrb[0].mxu0 %v91
  %v870 = vpop.f32.mrb[0].mxu0
  %v871 = vadd.f32 %v806, %v870
  %v872 = vpop.f32.mrb[0].mxu0
  %v873 = vpop.f32.mrb[0].mxu0
  %v874 = vadd.f32 %v809, %v873
  %v875 = vpop.f32.mrb[0].mxu0
  %876 = vmatprep.mubr.bf16.mxu0 %v101
  %877 = vmatmul.mubr.bf16.gmra.mrb[0].mxu0 %v100
  %v878 = vpop.f32.mrb[0].mxu0
  %v879 = vadd.f32 %v814, %v878
  %v880 = vpop.f32.mrb[0].mxu0
  %v881 = vpop.f32.mrb[0].mxu0
  %v882 = vadd.f32 %v817, %v881
  %v883 = vpop.f32.mrb[0].mxu0
  %884 = vmatprep.mubr.bf16.mxu0 %v110
  %885 = vmatmul.mubr.bf16.gmra.mrb[0].mxu0 %v109
  %v886 = vpop.f32.mrb[0].mxu0
  %v887 = vadd.f32 %v822, %v886
  %v888 = vpop.f32.mrb[0].mxu0
  %v889 = vpop.f32.mrb[0].mxu0
  %v890 = vadd.f32 %v825, %v889
  %v891 = vpop.f32.mrb[0].mxu0
  %892 = vmatprep.mubr.bf16.mxu0 %v119
  %893 = vmatmul.mubr.bf16.gmra.mrb[0].mxu0 %v118
  %v894 = vpop.f32.mrb[0].mxu0
  %v895 = vadd.f32 %v830, %v894
  %v896 = vpop.f32.mrb[0].mxu0
  %v897 = vpop.f32.mrb[0].mxu0
  %v898 = vadd.f32 %v833, %v897
  %v899 = vpop.f32.mrb[0].mxu0
  %900 = vdwg.mxu0
  %901 = vmatprep.subr.bf16.mxu0 0
  %902 = vmatpush1.bf16.msra.mxu0 %v610
  %903 = vmatprep.subr.bf16.mxu0 0
  %904 = vmatpush1.bf16.msra.mxu0 %v611
  %905 = vmatprep.subr.bf16.mxu0 0
  %906 = vmatpush1.bf16.msra.mxu0 %v612
  %907 = vmatprep.subr.bf16.mxu0 0
  %908 = vmatpush1.bf16.msra.mxu0 %v613
  %909 = vmatprep.subr.bf16.mxu0 0
  %910 = vmatpush1.bf16.msra.mxu0 %v614
  %911 = vmatprep.subr.bf16.mxu0 0
  %912 = vmatpush1.bf16.msra.mxu0 %v615
  %913 = vmatprep.subr.bf16.mxu0 0
  %914 = vmatpush1.bf16.msra.mxu0 %v616
  %915 = vmatprep.subr.bf16.mxu0 0
  %916 = vmatpush1.bf16.msra.mxu0 %v617
  %917 = vmatprep.subr.bf16.mxu0 0
  %918 = vmatpush1.bf16.msra.mxu0 %v618
  %919 = vmatprep.subr.bf16.mxu0 0
  %920 = vmatpush1.bf16.msra.mxu0 %v619
  %921 = vmatprep.subr.bf16.mxu0 0
  %922 = vmatpush1.bf16.msra.mxu0 %v620
  %923 = vmatprep.subr.bf16.mxu0 0
  %924 = vmatpush1.bf16.msra.mxu0 %v621
  %925 = vmatprep.subr.bf16.mxu0 0
  %926 = vmatpush1.bf16.msra.mxu0 %v622
  %927 = vmatprep.subr.bf16.mxu0 0
  %928 = vmatpush1.bf16.msra.mxu0 %v623
  %929 = vmatprep.subr.bf16.mxu0 0
  %930 = vmatpush1.bf16.msra.mxu0 %v624
  %931 = vmatprep.subr.bf16.mxu0 0
  %932 = vmatpush1.bf16.msra.mxu0 %v625
  %933 = vmatprep.mubr.bf16.mxu0 %v94
  %934 = vmatmul.mubr.bf16.gmra.mrb[0].mxu0 %v93
  %v935 = vpop.f32.mrb[0].mxu0
  %v936 = vadd.f32 %v871, %v935
  %v937 = vpop.f32.mrb[0].mxu0
  %v938 = vpop.f32.mrb[0].mxu0
  %v939 = vadd.f32 %v874, %v938
  %v940 = vpop.f32.mrb[0].mxu0
  %941 = vmatprep.mubr.bf16.mxu0 %v103
  %942 = vmatmul.mubr.bf16.gmra.mrb[0].mxu0 %v102
  %v943 = vpop.f32.mrb[0].mxu0
  %v944 = vadd.f32 %v879, %v943
  %v945 = vpop.f32.mrb[0].mxu0
  %v946 = vpop.f32.mrb[0].mxu0
  %v947 = vadd.f32 %v882, %v946
  %v948 = vpop.f32.mrb[0].mxu0
  %949 = vmatprep.mubr.bf16.mxu0 %v112
  %950 = vmatmul.mubr.bf16.gmra.mrb[0].mxu0 %v111
  %v951 = vpop.f32.mrb[0].mxu0
  %v952 = vadd.f32 %v887, %v951
  %v953 = vpop.f32.mrb[0].mxu0
  %v954 = vpop.f32.mrb[0].mxu0
  %v955 = vadd.f32 %v890, %v954
  %v956 = vpop.f32.mrb[0].mxu0
  %957 = vmatprep.mubr.bf16.mxu0 %v121
  %958 = vmatmul.mubr.bf16.gmra.mrb[0].mxu0 %v120
  %v959 = vpop.f32.mrb[0].mxu0
  %v960 = vadd.f32 %v895, %v959
  %v961 = vpop.f32.mrb[0].mxu0
  %v962 = vpop.f32.mrb[0].mxu0
  %v963 = vadd.f32 %v898, %v962
  %v964 = vpop.f32.mrb[0].mxu0
  %965 = vdwg.mxu0
  %966 = vmatprep.subr.bf16.mxu0 0
  %967 = vmatpush1.bf16.msra.mxu0 %v626
  %968 = vmatprep.subr.bf16.mxu0 0
  %969 = vmatpush1.bf16.msra.mxu0 %v627
  %970 = vmatprep.subr.bf16.mxu0 0
  %971 = vmatpush1.bf16.msra.mxu0 %v628
  %972 = vmatprep.subr.bf16.mxu0 0
  %973 = vmatpush1.bf16.msra.mxu0 %v629
  %974 = vmatprep.subr.bf16.mxu0 0
  %975 = vmatpush1.bf16.msra.mxu0 %v630
  %976 = vmatprep.subr.bf16.mxu0 0
  %977 = vmatpush1.bf16.msra.mxu0 %v631
  %978 = vmatprep.subr.bf16.mxu0 0
  %979 = vmatpush1.bf16.msra.mxu0 %v632
  %980 = vmatprep.subr.bf16.mxu0 0
  %981 = vmatpush1.bf16.msra.mxu0 %v633
  %982 = vmatprep.subr.bf16.mxu0 0
  %983 = vmatpush1.bf16.msra.mxu0 0
  %984 = vmatprep.subr.bf16.mxu0 0
  %985 = vmatpush1.bf16.msra.mxu0 0
  %986 = vmatprep.subr.bf16.mxu0 0
  %987 = vmatpush1.bf16.msra.mxu0 0
  %988 = vmatprep.subr.bf16.mxu0 0
  %989 = vmatpush1.bf16.msra.mxu0 0
  %990 = vmatprep.subr.bf16.mxu0 0
  %991 = vmatpush1.bf16.msra.mxu0 0
  %992 = vmatprep.subr.bf16.mxu0 0
  %993 = vmatpush1.bf16.msra.mxu0 0
  %994 = vmatprep.subr.bf16.mxu0 0
  %995 = vmatpush1.bf16.msra.mxu0 0
  %996 = vmatprep.subr.bf16.mxu0 0
  %997 = vmatpush1.bf16.msra.mxu0 0
  %998 = vmatprep.mubr.bf16.mxu0 0
  %999 = vmatmul.mubr.bf16.gmra.mrb[0].mxu0 %v95
  %v1000 = vpop.f32.mrb[0].mxu0
  %v1001 = vadd.f32 %v936, %v1000
  %v1002 = vpop.f32.mrb[0].mxu0
  %v1003 = vpop.f32.mrb[0].mxu0
  %v1004 = vadd.f32 %v939, %v1003
  %v1005 = vpop.f32.mrb[0].mxu0
  %1006 = vmatprep.mubr.bf16.mxu0 0
  %1007 = vmatmul.mubr.bf16.gmra.mrb[0].mxu0 %v104
  %v1008 = vpop.f32.mrb[0].mxu0
  %v1009 = vadd.f32 %v944, %v1008
  %v1010 = vpop.f32.mrb[0].mxu0
  %v1011 = vpop.f32.mrb[0].mxu0
  %v1012 = vadd.f32 %v947, %v1011
  %v1013 = vpop.f32.mrb[0].mxu0
  %1014 = vmatprep.mubr.bf16.mxu0 0
  %1015 = vmatmul.mubr.bf16.gmra.mrb[0].mxu0 %v113
  %v1016 = vpop.f32.mrb[0].mxu0
  %v1017 = vadd.f32 %v952, %v1016
  %v1018 = vpop.f32.mrb[0].mxu0
  %v1019 = vpop.f32.mrb[0].mxu0
  %v1020 = vadd.f32 %v955, %v1019
  %v1021 = vpop.f32.mrb[0].mxu0
  %1022 = vmatprep.mubr.bf16.mxu0 0
  %1023 = vmatmul.mubr.bf16.gmra.mrb[0].mxu0 %v122
  %v1024 = vpop.f32.mrb[0].mxu0
  %v1025 = vadd.f32 %v960, %v1024
  %v1026 = vpop.f32.mrb[0].mxu0
  %v1027 = vpop.f32.mrb[0].mxu0
  %v1028 = vadd.f32 %v963, %v1027
  %v1029 = vpop.f32.mrb[0].mxu0
  %1030 = vdwg.mxu0
  %v1031 = vmax.f32 %v1001, 0.0
  %v1032 = vmax.f32 %v1004, 0.0
  %v1033 = vmax.f32 %v1009, 0.0
  %v1034 = vmax.f32 %v1012, 0.0
  %v1035 = vmax.f32 %v1017, 0.0
  %v1036 = vmax.f32 %v1020, 0.0
  %v1037 = vmax.f32 %v1025, 0.0
  %v1038 = vmax.f32 %v1028, 0.0
  %1039 = vst [vmem:[%s3] sm:$0xff] %v1031
  %1040 = vst [vmem:[%s3 + $0x8] sm:$0xff] %v1032
  %1041 = vst [vmem:[%s3 + $0x10] sm:$0xff] %v1033
  %1042 = vst [vmem:[%s3 + $0x18] sm:$0xff] %v1034
  %1043 = vst [vmem:[%s3 + $0x20] sm:$0xff] %v1035
  %1044 = vst [vmem:[%s3 + $0x28] sm:$0xff] %v1036
  %1045 = vst [vmem:[%s3 + $0x30] sm:$0xff] %v1037
  %1046 = vst [vmem:[%s3 + $0x38] sm:$0xff] %v1038
  // Predicated region
  $region14: #{base_ctc_forward.8} parent=0 // pred_check
    _
  $region15: #{base_ctc_forward.8} parent=0 // pred_check_branch
    %1048 = sbr.rel (0) target = $region17
  $region16: #{base_ctc_forward.8} parent=0 // pred_region
    _
  $region17: #{base_ctc_forward.8} parent=0 // pred_fallthru
    _
  // Predicated region
  $region18: #{base_ctc_forward.8} parent=0 // pred_check
    _
  $region19: #{base_ctc_forward.8} parent=0 // pred_check_branch
    %1050 = sbr.rel (0) target = $region21
  $region20: #{base_ctc_forward.8} parent=0 // pred_region
    _
  $region21: #{base_ctc_forward.8} parent=0 // pred_fallthru
    _

// kernel: base_ctc_forward.11
$region0: #{base_ctc_forward.11}
  #allocation0 [shape = 'u32[]', space=smem, size = 0x4, offset = 0x4, fixed_abs, tag = 'smem constant byte address 0x4 - core index']
  #allocation1 [shape = 'u32[144,128]{1,0:T(1,128)}', space=vmem, size = 0x12000, scoped, tag = 'internal scratch']
  %s0 = inlined_call_operand.vmem [shape: f32[2,8,128], index: 0, kind: input, shape index: {}]
  %s1 = inlined_call_operand.vmem [shape: bf16[128,128], index: 1, kind: input, shape index: {}]
  %s2 = inlined_call_operand.vmem [shape: f32[1,128], index: 2, kind: input, shape index: {}]
  %s3 = inlined_call_operand.hbm [shape: f32[8,2,128], index: 3, kind: output, shape index: {}]
  %s4 = sld [smem:[#allocation0]]
  $region22: #{base_ctc_forward.11} parent=0
    _
  %s6 = ssub.s32 1, %s4
  %s7 = scalar_select 0, %s6, %s4
  $region1: #{base_ctc_forward.11} parent=0
    #allocation2 [shape = 'u8[8192]{0}', space=vmem, size = 0x2000, scoped, tag = 'output window, operand 0, single buffered']
    #allocation3 [shape = 's32[1]{0}', space=sflag, size = 0x4, scoped, tag = 'scoped memory for base_ctc_forward.11']
    %8 = vsyncpa [#allocation3], 0
    // Predicated region
    $region2: #{base_ctc_forward.11} parent=1 // pred_check
      _
    $region3: #{base_ctc_forward.11} parent=1 // pred_check_branch
      %10 = sbr.rel (0) target = $region5
    $region4: #{base_ctc_forward.11} parent=1 // pred_region
      _
    $region5: #{base_ctc_forward.11} parent=1 // pred_fallthru
      _
    // Predicated region
    $region6: #{base_ctc_forward.11} parent=1 // pred_check
      _
    $region7: #{base_ctc_forward.11} parent=1 // pred_check_branch
      %12 = sbr.rel (0) target = $region9
    $region8: #{base_ctc_forward.11} parent=1 // pred_region
      _
    $region9: #{base_ctc_forward.11} parent=1 // pred_fallthru
      _
    // Predicated region
    $region10: #{base_ctc_forward.11} parent=1 // pred_check
      _
    $region11: #{base_ctc_forward.11} parent=1 // pred_check_branch
      %14 = sbr.rel (0) target = $region13
    $region12: #{base_ctc_forward.11} parent=1 // pred_region
      _
    $region13: #{base_ctc_forward.11} parent=1 // pred_fallthru
      _
    %v16 = vld [vmem:[%s0] sm:$0xff]
    %v17 = vpack.c.bf16 %v16, %v16
    %v18 = vld [vmem:[%s1] sm:$0xf]
    %v19 = vld [vmem:[%s1 + $0x4] sm:$0xf]
    %v20 = vld [vmem:[%s1 + $0x8] sm:$0xf]
    %v21 = vld [vmem:[%s1 + $0xc] sm:$0xf]
    %v22 = vld [vmem:[%s1 + $0x10] sm:$0xf]
    %v23 = vld [vmem:[%s1 + $0x14] sm:$0xf]
    %v24 = vld [vmem:[%s1 + $0x18] sm:$0xf]
    %v25 = vld [vmem:[%s1 + $0x1c] sm:$0xf]
    %v26 = vld [vmem:[%s1 + $0x20] sm:$0xf]
    %v27 = vld [vmem:[%s1 + $0x24] sm:$0xf]
    %v28 = vld [vmem:[%s1 + $0x28] sm:$0xf]
    %v29 = vld [vmem:[%s1 + $0x2c] sm:$0xf]
    %v30 = vld [vmem:[%s1 + $0x30] sm:$0xf]
    %v31 = vld [vmem:[%s1 + $0x34] sm:$0xf]
    %v32 = vld [vmem:[%s1 + $0x38] sm:$0xf]
    %v33 = vld [vmem:[%s1 + $0x3c] sm:$0xf]
    %v34 = vld [vmem:[%s2] sm:$0x1]
    %v36 = vlaneseq
    %v37 = vshrl.u32 %v36, 7
    %v38 = vsub.s32 0, %v37
    %v39 = vrot.slane %v34, %v38
    %v57 = vunpack.c.l.b16 %v18
    %v58 = vunpack.c.l.b16 %v19
    %v59 = vunpack.c.l.b16 %v20
    %v60 = vunpack.c.l.b16 %v21
    %v61 = vunpack.c.l.b16 %v22
    %v62 = vunpack.c.l.b16 %v23
    %v63 = vunpack.c.l.b16 %v24
    %v64 = vunpack.c.l.b16 %v25
    %v65 = vunpack.c.l.b16 %v26
    %v66 = vunpack.c.l.b16 %v27
    %v67 = vunpack.c.l.b16 %v28
    %v68 = vunpack.c.l.b16 %v29
    %v69 = vunpack.c.l.b16 %v30
    %v70 = vunpack.c.l.b16 %v31
    %v71 = vunpack.c.l.b16 %v32
    %v72 = vunpack.c.l.b16 %v33
    %v73 = vpack.c.b16 %v58, %v57
    %v74 = vpack.c.b16 %v60, %v59
    %v75 = vpack.c.b16 %v62, %v61
    %v76 = vpack.c.b16 %v64, %v63
    %v77 = vpack.c.b16 %v66, %v65
    %v78 = vpack.c.b16 %v68, %v67
    %v79 = vpack.c.b16 %v70, %v69
    %v80 = vpack.c.b16 %v72, %v71
    %89 = vmatprep.subr.bf16.mxu0 0
    %90 = vmatpush1.bf16.msra.mxu0 %v73
    %91 = vmatprep.subr.bf16.mxu0 0
    %92 = vmatpush1.bf16.msra.mxu0 %v74
    %93 = vmatprep.subr.bf16.mxu0 0
    %94 = vmatpush1.bf16.msra.mxu0 %v75
    %95 = vmatprep.subr.bf16.mxu0 0
    %96 = vmatpush1.bf16.msra.mxu0 %v76
    %97 = vmatprep.subr.bf16.mxu0 0
    %98 = vmatpush1.bf16.msra.mxu0 %v77
    %99 = vmatprep.subr.bf16.mxu0 0
    %100 = vmatpush1.bf16.msra.mxu0 %v78
    %101 = vmatprep.subr.bf16.mxu0 0
    %102 = vmatpush1.bf16.msra.mxu0 %v79
    %103 = vmatprep.subr.bf16.mxu0 0
    %104 = vmatpush1.bf16.msra.mxu0 %v80
    %105 = vmatprep.subr.bf16.mxu0 0
    %106 = vmatpush1.bf16.msra.mxu0 0
    %107 = vmatprep.subr.bf16.mxu0 0
    %108 = vmatpush1.bf16.msra.mxu0 0
    %109 = vmatprep.subr.bf16.mxu0 0
    %110 = vmatpush1.bf16.msra.mxu0 0
    %111 = vmatprep.subr.bf16.mxu0 0
    %112 = vmatpush1.bf16.msra.mxu0 0
    %113 = vmatprep.subr.bf16.mxu0 0
    %114 = vmatpush1.bf16.msra.mxu0 0
    %115 = vmatprep.subr.bf16.mxu0 0
    %116 = vmatpush1.bf16.msra.mxu0 0
    %117 = vmatprep.subr.bf16.mxu0 0
    %118 = vmatpush1.bf16.msra.mxu0 0
    %119 = vmatprep.subr.bf16.mxu0 0
    %120 = vmatpush1.bf16.msra.mxu0 0
    %121 = vmatprep.mubr.bf16.mxu0 0
    %122 = vmatmul.mubr.bf16.gmra.mrb[0].mxu0 %v17
    %v123 = vpop.f32.mrb[0].mxu0
    %v124 = vadd.f32 %v39, %v123
    %v125 = vpop.f32.mrb[0].mxu0
    %v126 = vpop.f32.mrb[0].mxu0
    %v127 = vpop.f32.mrb[0].mxu0
    %128 = vdwg.mxu0
    %129 = vmax.xlane.f32.xlu0 %v124
    %v130 = vpop.xlane.xlu0 %129
    %v131 = vsub.f32 %v124, %v130
    %v132 = vmul.f32 %v131, 1.442695
    %v133 = vpow.pop %v132
    %134 = vadd.xlane.f32.xlu0 %v133
    %v135 = vpop.xlane.xlu0 %134
    %v136 = vlog2.pop %v135
    %v137 = vmul.f32 %v136, 0.6931472
    %v138 = vsub.f32 %v131, %v137
    %v140 = vcombine.high %v138, %v138
    %v142 = vunpack.c.l.s4 1966171168
    %v143 = vunpack.c.0.s8 %v142
    %v144 = vlaneseq
    %v145 = vshrl.u32 %v144, 7
    %v146 = vsub.s32 %v143, %v145
    %v147 = vrot.slane %v138, %v146
    %v149 = vunpack.c.l.s4 1966171168
    %v150 = vunpack.c.0.s8 %v149
    %v151 = vlaneseq
    %v152 = vshrl.u32 %v151, 7
    %v153 = vsub.s32 %v150, %v152
    %v154 = vrot.slane %v140, %v153
    %v155 = vcombine.high %v147, %v147
    %v156 = vcombine.high %v154, %v154
    %v158 = vunpack.c.l.s4 1966171168
    %v159 = vunpack.c.0.s8 %v158
    %v160 = vlaneseq
    %v161 = vshrl.u32 %v160, 7
    %v162 = vsub.s32 %v159, %v161
    %v163 = vrot.slane %v147, %v162
    %v165 = vunpack.c.l.s4 1966171168
    %v166 = vunpack.c.0.s8 %v165
    %v167 = vlaneseq
    %v168 = vshrl.u32 %v167, 7
    %v169 = vsub.s32 %v166, %v168
    %v170 = vrot.slane %v154, %v169
    %v172 = vunpack.c.l.s4 1966171168
    %v173 = vunpack.c.0.s8 %v172
    %v174 = vlaneseq
    %v175 = vshrl.u32 %v174, 7
    %v176 = vsub.s32 %v173, %v175
    %v177 = vrot.slane %v155, %v176
    %v179 = vunpack.c.l.s4 1966171168
    %v180 = vunpack.c.0.s8 %v179
    %v181 = vlaneseq
    %v182 = vshrl.u32 %v181, 7
    %v183 = vsub.s32 %v180, %v182
    %v184 = vrot.slane %v156, %v183
    %v185 = vcombine.high %v163, %v163
    %v186 = vcombine.high %v170, %v170
    %v187 = vcombine.high %v177, %v177
    %v188 = vcombine.high %v184, %v184
    %197 = vst [vmem:[#allocation2] sm:$0x1] %v163
    %198 = vst [vmem:[#allocation2 + $0x2] sm:$0x1] %v177
    %199 = vst [vmem:[#allocation2 + $0x4] sm:$0x1] %v185
    %200 = vst [vmem:[#allocation2 + $0x6] sm:$0x1] %v187
    %201 = vst [vmem:[#allocation2 + $0x8] sm:$0x1] %v170
    %202 = vst [vmem:[#allocation2 + $0xa] sm:$0x1] %v184
    %203 = vst [vmem:[#allocation2 + $0xc] sm:$0x1] %v186
    %204 = vst [vmem:[#allocation2 + $0xe] sm:$0x1] %v188
    %s205 = scalar_lea.vmem %s0, 8
    %v206 = vld [vmem:[%s205] sm:$0xff]
    %v207 = vpack.c.bf16 %v206, %v206
    %v208 = vld [vmem:[%s1] sm:$0xf]
    %v209 = vld [vmem:[%s1 + $0x4] sm:$0xf]
    %v210 = vld [vmem:[%s1 + $0x8] sm:$0xf]
    %v211 = vld [vmem:[%s1 + $0xc] sm:$0xf]
    %v212 = vld [vmem:[%s1 + $0x10] sm:$0xf]
    %v213 = vld [vmem:[%s1 + $0x14] sm:$0xf]
    %v214 = vld [vmem:[%s1 + $0x18] sm:$0xf]
    %v215 = vld [vmem:[%s1 + $0x1c] sm:$0xf]
    %v216 = vld [vmem:[%s1 + $0x20] sm:$0xf]
    %v217 = vld [vmem:[%s1 + $0x24] sm:$0xf]
    %v218 = vld [vmem:[%s1 + $0x28] sm:$0xf]
    %v219 = vld [vmem:[%s1 + $0x2c] sm:$0xf]
    %v220 = vld [vmem:[%s1 + $0x30] sm:$0xf]
    %v221 = vld [vmem:[%s1 + $0x34] sm:$0xf]
    %v222 = vld [vmem:[%s1 + $0x38] sm:$0xf]
    %v223 = vld [vmem:[%s1 + $0x3c] sm:$0xf]
    %v224 = vld [vmem:[%s2] sm:$0x1]
    %v226 = vlaneseq
    %v227 = vshrl.u32 %v226, 7
    %v228 = vsub.s32 0, %v227
    %v229 = vrot.slane %v224, %v228
    %v247 = vunpack.c.l.b16 %v208
    %v248 = vunpack.c.l.b16 %v209
    %v249 = vunpack.c.l.b16 %v210
    %v250 = vunpack.c.l.b16 %v211
    %v251 = vunpack.c.l.b16 %v212
    %v252 = vunpack.c.l.b16 %v213
    %v253 = vunpack.c.l.b16 %v214
    %v254 = vunpack.c.l.b16 %v215
    %v255 = vunpack.c.l.b16 %v216
    %v256 = vunpack.c.l.b16 %v217
    %v257 = vunpack.c.l.b16 %v218
    %v258 = vunpack.c.l.b16 %v219
    %v259 = vunpack.c.l.b16 %v220
    %v260 = vunpack.c.l.b16 %v221
    %v261 = vunpack.c.l.b16 %v222
    %v262 = vunpack.c.l.b16 %v223
    %v263 = vpack.c.b16 %v248, %v247
    %v264 = vpack.c.b16 %v250, %v249
    %v265 = vpack.c.b16 %v252, %v251
    %v266 = vpack.c.b16 %v254, %v253
    %v267 = vpack.c.b16 %v256, %v255
    %v268 = vpack.c.b16 %v258, %v257
    %v269 = vpack.c.b16 %v260, %v259
    %v270 = vpack.c.b16 %v262, %v261
    %279 = vmatprep.subr.bf16.mxu0 0
    %280 = vmatpush1.bf16.msra.mxu0 %v263
    %281 = vmatprep.subr.bf16.mxu0 0
    %282 = vmatpush1.bf16.msra.mxu0 %v264
    %283 = vmatprep.subr.bf16.mxu0 0
    %284 = vmatpush1.bf16.msra.mxu0 %v265
    %285 = vmatprep.subr.bf16.mxu0 0
    %286 = vmatpush1.bf16.msra.mxu0 %v266
    %287 = vmatprep.subr.bf16.mxu0 0
    %288 = vmatpush1.bf16.msra.mxu0 %v267
    %289 = vmatprep.subr.bf16.mxu0 0
    %290 = vmatpush1.bf16.msra.mxu0 %v268
    %291 = vmatprep.subr.bf16.mxu0 0
    %292 = vmatpush1.bf16.msra.mxu0 %v269
    %293 = vmatprep.subr.bf16.mxu0 0
    %294 = vmatpush1.bf16.msra.mxu0 %v270
    %295 = vmatprep.subr.bf16.mxu0 0
    %296 = vmatpush1.bf16.msra.mxu0 0
    %297 = vmatprep.subr.bf16.mxu0 0
    %298 = vmatpush1.bf16.msra.mxu0 0
    %299 = vmatprep.subr.bf16.mxu0 0
    %300 = vmatpush1.bf16.msra.mxu0 0
    %301 = vmatprep.subr.bf16.mxu0 0
    %302 = vmatpush1.bf16.msra.mxu0 0
    %303 = vmatprep.subr.bf16.mxu0 0
    %304 = vmatpush1.bf16.msra.mxu0 0
    %305 = vmatprep.subr.bf16.mxu0 0
    %306 = vmatpush1.bf16.msra.mxu0 0
    %307 = vmatprep.subr.bf16.mxu0 0
    %308 = vmatpush1.bf16.msra.mxu0 0
    %309 = vmatprep.subr.bf16.mxu0 0
    %310 = vmatpush1.bf16.msra.mxu0 0
    %311 = vmatprep.mubr.bf16.mxu0 0
    %312 = vmatmul.mubr.bf16.gmra.mrb[0].mxu0 %v207
    %v313 = vpop.f32.mrb[0].mxu0
    %v314 = vadd.f32 %v229, %v313
    %v315 = vpop.f32.mrb[0].mxu0
    %v316 = vpop.f32.mrb[0].mxu0
    %v317 = vpop.f32.mrb[0].mxu0
    %318 = vdwg.mxu0
    %319 = vmax.xlane.f32.xlu0 %v314
    %v320 = vpop.xlane.xlu0 %319
    %v321 = vsub.f32 %v314, %v320
    %v322 = vmul.f32 %v321, 1.442695
    %v323 = vpow.pop %v322
    %324 = vadd.xlane.f32.xlu0 %v323
    %v325 = vpop.xlane.xlu0 %324
    %v326 = vlog2.pop %v325
    %v327 = vmul.f32 %v326, 0.6931472
    %v328 = vsub.f32 %v321, %v327
    %v330 = vcombine.high %v328, %v328
    %v332 = vunpack.c.l.s4 1966171168
    %v333 = vunpack.c.0.s8 %v332
    %v334 = vlaneseq
    %v335 = vshrl.u32 %v334, 7
    %v336 = vsub.s32 %v333, %v335
    %v337 = vrot.slane %v328, %v336
    %v339 = vunpack.c.l.s4 1966171168
    %v340 = vunpack.c.0.s8 %v339
    %v341 = vlaneseq
    %v342 = vshrl.u32 %v341, 7
    %v343 = vsub.s32 %v340, %v342
    %v344 = vrot.slane %v330, %v343
    %v345 = vcombine.high %v337, %v337
    %v346 = vcombine.high %v344, %v344
    %v348 = vunpack.c.l.s4 1966171168
    %v349 = vunpack.c.0.s8 %v348
    %v350 = vlaneseq
    %v351 = vshrl.u32 %v350, 7
    %v352 = vsub.s32 %v349, %v351
    %v353 = vrot.slane %v337, %v352
    %v355 = vunpack.c.l.s4 1966171168
    %v356 = vunpack.c.0.s8 %v355
    %v357 = vlaneseq
    %v358 = vshrl.u32 %v357, 7
    %v359 = vsub.s32 %v356, %v358
    %v360 = vrot.slane %v344, %v359
    %v362 = vunpack.c.l.s4 1966171168
    %v363 = vunpack.c.0.s8 %v362
    %v364 = vlaneseq
    %v365 = vshrl.u32 %v364, 7
    %v366 = vsub.s32 %v363, %v365
    %v367 = vrot.slane %v345, %v366
    %v369 = vunpack.c.l.s4 1966171168
    %v370 = vunpack.c.0.s8 %v369
    %v371 = vlaneseq
    %v372 = vshrl.u32 %v371, 7
    %v373 = vsub.s32 %v370, %v372
    %v374 = vrot.slane %v346, %v373
    %v375 = vcombine.high %v353, %v353
    %v376 = vcombine.high %v360, %v360
    %v377 = vcombine.high %v367, %v367
    %v378 = vcombine.high %v374, %v374
    %387 = vst [vmem:[#allocation2 + $0x1] sm:$0x1] %v353
    %388 = vst [vmem:[#allocation2 + $0x3] sm:$0x1] %v367
    %389 = vst [vmem:[#allocation2 + $0x5] sm:$0x1] %v375
    %390 = vst [vmem:[#allocation2 + $0x7] sm:$0x1] %v377
    %391 = vst [vmem:[#allocation2 + $0x9] sm:$0x1] %v360
    %392 = vst [vmem:[#allocation2 + $0xb] sm:$0x1] %v374
    %393 = vst [vmem:[#allocation2 + $0xd] sm:$0x1] %v376
    %394 = vst [vmem:[#allocation2 + $0xf] sm:$0x1] %v378
    // Predicated region
    $region14: #{base_ctc_forward.11} parent=1 // pred_check
      _
    $region15: #{base_ctc_forward.11} parent=1 // pred_check_branch
      %396 = sbr.rel (0) target = $region17
    $region16: #{base_ctc_forward.11} parent=1 // pred_region
      %s398 = ssub.s32 256, 256
      %399 = vsyncadd [#allocation3], %s398
      %s400 = sshll.u32 [#allocation2], 4
      %s401 = int_to_ptr.vmem [resolvable:$true] %s400
      %406 = dma.vmem_to_hbm [thread:$0]  %s401, 256, %s3, [#allocation3], 32, 32, 2
    $region17: #{base_ctc_forward.11} parent=1 // pred_fallthru
      _
    // Predicated region
    $region18: #{base_ctc_forward.11} parent=1 // pred_check
      _
    $region19: #{base_ctc_forward.11} parent=1 // pred_check_branch
      %408 = sbr.rel (0) target = $region21
    $region20: #{base_ctc_forward.11} parent=1 // pred_region
      %409 = dma.done [#allocation3], 256
    $region21: #{base_ctc_forward.11} parent=1 // pred_fallthru
      _
    %410 = vsyncpa [#allocation3], 1

// kernel: base_ctc_forward.10
$region0: #{base_ctc_forward.10}
  #allocation0 [shape = 'u32[]', space=smem, size = 0x4, offset = 0x4, fixed_abs, tag = 'smem constant byte address 0x4 - core index']
  #allocation1 [shape = 'u32[144,128]{1,0:T(1,128)}', space=vmem, size = 0x12000, scoped, tag = 'internal scratch']
  %s0 = inlined_call_operand.smem [shape: u32[30], index: -1, kind: input, shape index: {}]
  %s1 = sld [smem:[%s0]]
  %s2 = scalar_lea.smem %s0, 1
  %s3 = sld [smem:[%s2]]
  %s4 = scalar_lea.smem %s0, 2
  %s5 = sld [smem:[%s4]]
  %s6 = scalar_lea.smem %s0, 3
  %s7 = sld [smem:[%s6]]
  %s8 = scalar_lea.smem %s0, 4
  %s9 = sld [smem:[%s8]]
  %s10 = scalar_lea.smem %s0, 5
  %s11 = sld [smem:[%s10]]
  %s12 = scalar_lea.smem %s0, 6
  %s13 = sld [smem:[%s12]]
  %s14 = scalar_lea.smem %s0, 7
  %s15 = sld [smem:[%s14]]
  %s16 = scalar_lea.smem %s0, 8
  %s17 = sld [smem:[%s16]]
  %s18 = scalar_lea.smem %s0, 9
  %s19 = sld [smem:[%s18]]
  %s20 = scalar_lea.smem %s0, 10
  %s21 = sld [smem:[%s20]]
  %s22 = scalar_lea.smem %s0, 11
  %s23 = sld [smem:[%s22]]
  %s24 = scalar_lea.smem %s0, 12
  %s25 = sld [smem:[%s24]]
  %s26 = scalar_lea.smem %s0, 13
  %s27 = sld [smem:[%s26]]
  %s28 = scalar_lea.smem %s0, 14
  %s29 = sld [smem:[%s28]]
  %s30 = scalar_lea.smem %s0, 15
  %s31 = sld [smem:[%s30]]
  %s32 = scalar_lea.smem %s0, 16
  %s33 = sld [smem:[%s32]]
  %s34 = scalar_lea.smem %s0, 17
  %s35 = sld [smem:[%s34]]
  %s36 = scalar_lea.smem %s0, 18
  %s37 = sld [smem:[%s36]]
  %s38 = scalar_lea.smem %s0, 19
  %s39 = sld [smem:[%s38]]
  %s40 = scalar_lea.smem %s0, 20
  %s41 = sld [smem:[%s40]]
  %s42 = scalar_lea.smem %s0, 21
  %s43 = sld [smem:[%s42]]
  %s44 = scalar_lea.smem %s0, 22
  %s45 = sld [smem:[%s44]]
  %s46 = scalar_lea.smem %s0, 23
  %s47 = sld [smem:[%s46]]
  %s48 = scalar_lea.smem %s0, 24
  %s49 = sld [smem:[%s48]]
  %s50 = scalar_lea.smem %s0, 25
  %s51 = sld [smem:[%s50]]
  %s52 = scalar_lea.smem %s0, 26
  %s53 = sld [smem:[%s52]]
  %s54 = scalar_lea.smem %s0, 27
  %s55 = sld [smem:[%s54]]
  %s56 = scalar_lea.smem %s0, 28
  %s57 = sld [smem:[%s56]]
  %s58 = scalar_lea.smem %s0, 29
  %s59 = sld [smem:[%s58]]
  %s60 = sld [smem:[#allocation0]]
  $region153: #{base_ctc_forward.10} parent=0
    _
  %s62 = ssub.s32 1, %s60
  %s63 = scalar_select 0, %s62, %s60
  $region1: #{base_ctc_forward.10} parent=0
    #allocation2 [shape = 'u8[512]{0}', space=vmem, size = 0x400, scoped, tag = 'input window, operand 28, single buffered']
    #allocation3 [shape = 's32[2]{0}', space=sflag, size = 0x8, scoped, tag = 'scoped memory for base_ctc_forward.10']
    %64 = vsyncpa [#allocation3], 0
    loop: start=0, step=1, limit=4
    $region2: #{base_ctc_forward.10} parent=1 // loop_pre_header
      _
    $region3: #{base_ctc_forward.10} parent=1 // loop_header
      %s66 = sphi 0, %s70
      %p67 = scmp.ge.s32.totalorder %s66, 4
      %s76 = sphi 0, %s78
      %s79 = sphi 0, %s76
      %s80 = sphi 0, %s79
      %s96 = sphi 0, %s80
      %s100 = sphi 0, %s100
      %s102 = sphi 0, %s100
      %s103 = sphi 0, %s102
      %s117 = sphi 0, %s103
      %s121 = sphi 0, %s121
      %s123 = sphi 0, %s121
      %s124 = sphi 0, %s123
      %s138 = sphi 0, %s124
      %s142 = sphi 0, %s142
      %s144 = sphi 0, %s142
      %s145 = sphi 0, %s144
      %s159 = sphi 0, %s145
      %s163 = sphi 0, %s163
      %s165 = sphi 0, %s163
      %s166 = sphi 0, %s165
      %s180 = sphi 0, %s166
      %s184 = sphi 0, %s184
      %s186 = sphi 0, %s184
      %s187 = sphi 0, %s186
      %s201 = sphi 0, %s187
      %s205 = sphi 0, %s205
      %s207 = sphi 0, %s205
      %s208 = sphi 0, %s207
      %s222 = sphi 0, %s208
      %s226 = sphi 0, %s226
      %s228 = sphi 0, %s226
      %s229 = sphi 0, %s228
      %s243 = sphi 0, %s229
      %s247 = sphi 0, %s247
      %s249 = sphi 0, %s247
      %s250 = sphi 0, %s249
      %s264 = sphi 0, %s250
      %s268 = sphi 0, %s268
      %s270 = sphi 0, %s268
      %s271 = sphi 0, %s270
      %s285 = sphi 0, %s271
      %s289 = sphi 0, %s289
      %s291 = sphi 0, %s289
      %s292 = sphi 0, %s291
      %s306 = sphi 0, %s292
      %s310 = sphi 0, %s310
      %s312 = sphi 0, %s310
      %s313 = sphi 0, %s312
      %s327 = sphi 0, %s313
      %s331 = sphi 0, %s331
      %s333 = sphi 0, %s331
      %s334 = sphi 0, %s333
      %s348 = sphi 0, %s334
      %s352 = sphi 0, %s352
      %s354 = sphi 0, %s352
      %s355 = sphi 0, %s354
      %s369 = sphi 0, %s355
      %s373 = sphi 0, %s373
      %s375 = sphi 0, %s373
      %s376 = sphi 0, %s375
      %s390 = sphi 0, %s376
      %s394 = sphi 0, %s394
      %s396 = sphi 0, %s394
      %s397 = sphi 0, %s396
      %s411 = sphi 0, %s397
      %s415 = sphi 0, %s415
      %s417 = sphi 0, %s415
      %s418 = sphi 0, %s417
      %s432 = sphi 0, %s418
      %s436 = sphi 0, %s436
      %s438 = sphi 0, %s436
      %s439 = sphi 0, %s438
      %s453 = sphi 0, %s439
      %s457 = sphi 0, %s457
      %s459 = sphi 0, %s457
      %s460 = sphi 0, %s459
      %s474 = sphi 0, %s460
      %s478 = sphi 0, %s478
      %s480 = sphi 0, %s478
      %s481 = sphi 0, %s480
      %s495 = sphi 0, %s481
      %s499 = sphi 0, %s499
      %s501 = sphi 0, %s499
      %s502 = sphi 0, %s501
      %s516 = sphi 0, %s502
      %s520 = sphi 0, %s520
      %s522 = sphi 0, %s520
      %s523 = sphi 0, %s522
      %s537 = sphi 0, %s523
      %s541 = sphi 0, %s541
      %s543 = sphi 0, %s541
      %s544 = sphi 0, %s543
      %s558 = sphi 0, %s544
      %s562 = sphi 0, %s562
      %s564 = sphi 0, %s562
      %s565 = sphi 0, %s564
      %s579 = sphi 0, %s565
      %s583 = sphi 0, %s583
      %s585 = sphi 0, %s583
      %s586 = sphi 0, %s585
      %s600 = sphi 0, %s586
      %s604 = sphi 0, %s604
      %s606 = sphi 0, %s604
      %s607 = sphi 0, %s606
      %s621 = sphi 0, %s607
      %s625 = sphi 0, %s625
      %s627 = sphi 0, %s625
      %s628 = sphi 0, %s627
      %s642 = sphi 0, %s628
      %s646 = sphi 0, %s646
      %s648 = sphi 0, %s646
      %s649 = sphi 0, %s648
      %s663 = sphi 0, %s649
      %s667 = sphi 0, %s667
      %s669 = sphi 0, %s667
      %s670 = sphi 0, %s669
      %s684 = sphi 0, %s670
      %s690 = sphi 0, %s692
      %s693 = sphi 0, %s690
      %s694 = sphi 0, %s693
      %s710 = sphi 0, %s694
    $region4: #{base_ctc_forward.10} parent=1 // loop_header_branch
      %69 = sbr.rel (%p67) target = $region8
    $region5: #{base_ctc_forward.10} parent=1 // loop_body
      %s71 = ssub.s32 %s66, 1
      %s72 = ssub.s32 %s66, 2
      %s73 = sadd.s32 %s66, 1
      %s74 = ssub.s32 %s66, %s73
      %p75 = scmp.eq.s32.totalorder %s74, 0
      %s77 = sadd.s32 %s76, 1
      %s78 = scalar_select %p75, %s76, %s77
      %p81 = pneg %p75
      %p82 = scmp.eq.s32.totalorder %s66, 1
      %p83 = por %p81, %p82
      %p84 = scmp.ne.s32.totalorder %s76, %s79
      %p85 = scmp.eq.s32.totalorder %s66, 0
      %p86 = por %p84, %p85
      %p87 = scmp.ne.s32.totalorder %s76, %s79
      %p88 = scmp.eq.s32.totalorder %s71, 1
      %p89 = por %p87, %p88
      %p90 = scmp.ne.s32.totalorder %s79, %s80
      %p91 = scmp.eq.s32.totalorder %s71, 0
      %p92 = por %p90, %p91
      %p93 = scmp.ne.s32.totalorder %s79, %s80
      %p94 = scmp.eq.s32.totalorder %s72, 1
      %p95 = por %p93, %p94
      %p97 = scmp.ne.s32.totalorder %s80, %s96
      %p98 = scmp.eq.s32.totalorder %s72, 0
      %p99 = por %p97, %p98
      %s101 = sadd.s32 %s100, 1
      %p104 = scmp.eq.s32.totalorder %s66, 1
      %p105 = scmp.ne.s32.totalorder %s100, %s102
      %p106 = scmp.eq.s32.totalorder %s66, 0
      %p107 = por %p105, %p106
      %p108 = scmp.ne.s32.totalorder %s100, %s102
      %p109 = scmp.eq.s32.totalorder %s71, 1
      %p110 = por %p108, %p109
      %p111 = scmp.ne.s32.totalorder %s102, %s103
      %p112 = scmp.eq.s32.totalorder %s71, 0
      %p113 = por %p111, %p112
      %p114 = scmp.ne.s32.totalorder %s102, %s103
      %p115 = scmp.eq.s32.totalorder %s72, 1
      %p116 = por %p114, %p115
      %p118 = scmp.ne.s32.totalorder %s103, %s117
      %p119 = scmp.eq.s32.totalorder %s72, 0
      %p120 = por %p118, %p119
      %s122 = sadd.s32 %s121, 1
      %p125 = scmp.eq.s32.totalorder %s66, 1
      %p126 = scmp.ne.s32.totalorder %s121, %s123
      %p127 = scmp.eq.s32.totalorder %s66, 0
      %p128 = por %p126, %p127
      %p129 = scmp.ne.s32.totalorder %s121, %s123
      %p130 = scmp.eq.s32.totalorder %s71, 1
      %p131 = por %p129, %p130
      %p132 = scmp.ne.s32.totalorder %s123, %s124
      %p133 = scmp.eq.s32.totalorder %s71, 0
      %p134 = por %p132, %p133
      %p135 = scmp.ne.s32.totalorder %s123, %s124
      %p136 = scmp.eq.s32.totalorder %s72, 1
      %p137 = por %p135, %p136
      %p139 = scmp.ne.s32.totalorder %s124, %s138
      %p140 = scmp.eq.s32.totalorder %s72, 0
      %p141 = por %p139, %p140
      %s143 = sadd.s32 %s142, 1
      %p146 = scmp.eq.s32.totalorder %s66, 1
      %p147 = scmp.ne.s32.totalorder %s142, %s144
      %p148 = scmp.eq.s32.totalorder %s66, 0
      %p149 = por %p147, %p148
      %p150 = scmp.ne.s32.totalorder %s142, %s144
      %p151 = scmp.eq.s32.totalorder %s71, 1
      %p152 = por %p150, %p151
      %p153 = scmp.ne.s32.totalorder %s144, %s145
      %p154 = scmp.eq.s32.totalorder %s71, 0
      %p155 = por %p153, %p154
      %p156 = scmp.ne.s32.totalorder %s144, %s145
      %p157 = scmp.eq.s32.totalorder %s72, 1
      %p158 = por %p156, %p157
      %p160 = scmp.ne.s32.totalorder %s145, %s159
      %p161 = scmp.eq.s32.totalorder %s72, 0
      %p162 = por %p160, %p161
      %s164 = sadd.s32 %s163, 1
      %p167 = scmp.eq.s32.totalorder %s66, 1
      %p168 = scmp.ne.s32.totalorder %s163, %s165
      %p169 = scmp.eq.s32.totalorder %s66, 0
      %p170 = por %p168, %p169
      %p171 = scmp.ne.s32.totalorder %s163, %s165
      %p172 = scmp.eq.s32.totalorder %s71, 1
      %p173 = por %p171, %p172
      %p174 = scmp.ne.s32.totalorder %s165, %s166
      %p175 = scmp.eq.s32.totalorder %s71, 0
      %p176 = por %p174, %p175
      %p177 = scmp.ne.s32.totalorder %s165, %s166
      %p178 = scmp.eq.s32.totalorder %s72, 1
      %p179 = por %p177, %p178
      %p181 = scmp.ne.s32.totalorder %s166, %s180
      %p182 = scmp.eq.s32.totalorder %s72, 0
      %p183 = por %p181, %p182
      %s185 = sadd.s32 %s184, 1
      %p188 = scmp.eq.s32.totalorder %s66, 1
      %p189 = scmp.ne.s32.totalorder %s184, %s186
      %p190 = scmp.eq.s32.totalorder %s66, 0
      %p191 = por %p189, %p190
      %p192 = scmp.ne.s32.totalorder %s184, %s186
      %p193 = scmp.eq.s32.totalorder %s71, 1
      %p194 = por %p192, %p193
      %p195 = scmp.ne.s32.totalorder %s186, %s187
      %p196 = scmp.eq.s32.totalorder %s71, 0
      %p197 = por %p195, %p196
      %p198 = scmp.ne.s32.totalorder %s186, %s187
      %p199 = scmp.eq.s32.totalorder %s72, 1
      %p200 = por %p198, %p199
      %p202 = scmp.ne.s32.totalorder %s187, %s201
      %p203 = scmp.eq.s32.totalorder %s72, 0
      %p204 = por %p202, %p203
      %s206 = sadd.s32 %s205, 1
      %p209 = scmp.eq.s32.totalorder %s66, 1
      %p210 = scmp.ne.s32.totalorder %s205, %s207
      %p211 = scmp.eq.s32.totalorder %s66, 0
      %p212 = por %p210, %p211
      %p213 = scmp.ne.s32.totalorder %s205, %s207
      %p214 = scmp.eq.s32.totalorder %s71, 1
      %p215 = por %p213, %p214
      %p216 = scmp.ne.s32.totalorder %s207, %s208
      %p217 = scmp.eq.s32.totalorder %s71, 0
      %p218 = por %p216, %p217
      %p219 = scmp.ne.s32.totalorder %s207, %s208
      %p220 = scmp.eq.s32.totalorder %s72, 1
      %p221 = por %p219, %p220
      %p223 = scmp.ne.s32.totalorder %s208, %s222
      %p224 = scmp.eq.s32.totalorder %s72, 0
      %p225 = por %p223, %p224
      %s227 = sadd.s32 %s226, 1
      %p230 = scmp.eq.s32.totalorder %s66, 1
      %p231 = scmp.ne.s32.totalorder %s226, %s228
      %p232 = scmp.eq.s32.totalorder %s66, 0
      %p233 = por %p231, %p232
      %p234 = scmp.ne.s32.totalorder %s226, %s228
      %p235 = scmp.eq.s32.totalorder %s71, 1
      %p236 = por %p234, %p235
      %p237 = scmp.ne.s32.totalorder %s228, %s229
      %p238 = scmp.eq.s32.totalorder %s71, 0
      %p239 = por %p237, %p238
      %p240 = scmp.ne.s32.totalorder %s228, %s229
      %p241 = scmp.eq.s32.totalorder %s72, 1
      %p242 = por %p240, %p241
      %p244 = scmp.ne.s32.totalorder %s229, %s243
      %p245 = scmp.eq.s32.totalorder %s72, 0
      %p246 = por %p244, %p245
      %s248 = sadd.s32 %s247, 1
      %p251 = scmp.eq.s32.totalorder %s66, 1
      %p252 = scmp.ne.s32.totalorder %s247, %s249
      %p253 = scmp.eq.s32.totalorder %s66, 0
      %p254 = por %p252, %p253
      %p255 = scmp.ne.s32.totalorder %s247, %s249
      %p256 = scmp.eq.s32.totalorder %s71, 1
      %p257 = por %p255, %p256
      %p258 = scmp.ne.s32.totalorder %s249, %s250
      %p259 = scmp.eq.s32.totalorder %s71, 0
      %p260 = por %p258, %p259
      %p261 = scmp.ne.s32.totalorder %s249, %s250
      %p262 = scmp.eq.s32.totalorder %s72, 1
      %p263 = por %p261, %p262
      %p265 = scmp.ne.s32.totalorder %s250, %s264
      %p266 = scmp.eq.s32.totalorder %s72, 0
      %p267 = por %p265, %p266
      %s269 = sadd.s32 %s268, 1
      %p272 = scmp.eq.s32.totalorder %s66, 1
      %p273 = scmp.ne.s32.totalorder %s268, %s270
      %p274 = scmp.eq.s32.totalorder %s66, 0
      %p275 = por %p273, %p274
      %p276 = scmp.ne.s32.totalorder %s268, %s270
      %p277 = scmp.eq.s32.totalorder %s71, 1
      %p278 = por %p276, %p277
      %p279 = scmp.ne.s32.totalorder %s270, %s271
      %p280 = scmp.eq.s32.totalorder %s71, 0
      %p281 = por %p279, %p280
      %p282 = scmp.ne.s32.totalorder %s270, %s271
      %p283 = scmp.eq.s32.totalorder %s72, 1
      %p284 = por %p282, %p283
      %p286 = scmp.ne.s32.totalorder %s271, %s285
      %p287 = scmp.eq.s32.totalorder %s72, 0
      %p288 = por %p286, %p287
      %s290 = sadd.s32 %s289, 1
      %p293 = scmp.eq.s32.totalorder %s66, 1
      %p294 = scmp.ne.s32.totalorder %s289, %s291
      %p295 = scmp.eq.s32.totalorder %s66, 0
      %p296 = por %p294, %p295
      %p297 = scmp.ne.s32.totalorder %s289, %s291
      %p298 = scmp.eq.s32.totalorder %s71, 1
      %p299 = por %p297, %p298
      %p300 = scmp.ne.s32.totalorder %s291, %s292
      %p301 = scmp.eq.s32.totalorder %s71, 0
      %p302 = por %p300, %p301
      %p303 = scmp.ne.s32.totalorder %s291, %s292
      %p304 = scmp.eq.s32.totalorder %s72, 1
      %p305 = por %p303, %p304
      %p307 = scmp.ne.s32.totalorder %s292, %s306
      %p308 = scmp.eq.s32.totalorder %s72, 0
      %p309 = por %p307, %p308
      %s311 = sadd.s32 %s310, 1
      %p314 = scmp.eq.s32.totalorder %s66, 1
      %p315 = scmp.ne.s32.totalorder %s310, %s312
      %p316 = scmp.eq.s32.totalorder %s66, 0
      %p317 = por %p315, %p316
      %p318 = scmp.ne.s32.totalorder %s310, %s312
      %p319 = scmp.eq.s32.totalorder %s71, 1
      %p320 = por %p318, %p319
      %p321 = scmp.ne.s32.totalorder %s312, %s313
      %p322 = scmp.eq.s32.totalorder %s71, 0
      %p323 = por %p321, %p322
      %p324 = scmp.ne.s32.totalorder %s312, %s313
      %p325 = scmp.eq.s32.totalorder %s72, 1
      %p326 = por %p324, %p325
      %p328 = scmp.ne.s32.totalorder %s313, %s327
      %p329 = scmp.eq.s32.totalorder %s72, 0
      %p330 = por %p328, %p329
      %s332 = sadd.s32 %s331, 1
      %p335 = scmp.eq.s32.totalorder %s66, 1
      %p336 = scmp.ne.s32.totalorder %s331, %s333
      %p337 = scmp.eq.s32.totalorder %s66, 0
      %p338 = por %p336, %p337
      %p339 = scmp.ne.s32.totalorder %s331, %s333
      %p340 = scmp.eq.s32.totalorder %s71, 1
      %p341 = por %p339, %p340
      %p342 = scmp.ne.s32.totalorder %s333, %s334
      %p343 = scmp.eq.s32.totalorder %s71, 0
      %p344 = por %p342, %p343
      %p345 = scmp.ne.s32.totalorder %s333, %s334
      %p346 = scmp.eq.s32.totalorder %s72, 1
      %p347 = por %p345, %p346
      %p349 = scmp.ne.s32.totalorder %s334, %s348
      %p350 = scmp.eq.s32.totalorder %s72, 0
      %p351 = por %p349, %p350
      %s353 = sadd.s32 %s352, 1
      %p356 = scmp.eq.s32.totalorder %s66, 1
      %p357 = scmp.ne.s32.totalorder %s352, %s354
      %p358 = scmp.eq.s32.totalorder %s66, 0
      %p359 = por %p357, %p358
      %p360 = scmp.ne.s32.totalorder %s352, %s354
      %p361 = scmp.eq.s32.totalorder %s71, 1
      %p362 = por %p360, %p361
      %p363 = scmp.ne.s32.totalorder %s354, %s355
      %p364 = scmp.eq.s32.totalorder %s71, 0
      %p365 = por %p363, %p364
      %p366 = scmp.ne.s32.totalorder %s354, %s355
      %p367 = scmp.eq.s32.totalorder %s72, 1
      %p368 = por %p366, %p367
      %p370 = scmp.ne.s32.totalorder %s355, %s369
      %p371 = scmp.eq.s32.totalorder %s72, 0
      %p372 = por %p370, %p371
      %s374 = sadd.s32 %s373, 1
      %p377 = scmp.eq.s32.totalorder %s66, 1
      %p378 = scmp.ne.s32.totalorder %s373, %s375
      %p379 = scmp.eq.s32.totalorder %s66, 0
      %p380 = por %p378, %p379
      %p381 = scmp.ne.s32.totalorder %s373, %s375
      %p382 = scmp.eq.s32.totalorder %s71, 1
      %p383 = por %p381, %p382
      %p384 = scmp.ne.s32.totalorder %s375, %s376
      %p385 = scmp.eq.s32.totalorder %s71, 0
      %p386 = por %p384, %p385
      %p387 = scmp.ne.s32.totalorder %s375, %s376
      %p388 = scmp.eq.s32.totalorder %s72, 1
      %p389 = por %p387, %p388
      %p391 = scmp.ne.s32.totalorder %s376, %s390
      %p392 = scmp.eq.s32.totalorder %s72, 0
      %p393 = por %p391, %p392
      %s395 = sadd.s32 %s394, 1
      %p398 = scmp.eq.s32.totalorder %s66, 1
      %p399 = scmp.ne.s32.totalorder %s394, %s396
      %p400 = scmp.eq.s32.totalorder %s66, 0
      %p401 = por %p399, %p400
      %p402 = scmp.ne.s32.totalorder %s394, %s396
      %p403 = scmp.eq.s32.totalorder %s71, 1
      %p404 = por %p402, %p403
      %p405 = scmp.ne.s32.totalorder %s396, %s397
      %p406 = scmp.eq.s32.totalorder %s71, 0
      %p407 = por %p405, %p406
      %p408 = scmp.ne.s32.totalorder %s396, %s397
      %p409 = scmp.eq.s32.totalorder %s72, 1
      %p410 = por %p408, %p409
      %p412 = scmp.ne.s32.totalorder %s397, %s411
      %p413 = scmp.eq.s32.totalorder %s72, 0
      %p414 = por %p412, %p413
      %s416 = sadd.s32 %s415, 1
      %p419 = scmp.eq.s32.totalorder %s66, 1
      %p420 = scmp.ne.s32.totalorder %s415, %s417
      %p421 = scmp.eq.s32.totalorder %s66, 0
      %p422 = por %p420, %p421
      %p423 = scmp.ne.s32.totalorder %s415, %s417
      %p424 = scmp.eq.s32.totalorder %s71, 1
      %p425 = por %p423, %p424
      %p426 = scmp.ne.s32.totalorder %s417, %s418
      %p427 = scmp.eq.s32.totalorder %s71, 0
      %p428 = por %p426, %p427
      %p429 = scmp.ne.s32.totalorder %s417, %s418
      %p430 = scmp.eq.s32.totalorder %s72, 1
      %p431 = por %p429, %p430
      %p433 = scmp.ne.s32.totalorder %s418, %s432
      %p434 = scmp.eq.s32.totalorder %s72, 0
      %p435 = por %p433, %p434
      %s437 = sadd.s32 %s436, 1
      %p440 = scmp.eq.s32.totalorder %s66, 1
      %p441 = scmp.ne.s32.totalorder %s436, %s438
      %p442 = scmp.eq.s32.totalorder %s66, 0
      %p443 = por %p441, %p442
      %p444 = scmp.ne.s32.totalorder %s436, %s438
      %p445 = scmp.eq.s32.totalorder %s71, 1
      %p446 = por %p444, %p445
      %p447 = scmp.ne.s32.totalorder %s438, %s439
      %p448 = scmp.eq.s32.totalorder %s71, 0
      %p449 = por %p447, %p448
      %p450 = scmp.ne.s32.totalorder %s438, %s439
      %p451 = scmp.eq.s32.totalorder %s72, 1
      %p452 = por %p450, %p451
      %p454 = scmp.ne.s32.totalorder %s439, %s453
      %p455 = scmp.eq.s32.totalorder %s72, 0
      %p456 = por %p454, %p455
      %s458 = sadd.s32 %s457, 1
      %p461 = scmp.eq.s32.totalorder %s66, 1
      %p462 = scmp.ne.s32.totalorder %s457, %s459
      %p463 = scmp.eq.s32.totalorder %s66, 0
      %p464 = por %p462, %p463
      %p465 = scmp.ne.s32.totalorder %s457, %s459
      %p466 = scmp.eq.s32.totalorder %s71, 1
      %p467 = por %p465, %p466
      %p468 = scmp.ne.s32.totalorder %s459, %s460
      %p469 = scmp.eq.s32.totalorder %s71, 0
      %p470 = por %p468, %p469
      %p471 = scmp.ne.s32.totalorder %s459, %s460
      %p472 = scmp.eq.s32.totalorder %s72, 1
      %p473 = por %p471, %p472
      %p475 = scmp.ne.s32.totalorder %s460, %s474
      %p476 = scmp.eq.s32.totalorder %s72, 0
      %p477 = por %p475, %p476
      %s479 = sadd.s32 %s478, 1
      %p482 = scmp.eq.s32.totalorder %s66, 1
      %p483 = scmp.ne.s32.totalorder %s478, %s480
      %p484 = scmp.eq.s32.totalorder %s66, 0
      %p485 = por %p483, %p484
      %p486 = scmp.ne.s32.totalorder %s478, %s480
      %p487 = scmp.eq.s32.totalorder %s71, 1
      %p488 = por %p486, %p487
      %p489 = scmp.ne.s32.totalorder %s480, %s481
      %p490 = scmp.eq.s32.totalorder %s71, 0
      %p491 = por %p489, %p490
      %p492 = scmp.ne.s32.totalorder %s480, %s481
      %p493 = scmp.eq.s32.totalorder %s72, 1
      %p494 = por %p492, %p493
      %p496 = scmp.ne.s32.totalorder %s481, %s495
      %p497 = scmp.eq.s32.totalorder %s72, 0
      %p498 = por %p496, %p497
      %s500 = sadd.s32 %s499, 1
      %p503 = scmp.eq.s32.totalorder %s66, 1
      %p504 = scmp.ne.s32.totalorder %s499, %s501
      %p505 = scmp.eq.s32.totalorder %s66, 0
      %p506 = por %p504, %p505
      %p507 = scmp.ne.s32.totalorder %s499, %s501
      %p508 = scmp.eq.s32.totalorder %s71, 1
      %p509 = por %p507, %p508
      %p510 = scmp.ne.s32.totalorder %s501, %s502
      %p511 = scmp.eq.s32.totalorder %s71, 0
      %p512 = por %p510, %p511
      %p513 = scmp.ne.s32.totalorder %s501, %s502
      %p514 = scmp.eq.s32.totalorder %s72, 1
      %p515 = por %p513, %p514
      %p517 = scmp.ne.s32.totalorder %s502, %s516
      %p518 = scmp.eq.s32.totalorder %s72, 0
      %p519 = por %p517, %p518
      %s521 = sadd.s32 %s520, 1
      %p524 = scmp.eq.s32.totalorder %s66, 1
      %p525 = scmp.ne.s32.totalorder %s520, %s522
      %p526 = scmp.eq.s32.totalorder %s66, 0
      %p527 = por %p525, %p526
      %p528 = scmp.ne.s32.totalorder %s520, %s522
      %p529 = scmp.eq.s32.totalorder %s71, 1
      %p530 = por %p528, %p529
      %p531 = scmp.ne.s32.totalorder %s522, %s523
      %p532 = scmp.eq.s32.totalorder %s71, 0
      %p533 = por %p531, %p532
      %p534 = scmp.ne.s32.totalorder %s522, %s523
      %p535 = scmp.eq.s32.totalorder %s72, 1
      %p536 = por %p534, %p535
      %p538 = scmp.ne.s32.totalorder %s523, %s537
      %p539 = scmp.eq.s32.totalorder %s72, 0
      %p540 = por %p538, %p539
      %s542 = sadd.s32 %s541, 1
      %p545 = scmp.eq.s32.totalorder %s66, 1
      %p546 = scmp.ne.s32.totalorder %s541, %s543
      %p547 = scmp.eq.s32.totalorder %s66, 0
      %p548 = por %p546, %p547
      %p549 = scmp.ne.s32.totalorder %s541, %s543
      %p550 = scmp.eq.s32.totalorder %s71, 1
      %p551 = por %p549, %p550
      %p552 = scmp.ne.s32.totalorder %s543, %s544
      %p553 = scmp.eq.s32.totalorder %s71, 0
      %p554 = por %p552, %p553
      %p555 = scmp.ne.s32.totalorder %s543, %s544
      %p556 = scmp.eq.s32.totalorder %s72, 1
      %p557 = por %p555, %p556
      %p559 = scmp.ne.s32.totalorder %s544, %s558
      %p560 = scmp.eq.s32.totalorder %s72, 0
      %p561 = por %p559, %p560
      %s563 = sadd.s32 %s562, 1
      %p566 = scmp.eq.s32.totalorder %s66, 1
      %p567 = scmp.ne.s32.totalorder %s562, %s564
      %p568 = scmp.eq.s32.totalorder %s66, 0
      %p569 = por %p567, %p568
      %p570 = scmp.ne.s32.totalorder %s562, %s564
      %p571 = scmp.eq.s32.totalorder %s71, 1
      %p572 = por %p570, %p571
      %p573 = scmp.ne.s32.totalorder %s564, %s565
      %p574 = scmp.eq.s32.totalorder %s71, 0
      %p575 = por %p573, %p574
      %p576 = scmp.ne.s32.totalorder %s564, %s565
      %p577 = scmp.eq.s32.totalorder %s72, 1
      %p578 = por %p576, %p577
      %p580 = scmp.ne.s32.totalorder %s565, %s579
      %p581 = scmp.eq.s32.totalorder %s72, 0
      %p582 = por %p580, %p581
      %s584 = sadd.s32 %s583, 1
      %p587 = scmp.eq.s32.totalorder %s66, 1
      %p588 = scmp.ne.s32.totalorder %s583, %s585
      %p589 = scmp.eq.s32.totalorder %s66, 0
      %p590 = por %p588, %p589
      %p591 = scmp.ne.s32.totalorder %s583, %s585
      %p592 = scmp.eq.s32.totalorder %s71, 1
      %p593 = por %p591, %p592
      %p594 = scmp.ne.s32.totalorder %s585, %s586
      %p595 = scmp.eq.s32.totalorder %s71, 0
      %p596 = por %p594, %p595
      %p597 = scmp.ne.s32.totalorder %s585, %s586
      %p598 = scmp.eq.s32.totalorder %s72, 1
      %p599 = por %p597, %p598
      %p601 = scmp.ne.s32.totalorder %s586, %s600
      %p602 = scmp.eq.s32.totalorder %s72, 0
      %p603 = por %p601, %p602
      %s605 = sadd.s32 %s604, 1
      %p608 = scmp.eq.s32.totalorder %s66, 1
      %p609 = scmp.ne.s32.totalorder %s604, %s606
      %p610 = scmp.eq.s32.totalorder %s66, 0
      %p611 = por %p609, %p610
      %p612 = scmp.ne.s32.totalorder %s604, %s606
      %p613 = scmp.eq.s32.totalorder %s71, 1
      %p614 = por %p612, %p613
      %p615 = scmp.ne.s32.totalorder %s606, %s607
      %p616 = scmp.eq.s32.totalorder %s71, 0
      %p617 = por %p615, %p616
      %p618 = scmp.ne.s32.totalorder %s606, %s607
      %p619 = scmp.eq.s32.totalorder %s72, 1
      %p620 = por %p618, %p619
      %p622 = scmp.ne.s32.totalorder %s607, %s621
      %p623 = scmp.eq.s32.totalorder %s72, 0
      %p624 = por %p622, %p623
      %s626 = sadd.s32 %s625, 1
      %p629 = scmp.eq.s32.totalorder %s66, 1
      %p630 = scmp.ne.s32.totalorder %s625, %s627
      %p631 = scmp.eq.s32.totalorder %s66, 0
      %p632 = por %p630, %p631
      %p633 = scmp.ne.s32.totalorder %s625, %s627
      %p634 = scmp.eq.s32.totalorder %s71, 1
      %p635 = por %p633, %p634
      %p636 = scmp.ne.s32.totalorder %s627, %s628
      %p637 = scmp.eq.s32.totalorder %s71, 0
      %p638 = por %p636, %p637
      %p639 = scmp.ne.s32.totalorder %s627, %s628
      %p640 = scmp.eq.s32.totalorder %s72, 1
      %p641 = por %p639, %p640
      %p643 = scmp.ne.s32.totalorder %s628, %s642
      %p644 = scmp.eq.s32.totalorder %s72, 0
      %p645 = por %p643, %p644
      %s647 = sadd.s32 %s646, 1
      %p650 = scmp.eq.s32.totalorder %s66, 1
      %p651 = scmp.ne.s32.totalorder %s646, %s648
      %p652 = scmp.eq.s32.totalorder %s66, 0
      %p653 = por %p651, %p652
      %p654 = scmp.ne.s32.totalorder %s646, %s648
      %p655 = scmp.eq.s32.totalorder %s71, 1
      %p656 = por %p654, %p655
      %p657 = scmp.ne.s32.totalorder %s648, %s649
      %p658 = scmp.eq.s32.totalorder %s71, 0
      %p659 = por %p657, %p658
      %p660 = scmp.ne.s32.totalorder %s648, %s649
      %p661 = scmp.eq.s32.totalorder %s72, 1
      %p662 = por %p660, %p661
      %p664 = scmp.ne.s32.totalorder %s649, %s663
      %p665 = scmp.eq.s32.totalorder %s72, 0
      %p666 = por %p664, %p665
      %s668 = sadd.s32 %s667, 1
      %p671 = scmp.eq.s32.totalorder %s66, 1
      %p672 = scmp.ne.s32.totalorder %s667, %s669
      %p673 = scmp.eq.s32.totalorder %s66, 0
      %p674 = por %p672, %p673
      %p675 = scmp.ne.s32.totalorder %s667, %s669
      %p676 = scmp.eq.s32.totalorder %s71, 1
      %p677 = por %p675, %p676
      %p678 = scmp.ne.s32.totalorder %s669, %s670
      %p679 = scmp.eq.s32.totalorder %s71, 0
      %p680 = por %p678, %p679
      %p681 = scmp.ne.s32.totalorder %s669, %s670
      %p682 = scmp.eq.s32.totalorder %s72, 1
      %p683 = por %p681, %p682
      %p685 = scmp.ne.s32.totalorder %s670, %s684
      %p686 = scmp.eq.s32.totalorder %s72, 0
      %p687 = por %p685, %p686
      %s688 = ssub.s32 %s66, %s73
      %p689 = scmp.eq.s32.totalorder %s688, 0
      %s691 = sadd.s32 %s690, 1
      %s692 = scalar_select %p689, %s690, %s691
      %p695 = pneg %p689
      %p696 = scmp.eq.s32.totalorder %s66, 1
      %p697 = por %p695, %p696
      %p698 = scmp.ne.s32.totalorder %s690, %s693
      %p699 = scmp.eq.s32.totalorder %s66, 0
      %p700 = por %p698, %p699
      %p701 = scmp.ne.s32.totalorder %s690, %s693
      %p702 = scmp.eq.s32.totalorder %s71, 1
      %p703 = por %p701, %p702
      %p704 = scmp.ne.s32.totalorder %s693, %s694
      %p705 = scmp.eq.s32.totalorder %s71, 0
      %p706 = por %p704, %p705
      %p707 = scmp.ne.s32.totalorder %s693, %s694
      %p708 = scmp.eq.s32.totalorder %s72, 1
      %p709 = por %p707, %p708
      %p711 = scmp.ne.s32.totalorder %s694, %s710
      %p712 = scmp.eq.s32.totalorder %s72, 0
      %p713 = por %p711, %p712
      %p714 = scmp.le.s32.totalorder 1, %s66
      %p715 = scmp.lt.s32.totalorder %s66, 3
      %p716 = pnand %p714, %p715
      %p717 = pneg %p716
      // Predicated region
      $region9: #{base_ctc_forward.10} parent=5 // pred_check
        _
      $region10: #{base_ctc_forward.10} parent=5 // pred_check_branch
        %719 = sbr.rel (%p716) target = $region12
      $region11: #{base_ctc_forward.10} parent=5 // pred_region
        %s720 = ssub.s32 %s66, 1
        // Predicated region
        $region13: #{base_ctc_forward.10} parent=11 // pred_check
          %p721 = pneg %p113
        $region14: #{base_ctc_forward.10} parent=11 // pred_check_branch
          %723 = sbr.rel (%p721) target = $region16
        $region15: #{base_ctc_forward.10} parent=11 // pred_region
          _
        $region16: #{base_ctc_forward.10} parent=11 // pred_fallthru
          _
        // Predicated region
        $region17: #{base_ctc_forward.10} parent=11 // pred_check
          %p724 = pneg %p134
        $region18: #{base_ctc_forward.10} parent=11 // pred_check_branch
          %726 = sbr.rel (%p724) target = $region20
        $region19: #{base_ctc_forward.10} parent=11 // pred_region
          _
        $region20: #{base_ctc_forward.10} parent=11 // pred_fallthru
          _
        // Predicated region
        $region21: #{base_ctc_forward.10} parent=11 // pred_check
          %p727 = pneg %p155
        $region22: #{base_ctc_forward.10} parent=11 // pred_check_branch
          %729 = sbr.rel (%p727) target = $region24
        $region23: #{base_ctc_forward.10} parent=11 // pred_region
          _
        $region24: #{base_ctc_forward.10} parent=11 // pred_fallthru
          _
        // Predicated region
        $region25: #{base_ctc_forward.10} parent=11 // pred_check
          %p730 = pneg %p176
        $region26: #{base_ctc_forward.10} parent=11 // pred_check_branch
          %732 = sbr.rel (%p730) target = $region28
        $region27: #{base_ctc_forward.10} parent=11 // pred_region
          _
        $region28: #{base_ctc_forward.10} parent=11 // pred_fallthru
          _
        // Predicated region
        $region29: #{base_ctc_forward.10} parent=11 // pred_check
          %p733 = pneg %p197
        $region30: #{base_ctc_forward.10} parent=11 // pred_check_branch
          %735 = sbr.rel (%p733) target = $region32
        $region31: #{base_ctc_forward.10} parent=11 // pred_region
          _
        $region32: #{base_ctc_forward.10} parent=11 // pred_fallthru
          _
        // Predicated region
        $region33: #{base_ctc_forward.10} parent=11 // pred_check
          %p736 = pneg %p218
        $region34: #{base_ctc_forward.10} parent=11 // pred_check_branch
          %738 = sbr.rel (%p736) target = $region36
        $region35: #{base_ctc_forward.10} parent=11 // pred_region
          _
        $region36: #{base_ctc_forward.10} parent=11 // pred_fallthru
          _
        // Predicated region
        $region37: #{base_ctc_forward.10} parent=11 // pred_check
          %p739 = pneg %p239
        $region38: #{base_ctc_forward.10} parent=11 // pred_check_branch
          %741 = sbr.rel (%p739) target = $region40
        $region39: #{base_ctc_forward.10} parent=11 // pred_region
          _
        $region40: #{base_ctc_forward.10} parent=11 // pred_fallthru
          _
        // Predicated region
        $region41: #{base_ctc_forward.10} parent=11 // pred_check
          %p742 = pneg %p260
        $region42: #{base_ctc_forward.10} parent=11 // pred_check_branch
          %744 = sbr.rel (%p742) target = $region44
        $region43: #{base_ctc_forward.10} parent=11 // pred_region
          _
        $region44: #{base_ctc_forward.10} parent=11 // pred_fallthru
          _
        // Predicated region
        $region45: #{base_ctc_forward.10} parent=11 // pred_check
          %p745 = pneg %p281
        $region46: #{base_ctc_forward.10} parent=11 // pred_check_branch
          %747 = sbr.rel (%p745) target = $region48
        $region47: #{base_ctc_forward.10} parent=11 // pred_region
          _
        $region48: #{base_ctc_forward.10} parent=11 // pred_fallthru
          _
        // Predicated region
        $region49: #{base_ctc_forward.10} parent=11 // pred_check
          %p748 = pneg %p302
        $region50: #{base_ctc_forward.10} parent=11 // pred_check_branch
          %750 = sbr.rel (%p748) target = $region52
        $region51: #{base_ctc_forward.10} parent=11 // pred_region
          _
        $region52: #{base_ctc_forward.10} parent=11 // pred_fallthru
          _
        // Predicated region
        $region53: #{base_ctc_forward.10} parent=11 // pred_check
          %p751 = pneg %p323
        $region54: #{base_ctc_forward.10} parent=11 // pred_check_branch
          %753 = sbr.rel (%p751) target = $region56
        $region55: #{base_ctc_forward.10} parent=11 // pred_region
          _
        $region56: #{base_ctc_forward.10} parent=11 // pred_fallthru
          _
        // Predicated region
        $region57: #{base_ctc_forward.10} parent=11 // pred_check
          %p754 = pneg %p344
        $region58: #{base_ctc_forward.10} parent=11 // pred_check_branch
          %756 = sbr.rel (%p754) target = $region60
        $region59: #{base_ctc_forward.10} parent=11 // pred_region
          _
        $region60: #{base_ctc_forward.10} parent=11 // pred_fallthru
          _
        // Predicated region
        $region61: #{base_ctc_forward.10} parent=11 // pred_check
          %p757 = pneg %p365
        $region62: #{base_ctc_forward.10} parent=11 // pred_check_branch
          %759 = sbr.rel (%p757) target = $region64
        $region63: #{base_ctc_forward.10} parent=11 // pred_region
          _
        $region64: #{base_ctc_forward.10} parent=11 // pred_fallthru
          _
        // Predicated region
        $region65: #{base_ctc_forward.10} parent=11 // pred_check
          %p760 = pneg %p386
        $region66: #{base_ctc_forward.10} parent=11 // pred_check_branch
          %762 = sbr.rel (%p760) target = $region68
        $region67: #{base_ctc_forward.10} parent=11 // pred_region
          _
        $region68: #{base_ctc_forward.10} parent=11 // pred_fallthru
          _
        // Predicated region
        $region69: #{base_ctc_forward.10} parent=11 // pred_check
          %p763 = pneg %p407
        $region70: #{base_ctc_forward.10} parent=11 // pred_check_branch
          %765 = sbr.rel (%p763) target = $region72
        $region71: #{base_ctc_forward.10} parent=11 // pred_region
          _
        $region72: #{base_ctc_forward.10} parent=11 // pred_fallthru
          _
        // Predicated region
        $region73: #{base_ctc_forward.10} parent=11 // pred_check
          %p766 = pneg %p428
        $region74: #{base_ctc_forward.10} parent=11 // pred_check_branch
          %768 = sbr.rel (%p766) target = $region76
        $region75: #{base_ctc_forward.10} parent=11 // pred_region
          _
        $region76: #{base_ctc_forward.10} parent=11 // pred_fallthru
          _
        // Predicated region
        $region77: #{base_ctc_forward.10} parent=11 // pred_check
          %p769 = pneg %p449
        $region78: #{base_ctc_forward.10} parent=11 // pred_check_branch
          %771 = sbr.rel (%p769) target = $region80
        $region79: #{base_ctc_forward.10} parent=11 // pred_region
          _
        $region80: #{base_ctc_forward.10} parent=11 // pred_fallthru
          _
        // Predicated region
        $region81: #{base_ctc_forward.10} parent=11 // pred_check
          %p772 = pneg %p470
        $region82: #{base_ctc_forward.10} parent=11 // pred_check_branch
          %774 = sbr.rel (%p772) target = $region84
        $region83: #{base_ctc_forward.10} parent=11 // pred_region
          _
        $region84: #{base_ctc_forward.10} parent=11 // pred_fallthru
          _
        // Predicated region
        $region85: #{base_ctc_forward.10} parent=11 // pred_check
          %p775 = pneg %p491
        $region86: #{base_ctc_forward.10} parent=11 // pred_check_branch
          %777 = sbr.rel (%p775) target = $region88
        $region87: #{base_ctc_forward.10} parent=11 // pred_region
          _
        $region88: #{base_ctc_forward.10} parent=11 // pred_fallthru
          _
        // Predicated region
        $region89: #{base_ctc_forward.10} parent=11 // pred_check
          %p778 = pneg %p512
        $region90: #{base_ctc_forward.10} parent=11 // pred_check_branch
          %780 = sbr.rel (%p778) target = $region92
        $region91: #{base_ctc_forward.10} parent=11 // pred_region
          _
        $region92: #{base_ctc_forward.10} parent=11 // pred_fallthru
          _
        // Predicated region
        $region93: #{base_ctc_forward.10} parent=11 // pred_check
          %p781 = pneg %p533
        $region94: #{base_ctc_forward.10} parent=11 // pred_check_branch
          %783 = sbr.rel (%p781) target = $region96
        $region95: #{base_ctc_forward.10} parent=11 // pred_region
          _
        $region96: #{base_ctc_forward.10} parent=11 // pred_fallthru
          _
        // Predicated region
        $region97: #{base_ctc_forward.10} parent=11 // pred_check
          %p784 = pneg %p554
        $region98: #{base_ctc_forward.10} parent=11 // pred_check_branch
          %786 = sbr.rel (%p784) target = $region100
        $region99: #{base_ctc_forward.10} parent=11 // pred_region
          _
        $region100: #{base_ctc_forward.10} parent=11 // pred_fallthru
          _
        // Predicated region
        $region101: #{base_ctc_forward.10} parent=11 // pred_check
          %p787 = pneg %p575
        $region102: #{base_ctc_forward.10} parent=11 // pred_check_branch
          %789 = sbr.rel (%p787) target = $region104
        $region103: #{base_ctc_forward.10} parent=11 // pred_region
          _
        $region104: #{base_ctc_forward.10} parent=11 // pred_fallthru
          _
        // Predicated region
        $region105: #{base_ctc_forward.10} parent=11 // pred_check
          %p790 = pneg %p596
        $region106: #{base_ctc_forward.10} parent=11 // pred_check_branch
          %792 = sbr.rel (%p790) target = $region108
        $region107: #{base_ctc_forward.10} parent=11 // pred_region
          _
        $region108: #{base_ctc_forward.10} parent=11 // pred_fallthru
          _
        // Predicated region
        $region109: #{base_ctc_forward.10} parent=11 // pred_check
          %p793 = pneg %p617
        $region110: #{base_ctc_forward.10} parent=11 // pred_check_branch
          %795 = sbr.rel (%p793) target = $region112
        $region111: #{base_ctc_forward.10} parent=11 // pred_region
          _
        $region112: #{base_ctc_forward.10} parent=11 // pred_fallthru
          _
        // Predicated region
        $region113: #{base_ctc_forward.10} parent=11 // pred_check
          %p796 = pneg %p638
        $region114: #{base_ctc_forward.10} parent=11 // pred_check_branch
          %798 = sbr.rel (%p796) target = $region116
        $region115: #{base_ctc_forward.10} parent=11 // pred_region
          _
        $region116: #{base_ctc_forward.10} parent=11 // pred_fallthru
          _
        // Predicated region
        $region117: #{base_ctc_forward.10} parent=11 // pred_check
          %p799 = pneg %p659
        $region118: #{base_ctc_forward.10} parent=11 // pred_check_branch
          %801 = sbr.rel (%p799) target = $region120
        $region119: #{base_ctc_forward.10} parent=11 // pred_region
          _
        $region120: #{base_ctc_forward.10} parent=11 // pred_fallthru
          _
        // Predicated region
        $region121: #{base_ctc_forward.10} parent=11 // pred_check
          %p802 = pneg %p680
        $region122: #{base_ctc_forward.10} parent=11 // pred_check_branch
          %804 = sbr.rel (%p802) target = $region124
        $region123: #{base_ctc_forward.10} parent=11 // pred_region
          %s806 = ssub.s32 16, 16
          %807 = vsyncadd [#allocation3], %s806
          %s809 = sshll.u32 [#allocation2], 4
          %s810 = int_to_ptr.vmem [resolvable:$true] %s809
          %812 = dma.hbm_to_vmem [thread:$0]  %s57, 16, %s810, [#allocation3]
        $region124: #{base_ctc_forward.10} parent=11 // pred_fallthru
          _
      $region12: #{base_ctc_forward.10} parent=5 // pred_fallthru
        _
      %p813 = scmp.lt.s32.totalorder %s66, 2
      // Predicated region
      $region125: #{base_ctc_forward.10} parent=5 // pred_check
        %p814 = pneg %p813
      $region126: #{base_ctc_forward.10} parent=5 // pred_check_branch
        %816 = sbr.rel (%p814) target = $region128
      $region127: #{base_ctc_forward.10} parent=5 // pred_region
        // Predicated region
        $region129: #{base_ctc_forward.10} parent=127 // pred_check
          %p817 = pneg %p86
        $region130: #{base_ctc_forward.10} parent=127 // pred_check_branch
          %819 = sbr.rel (%p817) target = $region132
        $region131: #{base_ctc_forward.10} parent=127 // pred_region
          %p820 = scmp.lt.s32.totalorder %s66, 1
          %s821 = scalar_select %p820, %s66, 1
          %s822 = smul.addr %s821, 8
          %s823 = scalar_lea.vmem %s1, %s822
        $region132: #{base_ctc_forward.10} parent=127 // pred_fallthru
          _
      $region128: #{base_ctc_forward.10} parent=5 // pred_fallthru
        _
      %p824 = scmp.le.s32.totalorder 1, %s66
      %p825 = scmp.lt.s32.totalorder %s66, 3
      %p826 = pnand %p824, %p825
      %p827 = pneg %p826
      // Predicated region
      $region133: #{base_ctc_forward.10} parent=5 // pred_check
        _
      $region134: #{base_ctc_forward.10} parent=5 // pred_check_branch
        %829 = sbr.rel (%p826) target = $region136
      $region135: #{base_ctc_forward.10} parent=5 // pred_region
        %s830 = ssub.s32 %s66, 1
        // Predicated region
        $region137: #{base_ctc_forward.10} parent=135 // pred_check
          %p831 = pneg %p680
        $region138: #{base_ctc_forward.10} parent=135 // pred_check_branch
          %833 = sbr.rel (%p831) target = $region140
        $region139: #{base_ctc_forward.10} parent=135 // pred_region
          %834 = dma.done [#allocation3], 16
        $region140: #{base_ctc_forward.10} parent=135 // pred_fallthru
          _
        %p835 = scmp.lt.s32.totalorder %s71, 1
        %s836 = scalar_select %p835, %s71, 1
        %s837 = smul.addr %s836, 8
        %s838 = scalar_lea.vmem %s1, %s837
        %p839 = pneg %p92
        %p840 = pneg %p89
        %p841 = pneg %p113
        %p842 = pneg %p110
        %p843 = pneg %p134
        %p844 = pneg %p131
        %p845 = pneg %p155
        %p846 = pneg %p152
        %p847 = pneg %p176
        %p848 = pneg %p173
        %p849 = pneg %p197
        %p850 = pneg %p194
        %p851 = pneg %p218
        %p852 = pneg %p215
        %p853 = pneg %p239
        %p854 = pneg %p236
        %p855 = pneg %p260
        %p856 = pneg %p257
        %p857 = pneg %p281
        %p858 = pneg %p278
        %p859 = pneg %p302
        %p860 = pneg %p299
        %p861 = pneg %p323
        %p862 = pneg %p320
        %p863 = pneg %p344
        %p864 = pneg %p341
        %p865 = pneg %p365
        %p866 = pneg %p362
        %p867 = pneg %p386
        %p868 = pneg %p383
        %p869 = pneg %p407
        %p870 = pneg %p404
        %p871 = pneg %p428
        %p872 = pneg %p425
        %p873 = pneg %p449
        %p874 = pneg %p446
        %p875 = pneg %p470
        %p876 = pneg %p467
        %p877 = pneg %p491
        %p878 = pneg %p488
        %p879 = pneg %p512
        %p880 = pneg %p509
        %p881 = pneg %p533
        %p882 = pneg %p530
        %p883 = pneg %p554
        %p884 = pneg %p551
        %p885 = pneg %p575
        %p886 = pneg %p572
        %p887 = pneg %p596
        %p888 = pneg %p593
        %p889 = pneg %p617
        %p890 = pneg %p614
        %p891 = pneg %p638
        %p892 = pneg %p635
        %p893 = pneg %p659
        %p894 = pneg %p656
        %p895 = pneg %p680
        %p896 = pneg %p677
        %p897 = pneg %p706
        %p898 = pneg %p703
        %p899 = scmp.lt.s32.totalorder %s71, 1
        %s900 = scalar_select %p899, %s71, 1
        %s901 = smul.addr %s900, 8
        %s902 = scalar_lea.vmem %s59, %s901
        %p903 = scmp.lt.s32.totalorder %s71, 1
        %s904 = scalar_select %p903, %s71, 1
        %s905 = smul.addr %s904, 8
        %s906 = scalar_lea.vmem %s1, %s905
        %p907 = scmp.lt.s32.totalorder %s71, 1
        %s908 = scalar_select %p907, %s71, 1
        %s909 = smul.addr %s908, 8
        %s910 = scalar_lea.vmem %s59, %s909
        %v912 = vld [vmem:[%s906] sm:$0xff]
        %913 = vadd.xlane.f32.xlu0 %v912
        %v914 = vpop.xlane.xlu0 %913
        %v915 = vrcp.pop 128.0
        %v916 = vmul.f32 %v914, %v915
        %v917 = vsub.f32 %v912, %v916
        %v918 = vmul.f32 %v917, %v917
        %919 = vadd.xlane.f32.xlu0 %v918
        %v920 = vpop.xlane.xlu0 %919
        %v921 = vmul.f32 %v920, %v915
        %v922 = vadd.f32 %v921, 1e-05
        %v923 = vrsqrt.pop %v922
        %v924 = vmul.f32 %v917, %v923
        %v925 = vld [vmem:[%s3] sm:$0x1]
        %v927 = vlaneseq
        %v928 = vshrl.u32 %v927, 7
        %v929 = vsub.s32 0, %v928
        %v930 = vrot.slane %v925, %v929
        %v932 = vmul.f32 %v924, %v930
        %v933 = vld [vmem:[%s5] sm:$0x1]
        %v935 = vlaneseq
        %v936 = vshrl.u32 %v935, 7
        %v937 = vsub.s32 0, %v936
        %v938 = vrot.slane %v933, %v937
        %v940 = vadd.f32 %v932, %v938
        %v941 = vpack.c.bf16 %v940, %v940
        %v942 = vld [vmem:[%s7] sm:$0xff]
        %v943 = vld [vmem:[%s7 + $0x8] sm:$0xff]
        %v944 = vld [vmem:[%s7 + $0x10] sm:$0xff]
        %v945 = vld [vmem:[%s7 + $0x18] sm:$0xff]
        %v946 = vld [vmem:[%s7 + $0x20] sm:$0xff]
        %v947 = vld [vmem:[%s7 + $0x28] sm:$0xff]
        %v948 = vld [vmem:[%s7 + $0x30] sm:$0xff]
        %v949 = vld [vmem:[%s7 + $0x38] sm:$0xff]
        %v950 = vld [vmem:[%s7 + $0x40] sm:$0xff]
        %v951 = vld [vmem:[%s7 + $0x48] sm:$0xff]
        %v952 = vld [vmem:[%s7 + $0x50] sm:$0xff]
        %v953 = vld [vmem:[%s7 + $0x58] sm:$0xff]
        %v954 = vld [vmem:[%s7 + $0x60] sm:$0xff]
        %v955 = vld [vmem:[%s7 + $0x68] sm:$0xff]
        %v956 = vld [vmem:[%s7 + $0x70] sm:$0xff]
        %v957 = vld [vmem:[%s7 + $0x78] sm:$0xff]
        %v958 = vld [vmem:[%s9] sm:$0x3]
        %v960 = vlaneseq
        %v961 = vshrl.u32 %v960, 7
        %v962 = vsub.s32 0, %v961
        %v963 = vrot.slane %v958, %v962
        %v964 = vlaneseq
        %v965 = vshrl.u32 %v964, 7
        %v966 = vsub.s32 1, %v965
        %v967 = vrot.slane %v958, %v966
        %v986 = vunpack.c.l.b16 %v942
        %v987 = vunpack.c.h.b16 %v942
        %v988 = vunpack.c.l.b16 %v943
        %v989 = vunpack.c.h.b16 %v943
        %v990 = vunpack.c.l.b16 %v944
        %v991 = vunpack.c.h.b16 %v944
        %v992 = vunpack.c.l.b16 %v945
        %v993 = vunpack.c.h.b16 %v945
        %v994 = vunpack.c.l.b16 %v946
        %v995 = vunpack.c.h.b16 %v946
        %v996 = vunpack.c.l.b16 %v947
        %v997 = vunpack.c.h.b16 %v947
        %v998 = vunpack.c.l.b16 %v948
        %v999 = vunpack.c.h.b16 %v948
        %v1000 = vunpack.c.l.b16 %v949
        %v1001 = vunpack.c.h.b16 %v949
        %v1002 = vunpack.c.l.b16 %v950
        %v1003 = vunpack.c.h.b16 %v950
        %v1004 = vunpack.c.l.b16 %v951
        %v1005 = vunpack.c.h.b16 %v951
        %v1006 = vunpack.c.l.b16 %v952
        %v1007 = vunpack.c.h.b16 %v952
        %v1008 = vunpack.c.l.b16 %v953
        %v1009 = vunpack.c.h.b16 %v953
        %v1010 = vunpack.c.l.b16 %v954
        %v1011 = vunpack.c.h.b16 %v954
        %v1012 = vunpack.c.l.b16 %v955
        %v1013 = vunpack.c.h.b16 %v955
        %v1014 = vunpack.c.l.b16 %v956
        %v1015 = vunpack.c.h.b16 %v956
        %v1016 = vunpack.c.l.b16 %v957
        %v1017 = vunpack.c.h.b16 %v957
        %v1018 = vpack.c.b16 %v988, %v986
        %v1019 = vpack.c.b16 %v989, %v987
        %v1020 = vpack.c.b16 %v992, %v990
        %v1021 = vpack.c.b16 %v993, %v991
        %v1022 = vpack.c.b16 %v996, %v994
        %v1023 = vpack.c.b16 %v997, %v995
        %v1024 = vpack.c.b16 %v1000, %v998
        %v1025 = vpack.c.b16 %v1001, %v999
        %v1026 = vpack.c.b16 %v1004, %v1002
        %v1027 = vpack.c.b16 %v1005, %v1003
        %v1028 = vpack.c.b16 %v1008, %v1006
        %v1029 = vpack.c.b16 %v1009, %v1007
        %v1030 = vpack.c.b16 %v1012, %v1010
        %v1031 = vpack.c.b16 %v1013, %v1011
        %v1032 = vpack.c.b16 %v1016, %v1014
        %v1033 = vpack.c.b16 %v1017, %v1015
        %1050 = vmatprep.subr.bf16.mxu0 %v1019
        %1051 = vmatpush1.bf16.msra.mxu0 %v1018
        %1052 = vmatprep.subr.bf16.mxu0 %v1021
        %1053 = vmatpush1.bf16.msra.mxu0 %v1020
        %1054 = vmatprep.subr.bf16.mxu0 %v1023
        %1055 = vmatpush1.bf16.msra.mxu0 %v1022
        %1056 = vmatprep.subr.bf16.mxu0 %v1025
        %1057 = vmatpush1.bf16.msra.mxu0 %v1024
        %1058 = vmatprep.subr.bf16.mxu0 %v1027
        %1059 = vmatpush1.bf16.msra.mxu0 %v1026
        %1060 = vmatprep.subr.bf16.mxu0 %v1029
        %1061 = vmatpush1.bf16.msra.mxu0 %v1028
        %1062 = vmatprep.subr.bf16.mxu0 %v1031
        %1063 = vmatpush1.bf16.msra.mxu0 %v1030
        %1064 = vmatprep.subr.bf16.mxu0 %v1033
        %1065 = vmatpush1.bf16.msra.mxu0 %v1032
        %1066 = vmatprep.subr.bf16.mxu0 0
        %1067 = vmatpush1.bf16.msra.mxu0 0
        %1068 = vmatprep.subr.bf16.mxu0 0
        %1069 = vmatpush1.bf16.msra.mxu0 0
        %1070 = vmatprep.subr.bf16.mxu0 0
        %1071 = vmatpush1.bf16.msra.mxu0 0
        %1072 = vmatprep.subr.bf16.mxu0 0
        %1073 = vmatpush1.bf16.msra.mxu0 0
        %1074 = vmatprep.subr.bf16.mxu0 0
        %1075 = vmatpush1.bf16.msra.mxu0 0
        %1076 = vmatprep.subr.bf16.mxu0 0
        %1077 = vmatpush1.bf16.msra.mxu0 0
        %1078 = vmatprep.subr.bf16.mxu0 0
        %1079 = vmatpush1.bf16.msra.mxu0 0
        %1080 = vmatprep.subr.bf16.mxu0 0
        %1081 = vmatpush1.bf16.msra.mxu0 0
        %1082 = vmatprep.mubr.bf16.mxu0 0
        %1083 = vmatmul.mubr.bf16.gmra.mrb[0].mxu0 %v941
        %v1084 = vpop.f32.mrb[0].mxu0
        %v1085 = vadd.f32 %v963, %v1084
        %v1086 = vpop.f32.mrb[0].mxu0
        %v1087 = vadd.f32 %v967, %v1086
        %v1088 = vpop.f32.mrb[0].mxu0
        %v1089 = vpop.f32.mrb[0].mxu0
        %1090 = vdwg.mxu0
        %v1091 = vxor.u32 %v1085, 2147483648
        %v1092 = vxor.u32 %v1087, 2147483648
        %v1093 = vmul.f32 %v1091, 1.442695
        %v1094 = vpow.pop %v1093
        %v1095 = vmul.f32 %v1092, 1.442695
        %v1096 = vpow.pop %v1095
        %v1097 = vadd.f32 %v1094, 1.0
        %v1098 = vadd.f32 %v1096, 1.0
        %v1099 = vrcp.pop %v1097
        %v1100 = vmul.f32 1.0, %v1099
        %v1101 = vrcp.pop %v1098
        %v1102 = vmul.f32 1.0, %v1101
        %v1103 = vmul.f32 %v1085, %v1100
        %v1104 = vmul.f32 %v1087, %v1102
        %v1105 = vpack.c.bf16 %v1103, %v1103
        %v1106 = vpack.c.bf16 %v1104, %v1104
        %v1107 = vld [vmem:[%s11] sm:$0xf]
        %v1108 = vld [vmem:[%s11 + $0x4] sm:$0xf]
        %v1109 = vld [vmem:[%s11 + $0x8] sm:$0xf]
        %v1110 = vld [vmem:[%s11 + $0xc] sm:$0xf]
        %v1111 = vld [vmem:[%s11 + $0x10] sm:$0xf]
        %v1112 = vld [vmem:[%s11 + $0x14] sm:$0xf]
        %v1113 = vld [vmem:[%s11 + $0x18] sm:$0xf]
        %v1114 = vld [vmem:[%s11 + $0x1c] sm:$0xf]
        %v1115 = vld [vmem:[%s11 + $0x20] sm:$0xf]
        %v1116 = vld [vmem:[%s11 + $0x24] sm:$0xf]
        %v1117 = vld [vmem:[%s11 + $0x28] sm:$0xf]
        %v1118 = vld [vmem:[%s11 + $0x2c] sm:$0xf]
        %v1119 = vld [vmem:[%s11 + $0x30] sm:$0xf]
        %v1120 = vld [vmem:[%s11 + $0x34] sm:$0xf]
        %v1121 = vld [vmem:[%s11 + $0x38] sm:$0xf]
        %v1122 = vld [vmem:[%s11 + $0x3c] sm:$0xf]
        %v1123 = vld [vmem:[%s11 + $0x40] sm:$0xf]
        %v1124 = vld [vmem:[%s11 + $0x44] sm:$0xf]
        %v1125 = vld [vmem:[%s11 + $0x48] sm:$0xf]
        %v1126 = vld [vmem:[%s11 + $0x4c] sm:$0xf]
        %v1127 = vld [vmem:[%s11 + $0x50] sm:$0xf]
        %v1128 = vld [vmem:[%s11 + $0x54] sm:$0xf]
        %v1129 = vld [vmem:[%s11 + $0x58] sm:$0xf]
        %v1130 = vld [vmem:[%s11 + $0x5c] sm:$0xf]
        %v1131 = vld [vmem:[%s11 + $0x60] sm:$0xf]
        %v1132 = vld [vmem:[%s11 + $0x64] sm:$0xf]
        %v1133 = vld [vmem:[%s11 + $0x68] sm:$0xf]
        %v1134 = vld [vmem:[%s11 + $0x6c] sm:$0xf]
        %v1135 = vld [vmem:[%s11 + $0x70] sm:$0xf]
        %v1136 = vld [vmem:[%s11 + $0x74] sm:$0xf]
        %v1137 = vld [vmem:[%s11 + $0x78] sm:$0xf]
        %v1138 = vld [vmem:[%s11 + $0x7c] sm:$0xf]
        %v1139 = vld [vmem:[%s13] sm:$0x1]
        %v1141 = vlaneseq
        %v1142 = vshrl.u32 %v1141, 7
        %v1143 = vsub.s32 0, %v1142
        %v1144 = vrot.slane %v1139, %v1143
        %v1178 = vunpack.c.l.b16 %v1107
        %v1179 = vunpack.c.l.b16 %v1108
        %v1180 = vunpack.c.l.b16 %v1109
        %v1181 = vunpack.c.l.b16 %v1110
        %v1182 = vunpack.c.l.b16 %v1111
        %v1183 = vunpack.c.l.b16 %v1112
        %v1184 = vunpack.c.l.b16 %v1113
        %v1185 = vunpack.c.l.b16 %v1114
        %v1186 = vunpack.c.l.b16 %v1115
        %v1187 = vunpack.c.l.b16 %v1116
        %v1188 = vunpack.c.l.b16 %v1117
        %v1189 = vunpack.c.l.b16 %v1118
        %v1190 = vunpack.c.l.b16 %v1119
        %v1191 = vunpack.c.l.b16 %v1120
        %v1192 = vunpack.c.l.b16 %v1121
        %v1193 = vunpack.c.l.b16 %v1122
        %v1194 = vunpack.c.l.b16 %v1123
        %v1195 = vunpack.c.l.b16 %v1124
        %v1196 = vunpack.c.l.b16 %v1125
        %v1197 = vunpack.c.l.b16 %v1126
        %v1198 = vunpack.c.l.b16 %v1127
        %v1199 = vunpack.c.l.b16 %v1128
        %v1200 = vunpack.c.l.b16 %v1129
        %v1201 = vunpack.c.l.b16 %v1130
        %v1202 = vunpack.c.l.b16 %v1131
        %v1203 = vunpack.c.l.b16 %v1132
        %v1204 = vunpack.c.l.b16 %v1133
        %v1205 = vunpack.c.l.b16 %v1134
        %v1206 = vunpack.c.l.b16 %v1135
        %v1207 = vunpack.c.l.b16 %v1136
        %v1208 = vunpack.c.l.b16 %v1137
        %v1209 = vunpack.c.l.b16 %v1138
        %v1210 = vpack.c.b16 %v1179, %v1178
        %v1211 = vpack.c.b16 %v1181, %v1180
        %v1212 = vpack.c.b16 %v1183, %v1182
        %v1213 = vpack.c.b16 %v1185, %v1184
        %v1214 = vpack.c.b16 %v1187, %v1186
        %v1215 = vpack.c.b16 %v1189, %v1188
        %v1216 = vpack.c.b16 %v1191, %v1190
        %v1217 = vpack.c.b16 %v1193, %v1192
        %v1218 = vpack.c.b16 %v1195, %v1194
        %v1219 = vpack.c.b16 %v1197, %v1196
        %v1220 = vpack.c.b16 %v1199, %v1198
        %v1221 = vpack.c.b16 %v1201, %v1200
        %v1222 = vpack.c.b16 %v1203, %v1202
        %v1223 = vpack.c.b16 %v1205, %v1204
        %v1224 = vpack.c.b16 %v1207, %v1206
        %v1225 = vpack.c.b16 %v1209, %v1208
        %1242 = vmatprep.subr.bf16.mxu0 0
        %1243 = vmatpush1.bf16.msra.mxu0 %v1210
        %1244 = vmatprep.subr.bf16.mxu0 0
        %1245 = vmatpush1.bf16.msra.mxu0 %v1211
        %1246 = vmatprep.subr.bf16.mxu0 0
        %1247 = vmatpush1.bf16.msra.mxu0 %v1212
        %1248 = vmatprep.subr.bf16.mxu0 0
        %1249 = vmatpush1.bf16.msra.mxu0 %v1213
        %1250 = vmatprep.subr.bf16.mxu0 0
        %1251 = vmatpush1.bf16.msra.mxu0 %v1214
        %1252 = vmatprep.subr.bf16.mxu0 0
        %1253 = vmatpush1.bf16.msra.mxu0 %v1215
        %1254 = vmatprep.subr.bf16.mxu0 0
        %1255 = vmatpush1.bf16.msra.mxu0 %v1216
        %1256 = vmatprep.subr.bf16.mxu0 0
        %1257 = vmatpush1.bf16.msra.mxu0 %v1217
        %1258 = vmatprep.subr.bf16.mxu0 0
        %1259 = vmatpush1.bf16.msra.mxu0 %v1218
        %1260 = vmatprep.subr.bf16.mxu0 0
        %1261 = vmatpush1.bf16.msra.mxu0 %v1219
        %1262 = vmatprep.subr.bf16.mxu0 0
        %1263 = vmatpush1.bf16.msra.mxu0 %v1220
        %1264 = vmatprep.subr.bf16.mxu0 0
        %1265 = vmatpush1.bf16.msra.mxu0 %v1221
        %1266 = vmatprep.subr.bf16.mxu0 0
        %1267 = vmatpush1.bf16.msra.mxu0 %v1222
        %1268 = vmatprep.subr.bf16.mxu0 0
        %1269 = vmatpush1.bf16.msra.mxu0 %v1223
        %1270 = vmatprep.subr.bf16.mxu0 0
        %1271 = vmatpush1.bf16.msra.mxu0 %v1224
        %1272 = vmatprep.subr.bf16.mxu0 0
        %1273 = vmatpush1.bf16.msra.mxu0 %v1225
        %1274 = vmatprep.mubr.bf16.mxu0 %v1106
        %1275 = vmatmul.mubr.bf16.gmra.mrb[0].mxu0 %v1105
        %v1276 = vpop.f32.mrb[0].mxu0
        %v1277 = vadd.f32 %v1144, %v1276
        %v1278 = vpop.f32.mrb[0].mxu0
        %v1279 = vpop.f32.mrb[0].mxu0
        %v1280 = vpop.f32.mrb[0].mxu0
        %1281 = vdwg.mxu0
        %v1282 = vmul.f32 %v1277, 0.5
        %v1283 = vadd.f32 %v912, %v1282
        %1284 = vadd.xlane.f32.xlu0 %v1283
        %v1285 = vpop.xlane.xlu0 %1284
        %v1286 = vmul.f32 %v1285, %v915
        %v1287 = vsub.f32 %v1283, %v1286
        %v1288 = vmul.f32 %v1287, %v1287
        %1289 = vadd.xlane.f32.xlu0 %v1288
        %v1290 = vpop.xlane.xlu0 %1289
        %v1291 = vmul.f32 %v1290, %v915
        %v1292 = vadd.f32 %v1291, 1e-05
        %v1293 = vrsqrt.pop %v1292
        %v1294 = vmul.f32 %v1287, %v1293
        %v1295 = vld [vmem:[%s15] sm:$0x1]
        %v1297 = vlaneseq
        %v1298 = vshrl.u32 %v1297, 7
        %v1299 = vsub.s32 0, %v1298
        %v1300 = vrot.slane %v1295, %v1299
        %v1302 = vmul.f32 %v1294, %v1300
        %v1303 = vld [vmem:[%s17] sm:$0x1]
        %v1305 = vlaneseq
        %v1306 = vshrl.u32 %v1305, 7
        %v1307 = vsub.s32 0, %v1306
        %v1308 = vrot.slane %v1303, %v1307
        %v1310 = vadd.f32 %v1302, %v1308
        %v1311 = vpack.c.bf16 %v1310, %v1310
        %v1312 = vld [vmem:[%s19] sm:$0xff]
        %v1313 = vld [vmem:[%s19 + $0x8] sm:$0xf]
        %v1314 = vld [vmem:[%s19 + $0xc] sm:$0xff]
        %v1315 = vld [vmem:[%s19 + $0x14] sm:$0xf]
        %v1316 = vld [vmem:[%s19 + $0x18] sm:$0xff]
        %v1317 = vld [vmem:[%s19 + $0x20] sm:$0xf]
        %v1318 = vld [vmem:[%s19 + $0x24] sm:$0xff]
        %v1319 = vld [vmem:[%s19 + $0x2c] sm:$0xf]
        %v1320 = vld [vmem:[%s19 + $0x30] sm:$0xff]
        %v1321 = vld [vmem:[%s19 + $0x38] sm:$0xf]
        %v1322 = vld [vmem:[%s19 + $0x3c] sm:$0xff]
        %v1323 = vld [vmem:[%s19 + $0x44] sm:$0xf]
        %v1324 = vld [vmem:[%s19 + $0x48] sm:$0xff]
        %v1325 = vld [vmem:[%s19 + $0x50] sm:$0xf]
        %v1326 = vld [vmem:[%s19 + $0x54] sm:$0xff]
        %v1327 = vld [vmem:[%s19 + $0x5c] sm:$0xf]
        %v1328 = vld [vmem:[%s19 + $0x60] sm:$0xff]
        %v1329 = vld [vmem:[%s19 + $0x68] sm:$0xf]
        %v1330 = vld [vmem:[%s19 + $0x6c] sm:$0xff]
        %v1331 = vld [vmem:[%s19 + $0x74] sm:$0xf]
        %v1332 = vld [vmem:[%s19 + $0x78] sm:$0xff]
        %v1333 = vld [vmem:[%s19 + $0x80] sm:$0xf]
        %v1334 = vld [vmem:[%s19 + $0x84] sm:$0xff]
        %v1335 = vld [vmem:[%s19 + $0x8c] sm:$0xf]
        %v1336 = vld [vmem:[%s19 + $0x90] sm:$0xff]
        %v1337 = vld [vmem:[%s19 + $0x98] sm:$0xf]
        %v1338 = vld [vmem:[%s19 + $0x9c] sm:$0xff]
        %v1339 = vld [vmem:[%s19 + $0xa4] sm:$0xf]
        %v1340 = vld [vmem:[%s19 + $0xa8] sm:$0xff]
        %v1341 = vld [vmem:[%s19 + $0xb0] sm:$0xf]
        %v1342 = vld [vmem:[%s19 + $0xb4] sm:$0xff]
        %v1343 = vld [vmem:[%s19 + $0xbc] sm:$0xf]
        %v1344 = vld [vmem:[%s21] sm:$0x7]
        %v1346 = vlaneseq
        %v1347 = vshrl.u32 %v1346, 7
        %v1348 = vsub.s32 0, %v1347
        %v1349 = vrot.slane %v1344, %v1348
        %v1350 = vlaneseq
        %v1351 = vshrl.u32 %v1350, 7
        %v1352 = vsub.s32 1, %v1351
        %v1353 = vrot.slane %v1344, %v1352
        %v1354 = vlaneseq
        %v1355 = vshrl.u32 %v1354, 7
        %v1356 = vsub.s32 2, %v1355
        %v1357 = vrot.slane %v1344, %v1356
        %v1393 = vunpack.c.l.b16 %v1312
        %v1394 = vunpack.c.h.b16 %v1312
        %v1395 = vunpack.c.l.b16 %v1313
        %v1396 = vunpack.c.l.b16 %v1314
        %v1397 = vunpack.c.h.b16 %v1314
        %v1398 = vunpack.c.l.b16 %v1315
        %v1399 = vunpack.c.l.b16 %v1316
        %v1400 = vunpack.c.h.b16 %v1316
        %v1401 = vunpack.c.l.b16 %v1317
        %v1402 = vunpack.c.l.b16 %v1318
        %v1403 = vunpack.c.h.b16 %v1318
        %v1404 = vunpack.c.l.b16 %v1319
        %v1405 = vunpack.c.l.b16 %v1320
        %v1406 = vunpack.c.h.b16 %v1320
        %v1407 = vunpack.c.l.b16 %v1321
        %v1408 = vunpack.c.l.b16 %v1322
        %v1409 = vunpack.c.h.b16 %v1322
        %v1410 = vunpack.c.l.b16 %v1323
        %v1411 = vunpack.c.l.b16 %v1324
        %v1412 = vunpack.c.h.b16 %v1324
        %v1413 = vunpack.c.l.b16 %v1325
        %v1414 = vunpack.c.l.b16 %v1326
        %v1415 = vunpack.c.h.b16 %v1326
        %v1416 = vunpack.c.l.b16 %v1327
        %v1417 = vunpack.c.l.b16 %v1328
        %v1418 = vunpack.c.h.b16 %v1328
        %v1419 = vunpack.c.l.b16 %v1329
        %v1420 = vunpack.c.l.b16 %v1330
        %v1421 = vunpack.c.h.b16 %v1330
        %v1422 = vunpack.c.l.b16 %v1331
        %v1423 = vunpack.c.l.b16 %v1332
        %v1424 = vunpack.c.h.b16 %v1332
        %v1425 = vunpack.c.l.b16 %v1333
        %v1426 = vunpack.c.l.b16 %v1334
        %v1427 = vunpack.c.h.b16 %v1334
        %v1428 = vunpack.c.l.b16 %v1335
        %v1429 = vunpack.c.l.b16 %v1336
        %v1430 = vunpack.c.h.b16 %v1336
        %v1431 = vunpack.c.l.b16 %v1337
        %v1432 = vunpack.c.l.b16 %v1338
        %v1433 = vunpack.c.h.b16 %v1338
        %v1434 = vunpack.c.l.b16 %v1339
        %v1435 = vunpack.c.l.b16 %v1340
        %v1436 = vunpack.c.h.b16 %v1340
        %v1437 = vunpack.c.l.b16 %v1341
        %v1438 = vunpack.c.l.b16 %v1342
        %v1439 = vunpack.c.h.b16 %v1342
        %v1440 = vunpack.c.l.b16 %v1343
        %v1441 = vpack.c.b16 %v1396, %v1393
        %v1442 = vpack.c.b16 %v1397, %v1394
        %v1443 = vpack.c.b16 %v1398, %v1395
        %v1444 = vpack.c.b16 %v1402, %v1399
        %v1445 = vpack.c.b16 %v1403, %v1400
        %v1446 = vpack.c.b16 %v1404, %v1401
        %v1447 = vpack.c.b16 %v1408, %v1405
        %v1448 = vpack.c.b16 %v1409, %v1406
        %v1449 = vpack.c.b16 %v1410, %v1407
        %v1450 = vpack.c.b16 %v1414, %v1411
        %v1451 = vpack.c.b16 %v1415, %v1412
        %v1452 = vpack.c.b16 %v1416, %v1413
        %v1453 = vpack.c.b16 %v1420, %v1417
        %v1454 = vpack.c.b16 %v1421, %v1418
        %v1455 = vpack.c.b16 %v1422, %v1419
        %v1456 = vpack.c.b16 %v1426, %v1423
        %v1457 = vpack.c.b16 %v1427, %v1424
        %v1458 = vpack.c.b16 %v1428, %v1425
        %v1459 = vpack.c.b16 %v1432, %v1429
        %v1460 = vpack.c.b16 %v1433, %v1430
        %v1461 = vpack.c.b16 %v1434, %v1431
        %v1462 = vpack.c.b16 %v1438, %v1435
        %v1463 = vpack.c.b16 %v1439, %v1436
        %v1464 = vpack.c.b16 %v1440, %v1437
        %1489 = vmatprep.subr.bf16.mxu0 %v1442
        %1490 = vmatpush1.bf16.msra.mxu0 %v1441
        %1491 = vmatprep.subr.bf16.mxu0 %v1445
        %1492 = vmatpush1.bf16.msra.mxu0 %v1444
        %1493 = vmatprep.subr.bf16.mxu0 %v1448
        %1494 = vmatpush1.bf16.msra.mxu0 %v1447
        %1495 = vmatprep.subr.bf16.mxu0 %v1451
        %1496 = vmatpush1.bf16.msra.mxu0 %v1450
        %1497 = vmatprep.subr.bf16.mxu0 %v1454
        %1498 = vmatpush1.bf16.msra.mxu0 %v1453
        %1499 = vmatprep.subr.bf16.mxu0 %v1457
        %1500 = vmatpush1.bf16.msra.mxu0 %v1456
        %1501 = vmatprep.subr.bf16.mxu0 %v1460
        %1502 = vmatpush1.bf16.msra.mxu0 %v1459
        %1503 = vmatprep.subr.bf16.mxu0 %v1463
        %1504 = vmatpush1.bf16.msra.mxu0 %v1462
        %1505 = vmatprep.subr.bf16.mxu0 0
        %1506 = vmatpush1.bf16.msra.mxu0 0
        %1507 = vmatprep.subr.bf16.mxu0 0
        %1508 = vmatpush1.bf16.msra.mxu0 0
        %1509 = vmatprep.subr.bf16.mxu0 0
        %1510 = vmatpush1.bf16.msra.mxu0 0
        %1511 = vmatprep.subr.bf16.mxu0 0
        %1512 = vmatpush1.bf16.msra.mxu0 0
        %1513 = vmatprep.subr.bf16.mxu0 0
        %1514 = vmatpush1.bf16.msra.mxu0 0
        %1515 = vmatprep.subr.bf16.mxu0 0
        %1516 = vmatpush1.bf16.msra.mxu0 0
        %1517 = vmatprep.subr.bf16.mxu0 0
        %1518 = vmatpush1.bf16.msra.mxu0 0
        %1519 = vmatprep.subr.bf16.mxu0 0
        %1520 = vmatpush1.bf16.msra.mxu0 0
        %1521 = vmatprep.mubr.bf16.mxu0 0
        %1522 = vmatmul.mubr.bf16.gmra.mrb[0].mxu0 %v1311
        %v1523 = vpop.f32.mrb[0].mxu0
        %v1524 = vadd.f32 %v1349, %v1523
        %v1525 = vpop.f32.mrb[0].mxu0
        %v1526 = vadd.f32 %v1353, %v1525
        %v1527 = vpop.f32.mrb[0].mxu0
        %v1528 = vpop.f32.mrb[0].mxu0
        %1529 = vdwg.mxu0
        %1530 = vmatprep.subr.bf16.mxu0 0
        %1531 = vmatpush1.bf16.msra.mxu0 %v1443
        %1532 = vmatprep.subr.bf16.mxu0 0
        %1533 = vmatpush1.bf16.msra.mxu0 %v1446
        %1534 = vmatprep.subr.bf16.mxu0 0
        %1535 = vmatpush1.bf16.msra.mxu0 %v1449
        %1536 = vmatprep.subr.bf16.mxu0 0
        %1537 = vmatpush1.bf16.msra.mxu0 %v1452
        %1538 = vmatprep.subr.bf16.mxu0 0
        %1539 = vmatpush1.bf16.msra.mxu0 %v1455
        %1540 = vmatprep.subr.bf16.mxu0 0
        %1541 = vmatpush1.bf16.msra.mxu0 %v1458
        %1542 = vmatprep.subr.bf16.mxu0 0
        %1543 = vmatpush1.bf16.msra.mxu0 %v1461
        %1544 = vmatprep.subr.bf16.mxu0 0
        %1545 = vmatpush1.bf16.msra.mxu0 %v1464
        %1546 = vmatprep.subr.bf16.mxu0 0
        %1547 = vmatpush1.bf16.msra.mxu0 0
        %1548 = vmatprep.subr.bf16.mxu0 0
        %1549 = vmatpush1.bf16.msra.mxu0 0
        %1550 = vmatprep.subr.bf16.mxu0 0
        %1551 = vmatpush1.bf16.msra.mxu0 0
        %1552 = vmatprep.subr.bf16.mxu0 0
        %1553 = vmatpush1.bf16.msra.mxu0 0
        %1554 = vmatprep.subr.bf16.mxu0 0
        %1555 = vmatpush1.bf16.msra.mxu0 0
        %1556 = vmatprep.subr.bf16.mxu0 0
        %1557 = vmatpush1.bf16.msra.mxu0 0
        %1558 = vmatprep.subr.bf16.mxu0 0
        %1559 = vmatpush1.bf16.msra.mxu0 0
        %1560 = vmatprep.subr.bf16.mxu0 0
        %1561 = vmatpush1.bf16.msra.mxu0 0
        %1562 = vmatprep.mubr.bf16.mxu0 0
        %1563 = vmatmul.mubr.bf16.gmra.mrb[0].mxu0 %v1311
        %v1564 = vpop.f32.mrb[0].mxu0
        %v1565 = vadd.f32 %v1357, %v1564
        %v1566 = vpop.f32.mrb[0].mxu0
        %v1567 = vpop.f32.mrb[0].mxu0
        %v1568 = vpop.f32.mrb[0].mxu0
        %1569 = vdwg.mxu0
        %1571 = vrot.lane.b32.xlu0 %v1524, 96
        %v1572 = vpop.permute.xlu0 %1571
        %1574 = vrot.lane.b32.xlu0 %v1524, 64
        %v1575 = vpop.permute.xlu0 %1574
        %1577 = vrot.lane.b32.xlu0 %v1524, 32
        %v1578 = vpop.permute.xlu0 %1577
        %v1580 = vcombine.low %v1524, %v1575
        %v1581 = vcombine.high %v1524, %v1575
        %v1583 = vunpack.c.l.s4 1983009808
        %v1584 = vunpack.c.0.s8 %v1583
        %v1585 = vlaneseq
        %v1586 = vshrl.u32 %v1585, 7
        %v1587 = vsub.s32 %v1584, %v1586
        %v1588 = vrot.slane %v1580, %v1587
        %v1590 = vunpack.c.l.s4 1983009808
        %v1591 = vunpack.c.0.s8 %v1590
        %v1592 = vlaneseq
        %v1593 = vshrl.u32 %v1592, 7
        %v1594 = vsub.s32 %v1591, %v1593
        %v1595 = vrot.slane %v1581, %v1594
        %v1596 = vcombine.low %v1572, %v1578
        %v1597 = vcombine.high %v1572, %v1578
        %v1599 = vunpack.c.l.s4 1983009808
        %v1600 = vunpack.c.0.s8 %v1599
        %v1601 = vlaneseq
        %v1602 = vshrl.u32 %v1601, 7
        %v1603 = vsub.s32 %v1600, %v1602
        %v1604 = vrot.slane %v1596, %v1603
        %v1606 = vunpack.c.l.s4 1983009808
        %v1607 = vunpack.c.0.s8 %v1606
        %v1608 = vlaneseq
        %v1609 = vshrl.u32 %v1608, 7
        %v1610 = vsub.s32 %v1607, %v1609
        %v1611 = vrot.slane %v1597, %v1610
        %v1612 = vcombine.low %v1588, %v1604
        %v1613 = vcombine.high %v1588, %v1604
        %v1615 = vunpack.c.l.s4 1934713408
        %v1616 = vunpack.c.0.s8 %v1615
        %v1617 = vlaneseq
        %v1618 = vshrl.u32 %v1617, 7
        %v1619 = vsub.s32 %v1616, %v1618
        %v1620 = vrot.slane %v1612, %v1619
        %v1622 = vunpack.c.l.s4 1934713408
        %v1623 = vunpack.c.0.s8 %v1622
        %v1624 = vlaneseq
        %v1625 = vshrl.u32 %v1624, 7
        %v1626 = vsub.s32 %v1623, %v1625
        %v1627 = vrot.slane %v1613, %v1626
        %v1628 = vcombine.low %v1595, %v1611
        %v1629 = vcombine.high %v1595, %v1611
        %v1631 = vunpack.c.l.s4 1934713408
        %v1632 = vunpack.c.0.s8 %v1631
        %v1633 = vlaneseq
        %v1634 = vshrl.u32 %v1633, 7
        %v1635 = vsub.s32 %v1632, %v1634
        %v1636 = vrot.slane %v1628, %v1635
        %v1638 = vunpack.c.l.s4 1934713408
        %v1639 = vunpack.c.0.s8 %v1638
        %v1640 = vlaneseq
        %v1641 = vshrl.u32 %v1640, 7
        %v1642 = vsub.s32 %v1639, %v1641
        %v1643 = vrot.slane %v1629, %v1642
        %v1644 = vcombine.high %v1620, 0.0
        %v1645 = vcombine.high %v1627, 0.0
        %v1646 = vcombine.high %v1636, 0.0
        %v1647 = vcombine.high %v1643, 0.0
        %v1648 = vcombine.low %v1620, %v1627
        %v1650 = vunpack.c.l.s4 1983009808
        %v1651 = vunpack.c.0.s8 %v1650
        %v1652 = vlaneseq
        %v1653 = vshrl.u32 %v1652, 7
        %v1654 = vsub.s32 %v1651, %v1653
        %v1655 = vrot.slane %v1648, %v1654
        %v1656 = vcombine.low %v1644, %v1645
        %v1658 = vunpack.c.l.s4 1983009808
        %v1659 = vunpack.c.0.s8 %v1658
        %v1660 = vlaneseq
        %v1661 = vshrl.u32 %v1660, 7
        %v1662 = vsub.s32 %v1659, %v1661
        %v1663 = vrot.slane %v1656, %v1662
        %v1664 = vcombine.low %v1636, %v1643
        %v1666 = vunpack.c.l.s4 1983009808
        %v1667 = vunpack.c.0.s8 %v1666
        %v1668 = vlaneseq
        %v1669 = vshrl.u32 %v1668, 7
        %v1670 = vsub.s32 %v1667, %v1669
        %v1671 = vrot.slane %v1664, %v1670
        %v1672 = vcombine.low %v1646, %v1647
        %v1674 = vunpack.c.l.s4 1983009808
        %v1675 = vunpack.c.0.s8 %v1674
        %v1676 = vlaneseq
        %v1677 = vshrl.u32 %v1676, 7
        %v1678 = vsub.s32 %v1675, %v1677
        %v1679 = vrot.slane %v1672, %v1678
        %v1680 = vcombine.low %v1655, %v1663
        %v1681 = vcombine.high %v1655, %v1663
        %v1683 = vunpack.c.l.s4 1934713408
        %v1684 = vunpack.c.0.s8 %v1683
        %v1685 = vlaneseq
        %v1686 = vshrl.u32 %v1685, 7
        %v1687 = vsub.s32 %v1684, %v1686
        %v1688 = vrot.slane %v1680, %v1687
        %v1690 = vunpack.c.l.s4 1934713408
        %v1691 = vunpack.c.0.s8 %v1690
        %v1692 = vlaneseq
        %v1693 = vshrl.u32 %v1692, 7
        %v1694 = vsub.s32 %v1691, %v1693
        %v1695 = vrot.slane %v1681, %v1694
        %v1696 = vcombine.low %v1671, %v1679
        %v1697 = vcombine.high %v1671, %v1679
        %v1699 = vunpack.c.l.s4 1934713408
        %v1700 = vunpack.c.0.s8 %v1699
        %v1701 = vlaneseq
        %v1702 = vshrl.u32 %v1701, 7
        %v1703 = vsub.s32 %v1700, %v1702
        %v1704 = vrot.slane %v1696, %v1703
        %v1706 = vunpack.c.l.s4 1934713408
        %v1707 = vunpack.c.0.s8 %v1706
        %v1708 = vlaneseq
        %v1709 = vshrl.u32 %v1708, 7
        %v1710 = vsub.s32 %v1707, %v1709
        %v1711 = vrot.slane %v1697, %v1710
        %v1712 = vcombine.low %v1688, %v1704
        %v1713 = vcombine.high %v1688, %v1704
        %v1714 = vcombine.low %v1695, %v1711
        %v1715 = vcombine.high %v1695, %v1711
        %v1716 = vpack.c.bf16 %v1712, %v1712
        %v1717 = vpack.c.bf16 %v1713, %v1713
        %v1718 = vpack.c.bf16 %v1714, %v1714
        %v1719 = vpack.c.bf16 %v1715, %v1715
        %1721 = vrot.lane.b32.xlu0 %v1526, 96
        %v1722 = vpop.permute.xlu0 %1721
        %1724 = vrot.lane.b32.xlu0 %v1526, 64
        %v1725 = vpop.permute.xlu0 %1724
        %1727 = vrot.lane.b32.xlu0 %v1526, 32
        %v1728 = vpop.permute.xlu0 %1727
        %v1730 = vcombine.low %v1526, %v1725
        %v1731 = vcombine.high %v1526, %v1725
        %v1733 = vunpack.c.l.s4 1983009808
        %v1734 = vunpack.c.0.s8 %v1733
        %v1735 = vlaneseq
        %v1736 = vshrl.u32 %v1735, 7
        %v1737 = vsub.s32 %v1734, %v1736
        %v1738 = vrot.slane %v1730, %v1737
        %v1740 = vunpack.c.l.s4 1983009808
        %v1741 = vunpack.c.0.s8 %v1740
        %v1742 = vlaneseq
        %v1743 = vshrl.u32 %v1742, 7
        %v1744 = vsub.s32 %v1741, %v1743
        %v1745 = vrot.slane %v1731, %v1744
        %v1746 = vcombine.low %v1722, %v1728
        %v1747 = vcombine.high %v1722, %v1728
        %v1749 = vunpack.c.l.s4 1983009808
        %v1750 = vunpack.c.0.s8 %v1749
        %v1751 = vlaneseq
        %v1752 = vshrl.u32 %v1751, 7
        %v1753 = vsub.s32 %v1750, %v1752
        %v1754 = vrot.slane %v1746, %v1753
        %v1756 = vunpack.c.l.s4 1983009808
        %v1757 = vunpack.c.0.s8 %v1756
        %v1758 = vlaneseq
        %v1759 = vshrl.u32 %v1758, 7
        %v1760 = vsub.s32 %v1757, %v1759
        %v1761 = vrot.slane %v1747, %v1760
        %v1762 = vcombine.low %v1738, %v1754
        %v1763 = vcombine.high %v1738, %v1754
        %v1765 = vunpack.c.l.s4 1934713408
        %v1766 = vunpack.c.0.s8 %v1765
        %v1767 = vlaneseq
        %v1768 = vshrl.u32 %v1767, 7
        %v1769 = vsub.s32 %v1766, %v1768
        %v1770 = vrot.slane %v1762, %v1769
        %v1772 = vunpack.c.l.s4 1934713408
        %v1773 = vunpack.c.0.s8 %v1772
        %v1774 = vlaneseq
        %v1775 = vshrl.u32 %v1774, 7
        %v1776 = vsub.s32 %v1773, %v1775
        %v1777 = vrot.slane %v1763, %v1776
        %v1778 = vcombine.low %v1745, %v1761
        %v1779 = vcombine.high %v1745, %v1761
        %v1781 = vunpack.c.l.s4 1934713408
        %v1782 = vunpack.c.0.s8 %v1781
        %v1783 = vlaneseq
        %v1784 = vshrl.u32 %v1783, 7
        %v1785 = vsub.s32 %v1782, %v1784
        %v1786 = vrot.slane %v1778, %v1785
        %v1788 = vunpack.c.l.s4 1934713408
        %v1789 = vunpack.c.0.s8 %v1788
        %v1790 = vlaneseq
        %v1791 = vshrl.u32 %v1790, 7
        %v1792 = vsub.s32 %v1789, %v1791
        %v1793 = vrot.slane %v1779, %v1792
        %v1794 = vcombine.high %v1770, 0.0
        %v1795 = vcombine.high %v1777, 0.0
        %v1796 = vcombine.high %v1786, 0.0
        %v1797 = vcombine.high %v1793, 0.0
        %v1798 = vcombine.low %v1770, %v1777
        %v1800 = vunpack.c.l.s4 1983009808
        %v1801 = vunpack.c.0.s8 %v1800
        %v1802 = vlaneseq
        %v1803 = vshrl.u32 %v1802, 7
        %v1804 = vsub.s32 %v1801, %v1803
        %v1805 = vrot.slane %v1798, %v1804
        %v1806 = vcombine.low %v1794, %v1795
        %v1808 = vunpack.c.l.s4 1983009808
        %v1809 = vunpack.c.0.s8 %v1808
        %v1810 = vlaneseq
        %v1811 = vshrl.u32 %v1810, 7
        %v1812 = vsub.s32 %v1809, %v1811
        %v1813 = vrot.slane %v1806, %v1812
        %v1814 = vcombine.low %v1786, %v1793
        %v1816 = vunpack.c.l.s4 1983009808
        %v1817 = vunpack.c.0.s8 %v1816
        %v1818 = vlaneseq
        %v1819 = vshrl.u32 %v1818, 7
        %v1820 = vsub.s32 %v1817, %v1819
        %v1821 = vrot.slane %v1814, %v1820
        %v1822 = vcombine.low %v1796, %v1797
        %v1824 = vunpack.c.l.s4 1983009808
        %v1825 = vunpack.c.0.s8 %v1824
        %v1826 = vlaneseq
        %v1827 = vshrl.u32 %v1826, 7
        %v1828 = vsub.s32 %v1825, %v1827
        %v1829 = vrot.slane %v1822, %v1828
        %v1830 = vcombine.low %v1805, %v1813
        %v1831 = vcombine.high %v1805, %v1813
        %v1833 = vunpack.c.l.s4 1934713408
        %v1834 = vunpack.c.0.s8 %v1833
        %v1835 = vlaneseq
        %v1836 = vshrl.u32 %v1835, 7
        %v1837 = vsub.s32 %v1834, %v1836
        %v1838 = vrot.slane %v1830, %v1837
        %v1840 = vunpack.c.l.s4 1934713408
        %v1841 = vunpack.c.0.s8 %v1840
        %v1842 = vlaneseq
        %v1843 = vshrl.u32 %v1842, 7
        %v1844 = vsub.s32 %v1841, %v1843
        %v1845 = vrot.slane %v1831, %v1844
        %v1846 = vcombine.low %v1821, %v1829
        %v1847 = vcombine.high %v1821, %v1829
        %v1849 = vunpack.c.l.s4 1934713408
        %v1850 = vunpack.c.0.s8 %v1849
        %v1851 = vlaneseq
        %v1852 = vshrl.u32 %v1851, 7
        %v1853 = vsub.s32 %v1850, %v1852
        %v1854 = vrot.slane %v1846, %v1853
        %v1856 = vunpack.c.l.s4 1934713408
        %v1857 = vunpack.c.0.s8 %v1856
        %v1858 = vlaneseq
        %v1859 = vshrl.u32 %v1858, 7
        %v1860 = vsub.s32 %v1857, %v1859
        %v1861 = vrot.slane %v1847, %v1860
        %v1862 = vcombine.low %v1838, %v1854
        %v1863 = vcombine.high %v1838, %v1854
        %v1864 = vcombine.low %v1845, %v1861
        %v1865 = vcombine.high %v1845, %v1861
        %v1866 = vpack.c.bf16 %v1862, %v1862
        %v1867 = vpack.c.bf16 %v1863, %v1863
        %v1868 = vpack.c.bf16 %v1864, %v1864
        %v1869 = vpack.c.bf16 %v1865, %v1865
        %1871 = vrot.lane.b32.xlu0 %v1565, 96
        %v1872 = vpop.permute.xlu0 %1871
        %1874 = vrot.lane.b32.xlu0 %v1565, 64
        %v1875 = vpop.permute.xlu0 %1874
        %1877 = vrot.lane.b32.xlu0 %v1565, 32
        %v1878 = vpop.permute.xlu0 %1877
        %v1880 = vcombine.low %v1565, %v1875
        %v1881 = vcombine.high %v1565, %v1875
        %v1883 = vunpack.c.l.s4 1983009808
        %v1884 = vunpack.c.0.s8 %v1883
        %v1885 = vlaneseq
        %v1886 = vshrl.u32 %v1885, 7
        %v1887 = vsub.s32 %v1884, %v1886
        %v1888 = vrot.slane %v1880, %v1887
        %v1890 = vunpack.c.l.s4 1983009808
        %v1891 = vunpack.c.0.s8 %v1890
        %v1892 = vlaneseq
        %v1893 = vshrl.u32 %v1892, 7
        %v1894 = vsub.s32 %v1891, %v1893
        %v1895 = vrot.slane %v1881, %v1894
        %v1896 = vcombine.low %v1872, %v1878
        %v1897 = vcombine.high %v1872, %v1878
        %v1899 = vunpack.c.l.s4 1983009808
        %v1900 = vunpack.c.0.s8 %v1899
        %v1901 = vlaneseq
        %v1902 = vshrl.u32 %v1901, 7
        %v1903 = vsub.s32 %v1900, %v1902
        %v1904 = vrot.slane %v1896, %v1903
        %v1906 = vunpack.c.l.s4 1983009808
        %v1907 = vunpack.c.0.s8 %v1906
        %v1908 = vlaneseq
        %v1909 = vshrl.u32 %v1908, 7
        %v1910 = vsub.s32 %v1907, %v1909
        %v1911 = vrot.slane %v1897, %v1910
        %v1912 = vcombine.low %v1888, %v1904
        %v1913 = vcombine.high %v1888, %v1904
        %v1915 = vunpack.c.l.s4 1934713408
        %v1916 = vunpack.c.0.s8 %v1915
        %v1917 = vlaneseq
        %v1918 = vshrl.u32 %v1917, 7
        %v1919 = vsub.s32 %v1916, %v1918
        %v1920 = vrot.slane %v1912, %v1919
        %v1922 = vunpack.c.l.s4 1934713408
        %v1923 = vunpack.c.0.s8 %v1922
        %v1924 = vlaneseq
        %v1925 = vshrl.u32 %v1924, 7
        %v1926 = vsub.s32 %v1923, %v1925
        %v1927 = vrot.slane %v1913, %v1926
        %v1928 = vcombine.low %v1895, %v1911
        %v1929 = vcombine.high %v1895, %v1911
        %v1931 = vunpack.c.l.s4 1934713408
        %v1932 = vunpack.c.0.s8 %v1931
        %v1933 = vlaneseq
        %v1934 = vshrl.u32 %v1933, 7
        %v1935 = vsub.s32 %v1932, %v1934
        %v1936 = vrot.slane %v1928, %v1935
        %v1938 = vunpack.c.l.s4 1934713408
        %v1939 = vunpack.c.0.s8 %v1938
        %v1940 = vlaneseq
        %v1941 = vshrl.u32 %v1940, 7
        %v1942 = vsub.s32 %v1939, %v1941
        %v1943 = vrot.slane %v1929, %v1942
        %v1944 = vcombine.high %v1920, 0.0
        %v1945 = vcombine.high %v1927, 0.0
        %v1946 = vcombine.high %v1936, 0.0
        %v1947 = vcombine.high %v1943, 0.0
        %v1948 = vcombine.low %v1920, %v1927
        %v1950 = vunpack.c.l.s4 1983009808
        %v1951 = vunpack.c.0.s8 %v1950
        %v1952 = vlaneseq
        %v1953 = vshrl.u32 %v1952, 7
        %v1954 = vsub.s32 %v1951, %v1953
        %v1955 = vrot.slane %v1948, %v1954
        %v1956 = vcombine.low %v1944, %v1945
        %v1958 = vunpack.c.l.s4 1983009808
        %v1959 = vunpack.c.0.s8 %v1958
        %v1960 = vlaneseq
        %v1961 = vshrl.u32 %v1960, 7
        %v1962 = vsub.s32 %v1959, %v1961
        %v1963 = vrot.slane %v1956, %v1962
        %v1964 = vcombine.low %v1936, %v1943
        %v1966 = vunpack.c.l.s4 1983009808
        %v1967 = vunpack.c.0.s8 %v1966
        %v1968 = vlaneseq
        %v1969 = vshrl.u32 %v1968, 7
        %v1970 = vsub.s32 %v1967, %v1969
        %v1971 = vrot.slane %v1964, %v1970
        %v1972 = vcombine.low %v1946, %v1947
        %v1974 = vunpack.c.l.s4 1983009808
        %v1975 = vunpack.c.0.s8 %v1974
        %v1976 = vlaneseq
        %v1977 = vshrl.u32 %v1976, 7
        %v1978 = vsub.s32 %v1975, %v1977
        %v1979 = vrot.slane %v1972, %v1978
        %v1980 = vcombine.low %v1955, %v1963
        %v1981 = vcombine.high %v1955, %v1963
        %v1983 = vunpack.c.l.s4 1934713408
        %v1984 = vunpack.c.0.s8 %v1983
        %v1985 = vlaneseq
        %v1986 = vshrl.u32 %v1985, 7
        %v1987 = vsub.s32 %v1984, %v1986
        %v1988 = vrot.slane %v1980, %v1987
        %v1990 = vunpack.c.l.s4 1934713408
        %v1991 = vunpack.c.0.s8 %v1990
        %v1992 = vlaneseq
        %v1993 = vshrl.u32 %v1992, 7
        %v1994 = vsub.s32 %v1991, %v1993
        %v1995 = vrot.slane %v1981, %v1994
        %v1996 = vcombine.low %v1971, %v1979
        %v1997 = vcombine.high %v1971, %v1979
        %v1999 = vunpack.c.l.s4 1934713408
        %v2000 = vunpack.c.0.s8 %v1999
        %v2001 = vlaneseq
        %v2002 = vshrl.u32 %v2001, 7
        %v2003 = vsub.s32 %v2000, %v2002
        %v2004 = vrot.slane %v1996, %v2003
        %v2006 = vunpack.c.l.s4 1934713408
        %v2007 = vunpack.c.0.s8 %v2006
        %v2008 = vlaneseq
        %v2009 = vshrl.u32 %v2008, 7
        %v2010 = vsub.s32 %v2007, %v2009
        %v2011 = vrot.slane %v1997, %v2010
        %v2012 = vcombine.low %v1988, %v2004
        %v2013 = vcombine.high %v1988, %v2004
        %v2014 = vcombine.low %v1995, %v2011
        %v2015 = vcombine.high %v1995, %v2011
        %v2016 = vpack.c.bf16 %v2012, %v2012
        %v2017 = vpack.c.bf16 %v2013, %v2013
        %v2018 = vpack.c.bf16 %v2014, %v2014
        %v2019 = vpack.c.bf16 %v2015, %v2015
        %vm2020 = vcmask 261120
        %v2022 = vsel %vm2020, %v1716, 0
        %v2025 = vsel %vm2020, %v1866, 0
        %2027 = vmatprep.subr.bf16.mxu0 0
        %2028 = vmatpush1.bf16.xpose.msra.mxu0 %v2025
        %2029 = vmatprep.subr.bf16.mxu0 0
        %2030 = vmatpush1.bf16.xpose.msra.mxu0 0
        %2031 = vmatprep.subr.bf16.mxu0 0
        %2032 = vmatpush1.bf16.xpose.msra.mxu0 0
        %2033 = vmatprep.subr.bf16.mxu0 0
        %2034 = vmatpush1.bf16.xpose.msra.mxu0 0
        %2035 = vmatprep.subr.bf16.mxu0 0
        %2036 = vmatpush1.bf16.xpose.msra.mxu0 0
        %2037 = vmatprep.subr.bf16.mxu0 0
        %2038 = vmatpush1.bf16.xpose.msra.mxu0 0
        %2039 = vmatprep.subr.bf16.mxu0 0
        %2040 = vmatpush1.bf16.xpose.msra.mxu0 0
        %2041 = vmatprep.subr.bf16.mxu0 0
        %2042 = vmatpush1.bf16.xpose.msra.mxu0 0
        %2043 = vmatprep.subr.bf16.mxu0 0
        %2044 = vmatpush1.bf16.xpose.msra.mxu0 0
        %2045 = vmatprep.subr.bf16.mxu0 0
        %2046 = vmatpush1.bf16.xpose.msra.mxu0 0
        %2047 = vmatprep.subr.bf16.mxu0 0
        %2048 = vmatpush1.bf16.xpose.msra.mxu0 0
        %2049 = vmatprep.subr.bf16.mxu0 0
        %2050 = vmatpush1.bf16.xpose.msra.mxu0 0
        %2051 = vmatprep.subr.bf16.mxu0 0
        %2052 = vmatpush1.bf16.xpose.msra.mxu0 0
        %2053 = vmatprep.subr.bf16.mxu0 0
        %2054 = vmatpush1.bf16.xpose.msra.mxu0 0
        %2055 = vmatprep.subr.bf16.mxu0 0
        %2056 = vmatpush1.bf16.xpose.msra.mxu0 0
        %2057 = vmatprep.subr.bf16.mxu0 0
        %2058 = vmatpush1.bf16.xpose.msra.mxu0 0
        %2059 = vmatprep.mubr.bf16.mxu0 0
        %2060 = vmatmul.mubr.bf16.gmra.mrb[0].mxu0 %v2022
        %v2061 = vpop.f32.mrb[0].mxu0
        %v2062 = vadd.f32 0.0, %v2061
        %v2063 = vpop.f32.mrb[0].mxu0
        %v2064 = vpop.f32.mrb[0].mxu0
        %v2065 = vpop.f32.mrb[0].mxu0
        %2066 = vdwg.mxu0
        %v2068 = vsel %vm2020, %v1717, 0
        %v2071 = vsel %vm2020, %v1867, 0
        %2073 = vmatprep.subr.bf16.mxu0 0
        %2074 = vmatpush1.bf16.xpose.msra.mxu0 %v2071
        %2075 = vmatprep.subr.bf16.mxu0 0
        %2076 = vmatpush1.bf16.xpose.msra.mxu0 0
        %2077 = vmatprep.subr.bf16.mxu0 0
        %2078 = vmatpush1.bf16.xpose.msra.mxu0 0
        %2079 = vmatprep.subr.bf16.mxu0 0
        %2080 = vmatpush1.bf16.xpose.msra.mxu0 0
        %2081 = vmatprep.subr.bf16.mxu0 0
        %2082 = vmatpush1.bf16.xpose.msra.mxu0 0
        %2083 = vmatprep.subr.bf16.mxu0 0
        %2084 = vmatpush1.bf16.xpose.msra.mxu0 0
        %2085 = vmatprep.subr.bf16.mxu0 0
        %2086 = vmatpush1.bf16.xpose.msra.mxu0 0
        %2087 = vmatprep.subr.bf16.mxu0 0
        %2088 = vmatpush1.bf16.xpose.msra.mxu0 0
        %2089 = vmatprep.subr.bf16.mxu0 0
        %2090 = vmatpush1.bf16.xpose.msra.mxu0 0
        %2091 = vmatprep.subr.bf16.mxu0 0
        %2092 = vmatpush1.bf16.xpose.msra.mxu0 0
        %2093 = vmatprep.subr.bf16.mxu0 0
        %2094 = vmatpush1.bf16.xpose.msra.mxu0 0
        %2095 = vmatprep.subr.bf16.mxu0 0
        %2096 = vmatpush1.bf16.xpose.msra.mxu0 0
        %2097 = vmatprep.subr.bf16.mxu0 0
        %2098 = vmatpush1.bf16.xpose.msra.mxu0 0
        %2099 = vmatprep.subr.bf16.mxu0 0
        %2100 = vmatpush1.bf16.xpose.msra.mxu0 0
        %2101 = vmatprep.subr.bf16.mxu0 0
        %2102 = vmatpush1.bf16.xpose.msra.mxu0 0
        %2103 = vmatprep.subr.bf16.mxu0 0
        %2104 = vmatpush1.bf16.xpose.msra.mxu0 0
        %2105 = vmatprep.mubr.bf16.mxu0 0
        %2106 = vmatmul.mubr.bf16.gmra.mrb[0].mxu0 %v2068
        %v2107 = vpop.f32.mrb[0].mxu0
        %v2108 = vadd.f32 0.0, %v2107
        %v2109 = vpop.f32.mrb[0].mxu0
        %v2110 = vpop.f32.mrb[0].mxu0
        %v2111 = vpop.f32.mrb[0].mxu0
        %2112 = vdwg.mxu0
        %v2114 = vsel %vm2020, %v1718, 0
        %v2117 = vsel %vm2020, %v1868, 0
        %2119 = vmatprep.subr.bf16.mxu0 0
        %2120 = vmatpush1.bf16.xpose.msra.mxu0 %v2117
        %2121 = vmatprep.subr.bf16.mxu0 0
        %2122 = vmatpush1.bf16.xpose.msra.mxu0 0
        %2123 = vmatprep.subr.bf16.mxu0 0
        %2124 = vmatpush1.bf16.xpose.msra.mxu0 0
        %2125 = vmatprep.subr.bf16.mxu0 0
        %2126 = vmatpush1.bf16.xpose.msra.mxu0 0
        %2127 = vmatprep.subr.bf16.mxu0 0
        %2128 = vmatpush1.bf16.xpose.msra.mxu0 0
        %2129 = vmatprep.subr.bf16.mxu0 0
        %2130 = vmatpush1.bf16.xpose.msra.mxu0 0
        %2131 = vmatprep.subr.bf16.mxu0 0
        %2132 = vmatpush1.bf16.xpose.msra.mxu0 0
        %2133 = vmatprep.subr.bf16.mxu0 0
        %2134 = vmatpush1.bf16.xpose.msra.mxu0 0
        %2135 = vmatprep.subr.bf16.mxu0 0
        %2136 = vmatpush1.bf16.xpose.msra.mxu0 0
        %2137 = vmatprep.subr.bf16.mxu0 0
        %2138 = vmatpush1.bf16.xpose.msra.mxu0 0
        %2139 = vmatprep.subr.bf16.mxu0 0
        %2140 = vmatpush1.bf16.xpose.msra.mxu0 0
        %2141 = vmatprep.subr.bf16.mxu0 0
        %2142 = vmatpush1.bf16.xpose.msra.mxu0 0
        %2143 = vmatprep.subr.bf16.mxu0 0
        %2144 = vmatpush1.bf16.xpose.msra.mxu0 0
        %2145 = vmatprep.subr.bf16.mxu0 0
        %2146 = vmatpush1.bf16.xpose.msra.mxu0 0
        %2147 = vmatprep.subr.bf16.mxu0 0
        %2148 = vmatpush1.bf16.xpose.msra.mxu0 0
        %2149 = vmatprep.subr.bf16.mxu0 0
        %2150 = vmatpush1.bf16.xpose.msra.mxu0 0
        %2151 = vmatprep.mubr.bf16.mxu0 0
        %2152 = vmatmul.mubr.bf16.gmra.mrb[0].mxu0 %v2114
        %v2153 = vpop.f32.mrb[0].mxu0
        %v2154 = vadd.f32 0.0, %v2153
        %v2155 = vpop.f32.mrb[0].mxu0
        %v2156 = vpop.f32.mrb[0].mxu0
        %v2157 = vpop.f32.mrb[0].mxu0
        %2158 = vdwg.mxu0
        %v2160 = vsel %vm2020, %v1719, 0
        %v2163 = vsel %vm2020, %v1869, 0
        %2165 = vmatprep.subr.bf16.mxu0 0
        %2166 = vmatpush1.bf16.xpose.msra.mxu0 %v2163
        %2167 = vmatprep.subr.bf16.mxu0 0
        %2168 = vmatpush1.bf16.xpose.msra.mxu0 0
        %2169 = vmatprep.subr.bf16.mxu0 0
        %2170 = vmatpush1.bf16.xpose.msra.mxu0 0
        %2171 = vmatprep.subr.bf16.mxu0 0
        %2172 = vmatpush1.bf16.xpose.msra.mxu0 0
        %2173 = vmatprep.subr.bf16.mxu0 0
        %2174 = vmatpush1.bf16.xpose.msra.mxu0 0
        %2175 = vmatprep.subr.bf16.mxu0 0
        %2176 = vmatpush1.bf16.xpose.msra.mxu0 0
        %2177 = vmatprep.subr.bf16.mxu0 0
        %2178 = vmatpush1.bf16.xpose.msra.mxu0 0
        %2179 = vmatprep.subr.bf16.mxu0 0
        %2180 = vmatpush1.bf16.xpose.msra.mxu0 0
        %2181 = vmatprep.subr.bf16.mxu0 0
        %2182 = vmatpush1.bf16.xpose.msra.mxu0 0
        %2183 = vmatprep.subr.bf16.mxu0 0
        %2184 = vmatpush1.bf16.xpose.msra.mxu0 0
        %2185 = vmatprep.subr.bf16.mxu0 0
        %2186 = vmatpush1.bf16.xpose.msra.mxu0 0
        %2187 = vmatprep.subr.bf16.mxu0 0
        %2188 = vmatpush1.bf16.xpose.msra.mxu0 0
        %2189 = vmatprep.subr.bf16.mxu0 0
        %2190 = vmatpush1.bf16.xpose.msra.mxu0 0
        %2191 = vmatprep.subr.bf16.mxu0 0
        %2192 = vmatpush1.bf16.xpose.msra.mxu0 0
        %2193 = vmatprep.subr.bf16.mxu0 0
        %2194 = vmatpush1.bf16.xpose.msra.mxu0 0
        %2195 = vmatprep.subr.bf16.mxu0 0
        %2196 = vmatpush1.bf16.xpose.msra.mxu0 0
        %2197 = vmatprep.mubr.bf16.mxu0 0
        %2198 = vmatmul.mubr.bf16.gmra.mrb[0].mxu0 %v2160
        %v2199 = vpop.f32.mrb[0].mxu0
        %v2200 = vadd.f32 0.0, %v2199
        %v2201 = vpop.f32.mrb[0].mxu0
        %v2202 = vpop.f32.mrb[0].mxu0
        %v2203 = vpop.f32.mrb[0].mxu0
        %2204 = vdwg.mxu0
        %vm2205 = vcmask 64512
        %v2206 = vsel %vm2205, %v2062, -inf
        %2207 = vmax.xlane.f32.xlu0 %v2206
        %v2208 = vpop.xlane.xlu0 %2207
        %v2209 = vsel %vm2205, %v2108, -inf
        %2210 = vmax.xlane.f32.xlu0 %v2209
        %v2211 = vpop.xlane.xlu0 %2210
        %v2212 = vsel %vm2205, %v2154, -inf
        %2213 = vmax.xlane.f32.xlu0 %v2212
        %v2214 = vpop.xlane.xlu0 %2213
        %v2215 = vsel %vm2205, %v2200, -inf
        %2216 = vmax.xlane.f32.xlu0 %v2215
        %v2217 = vpop.xlane.xlu0 %2216
        %v2218 = vsub.f32 %v2062, %v2208
        %v2219 = vsub.f32 %v2108, %v2211
        %v2220 = vsub.f32 %v2154, %v2214
        %v2221 = vsub.f32 %v2200, %v2217
        %v2222 = vmul.f32 %v2218, 1.442695
        %v2223 = vpow.pop %v2222
        %v2224 = vmul.f32 %v2219, 1.442695
        %v2225 = vpow.pop %v2224
        %v2226 = vmul.f32 %v2220, 1.442695
        %v2227 = vpow.pop %v2226
        %v2228 = vmul.f32 %v2221, 1.442695
        %v2229 = vpow.pop %v2228
        %v2230 = vsel %vm2205, %v2223, 0.0
        %2231 = vadd.xlane.f32.xlu0 %v2230
        %v2232 = vpop.xlane.xlu0 %2231
        %v2233 = vsel %vm2205, %v2225, 0.0
        %2234 = vadd.xlane.f32.xlu0 %v2233
        %v2235 = vpop.xlane.xlu0 %2234
        %v2236 = vsel %vm2205, %v2227, 0.0
        %2237 = vadd.xlane.f32.xlu0 %v2236
        %v2238 = vpop.xlane.xlu0 %2237
        %v2239 = vsel %vm2205, %v2229, 0.0
        %2240 = vadd.xlane.f32.xlu0 %v2239
        %v2241 = vpop.xlane.xlu0 %2240
        %v2242 = vrcp.pop %v2232
        %v2243 = vrcp.pop %v2235
        %v2244 = vrcp.pop %v2238
        %v2245 = vrcp.pop %v2241
        %v2246 = vmul.f32 %v2223, %v2242
        %v2247 = vmul.f32 %v2225, %v2243
        %v2248 = vmul.f32 %v2227, %v2244
        %v2249 = vmul.f32 %v2229, %v2245
        %v2250 = vpack.c.bf16 %v2246, %v2246
        %v2251 = vpack.c.bf16 %v2247, %v2247
        %v2252 = vpack.c.bf16 %v2248, %v2248
        %v2253 = vpack.c.bf16 %v2249, %v2249
        %v2255 = vsel %vm2205, %v2250, 0
        %vm2257 = vcmask 1043456
        %v2259 = vsel %vm2257, %v2016, 0
        %2261 = vmatprep.subr.bf16.mxu0 0
        %2262 = vmatpush1.bf16.msra.mxu0 %v2259
        %2263 = vmatprep.subr.bf16.mxu0 0
        %2264 = vmatpush1.bf16.msra.mxu0 0
        %2265 = vmatprep.subr.bf16.mxu0 0
        %2266 = vmatpush1.bf16.msra.mxu0 0
        %2267 = vmatprep.subr.bf16.mxu0 0
        %2268 = vmatpush1.bf16.msra.mxu0 0
        %2269 = vmatprep.subr.bf16.mxu0 0
        %2270 = vmatpush1.bf16.msra.mxu0 0
        %2271 = vmatprep.subr.bf16.mxu0 0
        %2272 = vmatpush1.bf16.msra.mxu0 0
        %2273 = vmatprep.subr.bf16.mxu0 0
        %2274 = vmatpush1.bf16.msra.mxu0 0
        %2275 = vmatprep.subr.bf16.mxu0 0
        %2276 = vmatpush1.bf16.msra.mxu0 0
        %2277 = vmatprep.subr.bf16.mxu0 0
        %2278 = vmatpush1.bf16.msra.mxu0 0
        %2279 = vmatprep.subr.bf16.mxu0 0
        %2280 = vmatpush1.bf16.msra.mxu0 0
        %2281 = vmatprep.subr.bf16.mxu0 0
        %2282 = vmatpush1.bf16.msra.mxu0 0
        %2283 = vmatprep.subr.bf16.mxu0 0
        %2284 = vmatpush1.bf16.msra.mxu0 0
        %2285 = vmatprep.subr.bf16.mxu0 0
        %2286 = vmatpush1.bf16.msra.mxu0 0
        %2287 = vmatprep.subr.bf16.mxu0 0
        %2288 = vmatpush1.bf16.msra.mxu0 0
        %2289 = vmatprep.subr.bf16.mxu0 0
        %2290 = vmatpush1.bf16.msra.mxu0 0
        %2291 = vmatprep.subr.bf16.mxu0 0
        %2292 = vmatpush1.bf16.msra.mxu0 0
        %2293 = vmatprep.mubr.bf16.mxu0 0
        %2294 = vmatmul.mubr.bf16.gmra.mrb[0].mxu0 %v2255
        %v2295 = vpop.f32.mrb[0].mxu0
        %v2296 = vadd.f32 0.0, %v2295
        %v2297 = vpop.f32.mrb[0].mxu0
        %v2298 = vpop.f32.mrb[0].mxu0
        %v2299 = vpop.f32.mrb[0].mxu0
        %2300 = vdwg.mxu0
        %v2302 = vsel %vm2205, %v2251, 0
        %v2305 = vsel %vm2257, %v2017, 0
        %2307 = vmatprep.subr.bf16.mxu0 0
        %2308 = vmatpush1.bf16.msra.mxu0 %v2305
        %2309 = vmatprep.subr.bf16.mxu0 0
        %2310 = vmatpush1.bf16.msra.mxu0 0
        %2311 = vmatprep.subr.bf16.mxu0 0
        %2312 = vmatpush1.bf16.msra.mxu0 0
        %2313 = vmatprep.subr.bf16.mxu0 0
        %2314 = vmatpush1.bf16.msra.mxu0 0
        %2315 = vmatprep.subr.bf16.mxu0 0
        %2316 = vmatpush1.bf16.msra.mxu0 0
        %2317 = vmatprep.subr.bf16.mxu0 0
        %2318 = vmatpush1.bf16.msra.mxu0 0
        %2319 = vmatprep.subr.bf16.mxu0 0
        %2320 = vmatpush1.bf16.msra.mxu0 0
        %2321 = vmatprep.subr.bf16.mxu0 0
        %2322 = vmatpush1.bf16.msra.mxu0 0
        %2323 = vmatprep.subr.bf16.mxu0 0
        %2324 = vmatpush1.bf16.msra.mxu0 0
        %2325 = vmatprep.subr.bf16.mxu0 0
        %2326 = vmatpush1.bf16.msra.mxu0 0
        %2327 = vmatprep.subr.bf16.mxu0 0
        %2328 = vmatpush1.bf16.msra.mxu0 0
        %2329 = vmatprep.subr.bf16.mxu0 0
        %2330 = vmatpush1.bf16.msra.mxu0 0
        %2331 = vmatprep.subr.bf16.mxu0 0
        %2332 = vmatpush1.bf16.msra.mxu0 0
        %2333 = vmatprep.subr.bf16.mxu0 0
        %2334 = vmatpush1.bf16.msra.mxu0 0
        %2335 = vmatprep.subr.bf16.mxu0 0
        %2336 = vmatpush1.bf16.msra.mxu0 0
        %2337 = vmatprep.subr.bf16.mxu0 0
        %2338 = vmatpush1.bf16.msra.mxu0 0
        %2339 = vmatprep.mubr.bf16.mxu0 0
        %2340 = vmatmul.mubr.bf16.gmra.mrb[0].mxu0 %v2302
        %v2341 = vpop.f32.mrb[0].mxu0
        %v2342 = vadd.f32 0.0, %v2341
        %v2343 = vpop.f32.mrb[0].mxu0
        %v2344 = vpop.f32.mrb[0].mxu0
        %v2345 = vpop.f32.mrb[0].mxu0
        %2346 = vdwg.mxu0
        %v2348 = vsel %vm2205, %v2252, 0
        %v2351 = vsel %vm2257, %v2018, 0
        %2353 = vmatprep.subr.bf16.mxu0 0
        %2354 = vmatpush1.bf16.msra.mxu0 %v2351
        %2355 = vmatprep.subr.bf16.mxu0 0
        %2356 = vmatpush1.bf16.msra.mxu0 0
        %2357 = vmatprep.subr.bf16.mxu0 0
        %2358 = vmatpush1.bf16.msra.mxu0 0
        %2359 = vmatprep.subr.bf16.mxu0 0
        %2360 = vmatpush1.bf16.msra.mxu0 0
        %2361 = vmatprep.subr.bf16.mxu0 0
        %2362 = vmatpush1.bf16.msra.mxu0 0
        %2363 = vmatprep.subr.bf16.mxu0 0
        %2364 = vmatpush1.bf16.msra.mxu0 0
        %2365 = vmatprep.subr.bf16.mxu0 0
        %2366 = vmatpush1.bf16.msra.mxu0 0
        %2367 = vmatprep.subr.bf16.mxu0 0
        %2368 = vmatpush1.bf16.msra.mxu0 0
        %2369 = vmatprep.subr.bf16.mxu0 0
        %2370 = vmatpush1.bf16.msra.mxu0 0
        %2371 = vmatprep.subr.bf16.mxu0 0
        %2372 = vmatpush1.bf16.msra.mxu0 0
        %2373 = vmatprep.subr.bf16.mxu0 0
        %2374 = vmatpush1.bf16.msra.mxu0 0
        %2375 = vmatprep.subr.bf16.mxu0 0
        %2376 = vmatpush1.bf16.msra.mxu0 0
        %2377 = vmatprep.subr.bf16.mxu0 0
        %2378 = vmatpush1.bf16.msra.mxu0 0
        %2379 = vmatprep.subr.bf16.mxu0 0
        %2380 = vmatpush1.bf16.msra.mxu0 0
        %2381 = vmatprep.subr.bf16.mxu0 0
        %2382 = vmatpush1.bf16.msra.mxu0 0
        %2383 = vmatprep.subr.bf16.mxu0 0
        %2384 = vmatpush1.bf16.msra.mxu0 0
        %2385 = vmatprep.mubr.bf16.mxu0 0
        %2386 = vmatmul.mubr.bf16.gmra.mrb[0].mxu0 %v2348
        %v2387 = vpop.f32.mrb[0].mxu0
        %v2388 = vadd.f32 0.0, %v2387
        %v2389 = vpop.f32.mrb[0].mxu0
        %v2390 = vpop.f32.mrb[0].mxu0
        %v2391 = vpop.f32.mrb[0].mxu0
        %2392 = vdwg.mxu0
        %v2394 = vsel %vm2205, %v2253, 0
        %v2397 = vsel %vm2257, %v2019, 0
        %2399 = vmatprep.subr.bf16.mxu0 0
        %2400 = vmatpush1.bf16.msra.mxu0 %v2397
        %2401 = vmatprep.subr.bf16.mxu0 0
        %2402 = vmatpush1.bf16.msra.mxu0 0
        %2403 = vmatprep.subr.bf16.mxu0 0
        %2404 = vmatpush1.bf16.msra.mxu0 0
        %2405 = vmatprep.subr.bf16.mxu0 0
        %2406 = vmatpush1.bf16.msra.mxu0 0
        %2407 = vmatprep.subr.bf16.mxu0 0
        %2408 = vmatpush1.bf16.msra.mxu0 0
        %2409 = vmatprep.subr.bf16.mxu0 0
        %2410 = vmatpush1.bf16.msra.mxu0 0
        %2411 = vmatprep.subr.bf16.mxu0 0
        %2412 = vmatpush1.bf16.msra.mxu0 0
        %2413 = vmatprep.subr.bf16.mxu0 0
        %2414 = vmatpush1.bf16.msra.mxu0 0
        %2415 = vmatprep.subr.bf16.mxu0 0
        %2416 = vmatpush1.bf16.msra.mxu0 0
        %2417 = vmatprep.subr.bf16.mxu0 0
        %2418 = vmatpush1.bf16.msra.mxu0 0
        %2419 = vmatprep.subr.bf16.mxu0 0
        %2420 = vmatpush1.bf16.msra.mxu0 0
        %2421 = vmatprep.subr.bf16.mxu0 0
        %2422 = vmatpush1.bf16.msra.mxu0 0
        %2423 = vmatprep.subr.bf16.mxu0 0
        %2424 = vmatpush1.bf16.msra.mxu0 0
        %2425 = vmatprep.subr.bf16.mxu0 0
        %2426 = vmatpush1.bf16.msra.mxu0 0
        %2427 = vmatprep.subr.bf16.mxu0 0
        %2428 = vmatpush1.bf16.msra.mxu0 0
        %2429 = vmatprep.subr.bf16.mxu0 0
        %2430 = vmatpush1.bf16.msra.mxu0 0
        %2431 = vmatprep.mubr.bf16.mxu0 0
        %2432 = vmatmul.mubr.bf16.gmra.mrb[0].mxu0 %v2394
        %v2433 = vpop.f32.mrb[0].mxu0
        %v2434 = vadd.f32 0.0, %v2433
        %v2435 = vpop.f32.mrb[0].mxu0
        %v2436 = vpop.f32.mrb[0].mxu0
        %v2437 = vpop.f32.mrb[0].mxu0
        %2438 = vdwg.mxu0
        %v2439 = vcombine.low %v2296, %v2388
        %v2440 = vcombine.high %v2296, %v2388
        %v2442 = vunpack.c.l.s4 1983009808
        %v2443 = vunpack.c.0.s8 %v2442
        %v2444 = vlaneseq
        %v2445 = vshrl.u32 %v2444, 7
        %v2446 = vsub.s32 %v2443, %v2445
        %v2447 = vrot.slane %v2439, %v2446
        %v2449 = vunpack.c.l.s4 1983009808
        %v2450 = vunpack.c.0.s8 %v2449
        %v2451 = vlaneseq
        %v2452 = vshrl.u32 %v2451, 7
        %v2453 = vsub.s32 %v2450, %v2452
        %v2454 = vrot.slane %v2440, %v2453
        %v2455 = vcombine.low %v2342, %v2434
        %v2456 = vcombine.high %v2342, %v2434
        %v2458 = vunpack.c.l.s4 1983009808
        %v2459 = vunpack.c.0.s8 %v2458
        %v2460 = vlaneseq
        %v2461 = vshrl.u32 %v2460, 7
        %v2462 = vsub.s32 %v2459, %v2461
        %v2463 = vrot.slane %v2455, %v2462
        %v2465 = vunpack.c.l.s4 1983009808
        %v2466 = vunpack.c.0.s8 %v2465
        %v2467 = vlaneseq
        %v2468 = vshrl.u32 %v2467, 7
        %v2469 = vsub.s32 %v2466, %v2468
        %v2470 = vrot.slane %v2456, %v2469
        %v2471 = vcombine.low %v2447, %v2463
        %v2472 = vcombine.high %v2447, %v2463
        %v2474 = vunpack.c.l.s4 1934713408
        %v2475 = vunpack.c.0.s8 %v2474
        %v2476 = vlaneseq
        %v2477 = vshrl.u32 %v2476, 7
        %v2478 = vsub.s32 %v2475, %v2477
        %v2479 = vrot.slane %v2471, %v2478
        %v2481 = vunpack.c.l.s4 1934713408
        %v2482 = vunpack.c.0.s8 %v2481
        %v2483 = vlaneseq
        %v2484 = vshrl.u32 %v2483, 7
        %v2485 = vsub.s32 %v2482, %v2484
        %v2486 = vrot.slane %v2472, %v2485
        %v2487 = vcombine.low %v2454, %v2470
        %v2488 = vcombine.high %v2454, %v2470
        %v2490 = vunpack.c.l.s4 1934713408
        %v2491 = vunpack.c.0.s8 %v2490
        %v2492 = vlaneseq
        %v2493 = vshrl.u32 %v2492, 7
        %v2494 = vsub.s32 %v2491, %v2493
        %v2495 = vrot.slane %v2487, %v2494
        %v2497 = vunpack.c.l.s4 1934713408
        %v2498 = vunpack.c.0.s8 %v2497
        %v2499 = vlaneseq
        %v2500 = vshrl.u32 %v2499, 7
        %v2501 = vsub.s32 %v2498, %v2500
        %v2502 = vrot.slane %v2488, %v2501
        %v2503 = vcombine.high %v2479, 0.0
        %v2504 = vcombine.high %v2486, 0.0
        %v2505 = vcombine.high %v2495, 0.0
        %v2506 = vcombine.high %v2502, 0.0
        %v2507 = vcombine.low %v2479, %v2486
        %v2509 = vunpack.c.l.s4 1983009808
        %v2510 = vunpack.c.0.s8 %v2509
        %v2511 = vlaneseq
        %v2512 = vshrl.u32 %v2511, 7
        %v2513 = vsub.s32 %v2510, %v2512
        %v2514 = vrot.slane %v2507, %v2513
        %v2515 = vcombine.low %v2503, %v2504
        %v2517 = vunpack.c.l.s4 1983009808
        %v2518 = vunpack.c.0.s8 %v2517
        %v2519 = vlaneseq
        %v2520 = vshrl.u32 %v2519, 7
        %v2521 = vsub.s32 %v2518, %v2520
        %v2522 = vrot.slane %v2515, %v2521
        %v2523 = vcombine.low %v2495, %v2502
        %v2525 = vunpack.c.l.s4 1983009808
        %v2526 = vunpack.c.0.s8 %v2525
        %v2527 = vlaneseq
        %v2528 = vshrl.u32 %v2527, 7
        %v2529 = vsub.s32 %v2526, %v2528
        %v2530 = vrot.slane %v2523, %v2529
        %v2531 = vcombine.low %v2505, %v2506
        %v2533 = vunpack.c.l.s4 1983009808
        %v2534 = vunpack.c.0.s8 %v2533
        %v2535 = vlaneseq
        %v2536 = vshrl.u32 %v2535, 7
        %v2537 = vsub.s32 %v2534, %v2536
        %v2538 = vrot.slane %v2531, %v2537
        %v2539 = vcombine.low %v2514, %v2522
        %v2540 = vcombine.high %v2514, %v2522
        %v2542 = vunpack.c.l.s4 1934713408
        %v2543 = vunpack.c.0.s8 %v2542
        %v2544 = vlaneseq
        %v2545 = vshrl.u32 %v2544, 7
        %v2546 = vsub.s32 %v2543, %v2545
        %v2547 = vrot.slane %v2539, %v2546
        %v2549 = vunpack.c.l.s4 1934713408
        %v2550 = vunpack.c.0.s8 %v2549
        %v2551 = vlaneseq
        %v2552 = vshrl.u32 %v2551, 7
        %v2553 = vsub.s32 %v2550, %v2552
        %v2554 = vrot.slane %v2540, %v2553
        %v2555 = vcombine.low %v2530, %v2538
        %v2556 = vcombine.high %v2530, %v2538
        %v2558 = vunpack.c.l.s4 1934713408
        %v2559 = vunpack.c.0.s8 %v2558
        %v2560 = vlaneseq
        %v2561 = vshrl.u32 %v2560, 7
        %v2562 = vsub.s32 %v2559, %v2561
        %v2563 = vrot.slane %v2555, %v2562
        %v2565 = vunpack.c.l.s4 1934713408
        %v2566 = vunpack.c.0.s8 %v2565
        %v2567 = vlaneseq
        %v2568 = vshrl.u32 %v2567, 7
        %v2569 = vsub.s32 %v2566, %v2568
        %v2570 = vrot.slane %v2556, %v2569
        %v2571 = vcombine.low %v2547, %v2563
        %v2572 = vcombine.high %v2547, %v2563
        %v2573 = vcombine.low %v2554, %v2570
        %v2574 = vcombine.high %v2554, %v2570
        %2576 = vrot.lane.b32.xlu0 %v2572, 32
        %v2577 = vpop.permute.xlu0 %2576
        %2580 = vrot.lane.b32.xlu0 %v2573, 64
        %v2581 = vpop.permute.xlu0 %2580
        %2584 = vrot.lane.b32.xlu0 %v2574, 96
        %v2585 = vpop.permute.xlu0 %2584
        %v2587 = vsel %vm2020, %v2571, %v2577
        %vm2588 = vcmask 523264
        %v2589 = vsel %vm2588, %v2587, %v2581
        %vm2590 = vcmask 785408
        %v2591 = vsel %vm2590, %v2589, %v2585
        %v2592 = vpack.c.bf16 %v2591, %v2591
        %v2593 = vld [vmem:[%s23] sm:$0xf]
        %v2594 = vld [vmem:[%s23 + $0x4] sm:$0xf]
        %v2595 = vld [vmem:[%s23 + $0x8] sm:$0xf]
        %v2596 = vld [vmem:[%s23 + $0xc] sm:$0xf]
        %v2597 = vld [vmem:[%s23 + $0x10] sm:$0xf]
        %v2598 = vld [vmem:[%s23 + $0x14] sm:$0xf]
        %v2599 = vld [vmem:[%s23 + $0x18] sm:$0xf]
        %v2600 = vld [vmem:[%s23 + $0x1c] sm:$0xf]
        %v2601 = vld [vmem:[%s23 + $0x20] sm:$0xf]
        %v2602 = vld [vmem:[%s23 + $0x24] sm:$0xf]
        %v2603 = vld [vmem:[%s23 + $0x28] sm:$0xf]
        %v2604 = vld [vmem:[%s23 + $0x2c] sm:$0xf]
        %v2605 = vld [vmem:[%s23 + $0x30] sm:$0xf]
        %v2606 = vld [vmem:[%s23 + $0x34] sm:$0xf]
        %v2607 = vld [vmem:[%s23 + $0x38] sm:$0xf]
        %v2608 = vld [vmem:[%s23 + $0x3c] sm:$0xf]
        %v2625 = vunpack.c.l.b16 %v2593
        %v2626 = vunpack.c.l.b16 %v2594
        %v2627 = vunpack.c.l.b16 %v2595
        %v2628 = vunpack.c.l.b16 %v2596
        %v2629 = vunpack.c.l.b16 %v2597
        %v2630 = vunpack.c.l.b16 %v2598
        %v2631 = vunpack.c.l.b16 %v2599
        %v2632 = vunpack.c.l.b16 %v2600
        %v2633 = vunpack.c.l.b16 %v2601
        %v2634 = vunpack.c.l.b16 %v2602
        %v2635 = vunpack.c.l.b16 %v2603
        %v2636 = vunpack.c.l.b16 %v2604
        %v2637 = vunpack.c.l.b16 %v2605
        %v2638 = vunpack.c.l.b16 %v2606
        %v2639 = vunpack.c.l.b16 %v2607
        %v2640 = vunpack.c.l.b16 %v2608
        %v2641 = vpack.c.b16 %v2626, %v2625
        %v2642 = vpack.c.b16 %v2628, %v2627
        %v2643 = vpack.c.b16 %v2630, %v2629
        %v2644 = vpack.c.b16 %v2632, %v2631
        %v2645 = vpack.c.b16 %v2634, %v2633
        %v2646 = vpack.c.b16 %v2636, %v2635
        %v2647 = vpack.c.b16 %v2638, %v2637
        %v2648 = vpack.c.b16 %v2640, %v2639
        %2657 = vmatprep.subr.bf16.mxu0 0
        %2658 = vmatpush1.bf16.msra.mxu0 %v2641
        %2659 = vmatprep.subr.bf16.mxu0 0
        %2660 = vmatpush1.bf16.msra.mxu0 %v2642
        %2661 = vmatprep.subr.bf16.mxu0 0
        %2662 = vmatpush1.bf16.msra.mxu0 %v2643
        %2663 = vmatprep.subr.bf16.mxu0 0
        %2664 = vmatpush1.bf16.msra.mxu0 %v2644
        %2665 = vmatprep.subr.bf16.mxu0 0
        %2666 = vmatpush1.bf16.msra.mxu0 %v2645
        %2667 = vmatprep.subr.bf16.mxu0 0
        %2668 = vmatpush1.bf16.msra.mxu0 %v2646
        %2669 = vmatprep.subr.bf16.mxu0 0
        %2670 = vmatpush1.bf16.msra.mxu0 %v2647
        %2671 = vmatprep.subr.bf16.mxu0 0
        %2672 = vmatpush1.bf16.msra.mxu0 %v2648
        %2673 = vmatprep.subr.bf16.mxu0 0
        %2674 = vmatpush1.bf16.msra.mxu0 0
        %2675 = vmatprep.subr.bf16.mxu0 0
        %2676 = vmatpush1.bf16.msra.mxu0 0
        %2677 = vmatprep.subr.bf16.mxu0 0
        %2678 = vmatpush1.bf16.msra.mxu0 0
        %2679 = vmatprep.subr.bf16.mxu0 0
        %2680 = vmatpush1.bf16.msra.mxu0 0
        %2681 = vmatprep.subr.bf16.mxu0 0
        %2682 = vmatpush1.bf16.msra.mxu0 0
        %2683 = vmatprep.subr.bf16.mxu0 0
        %2684 = vmatpush1.bf16.msra.mxu0 0
        %2685 = vmatprep.subr.bf16.mxu0 0
        %2686 = vmatpush1.bf16.msra.mxu0 0
        %2687 = vmatprep.subr.bf16.mxu0 0
        %2688 = vmatpush1.bf16.msra.mxu0 0
        %2689 = vmatprep.mubr.bf16.mxu0 0
        %2690 = vmatmul.mubr.bf16.gmra.mrb[0].mxu0 %v2592
        %v2691 = vpop.f32.mrb[0].mxu0
        %v2692 = vadd.f32 0.0, %v2691
        %v2693 = vpop.f32.mrb[0].mxu0
        %v2694 = vpop.f32.mrb[0].mxu0
        %v2695 = vpop.f32.mrb[0].mxu0
        %2696 = vdwg.mxu0
        %v2697 = vadd.f32 %v1283, %v2692
        %v2698 = vld [vmem:[%s25] sm:$0x1]
        %v2700 = vlaneseq
        %v2701 = vshrl.u32 %v2700, 7
        %v2702 = vsub.s32 0, %v2701
        %v2703 = vrot.slane %v2698, %v2702
        %v2705 = vadd.f32 %v2697, %v2703
        %2706 = vadd.xlane.f32.xlu0 %v2705
        %v2707 = vpop.xlane.xlu0 %2706
        %v2708 = vmul.f32 %v2707, %v915
        %v2709 = vsub.f32 %v2705, %v2708
        %v2710 = vmul.f32 %v2709, %v2709
        %2711 = vadd.xlane.f32.xlu0 %v2710
        %v2712 = vpop.xlane.xlu0 %2711
        %v2713 = vmul.f32 %v2712, %v915
        %v2714 = vadd.f32 %v2713, 1e-05
        %v2715 = vrsqrt.pop %v2714
        %v2716 = vmul.f32 %v2709, %v2715
        %v2717 = vld [vmem:[%s27] sm:$0x1]
        %v2719 = vlaneseq
        %v2720 = vshrl.u32 %v2719, 7
        %v2721 = vsub.s32 0, %v2720
        %v2722 = vrot.slane %v2717, %v2721
        %v2724 = vmul.f32 %v2716, %v2722
        %v2725 = vld [vmem:[%s29] sm:$0x1]
        %v2727 = vlaneseq
        %v2728 = vshrl.u32 %v2727, 7
        %v2729 = vsub.s32 0, %v2728
        %v2730 = vrot.slane %v2725, %v2729
        %v2732 = vadd.f32 %v2724, %v2730
        %v2733 = vpack.c.bf16 %v2732, %v2732
        %v2734 = vld [vmem:[%s31] sm:$0xff]
        %v2735 = vld [vmem:[%s31 + $0x8] sm:$0xff]
        %v2736 = vld [vmem:[%s31 + $0x10] sm:$0xff]
        %v2737 = vld [vmem:[%s31 + $0x18] sm:$0xff]
        %v2738 = vld [vmem:[%s31 + $0x20] sm:$0xff]
        %v2739 = vld [vmem:[%s31 + $0x28] sm:$0xff]
        %v2740 = vld [vmem:[%s31 + $0x30] sm:$0xff]
        %v2741 = vld [vmem:[%s31 + $0x38] sm:$0xff]
        %v2742 = vld [vmem:[%s31 + $0x40] sm:$0xff]
        %v2743 = vld [vmem:[%s31 + $0x48] sm:$0xff]
        %v2744 = vld [vmem:[%s31 + $0x50] sm:$0xff]
        %v2745 = vld [vmem:[%s31 + $0x58] sm:$0xff]
        %v2746 = vld [vmem:[%s31 + $0x60] sm:$0xff]
        %v2747 = vld [vmem:[%s31 + $0x68] sm:$0xff]
        %v2748 = vld [vmem:[%s31 + $0x70] sm:$0xff]
        %v2749 = vld [vmem:[%s31 + $0x78] sm:$0xff]
        %v2750 = vld [vmem:[%s33] sm:$0x3]
        %v2752 = vlaneseq
        %v2753 = vshrl.u32 %v2752, 7
        %v2754 = vsub.s32 0, %v2753
        %v2755 = vrot.slane %v2750, %v2754
        %v2756 = vlaneseq
        %v2757 = vshrl.u32 %v2756, 7
        %v2758 = vsub.s32 1, %v2757
        %v2759 = vrot.slane %v2750, %v2758
        %v2778 = vunpack.c.l.b16 %v2734
        %v2779 = vunpack.c.h.b16 %v2734
        %v2780 = vunpack.c.l.b16 %v2735
        %v2781 = vunpack.c.h.b16 %v2735
        %v2782 = vunpack.c.l.b16 %v2736
        %v2783 = vunpack.c.h.b16 %v2736
        %v2784 = vunpack.c.l.b16 %v2737
        %v2785 = vunpack.c.h.b16 %v2737
        %v2786 = vunpack.c.l.b16 %v2738
        %v2787 = vunpack.c.h.b16 %v2738
        %v2788 = vunpack.c.l.b16 %v2739
        %v2789 = vunpack.c.h.b16 %v2739
        %v2790 = vunpack.c.l.b16 %v2740
        %v2791 = vunpack.c.h.b16 %v2740
        %v2792 = vunpack.c.l.b16 %v2741
        %v2793 = vunpack.c.h.b16 %v2741
        %v2794 = vunpack.c.l.b16 %v2742
        %v2795 = vunpack.c.h.b16 %v2742
        %v2796 = vunpack.c.l.b16 %v2743
        %v2797 = vunpack.c.h.b16 %v2743
        %v2798 = vunpack.c.l.b16 %v2744
        %v2799 = vunpack.c.h.b16 %v2744
        %v2800 = vunpack.c.l.b16 %v2745
        %v2801 = vunpack.c.h.b16 %v2745
        %v2802 = vunpack.c.l.b16 %v2746
        %v2803 = vunpack.c.h.b16 %v2746
        %v2804 = vunpack.c.l.b16 %v2747
        %v2805 = vunpack.c.h.b16 %v2747
        %v2806 = vunpack.c.l.b16 %v2748
        %v2807 = vunpack.c.h.b16 %v2748
        %v2808 = vunpack.c.l.b16 %v2749
        %v2809 = vunpack.c.h.b16 %v2749
        %v2810 = vpack.c.b16 %v2780, %v2778
        %v2811 = vpack.c.b16 %v2781, %v2779
        %v2812 = vpack.c.b16 %v2784, %v2782
        %v2813 = vpack.c.b16 %v2785, %v2783
        %v2814 = vpack.c.b16 %v2788, %v2786
        %v2815 = vpack.c.b16 %v2789, %v2787
        %v2816 = vpack.c.b16 %v2792, %v2790
        %v2817 = vpack.c.b16 %v2793, %v2791
        %v2818 = vpack.c.b16 %v2796, %v2794
        %v2819 = vpack.c.b16 %v2797, %v2795
        %v2820 = vpack.c.b16 %v2800, %v2798
        %v2821 = vpack.c.b16 %v2801, %v2799
        %v2822 = vpack.c.b16 %v2804, %v2802
        %v2823 = vpack.c.b16 %v2805, %v2803
        %v2824 = vpack.c.b16 %v2808, %v2806
        %v2825 = vpack.c.b16 %v2809, %v2807
        %2842 = vmatprep.subr.bf16.mxu0 %v2811
        %2843 = vmatpush1.bf16.msra.mxu0 %v2810
        %2844 = vmatprep.subr.bf16.mxu0 %v2813
        %2845 = vmatpush1.bf16.msra.mxu0 %v2812
        %2846 = vmatprep.subr.bf16.mxu0 %v2815
        %2847 = vmatpush1.bf16.msra.mxu0 %v2814
        %2848 = vmatprep.subr.bf16.mxu0 %v2817
        %2849 = vmatpush1.bf16.msra.mxu0 %v2816
        %2850 = vmatprep.subr.bf16.mxu0 %v2819
        %2851 = vmatpush1.bf16.msra.mxu0 %v2818
        %2852 = vmatprep.subr.bf16.mxu0 %v2821
        %2853 = vmatpush1.bf16.msra.mxu0 %v2820
        %2854 = vmatprep.subr.bf16.mxu0 %v2823
        %2855 = vmatpush1.bf16.msra.mxu0 %v2822
        %2856 = vmatprep.subr.bf16.mxu0 %v2825
        %2857 = vmatpush1.bf16.msra.mxu0 %v2824
        %2858 = vmatprep.subr.bf16.mxu0 0
        %2859 = vmatpush1.bf16.msra.mxu0 0
        %2860 = vmatprep.subr.bf16.mxu0 0
        %2861 = vmatpush1.bf16.msra.mxu0 0
        %2862 = vmatprep.subr.bf16.mxu0 0
        %2863 = vmatpush1.bf16.msra.mxu0 0
        %2864 = vmatprep.subr.bf16.mxu0 0
        %2865 = vmatpush1.bf16.msra.mxu0 0
        %2866 = vmatprep.subr.bf16.mxu0 0
        %2867 = vmatpush1.bf16.msra.mxu0 0
        %2868 = vmatprep.subr.bf16.mxu0 0
        %2869 = vmatpush1.bf16.msra.mxu0 0
        %2870 = vmatprep.subr.bf16.mxu0 0
        %2871 = vmatpush1.bf16.msra.mxu0 0
        %2872 = vmatprep.subr.bf16.mxu0 0
        %2873 = vmatpush1.bf16.msra.mxu0 0
        %2874 = vmatprep.mubr.bf16.mxu0 0
        %2875 = vmatmul.mubr.bf16.gmra.mrb[0].mxu0 %v2733
        %v2876 = vpop.f32.mrb[0].mxu0
        %v2877 = vadd.f32 %v2755, %v2876
        %v2878 = vpop.f32.mrb[0].mxu0
        %v2879 = vadd.f32 %v2759, %v2878
        %v2880 = vpop.f32.mrb[0].mxu0
        %v2881 = vpop.f32.mrb[0].mxu0
        %2882 = vdwg.mxu0
        %v2883 = vxor.u32 %v2879, 2147483648
        %v2884 = vmul.f32 %v2883, 1.442695
        %v2885 = vpow.pop %v2884
        %v2886 = vadd.f32 %v2885, 1.0
        %v2887 = vrcp.pop %v2886
        %v2888 = vmul.f32 1.0, %v2887
        %v2889 = vmul.f32 %v2877, %v2888
        %v2890 = vld [vmem:[%s35] sm:$0x7f]
        %v2891 = vlaneseq
        %v2892 = vshrl.u32 %v2891, 7
        %v2893 = vlaneseq
        %v2894 = vshrl.u32 %v2893, 7
        %v2895 = vsub.s32 3, %v2894
        %v2896 = vrot.slane %v2890, %v2895
        %v2897 = vmul.f32 %v2889, %v2896
        %v2898 = vrot.slane %v2889, 5
        %v2899 = vadd.s32 %v2892, 4294967293
        %vm2900 = vcmp.ge.s32.totalorder %v2899, 0
        %vm2901 = vcmp.lt.s32.totalorder %v2899, 8
        %vm2902 = vmand %vm2900, %vm2901
        %v2903 = vsel %vm2902, 1, 0
        %vm2904 = vcmp.eq.s32.totalorder %v2903, 1
        %v2905 = vsel %vm2904, %v2898, 0.0
        %v2906 = vlaneseq
        %v2907 = vshrl.u32 %v2906, 7
        %v2908 = vsub.s32 0, %v2907
        %v2909 = vrot.slane %v2890, %v2908
        %v2910 = vmul.f32 %v2905, %v2909
        %v2911 = vadd.f32 %v2897, %v2910
        %v2912 = vrot.slane %v2889, 6
        %v2913 = vadd.s32 %v2892, 4294967294
        %vm2914 = vcmp.ge.s32.totalorder %v2913, 0
        %vm2915 = vcmp.lt.s32.totalorder %v2913, 8
        %vm2916 = vmand %vm2914, %vm2915
        %v2917 = vsel %vm2916, 1, 0
        %vm2918 = vcmp.eq.s32.totalorder %v2917, 1
        %v2919 = vsel %vm2918, %v2912, 0.0
        %v2920 = vlaneseq
        %v2921 = vshrl.u32 %v2920, 7
        %v2922 = vsub.s32 1, %v2921
        %v2923 = vrot.slane %v2890, %v2922
        %v2924 = vmul.f32 %v2919, %v2923
        %v2925 = vadd.f32 %v2911, %v2924
        %v2926 = vrot.slane %v2889, 7
        %v2927 = vadd.s32 %v2892, 4294967295
        %vm2928 = vcmp.ge.s32.totalorder %v2927, 0
        %vm2929 = vcmp.lt.s32.totalorder %v2927, 8
        %vm2930 = vmand %vm2928, %vm2929
        %v2931 = vsel %vm2930, 1, 0
        %vm2932 = vcmp.eq.s32.totalorder %v2931, 1
        %v2933 = vsel %vm2932, %v2926, 0.0
        %v2934 = vlaneseq
        %v2935 = vshrl.u32 %v2934, 7
        %v2936 = vsub.s32 2, %v2935
        %v2937 = vrot.slane %v2890, %v2936
        %v2938 = vmul.f32 %v2933, %v2937
        %v2939 = vadd.f32 %v2925, %v2938
        %v2940 = vrot.slane %v2889, 1
        %v2941 = vadd.s32 %v2892, 1
        %vm2942 = vcmp.ge.s32.totalorder %v2941, 0
        %vm2943 = vcmp.lt.s32.totalorder %v2941, 8
        %vm2944 = vmand %vm2942, %vm2943
        %v2945 = vsel %vm2944, 1, 0
        %vm2946 = vcmp.eq.s32.totalorder %v2945, 1
        %v2947 = vsel %vm2946, %v2940, 0.0
        %v2948 = vlaneseq
        %v2949 = vshrl.u32 %v2948, 7
        %v2950 = vsub.s32 4, %v2949
        %v2951 = vrot.slane %v2890, %v2950
        %v2952 = vmul.f32 %v2947, %v2951
        %v2953 = vadd.f32 %v2939, %v2952
        %v2954 = vrot.slane %v2889, 2
        %v2955 = vadd.s32 %v2892, 2
        %vm2956 = vcmp.ge.s32.totalorder %v2955, 0
        %vm2957 = vcmp.lt.s32.totalorder %v2955, 8
        %vm2958 = vmand %vm2956, %vm2957
        %v2959 = vsel %vm2958, 1, 0
        %vm2960 = vcmp.eq.s32.totalorder %v2959, 1
        %v2961 = vsel %vm2960, %v2954, 0.0
        %v2962 = vlaneseq
        %v2963 = vshrl.u32 %v2962, 7
        %v2964 = vsub.s32 5, %v2963
        %v2965 = vrot.slane %v2890, %v2964
        %v2966 = vmul.f32 %v2961, %v2965
        %v2967 = vadd.f32 %v2953, %v2966
        %v2968 = vrot.slane %v2889, 3
        %v2969 = vadd.s32 %v2892, 3
        %vm2970 = vcmp.ge.s32.totalorder %v2969, 0
        %vm2971 = vcmp.lt.s32.totalorder %v2969, 8
        %vm2972 = vmand %vm2970, %vm2971
        %v2973 = vsel %vm2972, 1, 0
        %vm2974 = vcmp.eq.s32.totalorder %v2973, 1
        %v2975 = vsel %vm2974, %v2968, 0.0
        %v2976 = vlaneseq
        %v2977 = vshrl.u32 %v2976, 7
        %v2978 = vsub.s32 6, %v2977
        %v2979 = vrot.slane %v2890, %v2978
        %v2980 = vmul.f32 %v2975, %v2979
        %v2981 = vadd.f32 %v2967, %v2980
        %v2982 = vld [vmem:[%s37] sm:$0x1]
        %v2984 = vlaneseq
        %v2985 = vshrl.u32 %v2984, 7
        %v2986 = vsub.s32 0, %v2985
        %v2987 = vrot.slane %v2982, %v2986
        %v2989 = vadd.f32 %v2981, %v2987
        %v2990 = vmul.f32 %v2989, 0.999995
        %v2991 = vxor.u32 %v2990, 2147483648
        %v2992 = vmul.f32 %v2991, 1.442695
        %v2993 = vpow.pop %v2992
        %v2994 = vadd.f32 %v2993, 1.0
        %v2995 = vrcp.pop %v2994
        %v2996 = vmul.f32 1.0, %v2995
        %v2997 = vmul.f32 %v2990, %v2996
        %v2998 = vpack.c.bf16 %v2997, %v2997
        %v2999 = vld [vmem:[%s39] sm:$0xf]
        %v3000 = vld [vmem:[%s39 + $0x4] sm:$0xf]
        %v3001 = vld [vmem:[%s39 + $0x8] sm:$0xf]
        %v3002 = vld [vmem:[%s39 + $0xc] sm:$0xf]
        %v3003 = vld [vmem:[%s39 + $0x10] sm:$0xf]
        %v3004 = vld [vmem:[%s39 + $0x14] sm:$0xf]
        %v3005 = vld [vmem:[%s39 + $0x18] sm:$0xf]
        %v3006 = vld [vmem:[%s39 + $0x1c] sm:$0xf]
        %v3007 = vld [vmem:[%s39 + $0x20] sm:$0xf]
        %v3008 = vld [vmem:[%s39 + $0x24] sm:$0xf]
        %v3009 = vld [vmem:[%s39 + $0x28] sm:$0xf]
        %v3010 = vld [vmem:[%s39 + $0x2c] sm:$0xf]
        %v3011 = vld [vmem:[%s39 + $0x30] sm:$0xf]
        %v3012 = vld [vmem:[%s39 + $0x34] sm:$0xf]
        %v3013 = vld [vmem:[%s39 + $0x38] sm:$0xf]
        %v3014 = vld [vmem:[%s39 + $0x3c] sm:$0xf]
        %v3031 = vunpack.c.l.b16 %v2999
        %v3032 = vunpack.c.l.b16 %v3000
        %v3033 = vunpack.c.l.b16 %v3001
        %v3034 = vunpack.c.l.b16 %v3002
        %v3035 = vunpack.c.l.b16 %v3003
        %v3036 = vunpack.c.l.b16 %v3004
        %v3037 = vunpack.c.l.b16 %v3005
        %v3038 = vunpack.c.l.b16 %v3006
        %v3039 = vunpack.c.l.b16 %v3007
        %v3040 = vunpack.c.l.b16 %v3008
        %v3041 = vunpack.c.l.b16 %v3009
        %v3042 = vunpack.c.l.b16 %v3010
        %v3043 = vunpack.c.l.b16 %v3011
        %v3044 = vunpack.c.l.b16 %v3012
        %v3045 = vunpack.c.l.b16 %v3013
        %v3046 = vunpack.c.l.b16 %v3014
        %v3047 = vpack.c.b16 %v3032, %v3031
        %v3048 = vpack.c.b16 %v3034, %v3033
        %v3049 = vpack.c.b16 %v3036, %v3035
        %v3050 = vpack.c.b16 %v3038, %v3037
        %v3051 = vpack.c.b16 %v3040, %v3039
        %v3052 = vpack.c.b16 %v3042, %v3041
        %v3053 = vpack.c.b16 %v3044, %v3043
        %v3054 = vpack.c.b16 %v3046, %v3045
        %3063 = vmatprep.subr.bf16.mxu0 0
        %3064 = vmatpush1.bf16.msra.mxu0 %v3047
        %3065 = vmatprep.subr.bf16.mxu0 0
        %3066 = vmatpush1.bf16.msra.mxu0 %v3048
        %3067 = vmatprep.subr.bf16.mxu0 0
        %3068 = vmatpush1.bf16.msra.mxu0 %v3049
        %3069 = vmatprep.subr.bf16.mxu0 0
        %3070 = vmatpush1.bf16.msra.mxu0 %v3050
        %3071 = vmatprep.subr.bf16.mxu0 0
        %3072 = vmatpush1.bf16.msra.mxu0 %v3051
        %3073 = vmatprep.subr.bf16.mxu0 0
        %3074 = vmatpush1.bf16.msra.mxu0 %v3052
        %3075 = vmatprep.subr.bf16.mxu0 0
        %3076 = vmatpush1.bf16.msra.mxu0 %v3053
        %3077 = vmatprep.subr.bf16.mxu0 0
        %3078 = vmatpush1.bf16.msra.mxu0 %v3054
        %3079 = vmatprep.subr.bf16.mxu0 0
        %3080 = vmatpush1.bf16.msra.mxu0 0
        %3081 = vmatprep.subr.bf16.mxu0 0
        %3082 = vmatpush1.bf16.msra.mxu0 0
        %3083 = vmatprep.subr.bf16.mxu0 0
        %3084 = vmatpush1.bf16.msra.mxu0 0
        %3085 = vmatprep.subr.bf16.mxu0 0
        %3086 = vmatpush1.bf16.msra.mxu0 0
        %3087 = vmatprep.subr.bf16.mxu0 0
        %3088 = vmatpush1.bf16.msra.mxu0 0
        %3089 = vmatprep.subr.bf16.mxu0 0
        %3090 = vmatpush1.bf16.msra.mxu0 0
        %3091 = vmatprep.subr.bf16.mxu0 0
        %3092 = vmatpush1.bf16.msra.mxu0 0
        %3093 = vmatprep.subr.bf16.mxu0 0
        %3094 = vmatpush1.bf16.msra.mxu0 0
        %3095 = vmatprep.mubr.bf16.mxu0 0
        %3096 = vmatmul.mubr.bf16.gmra.mrb[0].mxu0 %v2998
        %v3097 = vpop.f32.mrb[0].mxu0
        %v3098 = vadd.f32 0.0, %v3097
        %v3099 = vpop.f32.mrb[0].mxu0
        %v3100 = vpop.f32.mrb[0].mxu0
        %v3101 = vpop.f32.mrb[0].mxu0
        %3102 = vdwg.mxu0
        %v3103 = vadd.f32 %v2705, %v3098
        %v3104 = vld [vmem:[%s41] sm:$0x1]
        %v3106 = vlaneseq
        %v3107 = vshrl.u32 %v3106, 7
        %v3108 = vsub.s32 0, %v3107
        %v3109 = vrot.slane %v3104, %v3108
        %v3111 = vadd.f32 %v3103, %v3109
        %3112 = vadd.xlane.f32.xlu0 %v3111
        %v3113 = vpop.xlane.xlu0 %3112
        %v3114 = vmul.f32 %v3113, %v915
        %v3115 = vsub.f32 %v3111, %v3114
        %v3116 = vmul.f32 %v3115, %v3115
        %3117 = vadd.xlane.f32.xlu0 %v3116
        %v3118 = vpop.xlane.xlu0 %3117
        %v3119 = vmul.f32 %v3118, %v915
        %v3120 = vadd.f32 %v3119, 1e-05
        %v3121 = vrsqrt.pop %v3120
        %v3122 = vmul.f32 %v3115, %v3121
        %v3123 = vld [vmem:[%s43] sm:$0x1]
        %v3125 = vlaneseq
        %v3126 = vshrl.u32 %v3125, 7
        %v3127 = vsub.s32 0, %v3126
        %v3128 = vrot.slane %v3123, %v3127
        %v3130 = vmul.f32 %v3122, %v3128
        %v3131 = vld [vmem:[%s45] sm:$0x1]
        %v3133 = vlaneseq
        %v3134 = vshrl.u32 %v3133, 7
        %v3135 = vsub.s32 0, %v3134
        %v3136 = vrot.slane %v3131, %v3135
        %v3138 = vadd.f32 %v3130, %v3136
        %v3139 = vpack.c.bf16 %v3138, %v3138
        %v3140 = vld [vmem:[%s47] sm:$0xff]
        %v3141 = vld [vmem:[%s47 + $0x8] sm:$0xff]
        %v3142 = vld [vmem:[%s47 + $0x10] sm:$0xff]
        %v3143 = vld [vmem:[%s47 + $0x18] sm:$0xff]
        %v3144 = vld [vmem:[%s47 + $0x20] sm:$0xff]
        %v3145 = vld [vmem:[%s47 + $0x28] sm:$0xff]
        %v3146 = vld [vmem:[%s47 + $0x30] sm:$0xff]
        %v3147 = vld [vmem:[%s47 + $0x38] sm:$0xff]
        %v3148 = vld [vmem:[%s47 + $0x40] sm:$0xff]
        %v3149 = vld [vmem:[%s47 + $0x48] sm:$0xff]
        %v3150 = vld [vmem:[%s47 + $0x50] sm:$0xff]
        %v3151 = vld [vmem:[%s47 + $0x58] sm:$0xff]
        %v3152 = vld [vmem:[%s47 + $0x60] sm:$0xff]
        %v3153 = vld [vmem:[%s47 + $0x68] sm:$0xff]
        %v3154 = vld [vmem:[%s47 + $0x70] sm:$0xff]
        %v3155 = vld [vmem:[%s47 + $0x78] sm:$0xff]
        %v3156 = vld [vmem:[%s49] sm:$0x3]
        %v3158 = vlaneseq
        %v3159 = vshrl.u32 %v3158, 7
        %v3160 = vsub.s32 0, %v3159
        %v3161 = vrot.slane %v3156, %v3160
        %v3162 = vlaneseq
        %v3163 = vshrl.u32 %v3162, 7
        %v3164 = vsub.s32 1, %v3163
        %v3165 = vrot.slane %v3156, %v3164
        %v3184 = vunpack.c.l.b16 %v3140
        %v3185 = vunpack.c.h.b16 %v3140
        %v3186 = vunpack.c.l.b16 %v3141
        %v3187 = vunpack.c.h.b16 %v3141
        %v3188 = vunpack.c.l.b16 %v3142
        %v3189 = vunpack.c.h.b16 %v3142
        %v3190 = vunpack.c.l.b16 %v3143
        %v3191 = vunpack.c.h.b16 %v3143
        %v3192 = vunpack.c.l.b16 %v3144
        %v3193 = vunpack.c.h.b16 %v3144
        %v3194 = vunpack.c.l.b16 %v3145
        %v3195 = vunpack.c.h.b16 %v3145
        %v3196 = vunpack.c.l.b16 %v3146
        %v3197 = vunpack.c.h.b16 %v3146
        %v3198 = vunpack.c.l.b16 %v3147
        %v3199 = vunpack.c.h.b16 %v3147
        %v3200 = vunpack.c.l.b16 %v3148
        %v3201 = vunpack.c.h.b16 %v3148
        %v3202 = vunpack.c.l.b16 %v3149
        %v3203 = vunpack.c.h.b16 %v3149
        %v3204 = vunpack.c.l.b16 %v3150
        %v3205 = vunpack.c.h.b16 %v3150
        %v3206 = vunpack.c.l.b16 %v3151
        %v3207 = vunpack.c.h.b16 %v3151
        %v3208 = vunpack.c.l.b16 %v3152
        %v3209 = vunpack.c.h.b16 %v3152
        %v3210 = vunpack.c.l.b16 %v3153
        %v3211 = vunpack.c.h.b16 %v3153
        %v3212 = vunpack.c.l.b16 %v3154
        %v3213 = vunpack.c.h.b16 %v3154
        %v3214 = vunpack.c.l.b16 %v3155
        %v3215 = vunpack.c.h.b16 %v3155
        %v3216 = vpack.c.b16 %v3186, %v3184
        %v3217 = vpack.c.b16 %v3187, %v3185
        %v3218 = vpack.c.b16 %v3190, %v3188
        %v3219 = vpack.c.b16 %v3191, %v3189
        %v3220 = vpack.c.b16 %v3194, %v3192
        %v3221 = vpack.c.b16 %v3195, %v3193
        %v3222 = vpack.c.b16 %v3198, %v3196
        %v3223 = vpack.c.b16 %v3199, %v3197
        %v3224 = vpack.c.b16 %v3202, %v3200
        %v3225 = vpack.c.b16 %v3203, %v3201
        %v3226 = vpack.c.b16 %v3206, %v3204
        %v3227 = vpack.c.b16 %v3207, %v3205
        %v3228 = vpack.c.b16 %v3210, %v3208
        %v3229 = vpack.c.b16 %v3211, %v3209
        %v3230 = vpack.c.b16 %v3214, %v3212
        %v3231 = vpack.c.b16 %v3215, %v3213
        %3248 = vmatprep.subr.bf16.mxu0 %v3217
        %3249 = vmatpush1.bf16.msra.mxu0 %v3216
        %3250 = vmatprep.subr.bf16.mxu0 %v3219
        %3251 = vmatpush1.bf16.msra.mxu0 %v3218
        %3252 = vmatprep.subr.bf16.mxu0 %v3221
        %3253 = vmatpush1.bf16.msra.mxu0 %v3220
        %3254 = vmatprep.subr.bf16.mxu0 %v3223
        %3255 = vmatpush1.bf16.msra.mxu0 %v3222
        %3256 = vmatprep.subr.bf16.mxu0 %v3225
        %3257 = vmatpush1.bf16.msra.mxu0 %v3224
        %3258 = vmatprep.subr.bf16.mxu0 %v3227
        %3259 = vmatpush1.bf16.msra.mxu0 %v3226
        %3260 = vmatprep.subr.bf16.mxu0 %v3229
        %3261 = vmatpush1.bf16.msra.mxu0 %v3228
        %3262 = vmatprep.subr.bf16.mxu0 %v3231
        %3263 = vmatpush1.bf16.msra.mxu0 %v3230
        %3264 = vmatprep.subr.bf16.mxu0 0
        %3265 = vmatpush1.bf16.msra.mxu0 0
        %3266 = vmatprep.subr.bf16.mxu0 0
        %3267 = vmatpush1.bf16.msra.mxu0 0
        %3268 = vmatprep.subr.bf16.mxu0 0
        %3269 = vmatpush1.bf16.msra.mxu0 0
        %3270 = vmatprep.subr.bf16.mxu0 0
        %3271 = vmatpush1.bf16.msra.mxu0 0
        %3272 = vmatprep.subr.bf16.mxu0 0
        %3273 = vmatpush1.bf16.msra.mxu0 0
        %3274 = vmatprep.subr.bf16.mxu0 0
        %3275 = vmatpush1.bf16.msra.mxu0 0
        %3276 = vmatprep.subr.bf16.mxu0 0
        %3277 = vmatpush1.bf16.msra.mxu0 0
        %3278 = vmatprep.subr.bf16.mxu0 0
        %3279 = vmatpush1.bf16.msra.mxu0 0
        %3280 = vmatprep.mubr.bf16.mxu0 0
        %3281 = vmatmul.mubr.bf16.gmra.mrb[0].mxu0 %v3139
        %v3282 = vpop.f32.mrb[0].mxu0
        %v3283 = vadd.f32 %v3161, %v3282
        %v3284 = vpop.f32.mrb[0].mxu0
        %v3285 = vadd.f32 %v3165, %v3284
        %v3286 = vpop.f32.mrb[0].mxu0
        %v3287 = vpop.f32.mrb[0].mxu0
        %3288 = vdwg.mxu0
        %v3289 = vxor.u32 %v3283, 2147483648
        %v3290 = vxor.u32 %v3285, 2147483648
        %v3291 = vmul.f32 %v3289, 1.442695
        %v3292 = vpow.pop %v3291
        %v3293 = vmul.f32 %v3290, 1.442695
        %v3294 = vpow.pop %v3293
        %v3295 = vadd.f32 %v3292, 1.0
        %v3296 = vadd.f32 %v3294, 1.0
        %v3297 = vrcp.pop %v3295
        %v3298 = vmul.f32 1.0, %v3297
        %v3299 = vrcp.pop %v3296
        %v3300 = vmul.f32 1.0, %v3299
        %v3301 = vmul.f32 %v3283, %v3298
        %v3302 = vmul.f32 %v3285, %v3300
        %v3303 = vpack.c.bf16 %v3301, %v3301
        %v3304 = vpack.c.bf16 %v3302, %v3302
        %v3305 = vld [vmem:[%s51] sm:$0xf]
        %v3306 = vld [vmem:[%s51 + $0x4] sm:$0xf]
        %v3307 = vld [vmem:[%s51 + $0x8] sm:$0xf]
        %v3308 = vld [vmem:[%s51 + $0xc] sm:$0xf]
        %v3309 = vld [vmem:[%s51 + $0x10] sm:$0xf]
        %v3310 = vld [vmem:[%s51 + $0x14] sm:$0xf]
        %v3311 = vld [vmem:[%s51 + $0x18] sm:$0xf]
        %v3312 = vld [vmem:[%s51 + $0x1c] sm:$0xf]
        %v3313 = vld [vmem:[%s51 + $0x20] sm:$0xf]
        %v3314 = vld [vmem:[%s51 + $0x24] sm:$0xf]
        %v3315 = vld [vmem:[%s51 + $0x28] sm:$0xf]
        %v3316 = vld [vmem:[%s51 + $0x2c] sm:$0xf]
        %v3317 = vld [vmem:[%s51 + $0x30] sm:$0xf]
        %v3318 = vld [vmem:[%s51 + $0x34] sm:$0xf]
        %v3319 = vld [vmem:[%s51 + $0x38] sm:$0xf]
        %v3320 = vld [vmem:[%s51 + $0x3c] sm:$0xf]
        %v3321 = vld [vmem:[%s51 + $0x40] sm:$0xf]
        %v3322 = vld [vmem:[%s51 + $0x44] sm:$0xf]
        %v3323 = vld [vmem:[%s51 + $0x48] sm:$0xf]
        %v3324 = vld [vmem:[%s51 + $0x4c] sm:$0xf]
        %v3325 = vld [vmem:[%s51 + $0x50] sm:$0xf]
        %v3326 = vld [vmem:[%s51 + $0x54] sm:$0xf]
        %v3327 = vld [vmem:[%s51 + $0x58] sm:$0xf]
        %v3328 = vld [vmem:[%s51 + $0x5c] sm:$0xf]
        %v3329 = vld [vmem:[%s51 + $0x60] sm:$0xf]
        %v3330 = vld [vmem:[%s51 + $0x64] sm:$0xf]
        %v3331 = vld [vmem:[%s51 + $0x68] sm:$0xf]
        %v3332 = vld [vmem:[%s51 + $0x6c] sm:$0xf]
        %v3333 = vld [vmem:[%s51 + $0x70] sm:$0xf]
        %v3334 = vld [vmem:[%s51 + $0x74] sm:$0xf]
        %v3335 = vld [vmem:[%s51 + $0x78] sm:$0xf]
        %v3336 = vld [vmem:[%s51 + $0x7c] sm:$0xf]
        %v3337 = vld [vmem:[%s53] sm:$0x1]
        %v3339 = vlaneseq
        %v3340 = vshrl.u32 %v3339, 7
        %v3341 = vsub.s32 0, %v3340
        %v3342 = vrot.slane %v3337, %v3341
        %v3376 = vunpack.c.l.b16 %v3305
        %v3377 = vunpack.c.l.b16 %v3306
        %v3378 = vunpack.c.l.b16 %v3307
        %v3379 = vunpack.c.l.b16 %v3308
        %v3380 = vunpack.c.l.b16 %v3309
        %v3381 = vunpack.c.l.b16 %v3310
        %v3382 = vunpack.c.l.b16 %v3311
        %v3383 = vunpack.c.l.b16 %v3312
        %v3384 = vunpack.c.l.b16 %v3313
        %v3385 = vunpack.c.l.b16 %v3314
        %v3386 = vunpack.c.l.b16 %v3315
        %v3387 = vunpack.c.l.b16 %v3316
        %v3388 = vunpack.c.l.b16 %v3317
        %v3389 = vunpack.c.l.b16 %v3318
        %v3390 = vunpack.c.l.b16 %v3319
        %v3391 = vunpack.c.l.b16 %v3320
        %v3392 = vunpack.c.l.b16 %v3321
        %v3393 = vunpack.c.l.b16 %v3322
        %v3394 = vunpack.c.l.b16 %v3323
        %v3395 = vunpack.c.l.b16 %v3324
        %v3396 = vunpack.c.l.b16 %v3325
        %v3397 = vunpack.c.l.b16 %v3326
        %v3398 = vunpack.c.l.b16 %v3327
        %v3399 = vunpack.c.l.b16 %v3328
        %v3400 = vunpack.c.l.b16 %v3329
        %v3401 = vunpack.c.l.b16 %v3330
        %v3402 = vunpack.c.l.b16 %v3331
        %v3403 = vunpack.c.l.b16 %v3332
        %v3404 = vunpack.c.l.b16 %v3333
        %v3405 = vunpack.c.l.b16 %v3334
        %v3406 = vunpack.c.l.b16 %v3335
        %v3407 = vunpack.c.l.b16 %v3336
        %v3408 = vpack.c.b16 %v3377, %v3376
        %v3409 = vpack.c.b16 %v3379, %v3378
        %v3410 = vpack.c.b16 %v3381, %v3380
        %v3411 = vpack.c.b16 %v3383, %v3382
        %v3412 = vpack.c.b16 %v3385, %v3384
        %v3413 = vpack.c.b16 %v3387, %v3386
        %v3414 = vpack.c.b16 %v3389, %v3388
        %v3415 = vpack.c.b16 %v3391, %v3390
        %v3416 = vpack.c.b16 %v3393, %v3392
        %v3417 = vpack.c.b16 %v3395, %v3394
        %v3418 = vpack.c.b16 %v3397, %v3396
        %v3419 = vpack.c.b16 %v3399, %v3398
        %v3420 = vpack.c.b16 %v3401, %v3400
        %v3421 = vpack.c.b16 %v3403, %v3402
        %v3422 = vpack.c.b16 %v3405, %v3404
        %v3423 = vpack.c.b16 %v3407, %v3406
        %3440 = vmatprep.subr.bf16.mxu0 0
        %3441 = vmatpush1.bf16.msra.mxu0 %v3408
        %3442 = vmatprep.subr.bf16.mxu0 0
        %3443 = vmatpush1.bf16.msra.mxu0 %v3409
        %3444 = vmatprep.subr.bf16.mxu0 0
        %3445 = vmatpush1.bf16.msra.mxu0 %v3410
        %3446 = vmatprep.subr.bf16.mxu0 0
        %3447 = vmatpush1.bf16.msra.mxu0 %v3411
        %3448 = vmatprep.subr.bf16.mxu0 0
        %3449 = vmatpush1.bf16.msra.mxu0 %v3412
        %3450 = vmatprep.subr.bf16.mxu0 0
        %3451 = vmatpush1.bf16.msra.mxu0 %v3413
        %3452 = vmatprep.subr.bf16.mxu0 0
        %3453 = vmatpush1.bf16.msra.mxu0 %v3414
        %3454 = vmatprep.subr.bf16.mxu0 0
        %3455 = vmatpush1.bf16.msra.mxu0 %v3415
        %3456 = vmatprep.subr.bf16.mxu0 0
        %3457 = vmatpush1.bf16.msra.mxu0 %v3416
        %3458 = vmatprep.subr.bf16.mxu0 0
        %3459 = vmatpush1.bf16.msra.mxu0 %v3417
        %3460 = vmatprep.subr.bf16.mxu0 0
        %3461 = vmatpush1.bf16.msra.mxu0 %v3418
        %3462 = vmatprep.subr.bf16.mxu0 0
        %3463 = vmatpush1.bf16.msra.mxu0 %v3419
        %3464 = vmatprep.subr.bf16.mxu0 0
        %3465 = vmatpush1.bf16.msra.mxu0 %v3420
        %3466 = vmatprep.subr.bf16.mxu0 0
        %3467 = vmatpush1.bf16.msra.mxu0 %v3421
        %3468 = vmatprep.subr.bf16.mxu0 0
        %3469 = vmatpush1.bf16.msra.mxu0 %v3422
        %3470 = vmatprep.subr.bf16.mxu0 0
        %3471 = vmatpush1.bf16.msra.mxu0 %v3423
        %3472 = vmatprep.mubr.bf16.mxu0 %v3304
        %3473 = vmatmul.mubr.bf16.gmra.mrb[0].mxu0 %v3303
        %v3474 = vpop.f32.mrb[0].mxu0
        %v3475 = vadd.f32 %v3342, %v3474
        %v3476 = vpop.f32.mrb[0].mxu0
        %v3477 = vpop.f32.mrb[0].mxu0
        %v3478 = vpop.f32.mrb[0].mxu0
        %3479 = vdwg.mxu0
        %v3480 = vmul.f32 %v3475, 0.5
        %v3481 = vadd.f32 %v3111, %v3480
        %3482 = vadd.xlane.f32.xlu0 %v3481
        %v3483 = vpop.xlane.xlu0 %3482
        %v3484 = vmul.f32 %v3483, %v915
        %v3485 = vsub.f32 %v3481, %v3484
        %v3486 = vmul.f32 %v3485, %v3485
        %3487 = vadd.xlane.f32.xlu0 %v3486
        %v3488 = vpop.xlane.xlu0 %3487
        %v3489 = vmul.f32 %v3488, %v915
        %v3490 = vadd.f32 %v3489, 1e-05
        %v3491 = vrsqrt.pop %v3490
        %v3492 = vmul.f32 %v3485, %v3491
        %v3493 = vld [vmem:[%s55] sm:$0x1]
        %v3495 = vlaneseq
        %v3496 = vshrl.u32 %v3495, 7
        %v3497 = vsub.s32 0, %v3496
        %v3498 = vrot.slane %v3493, %v3497
        %v3500 = vmul.f32 %v3492, %v3498
        %v3501 = vld [vmem:[#allocation2] sm:$0x1]
        %v3503 = vlaneseq
        %v3504 = vshrl.u32 %v3503, 7
        %v3505 = vsub.s32 0, %v3504
        %v3506 = vrot.slane %v3501, %v3505
        %v3508 = vadd.f32 %v3500, %v3506
        %3509 = vst [vmem:[%s910] sm:$0xff] %v3508
        %p3510 = scmp.lt.s32.totalorder %s71, 1
        %s3511 = scalar_select %p3510, %s71, 1
        %s3512 = smul.addr %s3511, 8
        %s3513 = scalar_lea.vmem %s59, %s3512
        // Predicated region
        $region141: #{base_ctc_forward.10} parent=135 // pred_check
          %p3514 = pneg %p703
        $region142: #{base_ctc_forward.10} parent=135 // pred_check_branch
          %3516 = sbr.rel (%p3514) target = $region144
        $region143: #{base_ctc_forward.10} parent=135 // pred_region
          _
        $region144: #{base_ctc_forward.10} parent=135 // pred_fallthru
          _
      $region136: #{base_ctc_forward.10} parent=5 // pred_fallthru
        _
      %p3517 = scmp.le.s32.totalorder 2, %s66
      // Predicated region
      $region145: #{base_ctc_forward.10} parent=5 // pred_check
        %p3518 = pneg %p3517
      $region146: #{base_ctc_forward.10} parent=5 // pred_check_branch
        %3520 = sbr.rel (%p3518) target = $region148
      $region147: #{base_ctc_forward.10} parent=5 // pred_region
        %s3521 = ssub.s32 %s66, 2
        // Predicated region
        $region149: #{base_ctc_forward.10} parent=147 // pred_check
          %p3522 = pneg %p709
        $region150: #{base_ctc_forward.10} parent=147 // pred_check_branch
          %3524 = sbr.rel (%p3522) target = $region152
        $region151: #{base_ctc_forward.10} parent=147 // pred_region
          %p3525 = scmp.lt.s32.totalorder %s72, 1
          %s3526 = scalar_select %p3525, %s72, 1
          %s3527 = smul.addr %s3526, 8
          %s3528 = scalar_lea.vmem %s59, %s3527
        $region152: #{base_ctc_forward.10} parent=147 // pred_fallthru
          _
      $region148: #{base_ctc_forward.10} parent=5 // pred_fallthru
        _
    $region6: #{base_ctc_forward.10} parent=1 // loop_footer
      %s70 = sadd.s32 1, %s66
    $region7: #{base_ctc_forward.10} parent=1 // loop_footer_branch
      %65 = sbr.rel target = $region3
    $region8: #{base_ctc_forward.10} parent=1 // loop_exit
      _
    %3529 = vsyncpa [#allocation3], 1
    %s3530 = scalar_lea.sflag [#allocation3], 1
    %3531 = vsyncpa %s3530, 1

// kernel: base_ctc_forward.12
$region0: #{base_ctc_forward.12}
  #allocation0 [shape = 'u32[]', space=smem, size = 0x4, offset = 0x4, fixed_abs, tag = 'smem constant byte address 0x4 - core index']
  #allocation1 [shape = 'u32[144,128]{1,0:T(1,128)}', space=vmem, size = 0x12000, scoped, tag = 'internal scratch']
  %s0 = inlined_call_operand.smem [shape: u32[30], index: -1, kind: input, shape index: {}]
  %s1 = sld [smem:[%s0]]
  %s2 = scalar_lea.smem %s0, 1
  %s3 = sld [smem:[%s2]]
  %s4 = scalar_lea.smem %s0, 2
  %s5 = sld [smem:[%s4]]
  %s6 = scalar_lea.smem %s0, 3
  %s7 = sld [smem:[%s6]]
  %s8 = scalar_lea.smem %s0, 4
  %s9 = sld [smem:[%s8]]
  %s10 = scalar_lea.smem %s0, 5
  %s11 = sld [smem:[%s10]]
  %s12 = scalar_lea.smem %s0, 6
  %s13 = sld [smem:[%s12]]
  %s14 = scalar_lea.smem %s0, 7
  %s15 = sld [smem:[%s14]]
  %s16 = scalar_lea.smem %s0, 8
  %s17 = sld [smem:[%s16]]
  %s18 = scalar_lea.smem %s0, 9
  %s19 = sld [smem:[%s18]]
  %s20 = scalar_lea.smem %s0, 10
  %s21 = sld [smem:[%s20]]
  %s22 = scalar_lea.smem %s0, 11
  %s23 = sld [smem:[%s22]]
  %s24 = scalar_lea.smem %s0, 12
  %s25 = sld [smem:[%s24]]
  %s26 = scalar_lea.smem %s0, 13
  %s27 = sld [smem:[%s26]]
  %s28 = scalar_lea.smem %s0, 14
  %s29 = sld [smem:[%s28]]
  %s30 = scalar_lea.smem %s0, 15
  %s31 = sld [smem:[%s30]]
  %s32 = scalar_lea.smem %s0, 16
  %s33 = sld [smem:[%s32]]
  %s34 = scalar_lea.smem %s0, 17
  %s35 = sld [smem:[%s34]]
  %s36 = scalar_lea.smem %s0, 18
  %s37 = sld [smem:[%s36]]
  %s38 = scalar_lea.smem %s0, 19
  %s39 = sld [smem:[%s38]]
  %s40 = scalar_lea.smem %s0, 20
  %s41 = sld [smem:[%s40]]
  %s42 = scalar_lea.smem %s0, 21
  %s43 = sld [smem:[%s42]]
  %s44 = scalar_lea.smem %s0, 22
  %s45 = sld [smem:[%s44]]
  %s46 = scalar_lea.smem %s0, 23
  %s47 = sld [smem:[%s46]]
  %s48 = scalar_lea.smem %s0, 24
  %s49 = sld [smem:[%s48]]
  %s50 = scalar_lea.smem %s0, 25
  %s51 = sld [smem:[%s50]]
  %s52 = scalar_lea.smem %s0, 26
  %s53 = sld [smem:[%s52]]
  %s54 = scalar_lea.smem %s0, 27
  %s55 = sld [smem:[%s54]]
  %s56 = scalar_lea.smem %s0, 28
  %s57 = sld [smem:[%s56]]
  %s58 = scalar_lea.smem %s0, 29
  %s59 = sld [smem:[%s58]]
  %s60 = sld [smem:[#allocation0]]
  $region209: #{base_ctc_forward.12} parent=0
    _
  %s62 = ssub.s32 1, %s60
  %s63 = scalar_select 0, %s62, %s60
  $region1: #{base_ctc_forward.12} parent=0
    #allocation2 [shape = 'u8[512]{0}', space=vmem, size = 0x400, scoped, tag = 'input window, operand 1, single buffered']
    #allocation3 [shape = 's32[2]{0}', space=sflag, size = 0x8, scoped, tag = 'scoped memory for base_ctc_forward.12']
    #allocation4 [shape = 'u8[512]{0}', space=vmem, size = 0x400, scoped, tag = 'input window, operand 2, single buffered']
    #allocation5 [shape = 's32[1]{0}', space=sflag, size = 0x4, scoped, tag = 'scoped memory for base_ctc_forward.12']
    #allocation6 [shape = 'u8[512]{0}', space=vmem, size = 0x400, scoped, tag = 'input window, operand 6, single buffered']
    #allocation7 [shape = 'u8[512]{0}', space=vmem, size = 0x400, scoped, tag = 'input window, operand 7, single buffered']
    #allocation8 [shape = 's32[1]{0}', space=sflag, size = 0x4, scoped, tag = 'scoped memory for base_ctc_forward.12']
    #allocation9 [shape = 'u8[512]{0}', space=vmem, size = 0x400, scoped, tag = 'input window, operand 8, single buffered']
    #allocation10 [shape = 'u8[512]{0}', space=vmem, size = 0x400, scoped, tag = 'input window, operand 12, single buffered']
    #allocation11 [shape = 's32[1]{0}', space=sflag, size = 0x4, scoped, tag = 'scoped memory for base_ctc_forward.12']
    #allocation12 [shape = 'u8[512]{0}', space=vmem, size = 0x400, scoped, tag = 'input window, operand 13, single buffered']
    #allocation13 [shape = 'u8[512]{0}', space=vmem, size = 0x400, scoped, tag = 'input window, operand 14, single buffered']
    #allocation14 [shape = 's32[1]{0}', space=sflag, size = 0x4, scoped, tag = 'scoped memory for base_ctc_forward.12']
    #allocation15 [shape = 'u8[512]{0}', space=vmem, size = 0x400, scoped, tag = 'input window, operand 18, single buffered']
    #allocation16 [shape = 'u8[512]{0}', space=vmem, size = 0x400, scoped, tag = 'input window, operand 20, single buffered']
    #allocation17 [shape = 's32[1]{0}', space=sflag, size = 0x4, scoped, tag = 'scoped memory for base_ctc_forward.12']
    #allocation18 [shape = 'u8[512]{0}', space=vmem, size = 0x400, scoped, tag = 'input window, operand 21, single buffered']
    #allocation19 [shape = 'u8[512]{0}', space=vmem, size = 0x400, scoped, tag = 'input window, operand 22, single buffered']
    #allocation20 [shape = 's32[1]{0}', space=sflag, size = 0x4, scoped, tag = 'scoped memory for base_ctc_forward.12']
    #allocation21 [shape = 'u8[512]{0}', space=vmem, size = 0x400, scoped, tag = 'input window, operand 26, single buffered']
    #allocation22 [shape = 'u8[512]{0}', space=vmem, size = 0x400, scoped, tag = 'input window, operand 27, single buffered']
    #allocation23 [shape = 's32[1]{0}', space=sflag, size = 0x4, scoped, tag = 'scoped memory for base_ctc_forward.12']
    #allocation24 [shape = 'u8[512]{0}', space=vmem, size = 0x400, scoped, tag = 'input window, operand 28, single buffered']
    %64 = vsyncpa [#allocation3], 0
    %65 = vsyncpa [#allocation5], 0
    %66 = vsyncpa [#allocation8], 0
    %67 = vsyncpa [#allocation11], 0
    %68 = vsyncpa [#allocation14], 0
    %69 = vsyncpa [#allocation17], 0
    %70 = vsyncpa [#allocation20], 0
    %71 = vsyncpa [#allocation23], 0
    loop: start=0, step=1, limit=4
    $region2: #{base_ctc_forward.12} parent=1 // loop_pre_header
      _
    $region3: #{base_ctc_forward.12} parent=1 // loop_header
      %s73 = sphi 0, %s77
      %p74 = scmp.ge.s32.totalorder %s73, 4
      %s83 = sphi 0, %s85
      %s86 = sphi 0, %s83
      %s87 = sphi 0, %s86
      %s103 = sphi 0, %s87
      %s107 = sphi 0, %s107
      %s109 = sphi 0, %s107
      %s110 = sphi 0, %s109
      %s124 = sphi 0, %s110
      %s128 = sphi 0, %s128
      %s130 = sphi 0, %s128
      %s131 = sphi 0, %s130
      %s145 = sphi 0, %s131
      %s149 = sphi 0, %s149
      %s151 = sphi 0, %s149
      %s152 = sphi 0, %s151
      %s166 = sphi 0, %s152
      %s170 = sphi 0, %s170
      %s172 = sphi 0, %s170
      %s173 = sphi 0, %s172
      %s187 = sphi 0, %s173
      %s191 = sphi 0, %s191
      %s193 = sphi 0, %s191
      %s194 = sphi 0, %s193
      %s208 = sphi 0, %s194
      %s212 = sphi 0, %s212
      %s214 = sphi 0, %s212
      %s215 = sphi 0, %s214
      %s229 = sphi 0, %s215
      %s233 = sphi 0, %s233
      %s235 = sphi 0, %s233
      %s236 = sphi 0, %s235
      %s250 = sphi 0, %s236
      %s254 = sphi 0, %s254
      %s256 = sphi 0, %s254
      %s257 = sphi 0, %s256
      %s271 = sphi 0, %s257
      %s275 = sphi 0, %s275
      %s277 = sphi 0, %s275
      %s278 = sphi 0, %s277
      %s292 = sphi 0, %s278
      %s296 = sphi 0, %s296
      %s298 = sphi 0, %s296
      %s299 = sphi 0, %s298
      %s313 = sphi 0, %s299
      %s317 = sphi 0, %s317
      %s319 = sphi 0, %s317
      %s320 = sphi 0, %s319
      %s334 = sphi 0, %s320
      %s338 = sphi 0, %s338
      %s340 = sphi 0, %s338
      %s341 = sphi 0, %s340
      %s355 = sphi 0, %s341
      %s359 = sphi 0, %s359
      %s361 = sphi 0, %s359
      %s362 = sphi 0, %s361
      %s376 = sphi 0, %s362
      %s380 = sphi 0, %s380
      %s382 = sphi 0, %s380
      %s383 = sphi 0, %s382
      %s397 = sphi 0, %s383
      %s401 = sphi 0, %s401
      %s403 = sphi 0, %s401
      %s404 = sphi 0, %s403
      %s418 = sphi 0, %s404
      %s422 = sphi 0, %s422
      %s424 = sphi 0, %s422
      %s425 = sphi 0, %s424
      %s439 = sphi 0, %s425
      %s443 = sphi 0, %s443
      %s445 = sphi 0, %s443
      %s446 = sphi 0, %s445
      %s460 = sphi 0, %s446
      %s464 = sphi 0, %s464
      %s466 = sphi 0, %s464
      %s467 = sphi 0, %s466
      %s481 = sphi 0, %s467
      %s485 = sphi 0, %s485
      %s487 = sphi 0, %s485
      %s488 = sphi 0, %s487
      %s502 = sphi 0, %s488
      %s506 = sphi 0, %s506
      %s508 = sphi 0, %s506
      %s509 = sphi 0, %s508
      %s523 = sphi 0, %s509
      %s527 = sphi 0, %s527
      %s529 = sphi 0, %s527
      %s530 = sphi 0, %s529
      %s544 = sphi 0, %s530
      %s548 = sphi 0, %s548
      %s550 = sphi 0, %s548
      %s551 = sphi 0, %s550
      %s565 = sphi 0, %s551
      %s569 = sphi 0, %s569
      %s571 = sphi 0, %s569
      %s572 = sphi 0, %s571
      %s586 = sphi 0, %s572
      %s590 = sphi 0, %s590
      %s592 = sphi 0, %s590
      %s593 = sphi 0, %s592
      %s607 = sphi 0, %s593
      %s611 = sphi 0, %s611
      %s613 = sphi 0, %s611
      %s614 = sphi 0, %s613
      %s628 = sphi 0, %s614
      %s632 = sphi 0, %s632
      %s634 = sphi 0, %s632
      %s635 = sphi 0, %s634
      %s649 = sphi 0, %s635
      %s653 = sphi 0, %s653
      %s655 = sphi 0, %s653
      %s656 = sphi 0, %s655
      %s670 = sphi 0, %s656
      %s674 = sphi 0, %s674
      %s676 = sphi 0, %s674
      %s677 = sphi 0, %s676
      %s691 = sphi 0, %s677
      %s697 = sphi 0, %s699
      %s700 = sphi 0, %s697
      %s701 = sphi 0, %s700
      %s717 = sphi 0, %s701
    $region4: #{base_ctc_forward.12} parent=1 // loop_header_branch
      %76 = sbr.rel (%p74) target = $region8
    $region5: #{base_ctc_forward.12} parent=1 // loop_body
      %s78 = ssub.s32 %s73, 1
      %s79 = ssub.s32 %s73, 2
      %s80 = sadd.s32 %s73, 1
      %s81 = ssub.s32 %s73, %s80
      %p82 = scmp.eq.s32.totalorder %s81, 0
      %s84 = sadd.s32 %s83, 1
      %s85 = scalar_select %p82, %s83, %s84
      %p88 = pneg %p82
      %p89 = scmp.eq.s32.totalorder %s73, 1
      %p90 = por %p88, %p89
      %p91 = scmp.ne.s32.totalorder %s83, %s86
      %p92 = scmp.eq.s32.totalorder %s73, 0
      %p93 = por %p91, %p92
      %p94 = scmp.ne.s32.totalorder %s83, %s86
      %p95 = scmp.eq.s32.totalorder %s78, 1
      %p96 = por %p94, %p95
      %p97 = scmp.ne.s32.totalorder %s86, %s87
      %p98 = scmp.eq.s32.totalorder %s78, 0
      %p99 = por %p97, %p98
      %p100 = scmp.ne.s32.totalorder %s86, %s87
      %p101 = scmp.eq.s32.totalorder %s79, 1
      %p102 = por %p100, %p101
      %p104 = scmp.ne.s32.totalorder %s87, %s103
      %p105 = scmp.eq.s32.totalorder %s79, 0
      %p106 = por %p104, %p105
      %s108 = sadd.s32 %s107, 1
      %p111 = scmp.eq.s32.totalorder %s73, 1
      %p112 = scmp.ne.s32.totalorder %s107, %s109
      %p113 = scmp.eq.s32.totalorder %s73, 0
      %p114 = por %p112, %p113
      %p115 = scmp.ne.s32.totalorder %s107, %s109
      %p116 = scmp.eq.s32.totalorder %s78, 1
      %p117 = por %p115, %p116
      %p118 = scmp.ne.s32.totalorder %s109, %s110
      %p119 = scmp.eq.s32.totalorder %s78, 0
      %p120 = por %p118, %p119
      %p121 = scmp.ne.s32.totalorder %s109, %s110
      %p122 = scmp.eq.s32.totalorder %s79, 1
      %p123 = por %p121, %p122
      %p125 = scmp.ne.s32.totalorder %s110, %s124
      %p126 = scmp.eq.s32.totalorder %s79, 0
      %p127 = por %p125, %p126
      %s129 = sadd.s32 %s128, 1
      %p132 = scmp.eq.s32.totalorder %s73, 1
      %p133 = scmp.ne.s32.totalorder %s128, %s130
      %p134 = scmp.eq.s32.totalorder %s73, 0
      %p135 = por %p133, %p134
      %p136 = scmp.ne.s32.totalorder %s128, %s130
      %p137 = scmp.eq.s32.totalorder %s78, 1
      %p138 = por %p136, %p137
      %p139 = scmp.ne.s32.totalorder %s130, %s131
      %p140 = scmp.eq.s32.totalorder %s78, 0
      %p141 = por %p139, %p140
      %p142 = scmp.ne.s32.totalorder %s130, %s131
      %p143 = scmp.eq.s32.totalorder %s79, 1
      %p144 = por %p142, %p143
      %p146 = scmp.ne.s32.totalorder %s131, %s145
      %p147 = scmp.eq.s32.totalorder %s79, 0
      %p148 = por %p146, %p147
      %s150 = sadd.s32 %s149, 1
      %p153 = scmp.eq.s32.totalorder %s73, 1
      %p154 = scmp.ne.s32.totalorder %s149, %s151
      %p155 = scmp.eq.s32.totalorder %s73, 0
      %p156 = por %p154, %p155
      %p157 = scmp.ne.s32.totalorder %s149, %s151
      %p158 = scmp.eq.s32.totalorder %s78, 1
      %p159 = por %p157, %p158
      %p160 = scmp.ne.s32.totalorder %s151, %s152
      %p161 = scmp.eq.s32.totalorder %s78, 0
      %p162 = por %p160, %p161
      %p163 = scmp.ne.s32.totalorder %s151, %s152
      %p164 = scmp.eq.s32.totalorder %s79, 1
      %p165 = por %p163, %p164
      %p167 = scmp.ne.s32.totalorder %s152, %s166
      %p168 = scmp.eq.s32.totalorder %s79, 0
      %p169 = por %p167, %p168
      %s171 = sadd.s32 %s170, 1
      %p174 = scmp.eq.s32.totalorder %s73, 1
      %p175 = scmp.ne.s32.totalorder %s170, %s172
      %p176 = scmp.eq.s32.totalorder %s73, 0
      %p177 = por %p175, %p176
      %p178 = scmp.ne.s32.totalorder %s170, %s172
      %p179 = scmp.eq.s32.totalorder %s78, 1
      %p180 = por %p178, %p179
      %p181 = scmp.ne.s32.totalorder %s172, %s173
      %p182 = scmp.eq.s32.totalorder %s78, 0
      %p183 = por %p181, %p182
      %p184 = scmp.ne.s32.totalorder %s172, %s173
      %p185 = scmp.eq.s32.totalorder %s79, 1
      %p186 = por %p184, %p185
      %p188 = scmp.ne.s32.totalorder %s173, %s187
      %p189 = scmp.eq.s32.totalorder %s79, 0
      %p190 = por %p188, %p189
      %s192 = sadd.s32 %s191, 1
      %p195 = scmp.eq.s32.totalorder %s73, 1
      %p196 = scmp.ne.s32.totalorder %s191, %s193
      %p197 = scmp.eq.s32.totalorder %s73, 0
      %p198 = por %p196, %p197
      %p199 = scmp.ne.s32.totalorder %s191, %s193
      %p200 = scmp.eq.s32.totalorder %s78, 1
      %p201 = por %p199, %p200
      %p202 = scmp.ne.s32.totalorder %s193, %s194
      %p203 = scmp.eq.s32.totalorder %s78, 0
      %p204 = por %p202, %p203
      %p205 = scmp.ne.s32.totalorder %s193, %s194
      %p206 = scmp.eq.s32.totalorder %s79, 1
      %p207 = por %p205, %p206
      %p209 = scmp.ne.s32.totalorder %s194, %s208
      %p210 = scmp.eq.s32.totalorder %s79, 0
      %p211 = por %p209, %p210
      %s213 = sadd.s32 %s212, 1
      %p216 = scmp.eq.s32.totalorder %s73, 1
      %p217 = scmp.ne.s32.totalorder %s212, %s214
      %p218 = scmp.eq.s32.totalorder %s73, 0
      %p219 = por %p217, %p218
      %p220 = scmp.ne.s32.totalorder %s212, %s214
      %p221 = scmp.eq.s32.totalorder %s78, 1
      %p222 = por %p220, %p221
      %p223 = scmp.ne.s32.totalorder %s214, %s215
      %p224 = scmp.eq.s32.totalorder %s78, 0
      %p225 = por %p223, %p224
      %p226 = scmp.ne.s32.totalorder %s214, %s215
      %p227 = scmp.eq.s32.totalorder %s79, 1
      %p228 = por %p226, %p227
      %p230 = scmp.ne.s32.totalorder %s215, %s229
      %p231 = scmp.eq.s32.totalorder %s79, 0
      %p232 = por %p230, %p231
      %s234 = sadd.s32 %s233, 1
      %p237 = scmp.eq.s32.totalorder %s73, 1
      %p238 = scmp.ne.s32.totalorder %s233, %s235
      %p239 = scmp.eq.s32.totalorder %s73, 0
      %p240 = por %p238, %p239
      %p241 = scmp.ne.s32.totalorder %s233, %s235
      %p242 = scmp.eq.s32.totalorder %s78, 1
      %p243 = por %p241, %p242
      %p244 = scmp.ne.s32.totalorder %s235, %s236
      %p245 = scmp.eq.s32.totalorder %s78, 0
      %p246 = por %p244, %p245
      %p247 = scmp.ne.s32.totalorder %s235, %s236
      %p248 = scmp.eq.s32.totalorder %s79, 1
      %p249 = por %p247, %p248
      %p251 = scmp.ne.s32.totalorder %s236, %s250
      %p252 = scmp.eq.s32.totalorder %s79, 0
      %p253 = por %p251, %p252
      %s255 = sadd.s32 %s254, 1
      %p258 = scmp.eq.s32.totalorder %s73, 1
      %p259 = scmp.ne.s32.totalorder %s254, %s256
      %p260 = scmp.eq.s32.totalorder %s73, 0
      %p261 = por %p259, %p260
      %p262 = scmp.ne.s32.totalorder %s254, %s256
      %p263 = scmp.eq.s32.totalorder %s78, 1
      %p264 = por %p262, %p263
      %p265 = scmp.ne.s32.totalorder %s256, %s257
      %p266 = scmp.eq.s32.totalorder %s78, 0
      %p267 = por %p265, %p266
      %p268 = scmp.ne.s32.totalorder %s256, %s257
      %p269 = scmp.eq.s32.totalorder %s79, 1
      %p270 = por %p268, %p269
      %p272 = scmp.ne.s32.totalorder %s257, %s271
      %p273 = scmp.eq.s32.totalorder %s79, 0
      %p274 = por %p272, %p273
      %s276 = sadd.s32 %s275, 1
      %p279 = scmp.eq.s32.totalorder %s73, 1
      %p280 = scmp.ne.s32.totalorder %s275, %s277
      %p281 = scmp.eq.s32.totalorder %s73, 0
      %p282 = por %p280, %p281
      %p283 = scmp.ne.s32.totalorder %s275, %s277
      %p284 = scmp.eq.s32.totalorder %s78, 1
      %p285 = por %p283, %p284
      %p286 = scmp.ne.s32.totalorder %s277, %s278
      %p287 = scmp.eq.s32.totalorder %s78, 0
      %p288 = por %p286, %p287
      %p289 = scmp.ne.s32.totalorder %s277, %s278
      %p290 = scmp.eq.s32.totalorder %s79, 1
      %p291 = por %p289, %p290
      %p293 = scmp.ne.s32.totalorder %s278, %s292
      %p294 = scmp.eq.s32.totalorder %s79, 0
      %p295 = por %p293, %p294
      %s297 = sadd.s32 %s296, 1
      %p300 = scmp.eq.s32.totalorder %s73, 1
      %p301 = scmp.ne.s32.totalorder %s296, %s298
      %p302 = scmp.eq.s32.totalorder %s73, 0
      %p303 = por %p301, %p302
      %p304 = scmp.ne.s32.totalorder %s296, %s298
      %p305 = scmp.eq.s32.totalorder %s78, 1
      %p306 = por %p304, %p305
      %p307 = scmp.ne.s32.totalorder %s298, %s299
      %p308 = scmp.eq.s32.totalorder %s78, 0
      %p309 = por %p307, %p308
      %p310 = scmp.ne.s32.totalorder %s298, %s299
      %p311 = scmp.eq.s32.totalorder %s79, 1
      %p312 = por %p310, %p311
      %p314 = scmp.ne.s32.totalorder %s299, %s313
      %p315 = scmp.eq.s32.totalorder %s79, 0
      %p316 = por %p314, %p315
      %s318 = sadd.s32 %s317, 1
      %p321 = scmp.eq.s32.totalorder %s73, 1
      %p322 = scmp.ne.s32.totalorder %s317, %s319
      %p323 = scmp.eq.s32.totalorder %s73, 0
      %p324 = por %p322, %p323
      %p325 = scmp.ne.s32.totalorder %s317, %s319
      %p326 = scmp.eq.s32.totalorder %s78, 1
      %p327 = por %p325, %p326
      %p328 = scmp.ne.s32.totalorder %s319, %s320
      %p329 = scmp.eq.s32.totalorder %s78, 0
      %p330 = por %p328, %p329
      %p331 = scmp.ne.s32.totalorder %s319, %s320
      %p332 = scmp.eq.s32.totalorder %s79, 1
      %p333 = por %p331, %p332
      %p335 = scmp.ne.s32.totalorder %s320, %s334
      %p336 = scmp.eq.s32.totalorder %s79, 0
      %p337 = por %p335, %p336
      %s339 = sadd.s32 %s338, 1
      %p342 = scmp.eq.s32.totalorder %s73, 1
      %p343 = scmp.ne.s32.totalorder %s338, %s340
      %p344 = scmp.eq.s32.totalorder %s73, 0
      %p345 = por %p343, %p344
      %p346 = scmp.ne.s32.totalorder %s338, %s340
      %p347 = scmp.eq.s32.totalorder %s78, 1
      %p348 = por %p346, %p347
      %p349 = scmp.ne.s32.totalorder %s340, %s341
      %p350 = scmp.eq.s32.totalorder %s78, 0
      %p351 = por %p349, %p350
      %p352 = scmp.ne.s32.totalorder %s340, %s341
      %p353 = scmp.eq.s32.totalorder %s79, 1
      %p354 = por %p352, %p353
      %p356 = scmp.ne.s32.totalorder %s341, %s355
      %p357 = scmp.eq.s32.totalorder %s79, 0
      %p358 = por %p356, %p357
      %s360 = sadd.s32 %s359, 1
      %p363 = scmp.eq.s32.totalorder %s73, 1
      %p364 = scmp.ne.s32.totalorder %s359, %s361
      %p365 = scmp.eq.s32.totalorder %s73, 0
      %p366 = por %p364, %p365
      %p367 = scmp.ne.s32.totalorder %s359, %s361
      %p368 = scmp.eq.s32.totalorder %s78, 1
      %p369 = por %p367, %p368
      %p370 = scmp.ne.s32.totalorder %s361, %s362
      %p371 = scmp.eq.s32.totalorder %s78, 0
      %p372 = por %p370, %p371
      %p373 = scmp.ne.s32.totalorder %s361, %s362
      %p374 = scmp.eq.s32.totalorder %s79, 1
      %p375 = por %p373, %p374
      %p377 = scmp.ne.s32.totalorder %s362, %s376
      %p378 = scmp.eq.s32.totalorder %s79, 0
      %p379 = por %p377, %p378
      %s381 = sadd.s32 %s380, 1
      %p384 = scmp.eq.s32.totalorder %s73, 1
      %p385 = scmp.ne.s32.totalorder %s380, %s382
      %p386 = scmp.eq.s32.totalorder %s73, 0
      %p387 = por %p385, %p386
      %p388 = scmp.ne.s32.totalorder %s380, %s382
      %p389 = scmp.eq.s32.totalorder %s78, 1
      %p390 = por %p388, %p389
      %p391 = scmp.ne.s32.totalorder %s382, %s383
      %p392 = scmp.eq.s32.totalorder %s78, 0
      %p393 = por %p391, %p392
      %p394 = scmp.ne.s32.totalorder %s382, %s383
      %p395 = scmp.eq.s32.totalorder %s79, 1
      %p396 = por %p394, %p395
      %p398 = scmp.ne.s32.totalorder %s383, %s397
      %p399 = scmp.eq.s32.totalorder %s79, 0
      %p400 = por %p398, %p399
      %s402 = sadd.s32 %s401, 1
      %p405 = scmp.eq.s32.totalorder %s73, 1
      %p406 = scmp.ne.s32.totalorder %s401, %s403
      %p407 = scmp.eq.s32.totalorder %s73, 0
      %p408 = por %p406, %p407
      %p409 = scmp.ne.s32.totalorder %s401, %s403
      %p410 = scmp.eq.s32.totalorder %s78, 1
      %p411 = por %p409, %p410
      %p412 = scmp.ne.s32.totalorder %s403, %s404
      %p413 = scmp.eq.s32.totalorder %s78, 0
      %p414 = por %p412, %p413
      %p415 = scmp.ne.s32.totalorder %s403, %s404
      %p416 = scmp.eq.s32.totalorder %s79, 1
      %p417 = por %p415, %p416
      %p419 = scmp.ne.s32.totalorder %s404, %s418
      %p420 = scmp.eq.s32.totalorder %s79, 0
      %p421 = por %p419, %p420
      %s423 = sadd.s32 %s422, 1
      %p426 = scmp.eq.s32.totalorder %s73, 1
      %p427 = scmp.ne.s32.totalorder %s422, %s424
      %p428 = scmp.eq.s32.totalorder %s73, 0
      %p429 = por %p427, %p428
      %p430 = scmp.ne.s32.totalorder %s422, %s424
      %p431 = scmp.eq.s32.totalorder %s78, 1
      %p432 = por %p430, %p431
      %p433 = scmp.ne.s32.totalorder %s424, %s425
      %p434 = scmp.eq.s32.totalorder %s78, 0
      %p435 = por %p433, %p434
      %p436 = scmp.ne.s32.totalorder %s424, %s425
      %p437 = scmp.eq.s32.totalorder %s79, 1
      %p438 = por %p436, %p437
      %p440 = scmp.ne.s32.totalorder %s425, %s439
      %p441 = scmp.eq.s32.totalorder %s79, 0
      %p442 = por %p440, %p441
      %s444 = sadd.s32 %s443, 1
      %p447 = scmp.eq.s32.totalorder %s73, 1
      %p448 = scmp.ne.s32.totalorder %s443, %s445
      %p449 = scmp.eq.s32.totalorder %s73, 0
      %p450 = por %p448, %p449
      %p451 = scmp.ne.s32.totalorder %s443, %s445
      %p452 = scmp.eq.s32.totalorder %s78, 1
      %p453 = por %p451, %p452
      %p454 = scmp.ne.s32.totalorder %s445, %s446
      %p455 = scmp.eq.s32.totalorder %s78, 0
      %p456 = por %p454, %p455
      %p457 = scmp.ne.s32.totalorder %s445, %s446
      %p458 = scmp.eq.s32.totalorder %s79, 1
      %p459 = por %p457, %p458
      %p461 = scmp.ne.s32.totalorder %s446, %s460
      %p462 = scmp.eq.s32.totalorder %s79, 0
      %p463 = por %p461, %p462
      %s465 = sadd.s32 %s464, 1
      %p468 = scmp.eq.s32.totalorder %s73, 1
      %p469 = scmp.ne.s32.totalorder %s464, %s466
      %p470 = scmp.eq.s32.totalorder %s73, 0
      %p471 = por %p469, %p470
      %p472 = scmp.ne.s32.totalorder %s464, %s466
      %p473 = scmp.eq.s32.totalorder %s78, 1
      %p474 = por %p472, %p473
      %p475 = scmp.ne.s32.totalorder %s466, %s467
      %p476 = scmp.eq.s32.totalorder %s78, 0
      %p477 = por %p475, %p476
      %p478 = scmp.ne.s32.totalorder %s466, %s467
      %p479 = scmp.eq.s32.totalorder %s79, 1
      %p480 = por %p478, %p479
      %p482 = scmp.ne.s32.totalorder %s467, %s481
      %p483 = scmp.eq.s32.totalorder %s79, 0
      %p484 = por %p482, %p483
      %s486 = sadd.s32 %s485, 1
      %p489 = scmp.eq.s32.totalorder %s73, 1
      %p490 = scmp.ne.s32.totalorder %s485, %s487
      %p491 = scmp.eq.s32.totalorder %s73, 0
      %p492 = por %p490, %p491
      %p493 = scmp.ne.s32.totalorder %s485, %s487
      %p494 = scmp.eq.s32.totalorder %s78, 1
      %p495 = por %p493, %p494
      %p496 = scmp.ne.s32.totalorder %s487, %s488
      %p497 = scmp.eq.s32.totalorder %s78, 0
      %p498 = por %p496, %p497
      %p499 = scmp.ne.s32.totalorder %s487, %s488
      %p500 = scmp.eq.s32.totalorder %s79, 1
      %p501 = por %p499, %p500
      %p503 = scmp.ne.s32.totalorder %s488, %s502
      %p504 = scmp.eq.s32.totalorder %s79, 0
      %p505 = por %p503, %p504
      %s507 = sadd.s32 %s506, 1
      %p510 = scmp.eq.s32.totalorder %s73, 1
      %p511 = scmp.ne.s32.totalorder %s506, %s508
      %p512 = scmp.eq.s32.totalorder %s73, 0
      %p513 = por %p511, %p512
      %p514 = scmp.ne.s32.totalorder %s506, %s508
      %p515 = scmp.eq.s32.totalorder %s78, 1
      %p516 = por %p514, %p515
      %p517 = scmp.ne.s32.totalorder %s508, %s509
      %p518 = scmp.eq.s32.totalorder %s78, 0
      %p519 = por %p517, %p518
      %p520 = scmp.ne.s32.totalorder %s508, %s509
      %p521 = scmp.eq.s32.totalorder %s79, 1
      %p522 = por %p520, %p521
      %p524 = scmp.ne.s32.totalorder %s509, %s523
      %p525 = scmp.eq.s32.totalorder %s79, 0
      %p526 = por %p524, %p525
      %s528 = sadd.s32 %s527, 1
      %p531 = scmp.eq.s32.totalorder %s73, 1
      %p532 = scmp.ne.s32.totalorder %s527, %s529
      %p533 = scmp.eq.s32.totalorder %s73, 0
      %p534 = por %p532, %p533
      %p535 = scmp.ne.s32.totalorder %s527, %s529
      %p536 = scmp.eq.s32.totalorder %s78, 1
      %p537 = por %p535, %p536
      %p538 = scmp.ne.s32.totalorder %s529, %s530
      %p539 = scmp.eq.s32.totalorder %s78, 0
      %p540 = por %p538, %p539
      %p541 = scmp.ne.s32.totalorder %s529, %s530
      %p542 = scmp.eq.s32.totalorder %s79, 1
      %p543 = por %p541, %p542
      %p545 = scmp.ne.s32.totalorder %s530, %s544
      %p546 = scmp.eq.s32.totalorder %s79, 0
      %p547 = por %p545, %p546
      %s549 = sadd.s32 %s548, 1
      %p552 = scmp.eq.s32.totalorder %s73, 1
      %p553 = scmp.ne.s32.totalorder %s548, %s550
      %p554 = scmp.eq.s32.totalorder %s73, 0
      %p555 = por %p553, %p554
      %p556 = scmp.ne.s32.totalorder %s548, %s550
      %p557 = scmp.eq.s32.totalorder %s78, 1
      %p558 = por %p556, %p557
      %p559 = scmp.ne.s32.totalorder %s550, %s551
      %p560 = scmp.eq.s32.totalorder %s78, 0
      %p561 = por %p559, %p560
      %p562 = scmp.ne.s32.totalorder %s550, %s551
      %p563 = scmp.eq.s32.totalorder %s79, 1
      %p564 = por %p562, %p563
      %p566 = scmp.ne.s32.totalorder %s551, %s565
      %p567 = scmp.eq.s32.totalorder %s79, 0
      %p568 = por %p566, %p567
      %s570 = sadd.s32 %s569, 1
      %p573 = scmp.eq.s32.totalorder %s73, 1
      %p574 = scmp.ne.s32.totalorder %s569, %s571
      %p575 = scmp.eq.s32.totalorder %s73, 0
      %p576 = por %p574, %p575
      %p577 = scmp.ne.s32.totalorder %s569, %s571
      %p578 = scmp.eq.s32.totalorder %s78, 1
      %p579 = por %p577, %p578
      %p580 = scmp.ne.s32.totalorder %s571, %s572
      %p581 = scmp.eq.s32.totalorder %s78, 0
      %p582 = por %p580, %p581
      %p583 = scmp.ne.s32.totalorder %s571, %s572
      %p584 = scmp.eq.s32.totalorder %s79, 1
      %p585 = por %p583, %p584
      %p587 = scmp.ne.s32.totalorder %s572, %s586
      %p588 = scmp.eq.s32.totalorder %s79, 0
      %p589 = por %p587, %p588
      %s591 = sadd.s32 %s590, 1
      %p594 = scmp.eq.s32.totalorder %s73, 1
      %p595 = scmp.ne.s32.totalorder %s590, %s592
      %p596 = scmp.eq.s32.totalorder %s73, 0
      %p597 = por %p595, %p596
      %p598 = scmp.ne.s32.totalorder %s590, %s592
      %p599 = scmp.eq.s32.totalorder %s78, 1
      %p600 = por %p598, %p599
      %p601 = scmp.ne.s32.totalorder %s592, %s593
      %p602 = scmp.eq.s32.totalorder %s78, 0
      %p603 = por %p601, %p602
      %p604 = scmp.ne.s32.totalorder %s592, %s593
      %p605 = scmp.eq.s32.totalorder %s79, 1
      %p606 = por %p604, %p605
      %p608 = scmp.ne.s32.totalorder %s593, %s607
      %p609 = scmp.eq.s32.totalorder %s79, 0
      %p610 = por %p608, %p609
      %s612 = sadd.s32 %s611, 1
      %p615 = scmp.eq.s32.totalorder %s73, 1
      %p616 = scmp.ne.s32.totalorder %s611, %s613
      %p617 = scmp.eq.s32.totalorder %s73, 0
      %p618 = por %p616, %p617
      %p619 = scmp.ne.s32.totalorder %s611, %s613
      %p620 = scmp.eq.s32.totalorder %s78, 1
      %p621 = por %p619, %p620
      %p622 = scmp.ne.s32.totalorder %s613, %s614
      %p623 = scmp.eq.s32.totalorder %s78, 0
      %p624 = por %p622, %p623
      %p625 = scmp.ne.s32.totalorder %s613, %s614
      %p626 = scmp.eq.s32.totalorder %s79, 1
      %p627 = por %p625, %p626
      %p629 = scmp.ne.s32.totalorder %s614, %s628
      %p630 = scmp.eq.s32.totalorder %s79, 0
      %p631 = por %p629, %p630
      %s633 = sadd.s32 %s632, 1
      %p636 = scmp.eq.s32.totalorder %s73, 1
      %p637 = scmp.ne.s32.totalorder %s632, %s634
      %p638 = scmp.eq.s32.totalorder %s73, 0
      %p639 = por %p637, %p638
      %p640 = scmp.ne.s32.totalorder %s632, %s634
      %p641 = scmp.eq.s32.totalorder %s78, 1
      %p642 = por %p640, %p641
      %p643 = scmp.ne.s32.totalorder %s634, %s635
      %p644 = scmp.eq.s32.totalorder %s78, 0
      %p645 = por %p643, %p644
      %p646 = scmp.ne.s32.totalorder %s634, %s635
      %p647 = scmp.eq.s32.totalorder %s79, 1
      %p648 = por %p646, %p647
      %p650 = scmp.ne.s32.totalorder %s635, %s649
      %p651 = scmp.eq.s32.totalorder %s79, 0
      %p652 = por %p650, %p651
      %s654 = sadd.s32 %s653, 1
      %p657 = scmp.eq.s32.totalorder %s73, 1
      %p658 = scmp.ne.s32.totalorder %s653, %s655
      %p659 = scmp.eq.s32.totalorder %s73, 0
      %p660 = por %p658, %p659
      %p661 = scmp.ne.s32.totalorder %s653, %s655
      %p662 = scmp.eq.s32.totalorder %s78, 1
      %p663 = por %p661, %p662
      %p664 = scmp.ne.s32.totalorder %s655, %s656
      %p665 = scmp.eq.s32.totalorder %s78, 0
      %p666 = por %p664, %p665
      %p667 = scmp.ne.s32.totalorder %s655, %s656
      %p668 = scmp.eq.s32.totalorder %s79, 1
      %p669 = por %p667, %p668
      %p671 = scmp.ne.s32.totalorder %s656, %s670
      %p672 = scmp.eq.s32.totalorder %s79, 0
      %p673 = por %p671, %p672
      %s675 = sadd.s32 %s674, 1
      %p678 = scmp.eq.s32.totalorder %s73, 1
      %p679 = scmp.ne.s32.totalorder %s674, %s676
      %p680 = scmp.eq.s32.totalorder %s73, 0
      %p681 = por %p679, %p680
      %p682 = scmp.ne.s32.totalorder %s674, %s676
      %p683 = scmp.eq.s32.totalorder %s78, 1
      %p684 = por %p682, %p683
      %p685 = scmp.ne.s32.totalorder %s676, %s677
      %p686 = scmp.eq.s32.totalorder %s78, 0
      %p687 = por %p685, %p686
      %p688 = scmp.ne.s32.totalorder %s676, %s677
      %p689 = scmp.eq.s32.totalorder %s79, 1
      %p690 = por %p688, %p689
      %p692 = scmp.ne.s32.totalorder %s677, %s691
      %p693 = scmp.eq.s32.totalorder %s79, 0
      %p694 = por %p692, %p693
      %s695 = ssub.s32 %s73, %s80
      %p696 = scmp.eq.s32.totalorder %s695, 0
      %s698 = sadd.s32 %s697, 1
      %s699 = scalar_select %p696, %s697, %s698
      %p702 = pneg %p696
      %p703 = scmp.eq.s32.totalorder %s73, 1
      %p704 = por %p702, %p703
      %p705 = scmp.ne.s32.totalorder %s697, %s700
      %p706 = scmp.eq.s32.totalorder %s73, 0
      %p707 = por %p705, %p706
      %p708 = scmp.ne.s32.totalorder %s697, %s700
      %p709 = scmp.eq.s32.totalorder %s78, 1
      %p710 = por %p708, %p709
      %p711 = scmp.ne.s32.totalorder %s700, %s701
      %p712 = scmp.eq.s32.totalorder %s78, 0
      %p713 = por %p711, %p712
      %p714 = scmp.ne.s32.totalorder %s700, %s701
      %p715 = scmp.eq.s32.totalorder %s79, 1
      %p716 = por %p714, %p715
      %p718 = scmp.ne.s32.totalorder %s701, %s717
      %p719 = scmp.eq.s32.totalorder %s79, 0
      %p720 = por %p718, %p719
      %p721 = scmp.le.s32.totalorder 1, %s73
      %p722 = scmp.lt.s32.totalorder %s73, 3
      %p723 = pnand %p721, %p722
      %p724 = pneg %p723
      // Predicated region
      $region9: #{base_ctc_forward.12} parent=5 // pred_check
        _
      $region10: #{base_ctc_forward.12} parent=5 // pred_check_branch
        %726 = sbr.rel (%p723) target = $region12
      $region11: #{base_ctc_forward.12} parent=5 // pred_region
        %s727 = ssub.s32 %s73, 1
        // Predicated region
        $region13: #{base_ctc_forward.12} parent=11 // pred_check
          %p728 = pneg %p120
        $region14: #{base_ctc_forward.12} parent=11 // pred_check_branch
          %730 = sbr.rel (%p728) target = $region16
        $region15: #{base_ctc_forward.12} parent=11 // pred_region
          %s732 = ssub.s32 16, 16
          %733 = vsyncadd [#allocation3], %s732
          %s735 = sshll.u32 [#allocation2], 4
          %s736 = int_to_ptr.vmem [resolvable:$true] %s735
          %738 = dma.hbm_to_vmem [thread:$0]  %s3, 16, %s736, [#allocation3]
        $region16: #{base_ctc_forward.12} parent=11 // pred_fallthru
          _
        // Predicated region
        $region17: #{base_ctc_forward.12} parent=11 // pred_check
          %p739 = pneg %p141
        $region18: #{base_ctc_forward.12} parent=11 // pred_check_branch
          %741 = sbr.rel (%p739) target = $region20
        $region19: #{base_ctc_forward.12} parent=11 // pred_region
          %s743 = ssub.s32 16, 16
          %744 = vsyncadd [#allocation5], %s743
          %s746 = sshll.u32 [#allocation4], 4
          %s747 = int_to_ptr.vmem [resolvable:$true] %s746
          %749 = dma.hbm_to_vmem [thread:$0]  %s5, 16, %s747, [#allocation5]
        $region20: #{base_ctc_forward.12} parent=11 // pred_fallthru
          _
        // Predicated region
        $region21: #{base_ctc_forward.12} parent=11 // pred_check
          %p750 = pneg %p162
        $region22: #{base_ctc_forward.12} parent=11 // pred_check_branch
          %752 = sbr.rel (%p750) target = $region24
        $region23: #{base_ctc_forward.12} parent=11 // pred_region
          _
        $region24: #{base_ctc_forward.12} parent=11 // pred_fallthru
          _
        // Predicated region
        $region25: #{base_ctc_forward.12} parent=11 // pred_check
          %p753 = pneg %p183
        $region26: #{base_ctc_forward.12} parent=11 // pred_check_branch
          %755 = sbr.rel (%p753) target = $region28
        $region27: #{base_ctc_forward.12} parent=11 // pred_region
          _
        $region28: #{base_ctc_forward.12} parent=11 // pred_fallthru
          _
        // Predicated region
        $region29: #{base_ctc_forward.12} parent=11 // pred_check
          %p756 = pneg %p204
        $region30: #{base_ctc_forward.12} parent=11 // pred_check_branch
          %758 = sbr.rel (%p756) target = $region32
        $region31: #{base_ctc_forward.12} parent=11 // pred_region
          _
        $region32: #{base_ctc_forward.12} parent=11 // pred_fallthru
          _
        // Predicated region
        $region33: #{base_ctc_forward.12} parent=11 // pred_check
          %p759 = pneg %p225
        $region34: #{base_ctc_forward.12} parent=11 // pred_check_branch
          %761 = sbr.rel (%p759) target = $region36
        $region35: #{base_ctc_forward.12} parent=11 // pred_region
          %s763 = ssub.s32 16, 16
          %764 = vsyncadd [#allocation5], %s763
          %s766 = sshll.u32 [#allocation6], 4
          %s767 = int_to_ptr.vmem [resolvable:$true] %s766
          %769 = dma.hbm_to_vmem [thread:$0]  %s13, 16, %s767, [#allocation5]
        $region36: #{base_ctc_forward.12} parent=11 // pred_fallthru
          _
        // Predicated region
        $region37: #{base_ctc_forward.12} parent=11 // pred_check
          %p770 = pneg %p246
        $region38: #{base_ctc_forward.12} parent=11 // pred_check_branch
          %772 = sbr.rel (%p770) target = $region40
        $region39: #{base_ctc_forward.12} parent=11 // pred_region
          %s774 = ssub.s32 16, 16
          %775 = vsyncadd [#allocation8], %s774
          %s777 = sshll.u32 [#allocation7], 4
          %s778 = int_to_ptr.vmem [resolvable:$true] %s777
          %780 = dma.hbm_to_vmem [thread:$0]  %s15, 16, %s778, [#allocation8]
        $region40: #{base_ctc_forward.12} parent=11 // pred_fallthru
          _
        // Predicated region
        $region41: #{base_ctc_forward.12} parent=11 // pred_check
          %p781 = pneg %p267
        $region42: #{base_ctc_forward.12} parent=11 // pred_check_branch
          %783 = sbr.rel (%p781) target = $region44
        $region43: #{base_ctc_forward.12} parent=11 // pred_region
          %s785 = ssub.s32 16, 16
          %786 = vsyncadd [#allocation8], %s785
          %s788 = sshll.u32 [#allocation9], 4
          %s789 = int_to_ptr.vmem [resolvable:$true] %s788
          %791 = dma.hbm_to_vmem [thread:$0]  %s17, 16, %s789, [#allocation8]
        $region44: #{base_ctc_forward.12} parent=11 // pred_fallthru
          _
        // Predicated region
        $region45: #{base_ctc_forward.12} parent=11 // pred_check
          %p792 = pneg %p288
        $region46: #{base_ctc_forward.12} parent=11 // pred_check_branch
          %794 = sbr.rel (%p792) target = $region48
        $region47: #{base_ctc_forward.12} parent=11 // pred_region
          _
        $region48: #{base_ctc_forward.12} parent=11 // pred_fallthru
          _
        // Predicated region
        $region49: #{base_ctc_forward.12} parent=11 // pred_check
          %p795 = pneg %p309
        $region50: #{base_ctc_forward.12} parent=11 // pred_check_branch
          %797 = sbr.rel (%p795) target = $region52
        $region51: #{base_ctc_forward.12} parent=11 // pred_region
          _
        $region52: #{base_ctc_forward.12} parent=11 // pred_fallthru
          _
        // Predicated region
        $region53: #{base_ctc_forward.12} parent=11 // pred_check
          %p798 = pneg %p330
        $region54: #{base_ctc_forward.12} parent=11 // pred_check_branch
          %800 = sbr.rel (%p798) target = $region56
        $region55: #{base_ctc_forward.12} parent=11 // pred_region
          _
        $region56: #{base_ctc_forward.12} parent=11 // pred_fallthru
          _
        // Predicated region
        $region57: #{base_ctc_forward.12} parent=11 // pred_check
          %p801 = pneg %p351
        $region58: #{base_ctc_forward.12} parent=11 // pred_check_branch
          %803 = sbr.rel (%p801) target = $region60
        $region59: #{base_ctc_forward.12} parent=11 // pred_region
          %s805 = ssub.s32 16, 16
          %806 = vsyncadd [#allocation11], %s805
          %s808 = sshll.u32 [#allocation10], 4
          %s809 = int_to_ptr.vmem [resolvable:$true] %s808
          %811 = dma.hbm_to_vmem [thread:$0]  %s25, 16, %s809, [#allocation11]
        $region60: #{base_ctc_forward.12} parent=11 // pred_fallthru
          _
        // Predicated region
        $region61: #{base_ctc_forward.12} parent=11 // pred_check
          %p812 = pneg %p372
        $region62: #{base_ctc_forward.12} parent=11 // pred_check_branch
          %814 = sbr.rel (%p812) target = $region64
        $region63: #{base_ctc_forward.12} parent=11 // pred_region
          %s816 = ssub.s32 16, 16
          %817 = vsyncadd [#allocation11], %s816
          %s819 = sshll.u32 [#allocation12], 4
          %s820 = int_to_ptr.vmem [resolvable:$true] %s819
          %822 = dma.hbm_to_vmem [thread:$0]  %s27, 16, %s820, [#allocation11]
        $region64: #{base_ctc_forward.12} parent=11 // pred_fallthru
          _
        // Predicated region
        $region65: #{base_ctc_forward.12} parent=11 // pred_check
          %p823 = pneg %p393
        $region66: #{base_ctc_forward.12} parent=11 // pred_check_branch
          %825 = sbr.rel (%p823) target = $region68
        $region67: #{base_ctc_forward.12} parent=11 // pred_region
          %s827 = ssub.s32 16, 16
          %828 = vsyncadd [#allocation14], %s827
          %s830 = sshll.u32 [#allocation13], 4
          %s831 = int_to_ptr.vmem [resolvable:$true] %s830
          %833 = dma.hbm_to_vmem [thread:$0]  %s29, 16, %s831, [#allocation14]
        $region68: #{base_ctc_forward.12} parent=11 // pred_fallthru
          _
        // Predicated region
        $region69: #{base_ctc_forward.12} parent=11 // pred_check
          %p834 = pneg %p414
        $region70: #{base_ctc_forward.12} parent=11 // pred_check_branch
          %836 = sbr.rel (%p834) target = $region72
        $region71: #{base_ctc_forward.12} parent=11 // pred_region
          _
        $region72: #{base_ctc_forward.12} parent=11 // pred_fallthru
          _
        // Predicated region
        $region73: #{base_ctc_forward.12} parent=11 // pred_check
          %p837 = pneg %p435
        $region74: #{base_ctc_forward.12} parent=11 // pred_check_branch
          %839 = sbr.rel (%p837) target = $region76
        $region75: #{base_ctc_forward.12} parent=11 // pred_region
          _
        $region76: #{base_ctc_forward.12} parent=11 // pred_fallthru
          _
        // Predicated region
        $region77: #{base_ctc_forward.12} parent=11 // pred_check
          %p840 = pneg %p456
        $region78: #{base_ctc_forward.12} parent=11 // pred_check_branch
          %842 = sbr.rel (%p840) target = $region80
        $region79: #{base_ctc_forward.12} parent=11 // pred_region
          _
        $region80: #{base_ctc_forward.12} parent=11 // pred_fallthru
          _
        // Predicated region
        $region81: #{base_ctc_forward.12} parent=11 // pred_check
          %p843 = pneg %p477
        $region82: #{base_ctc_forward.12} parent=11 // pred_check_branch
          %845 = sbr.rel (%p843) target = $region84
        $region83: #{base_ctc_forward.12} parent=11 // pred_region
          %s847 = ssub.s32 16, 16
          %848 = vsyncadd [#allocation14], %s847
          %s850 = sshll.u32 [#allocation15], 4
          %s851 = int_to_ptr.vmem [resolvable:$true] %s850
          %853 = dma.hbm_to_vmem [thread:$0]  %s37, 16, %s851, [#allocation14]
        $region84: #{base_ctc_forward.12} parent=11 // pred_fallthru
          _
        // Predicated region
        $region85: #{base_ctc_forward.12} parent=11 // pred_check
          %p854 = pneg %p498
        $region86: #{base_ctc_forward.12} parent=11 // pred_check_branch
          %856 = sbr.rel (%p854) target = $region88
        $region87: #{base_ctc_forward.12} parent=11 // pred_region
          _
        $region88: #{base_ctc_forward.12} parent=11 // pred_fallthru
          _
        // Predicated region
        $region89: #{base_ctc_forward.12} parent=11 // pred_check
          %p857 = pneg %p519
        $region90: #{base_ctc_forward.12} parent=11 // pred_check_branch
          %859 = sbr.rel (%p857) target = $region92
        $region91: #{base_ctc_forward.12} parent=11 // pred_region
          %s861 = ssub.s32 16, 16
          %862 = vsyncadd [#allocation17], %s861
          %s864 = sshll.u32 [#allocation16], 4
          %s865 = int_to_ptr.vmem [resolvable:$true] %s864
          %867 = dma.hbm_to_vmem [thread:$0]  %s41, 16, %s865, [#allocation17]
        $region92: #{base_ctc_forward.12} parent=11 // pred_fallthru
          _
        // Predicated region
        $region93: #{base_ctc_forward.12} parent=11 // pred_check
          %p868 = pneg %p540
        $region94: #{base_ctc_forward.12} parent=11 // pred_check_branch
          %870 = sbr.rel (%p868) target = $region96
        $region95: #{base_ctc_forward.12} parent=11 // pred_region
          %s872 = ssub.s32 16, 16
          %873 = vsyncadd [#allocation17], %s872
          %s875 = sshll.u32 [#allocation18], 4
          %s876 = int_to_ptr.vmem [resolvable:$true] %s875
          %878 = dma.hbm_to_vmem [thread:$0]  %s43, 16, %s876, [#allocation17]
        $region96: #{base_ctc_forward.12} parent=11 // pred_fallthru
          _
        // Predicated region
        $region97: #{base_ctc_forward.12} parent=11 // pred_check
          %p879 = pneg %p561
        $region98: #{base_ctc_forward.12} parent=11 // pred_check_branch
          %881 = sbr.rel (%p879) target = $region100
        $region99: #{base_ctc_forward.12} parent=11 // pred_region
          %s883 = ssub.s32 16, 16
          %884 = vsyncadd [#allocation20], %s883
          %s886 = sshll.u32 [#allocation19], 4
          %s887 = int_to_ptr.vmem [resolvable:$true] %s886
          %889 = dma.hbm_to_vmem [thread:$0]  %s45, 16, %s887, [#allocation20]
        $region100: #{base_ctc_forward.12} parent=11 // pred_fallthru
          _
        // Predicated region
        $region101: #{base_ctc_forward.12} parent=11 // pred_check
          %p890 = pneg %p582
        $region102: #{base_ctc_forward.12} parent=11 // pred_check_branch
          %892 = sbr.rel (%p890) target = $region104
        $region103: #{base_ctc_forward.12} parent=11 // pred_region
          _
        $region104: #{base_ctc_forward.12} parent=11 // pred_fallthru
          _
        // Predicated region
        $region105: #{base_ctc_forward.12} parent=11 // pred_check
          %p893 = pneg %p603
        $region106: #{base_ctc_forward.12} parent=11 // pred_check_branch
          %895 = sbr.rel (%p893) target = $region108
        $region107: #{base_ctc_forward.12} parent=11 // pred_region
          _
        $region108: #{base_ctc_forward.12} parent=11 // pred_fallthru
          _
        // Predicated region
        $region109: #{base_ctc_forward.12} parent=11 // pred_check
          %p896 = pneg %p624
        $region110: #{base_ctc_forward.12} parent=11 // pred_check_branch
          %898 = sbr.rel (%p896) target = $region112
        $region111: #{base_ctc_forward.12} parent=11 // pred_region
          _
        $region112: #{base_ctc_forward.12} parent=11 // pred_fallthru
          _
        // Predicated region
        $region113: #{base_ctc_forward.12} parent=11 // pred_check
          %p899 = pneg %p645
        $region114: #{base_ctc_forward.12} parent=11 // pred_check_branch
          %901 = sbr.rel (%p899) target = $region116
        $region115: #{base_ctc_forward.12} parent=11 // pred_region
          %s903 = ssub.s32 16, 16
          %904 = vsyncadd [#allocation20], %s903
          %s906 = sshll.u32 [#allocation21], 4
          %s907 = int_to_ptr.vmem [resolvable:$true] %s906
          %909 = dma.hbm_to_vmem [thread:$0]  %s53, 16, %s907, [#allocation20]
        $region116: #{base_ctc_forward.12} parent=11 // pred_fallthru
          _
        // Predicated region
        $region117: #{base_ctc_forward.12} parent=11 // pred_check
          %p910 = pneg %p666
        $region118: #{base_ctc_forward.12} parent=11 // pred_check_branch
          %912 = sbr.rel (%p910) target = $region120
        $region119: #{base_ctc_forward.12} parent=11 // pred_region
          %s914 = ssub.s32 16, 16
          %915 = vsyncadd [#allocation23], %s914
          %s917 = sshll.u32 [#allocation22], 4
          %s918 = int_to_ptr.vmem [resolvable:$true] %s917
          %920 = dma.hbm_to_vmem [thread:$0]  %s55, 16, %s918, [#allocation23]
        $region120: #{base_ctc_forward.12} parent=11 // pred_fallthru
          _
        // Predicated region
        $region121: #{base_ctc_forward.12} parent=11 // pred_check
          %p921 = pneg %p687
        $region122: #{base_ctc_forward.12} parent=11 // pred_check_branch
          %923 = sbr.rel (%p921) target = $region124
        $region123: #{base_ctc_forward.12} parent=11 // pred_region
          %s925 = ssub.s32 16, 16
          %926 = vsyncadd [#allocation23], %s925
          %s928 = sshll.u32 [#allocation24], 4
          %s929 = int_to_ptr.vmem [resolvable:$true] %s928
          %931 = dma.hbm_to_vmem [thread:$0]  %s57, 16, %s929, [#allocation23]
        $region124: #{base_ctc_forward.12} parent=11 // pred_fallthru
          _
      $region12: #{base_ctc_forward.12} parent=5 // pred_fallthru
        _
      %p932 = scmp.lt.s32.totalorder %s73, 2
      // Predicated region
      $region125: #{base_ctc_forward.12} parent=5 // pred_check
        %p933 = pneg %p932
      $region126: #{base_ctc_forward.12} parent=5 // pred_check_branch
        %935 = sbr.rel (%p933) target = $region128
      $region127: #{base_ctc_forward.12} parent=5 // pred_region
        // Predicated region
        $region129: #{base_ctc_forward.12} parent=127 // pred_check
          %p936 = pneg %p93
        $region130: #{base_ctc_forward.12} parent=127 // pred_check_branch
          %938 = sbr.rel (%p936) target = $region132
        $region131: #{base_ctc_forward.12} parent=127 // pred_region
          %p939 = scmp.lt.s32.totalorder %s73, 1
          %s940 = scalar_select %p939, %s73, 1
          %s941 = smul.addr %s940, 8
          %s942 = scalar_lea.vmem %s1, %s941
        $region132: #{base_ctc_forward.12} parent=127 // pred_fallthru
          _
      $region128: #{base_ctc_forward.12} parent=5 // pred_fallthru
        _
      %p943 = scmp.le.s32.totalorder 1, %s73
      %p944 = scmp.lt.s32.totalorder %s73, 3
      %p945 = pnand %p943, %p944
      %p946 = pneg %p945
      // Predicated region
      $region133: #{base_ctc_forward.12} parent=5 // pred_check
        _
      $region134: #{base_ctc_forward.12} parent=5 // pred_check_branch
        %948 = sbr.rel (%p945) target = $region136
      $region135: #{base_ctc_forward.12} parent=5 // pred_region
        %s949 = ssub.s32 %s73, 1
        // Predicated region
        $region137: #{base_ctc_forward.12} parent=135 // pred_check
          %p950 = pneg %p120
        $region138: #{base_ctc_forward.12} parent=135 // pred_check_branch
          %952 = sbr.rel (%p950) target = $region140
        $region139: #{base_ctc_forward.12} parent=135 // pred_region
          %953 = dma.done [#allocation3], 16
        $region140: #{base_ctc_forward.12} parent=135 // pred_fallthru
          _
        // Predicated region
        $region141: #{base_ctc_forward.12} parent=135 // pred_check
          %p954 = pneg %p141
        $region142: #{base_ctc_forward.12} parent=135 // pred_check_branch
          %956 = sbr.rel (%p954) target = $region144
        $region143: #{base_ctc_forward.12} parent=135 // pred_region
          %957 = dma.done [#allocation5], 16
        $region144: #{base_ctc_forward.12} parent=135 // pred_fallthru
          _
        // Predicated region
        $region145: #{base_ctc_forward.12} parent=135 // pred_check
          %p958 = pneg %p225
        $region146: #{base_ctc_forward.12} parent=135 // pred_check_branch
          %960 = sbr.rel (%p958) target = $region148
        $region147: #{base_ctc_forward.12} parent=135 // pred_region
          %961 = dma.done [#allocation5], 16
        $region148: #{base_ctc_forward.12} parent=135 // pred_fallthru
          _
        // Predicated region
        $region149: #{base_ctc_forward.12} parent=135 // pred_check
          %p962 = pneg %p246
        $region150: #{base_ctc_forward.12} parent=135 // pred_check_branch
          %964 = sbr.rel (%p962) target = $region152
        $region151: #{base_ctc_forward.12} parent=135 // pred_region
          %965 = dma.done [#allocation8], 16
        $region152: #{base_ctc_forward.12} parent=135 // pred_fallthru
          _
        // Predicated region
        $region153: #{base_ctc_forward.12} parent=135 // pred_check
          %p966 = pneg %p267
        $region154: #{base_ctc_forward.12} parent=135 // pred_check_branch
          %968 = sbr.rel (%p966) target = $region156
        $region155: #{base_ctc_forward.12} parent=135 // pred_region
          %969 = dma.done [#allocation8], 16
        $region156: #{base_ctc_forward.12} parent=135 // pred_fallthru
          _
        // Predicated region
        $region157: #{base_ctc_forward.12} parent=135 // pred_check
          %p970 = pneg %p351
        $region158: #{base_ctc_forward.12} parent=135 // pred_check_branch
          %972 = sbr.rel (%p970) target = $region160
        $region159: #{base_ctc_forward.12} parent=135 // pred_region
          %973 = dma.done [#allocation11], 16
        $region160: #{base_ctc_forward.12} parent=135 // pred_fallthru
          _
        // Predicated region
        $region161: #{base_ctc_forward.12} parent=135 // pred_check
          %p974 = pneg %p372
        $region162: #{base_ctc_forward.12} parent=135 // pred_check_branch
          %976 = sbr.rel (%p974) target = $region164
        $region163: #{base_ctc_forward.12} parent=135 // pred_region
          %977 = dma.done [#allocation11], 16
        $region164: #{base_ctc_forward.12} parent=135 // pred_fallthru
          _
        // Predicated region
        $region165: #{base_ctc_forward.12} parent=135 // pred_check
          %p978 = pneg %p393
        $region166: #{base_ctc_forward.12} parent=135 // pred_check_branch
          %980 = sbr.rel (%p978) target = $region168
        $region167: #{base_ctc_forward.12} parent=135 // pred_region
          %981 = dma.done [#allocation14], 16
        $region168: #{base_ctc_forward.12} parent=135 // pred_fallthru
          _
        // Predicated region
        $region169: #{base_ctc_forward.12} parent=135 // pred_check
          %p982 = pneg %p477
        $region170: #{base_ctc_forward.12} parent=135 // pred_check_branch
          %984 = sbr.rel (%p982) target = $region172
        $region171: #{base_ctc_forward.12} parent=135 // pred_region
          %985 = dma.done [#allocation14], 16
        $region172: #{base_ctc_forward.12} parent=135 // pred_fallthru
          _
        // Predicated region
        $region173: #{base_ctc_forward.12} parent=135 // pred_check
          %p986 = pneg %p519
        $region174: #{base_ctc_forward.12} parent=135 // pred_check_branch
          %988 = sbr.rel (%p986) target = $region176
        $region175: #{base_ctc_forward.12} parent=135 // pred_region
          %989 = dma.done [#allocation17], 16
        $region176: #{base_ctc_forward.12} parent=135 // pred_fallthru
          _
        // Predicated region
        $region177: #{base_ctc_forward.12} parent=135 // pred_check
          %p990 = pneg %p540
        $region178: #{base_ctc_forward.12} parent=135 // pred_check_branch
          %992 = sbr.rel (%p990) target = $region180
        $region179: #{base_ctc_forward.12} parent=135 // pred_region
          %993 = dma.done [#allocation17], 16
        $region180: #{base_ctc_forward.12} parent=135 // pred_fallthru
          _
        // Predicated region
        $region181: #{base_ctc_forward.12} parent=135 // pred_check
          %p994 = pneg %p561
        $region182: #{base_ctc_forward.12} parent=135 // pred_check_branch
          %996 = sbr.rel (%p994) target = $region184
        $region183: #{base_ctc_forward.12} parent=135 // pred_region
          %997 = dma.done [#allocation20], 16
        $region184: #{base_ctc_forward.12} parent=135 // pred_fallthru
          _
        // Predicated region
        $region185: #{base_ctc_forward.12} parent=135 // pred_check
          %p998 = pneg %p645
        $region186: #{base_ctc_forward.12} parent=135 // pred_check_branch
          %1000 = sbr.rel (%p998) target = $region188
        $region187: #{base_ctc_forward.12} parent=135 // pred_region
          %1001 = dma.done [#allocation20], 16
        $region188: #{base_ctc_forward.12} parent=135 // pred_fallthru
          _
        // Predicated region
        $region189: #{base_ctc_forward.12} parent=135 // pred_check
          %p1002 = pneg %p666
        $region190: #{base_ctc_forward.12} parent=135 // pred_check_branch
          %1004 = sbr.rel (%p1002) target = $region192
        $region191: #{base_ctc_forward.12} parent=135 // pred_region
          %1005 = dma.done [#allocation23], 16
        $region192: #{base_ctc_forward.12} parent=135 // pred_fallthru
          _
        // Predicated region
        $region193: #{base_ctc_forward.12} parent=135 // pred_check
          %p1006 = pneg %p687
        $region194: #{base_ctc_forward.12} parent=135 // pred_check_branch
          %1008 = sbr.rel (%p1006) target = $region196
        $region195: #{base_ctc_forward.12} parent=135 // pred_region
          %1009 = dma.done [#allocation23], 16
        $region196: #{base_ctc_forward.12} parent=135 // pred_fallthru
          _
        %p1010 = scmp.lt.s32.totalorder %s78, 1
        %s1011 = scalar_select %p1010, %s78, 1
        %s1012 = smul.addr %s1011, 8
        %s1013 = scalar_lea.vmem %s1, %s1012
        %p1014 = pneg %p99
        %p1015 = pneg %p96
        %p1016 = pneg %p120
        %p1017 = pneg %p117
        %p1018 = pneg %p141
        %p1019 = pneg %p138
        %p1020 = pneg %p162
        %p1021 = pneg %p159
        %p1022 = pneg %p183
        %p1023 = pneg %p180
        %p1024 = pneg %p204
        %p1025 = pneg %p201
        %p1026 = pneg %p225
        %p1027 = pneg %p222
        %p1028 = pneg %p246
        %p1029 = pneg %p243
        %p1030 = pneg %p267
        %p1031 = pneg %p264
        %p1032 = pneg %p288
        %p1033 = pneg %p285
        %p1034 = pneg %p309
        %p1035 = pneg %p306
        %p1036 = pneg %p330
        %p1037 = pneg %p327
        %p1038 = pneg %p351
        %p1039 = pneg %p348
        %p1040 = pneg %p372
        %p1041 = pneg %p369
        %p1042 = pneg %p393
        %p1043 = pneg %p390
        %p1044 = pneg %p414
        %p1045 = pneg %p411
        %p1046 = pneg %p435
        %p1047 = pneg %p432
        %p1048 = pneg %p456
        %p1049 = pneg %p453
        %p1050 = pneg %p477
        %p1051 = pneg %p474
        %p1052 = pneg %p498
        %p1053 = pneg %p495
        %p1054 = pneg %p519
        %p1055 = pneg %p516
        %p1056 = pneg %p540
        %p1057 = pneg %p537
        %p1058 = pneg %p561
        %p1059 = pneg %p558
        %p1060 = pneg %p582
        %p1061 = pneg %p579
        %p1062 = pneg %p603
        %p1063 = pneg %p600
        %p1064 = pneg %p624
        %p1065 = pneg %p621
        %p1066 = pneg %p645
        %p1067 = pneg %p642
        %p1068 = pneg %p666
        %p1069 = pneg %p663
        %p1070 = pneg %p687
        %p1071 = pneg %p684
        %p1072 = pneg %p713
        %p1073 = pneg %p710
        %p1074 = scmp.lt.s32.totalorder %s78, 1
        %s1075 = scalar_select %p1074, %s78, 1
        %s1076 = smul.addr %s1075, 8
        %s1077 = scalar_lea.vmem %s59, %s1076
        %p1078 = scmp.lt.s32.totalorder %s78, 1
        %s1079 = scalar_select %p1078, %s78, 1
        %s1080 = smul.addr %s1079, 8
        %s1081 = scalar_lea.vmem %s1, %s1080
        %p1082 = scmp.lt.s32.totalorder %s78, 1
        %s1083 = scalar_select %p1082, %s78, 1
        %s1084 = smul.addr %s1083, 8
        %s1085 = scalar_lea.vmem %s59, %s1084
        %v1087 = vld [vmem:[%s1081] sm:$0xff]
        %1088 = vadd.xlane.f32.xlu0 %v1087
        %v1089 = vpop.xlane.xlu0 %1088
        %v1090 = vrcp.pop 128.0
        %v1091 = vmul.f32 %v1089, %v1090
        %v1092 = vsub.f32 %v1087, %v1091
        %v1093 = vmul.f32 %v1092, %v1092
        %1094 = vadd.xlane.f32.xlu0 %v1093
        %v1095 = vpop.xlane.xlu0 %1094
        %v1096 = vmul.f32 %v1095, %v1090
        %v1097 = vadd.f32 %v1096, 1e-05
        %v1098 = vrsqrt.pop %v1097
        %v1099 = vmul.f32 %v1092, %v1098
        %v1100 = vld [vmem:[#allocation2] sm:$0x1]
        %v1102 = vlaneseq
        %v1103 = vshrl.u32 %v1102, 7
        %v1104 = vsub.s32 0, %v1103
        %v1105 = vrot.slane %v1100, %v1104
        %v1107 = vmul.f32 %v1099, %v1105
        %v1108 = vld [vmem:[#allocation4] sm:$0x1]
        %v1110 = vlaneseq
        %v1111 = vshrl.u32 %v1110, 7
        %v1112 = vsub.s32 0, %v1111
        %v1113 = vrot.slane %v1108, %v1112
        %v1115 = vadd.f32 %v1107, %v1113
        %v1116 = vpack.c.bf16 %v1115, %v1115
        %v1117 = vld [vmem:[%s7] sm:$0xff]
        %v1118 = vld [vmem:[%s7 + $0x8] sm:$0xff]
        %v1119 = vld [vmem:[%s7 + $0x10] sm:$0xff]
        %v1120 = vld [vmem:[%s7 + $0x18] sm:$0xff]
        %v1121 = vld [vmem:[%s7 + $0x20] sm:$0xff]
        %v1122 = vld [vmem:[%s7 + $0x28] sm:$0xff]
        %v1123 = vld [vmem:[%s7 + $0x30] sm:$0xff]
        %v1124 = vld [vmem:[%s7 + $0x38] sm:$0xff]
        %v1125 = vld [vmem:[%s7 + $0x40] sm:$0xff]
        %v1126 = vld [vmem:[%s7 + $0x48] sm:$0xff]
        %v1127 = vld [vmem:[%s7 + $0x50] sm:$0xff]
        %v1128 = vld [vmem:[%s7 + $0x58] sm:$0xff]
        %v1129 = vld [vmem:[%s7 + $0x60] sm:$0xff]
        %v1130 = vld [vmem:[%s7 + $0x68] sm:$0xff]
        %v1131 = vld [vmem:[%s7 + $0x70] sm:$0xff]
        %v1132 = vld [vmem:[%s7 + $0x78] sm:$0xff]
        %v1133 = vld [vmem:[%s9] sm:$0x3]
        %v1135 = vlaneseq
        %v1136 = vshrl.u32 %v1135, 7
        %v1137 = vsub.s32 0, %v1136
        %v1138 = vrot.slane %v1133, %v1137
        %v1139 = vlaneseq
        %v1140 = vshrl.u32 %v1139, 7
        %v1141 = vsub.s32 1, %v1140
        %v1142 = vrot.slane %v1133, %v1141
        %v1161 = vunpack.c.l.b16 %v1117
        %v1162 = vunpack.c.h.b16 %v1117
        %v1163 = vunpack.c.l.b16 %v1118
        %v1164 = vunpack.c.h.b16 %v1118
        %v1165 = vunpack.c.l.b16 %v1119
        %v1166 = vunpack.c.h.b16 %v1119
        %v1167 = vunpack.c.l.b16 %v1120
        %v1168 = vunpack.c.h.b16 %v1120
        %v1169 = vunpack.c.l.b16 %v1121
        %v1170 = vunpack.c.h.b16 %v1121
        %v1171 = vunpack.c.l.b16 %v1122
        %v1172 = vunpack.c.h.b16 %v1122
        %v1173 = vunpack.c.l.b16 %v1123
        %v1174 = vunpack.c.h.b16 %v1123
        %v1175 = vunpack.c.l.b16 %v1124
        %v1176 = vunpack.c.h.b16 %v1124
        %v1177 = vunpack.c.l.b16 %v1125
        %v1178 = vunpack.c.h.b16 %v1125
        %v1179 = vunpack.c.l.b16 %v1126
        %v1180 = vunpack.c.h.b16 %v1126
        %v1181 = vunpack.c.l.b16 %v1127
        %v1182 = vunpack.c.h.b16 %v1127
        %v1183 = vunpack.c.l.b16 %v1128
        %v1184 = vunpack.c.h.b16 %v1128
        %v1185 = vunpack.c.l.b16 %v1129
        %v1186 = vunpack.c.h.b16 %v1129
        %v1187 = vunpack.c.l.b16 %v1130
        %v1188 = vunpack.c.h.b16 %v1130
        %v1189 = vunpack.c.l.b16 %v1131
        %v1190 = vunpack.c.h.b16 %v1131
        %v1191 = vunpack.c.l.b16 %v1132
        %v1192 = vunpack.c.h.b16 %v1132
        %v1193 = vpack.c.b16 %v1163, %v1161
        %v1194 = vpack.c.b16 %v1164, %v1162
        %v1195 = vpack.c.b16 %v1167, %v1165
        %v1196 = vpack.c.b16 %v1168, %v1166
        %v1197 = vpack.c.b16 %v1171, %v1169
        %v1198 = vpack.c.b16 %v1172, %v1170
        %v1199 = vpack.c.b16 %v1175, %v1173
        %v1200 = vpack.c.b16 %v1176, %v1174
        %v1201 = vpack.c.b16 %v1179, %v1177
        %v1202 = vpack.c.b16 %v1180, %v1178
        %v1203 = vpack.c.b16 %v1183, %v1181
        %v1204 = vpack.c.b16 %v1184, %v1182
        %v1205 = vpack.c.b16 %v1187, %v1185
        %v1206 = vpack.c.b16 %v1188, %v1186
        %v1207 = vpack.c.b16 %v1191, %v1189
        %v1208 = vpack.c.b16 %v1192, %v1190
        %1225 = vmatprep.subr.bf16.mxu0 %v1194
        %1226 = vmatpush1.bf16.msra.mxu0 %v1193
        %1227 = vmatprep.subr.bf16.mxu0 %v1196
        %1228 = vmatpush1.bf16.msra.mxu0 %v1195
        %1229 = vmatprep.subr.bf16.mxu0 %v1198
        %1230 = vmatpush1.bf16.msra.mxu0 %v1197
        %1231 = vmatprep.subr.bf16.mxu0 %v1200
        %1232 = vmatpush1.bf16.msra.mxu0 %v1199
        %1233 = vmatprep.subr.bf16.mxu0 %v1202
        %1234 = vmatpush1.bf16.msra.mxu0 %v1201
        %1235 = vmatprep.subr.bf16.mxu0 %v1204
        %1236 = vmatpush1.bf16.msra.mxu0 %v1203
        %1237 = vmatprep.subr.bf16.mxu0 %v1206
        %1238 = vmatpush1.bf16.msra.mxu0 %v1205
        %1239 = vmatprep.subr.bf16.mxu0 %v1208
        %1240 = vmatpush1.bf16.msra.mxu0 %v1207
        %1241 = vmatprep.subr.bf16.mxu0 0
        %1242 = vmatpush1.bf16.msra.mxu0 0
        %1243 = vmatprep.subr.bf16.mxu0 0
        %1244 = vmatpush1.bf16.msra.mxu0 0
        %1245 = vmatprep.subr.bf16.mxu0 0
        %1246 = vmatpush1.bf16.msra.mxu0 0
        %1247 = vmatprep.subr.bf16.mxu0 0
        %1248 = vmatpush1.bf16.msra.mxu0 0
        %1249 = vmatprep.subr.bf16.mxu0 0
        %1250 = vmatpush1.bf16.msra.mxu0 0
        %1251 = vmatprep.subr.bf16.mxu0 0
        %1252 = vmatpush1.bf16.msra.mxu0 0
        %1253 = vmatprep.subr.bf16.mxu0 0
        %1254 = vmatpush1.bf16.msra.mxu0 0
        %1255 = vmatprep.subr.bf16.mxu0 0
        %1256 = vmatpush1.bf16.msra.mxu0 0
        %1257 = vmatprep.mubr.bf16.mxu0 0
        %1258 = vmatmul.mubr.bf16.gmra.mrb[0].mxu0 %v1116
        %v1259 = vpop.f32.mrb[0].mxu0
        %v1260 = vadd.f32 %v1138, %v1259
        %v1261 = vpop.f32.mrb[0].mxu0
        %v1262 = vadd.f32 %v1142, %v1261
        %v1263 = vpop.f32.mrb[0].mxu0
        %v1264 = vpop.f32.mrb[0].mxu0
        %1265 = vdwg.mxu0
        %v1266 = vxor.u32 %v1260, 2147483648
        %v1267 = vxor.u32 %v1262, 2147483648
        %v1268 = vmul.f32 %v1266, 1.442695
        %v1269 = vpow.pop %v1268
        %v1270 = vmul.f32 %v1267, 1.442695
        %v1271 = vpow.pop %v1270
        %v1272 = vadd.f32 %v1269, 1.0
        %v1273 = vadd.f32 %v1271, 1.0
        %v1274 = vrcp.pop %v1272
        %v1275 = vmul.f32 1.0, %v1274
        %v1276 = vrcp.pop %v1273
        %v1277 = vmul.f32 1.0, %v1276
        %v1278 = vmul.f32 %v1260, %v1275
        %v1279 = vmul.f32 %v1262, %v1277
        %v1280 = vpack.c.bf16 %v1278, %v1278
        %v1281 = vpack.c.bf16 %v1279, %v1279
        %v1282 = vld [vmem:[%s11] sm:$0xf]
        %v1283 = vld [vmem:[%s11 + $0x4] sm:$0xf]
        %v1284 = vld [vmem:[%s11 + $0x8] sm:$0xf]
        %v1285 = vld [vmem:[%s11 + $0xc] sm:$0xf]
        %v1286 = vld [vmem:[%s11 + $0x10] sm:$0xf]
        %v1287 = vld [vmem:[%s11 + $0x14] sm:$0xf]
        %v1288 = vld [vmem:[%s11 + $0x18] sm:$0xf]
        %v1289 = vld [vmem:[%s11 + $0x1c] sm:$0xf]
        %v1290 = vld [vmem:[%s11 + $0x20] sm:$0xf]
        %v1291 = vld [vmem:[%s11 + $0x24] sm:$0xf]
        %v1292 = vld [vmem:[%s11 + $0x28] sm:$0xf]
        %v1293 = vld [vmem:[%s11 + $0x2c] sm:$0xf]
        %v1294 = vld [vmem:[%s11 + $0x30] sm:$0xf]
        %v1295 = vld [vmem:[%s11 + $0x34] sm:$0xf]
        %v1296 = vld [vmem:[%s11 + $0x38] sm:$0xf]
        %v1297 = vld [vmem:[%s11 + $0x3c] sm:$0xf]
        %v1298 = vld [vmem:[%s11 + $0x40] sm:$0xf]
        %v1299 = vld [vmem:[%s11 + $0x44] sm:$0xf]
        %v1300 = vld [vmem:[%s11 + $0x48] sm:$0xf]
        %v1301 = vld [vmem:[%s11 + $0x4c] sm:$0xf]
        %v1302 = vld [vmem:[%s11 + $0x50] sm:$0xf]
        %v1303 = vld [vmem:[%s11 + $0x54] sm:$0xf]
        %v1304 = vld [vmem:[%s11 + $0x58] sm:$0xf]
        %v1305 = vld [vmem:[%s11 + $0x5c] sm:$0xf]
        %v1306 = vld [vmem:[%s11 + $0x60] sm:$0xf]
        %v1307 = vld [vmem:[%s11 + $0x64] sm:$0xf]
        %v1308 = vld [vmem:[%s11 + $0x68] sm:$0xf]
        %v1309 = vld [vmem:[%s11 + $0x6c] sm:$0xf]
        %v1310 = vld [vmem:[%s11 + $0x70] sm:$0xf]
        %v1311 = vld [vmem:[%s11 + $0x74] sm:$0xf]
        %v1312 = vld [vmem:[%s11 + $0x78] sm:$0xf]
        %v1313 = vld [vmem:[%s11 + $0x7c] sm:$0xf]
        %v1314 = vld [vmem:[#allocation6] sm:$0x1]
        %v1316 = vlaneseq
        %v1317 = vshrl.u32 %v1316, 7
        %v1318 = vsub.s32 0, %v1317
        %v1319 = vrot.slane %v1314, %v1318
        %v1353 = vunpack.c.l.b16 %v1282
        %v1354 = vunpack.c.l.b16 %v1283
        %v1355 = vunpack.c.l.b16 %v1284
        %v1356 = vunpack.c.l.b16 %v1285
        %v1357 = vunpack.c.l.b16 %v1286
        %v1358 = vunpack.c.l.b16 %v1287
        %v1359 = vunpack.c.l.b16 %v1288
        %v1360 = vunpack.c.l.b16 %v1289
        %v1361 = vunpack.c.l.b16 %v1290
        %v1362 = vunpack.c.l.b16 %v1291
        %v1363 = vunpack.c.l.b16 %v1292
        %v1364 = vunpack.c.l.b16 %v1293
        %v1365 = vunpack.c.l.b16 %v1294
        %v1366 = vunpack.c.l.b16 %v1295
        %v1367 = vunpack.c.l.b16 %v1296
        %v1368 = vunpack.c.l.b16 %v1297
        %v1369 = vunpack.c.l.b16 %v1298
        %v1370 = vunpack.c.l.b16 %v1299
        %v1371 = vunpack.c.l.b16 %v1300
        %v1372 = vunpack.c.l.b16 %v1301
        %v1373 = vunpack.c.l.b16 %v1302
        %v1374 = vunpack.c.l.b16 %v1303
        %v1375 = vunpack.c.l.b16 %v1304
        %v1376 = vunpack.c.l.b16 %v1305
        %v1377 = vunpack.c.l.b16 %v1306
        %v1378 = vunpack.c.l.b16 %v1307
        %v1379 = vunpack.c.l.b16 %v1308
        %v1380 = vunpack.c.l.b16 %v1309
        %v1381 = vunpack.c.l.b16 %v1310
        %v1382 = vunpack.c.l.b16 %v1311
        %v1383 = vunpack.c.l.b16 %v1312
        %v1384 = vunpack.c.l.b16 %v1313
        %v1385 = vpack.c.b16 %v1354, %v1353
        %v1386 = vpack.c.b16 %v1356, %v1355
        %v1387 = vpack.c.b16 %v1358, %v1357
        %v1388 = vpack.c.b16 %v1360, %v1359
        %v1389 = vpack.c.b16 %v1362, %v1361
        %v1390 = vpack.c.b16 %v1364, %v1363
        %v1391 = vpack.c.b16 %v1366, %v1365
        %v1392 = vpack.c.b16 %v1368, %v1367
        %v1393 = vpack.c.b16 %v1370, %v1369
        %v1394 = vpack.c.b16 %v1372, %v1371
        %v1395 = vpack.c.b16 %v1374, %v1373
        %v1396 = vpack.c.b16 %v1376, %v1375
        %v1397 = vpack.c.b16 %v1378, %v1377
        %v1398 = vpack.c.b16 %v1380, %v1379
        %v1399 = vpack.c.b16 %v1382, %v1381
        %v1400 = vpack.c.b16 %v1384, %v1383
        %1417 = vmatprep.subr.bf16.mxu0 0
        %1418 = vmatpush1.bf16.msra.mxu0 %v1385
        %1419 = vmatprep.subr.bf16.mxu0 0
        %1420 = vmatpush1.bf16.msra.mxu0 %v1386
        %1421 = vmatprep.subr.bf16.mxu0 0
        %1422 = vmatpush1.bf16.msra.mxu0 %v1387
        %1423 = vmatprep.subr.bf16.mxu0 0
        %1424 = vmatpush1.bf16.msra.mxu0 %v1388
        %1425 = vmatprep.subr.bf16.mxu0 0
        %1426 = vmatpush1.bf16.msra.mxu0 %v1389
        %1427 = vmatprep.subr.bf16.mxu0 0
        %1428 = vmatpush1.bf16.msra.mxu0 %v1390
        %1429 = vmatprep.subr.bf16.mxu0 0
        %1430 = vmatpush1.bf16.msra.mxu0 %v1391
        %1431 = vmatprep.subr.bf16.mxu0 0
        %1432 = vmatpush1.bf16.msra.mxu0 %v1392
        %1433 = vmatprep.subr.bf16.mxu0 0
        %1434 = vmatpush1.bf16.msra.mxu0 %v1393
        %1435 = vmatprep.subr.bf16.mxu0 0
        %1436 = vmatpush1.bf16.msra.mxu0 %v1394
        %1437 = vmatprep.subr.bf16.mxu0 0
        %1438 = vmatpush1.bf16.msra.mxu0 %v1395
        %1439 = vmatprep.subr.bf16.mxu0 0
        %1440 = vmatpush1.bf16.msra.mxu0 %v1396
        %1441 = vmatprep.subr.bf16.mxu0 0
        %1442 = vmatpush1.bf16.msra.mxu0 %v1397
        %1443 = vmatprep.subr.bf16.mxu0 0
        %1444 = vmatpush1.bf16.msra.mxu0 %v1398
        %1445 = vmatprep.subr.bf16.mxu0 0
        %1446 = vmatpush1.bf16.msra.mxu0 %v1399
        %1447 = vmatprep.subr.bf16.mxu0 0
        %1448 = vmatpush1.bf16.msra.mxu0 %v1400
        %1449 = vmatprep.mubr.bf16.mxu0 %v1281
        %1450 = vmatmul.mubr.bf16.gmra.mrb[0].mxu0 %v1280
        %v1451 = vpop.f32.mrb[0].mxu0
        %v1452 = vadd.f32 %v1319, %v1451
        %v1453 = vpop.f32.mrb[0].mxu0
        %v1454 = vpop.f32.mrb[0].mxu0
        %v1455 = vpop.f32.mrb[0].mxu0
        %1456 = vdwg.mxu0
        %v1457 = vmul.f32 %v1452, 0.5
        %v1458 = vadd.f32 %v1087, %v1457
        %1459 = vadd.xlane.f32.xlu0 %v1458
        %v1460 = vpop.xlane.xlu0 %1459
        %v1461 = vmul.f32 %v1460, %v1090
        %v1462 = vsub.f32 %v1458, %v1461
        %v1463 = vmul.f32 %v1462, %v1462
        %1464 = vadd.xlane.f32.xlu0 %v1463
        %v1465 = vpop.xlane.xlu0 %1464
        %v1466 = vmul.f32 %v1465, %v1090
        %v1467 = vadd.f32 %v1466, 1e-05
        %v1468 = vrsqrt.pop %v1467
        %v1469 = vmul.f32 %v1462, %v1468
        %v1470 = vld [vmem:[#allocation7] sm:$0x1]
        %v1472 = vlaneseq
        %v1473 = vshrl.u32 %v1472, 7
        %v1474 = vsub.s32 0, %v1473
        %v1475 = vrot.slane %v1470, %v1474
        %v1477 = vmul.f32 %v1469, %v1475
        %v1478 = vld [vmem:[#allocation9] sm:$0x1]
        %v1480 = vlaneseq
        %v1481 = vshrl.u32 %v1480, 7
        %v1482 = vsub.s32 0, %v1481
        %v1483 = vrot.slane %v1478, %v1482
        %v1485 = vadd.f32 %v1477, %v1483
        %v1486 = vpack.c.bf16 %v1485, %v1485
        %v1487 = vld [vmem:[%s19] sm:$0xff]
        %v1488 = vld [vmem:[%s19 + $0x8] sm:$0xf]
        %v1489 = vld [vmem:[%s19 + $0xc] sm:$0xff]
        %v1490 = vld [vmem:[%s19 + $0x14] sm:$0xf]
        %v1491 = vld [vmem:[%s19 + $0x18] sm:$0xff]
        %v1492 = vld [vmem:[%s19 + $0x20] sm:$0xf]
        %v1493 = vld [vmem:[%s19 + $0x24] sm:$0xff]
        %v1494 = vld [vmem:[%s19 + $0x2c] sm:$0xf]
        %v1495 = vld [vmem:[%s19 + $0x30] sm:$0xff]
        %v1496 = vld [vmem:[%s19 + $0x38] sm:$0xf]
        %v1497 = vld [vmem:[%s19 + $0x3c] sm:$0xff]
        %v1498 = vld [vmem:[%s19 + $0x44] sm:$0xf]
        %v1499 = vld [vmem:[%s19 + $0x48] sm:$0xff]
        %v1500 = vld [vmem:[%s19 + $0x50] sm:$0xf]
        %v1501 = vld [vmem:[%s19 + $0x54] sm:$0xff]
        %v1502 = vld [vmem:[%s19 + $0x5c] sm:$0xf]
        %v1503 = vld [vmem:[%s19 + $0x60] sm:$0xff]
        %v1504 = vld [vmem:[%s19 + $0x68] sm:$0xf]
        %v1505 = vld [vmem:[%s19 + $0x6c] sm:$0xff]
        %v1506 = vld [vmem:[%s19 + $0x74] sm:$0xf]
        %v1507 = vld [vmem:[%s19 + $0x78] sm:$0xff]
        %v1508 = vld [vmem:[%s19 + $0x80] sm:$0xf]
        %v1509 = vld [vmem:[%s19 + $0x84] sm:$0xff]
        %v1510 = vld [vmem:[%s19 + $0x8c] sm:$0xf]
        %v1511 = vld [vmem:[%s19 + $0x90] sm:$0xff]
        %v1512 = vld [vmem:[%s19 + $0x98] sm:$0xf]
        %v1513 = vld [vmem:[%s19 + $0x9c] sm:$0xff]
        %v1514 = vld [vmem:[%s19 + $0xa4] sm:$0xf]
        %v1515 = vld [vmem:[%s19 + $0xa8] sm:$0xff]
        %v1516 = vld [vmem:[%s19 + $0xb0] sm:$0xf]
        %v1517 = vld [vmem:[%s19 + $0xb4] sm:$0xff]
        %v1518 = vld [vmem:[%s19 + $0xbc] sm:$0xf]
        %v1519 = vld [vmem:[%s21] sm:$0x7]
        %v1521 = vlaneseq
        %v1522 = vshrl.u32 %v1521, 7
        %v1523 = vsub.s32 0, %v1522
        %v1524 = vrot.slane %v1519, %v1523
        %v1525 = vlaneseq
        %v1526 = vshrl.u32 %v1525, 7
        %v1527 = vsub.s32 1, %v1526
        %v1528 = vrot.slane %v1519, %v1527
        %v1529 = vlaneseq
        %v1530 = vshrl.u32 %v1529, 7
        %v1531 = vsub.s32 2, %v1530
        %v1532 = vrot.slane %v1519, %v1531
        %v1568 = vunpack.c.l.b16 %v1487
        %v1569 = vunpack.c.h.b16 %v1487
        %v1570 = vunpack.c.l.b16 %v1488
        %v1571 = vunpack.c.l.b16 %v1489
        %v1572 = vunpack.c.h.b16 %v1489
        %v1573 = vunpack.c.l.b16 %v1490
        %v1574 = vunpack.c.l.b16 %v1491
        %v1575 = vunpack.c.h.b16 %v1491
        %v1576 = vunpack.c.l.b16 %v1492
        %v1577 = vunpack.c.l.b16 %v1493
        %v1578 = vunpack.c.h.b16 %v1493
        %v1579 = vunpack.c.l.b16 %v1494
        %v1580 = vunpack.c.l.b16 %v1495
        %v1581 = vunpack.c.h.b16 %v1495
        %v1582 = vunpack.c.l.b16 %v1496
        %v1583 = vunpack.c.l.b16 %v1497
        %v1584 = vunpack.c.h.b16 %v1497
        %v1585 = vunpack.c.l.b16 %v1498
        %v1586 = vunpack.c.l.b16 %v1499
        %v1587 = vunpack.c.h.b16 %v1499
        %v1588 = vunpack.c.l.b16 %v1500
        %v1589 = vunpack.c.l.b16 %v1501
        %v1590 = vunpack.c.h.b16 %v1501
        %v1591 = vunpack.c.l.b16 %v1502
        %v1592 = vunpack.c.l.b16 %v1503
        %v1593 = vunpack.c.h.b16 %v1503
        %v1594 = vunpack.c.l.b16 %v1504
        %v1595 = vunpack.c.l.b16 %v1505
        %v1596 = vunpack.c.h.b16 %v1505
        %v1597 = vunpack.c.l.b16 %v1506
        %v1598 = vunpack.c.l.b16 %v1507
        %v1599 = vunpack.c.h.b16 %v1507
        %v1600 = vunpack.c.l.b16 %v1508
        %v1601 = vunpack.c.l.b16 %v1509
        %v1602 = vunpack.c.h.b16 %v1509
        %v1603 = vunpack.c.l.b16 %v1510
        %v1604 = vunpack.c.l.b16 %v1511
        %v1605 = vunpack.c.h.b16 %v1511
        %v1606 = vunpack.c.l.b16 %v1512
        %v1607 = vunpack.c.l.b16 %v1513
        %v1608 = vunpack.c.h.b16 %v1513
        %v1609 = vunpack.c.l.b16 %v1514
        %v1610 = vunpack.c.l.b16 %v1515
        %v1611 = vunpack.c.h.b16 %v1515
        %v1612 = vunpack.c.l.b16 %v1516
        %v1613 = vunpack.c.l.b16 %v1517
        %v1614 = vunpack.c.h.b16 %v1517
        %v1615 = vunpack.c.l.b16 %v1518
        %v1616 = vpack.c.b16 %v1571, %v1568
        %v1617 = vpack.c.b16 %v1572, %v1569
        %v1618 = vpack.c.b16 %v1573, %v1570
        %v1619 = vpack.c.b16 %v1577, %v1574
        %v1620 = vpack.c.b16 %v1578, %v1575
        %v1621 = vpack.c.b16 %v1579, %v1576
        %v1622 = vpack.c.b16 %v1583, %v1580
        %v1623 = vpack.c.b16 %v1584, %v1581
        %v1624 = vpack.c.b16 %v1585, %v1582
        %v1625 = vpack.c.b16 %v1589, %v1586
        %v1626 = vpack.c.b16 %v1590, %v1587
        %v1627 = vpack.c.b16 %v1591, %v1588
        %v1628 = vpack.c.b16 %v1595, %v1592
        %v1629 = vpack.c.b16 %v1596, %v1593
        %v1630 = vpack.c.b16 %v1597, %v1594
        %v1631 = vpack.c.b16 %v1601, %v1598
        %v1632 = vpack.c.b16 %v1602, %v1599
        %v1633 = vpack.c.b16 %v1603, %v1600
        %v1634 = vpack.c.b16 %v1607, %v1604
        %v1635 = vpack.c.b16 %v1608, %v1605
        %v1636 = vpack.c.b16 %v1609, %v1606
        %v1637 = vpack.c.b16 %v1613, %v1610
        %v1638 = vpack.c.b16 %v1614, %v1611
        %v1639 = vpack.c.b16 %v1615, %v1612
        %1664 = vmatprep.subr.bf16.mxu0 %v1617
        %1665 = vmatpush1.bf16.msra.mxu0 %v1616
        %1666 = vmatprep.subr.bf16.mxu0 %v1620
        %1667 = vmatpush1.bf16.msra.mxu0 %v1619
        %1668 = vmatprep.subr.bf16.mxu0 %v1623
        %1669 = vmatpush1.bf16.msra.mxu0 %v1622
        %1670 = vmatprep.subr.bf16.mxu0 %v1626
        %1671 = vmatpush1.bf16.msra.mxu0 %v1625
        %1672 = vmatprep.subr.bf16.mxu0 %v1629
        %1673 = vmatpush1.bf16.msra.mxu0 %v1628
        %1674 = vmatprep.subr.bf16.mxu0 %v1632
        %1675 = vmatpush1.bf16.msra.mxu0 %v1631
        %1676 = vmatprep.subr.bf16.mxu0 %v1635
        %1677 = vmatpush1.bf16.msra.mxu0 %v1634
        %1678 = vmatprep.subr.bf16.mxu0 %v1638
        %1679 = vmatpush1.bf16.msra.mxu0 %v1637
        %1680 = vmatprep.subr.bf16.mxu0 0
        %1681 = vmatpush1.bf16.msra.mxu0 0
        %1682 = vmatprep.subr.bf16.mxu0 0
        %1683 = vmatpush1.bf16.msra.mxu0 0
        %1684 = vmatprep.subr.bf16.mxu0 0
        %1685 = vmatpush1.bf16.msra.mxu0 0
        %1686 = vmatprep.subr.bf16.mxu0 0
        %1687 = vmatpush1.bf16.msra.mxu0 0
        %1688 = vmatprep.subr.bf16.mxu0 0
        %1689 = vmatpush1.bf16.msra.mxu0 0
        %1690 = vmatprep.subr.bf16.mxu0 0
        %1691 = vmatpush1.bf16.msra.mxu0 0
        %1692 = vmatprep.subr.bf16.mxu0 0
        %1693 = vmatpush1.bf16.msra.mxu0 0
        %1694 = vmatprep.subr.bf16.mxu0 0
        %1695 = vmatpush1.bf16.msra.mxu0 0
        %1696 = vmatprep.mubr.bf16.mxu0 0
        %1697 = vmatmul.mubr.bf16.gmra.mrb[0].mxu0 %v1486
        %v1698 = vpop.f32.mrb[0].mxu0
        %v1699 = vadd.f32 %v1524, %v1698
        %v1700 = vpop.f32.mrb[0].mxu0
        %v1701 = vadd.f32 %v1528, %v1700
        %v1702 = vpop.f32.mrb[0].mxu0
        %v1703 = vpop.f32.mrb[0].mxu0
        %1704 = vdwg.mxu0
        %1705 = vmatprep.subr.bf16.mxu0 0
        %1706 = vmatpush1.bf16.msra.mxu0 %v1618
        %1707 = vmatprep.subr.bf16.mxu0 0
        %1708 = vmatpush1.bf16.msra.mxu0 %v1621
        %1709 = vmatprep.subr.bf16.mxu0 0
        %1710 = vmatpush1.bf16.msra.mxu0 %v1624
        %1711 = vmatprep.subr.bf16.mxu0 0
        %1712 = vmatpush1.bf16.msra.mxu0 %v1627
        %1713 = vmatprep.subr.bf16.mxu0 0
        %1714 = vmatpush1.bf16.msra.mxu0 %v1630
        %1715 = vmatprep.subr.bf16.mxu0 0
        %1716 = vmatpush1.bf16.msra.mxu0 %v1633
        %1717 = vmatprep.subr.bf16.mxu0 0
        %1718 = vmatpush1.bf16.msra.mxu0 %v1636
        %1719 = vmatprep.subr.bf16.mxu0 0
        %1720 = vmatpush1.bf16.msra.mxu0 %v1639
        %1721 = vmatprep.subr.bf16.mxu0 0
        %1722 = vmatpush1.bf16.msra.mxu0 0
        %1723 = vmatprep.subr.bf16.mxu0 0
        %1724 = vmatpush1.bf16.msra.mxu0 0
        %1725 = vmatprep.subr.bf16.mxu0 0
        %1726 = vmatpush1.bf16.msra.mxu0 0
        %1727 = vmatprep.subr.bf16.mxu0 0
        %1728 = vmatpush1.bf16.msra.mxu0 0
        %1729 = vmatprep.subr.bf16.mxu0 0
        %1730 = vmatpush1.bf16.msra.mxu0 0
        %1731 = vmatprep.subr.bf16.mxu0 0
        %1732 = vmatpush1.bf16.msra.mxu0 0
        %1733 = vmatprep.subr.bf16.mxu0 0
        %1734 = vmatpush1.bf16.msra.mxu0 0
        %1735 = vmatprep.subr.bf16.mxu0 0
        %1736 = vmatpush1.bf16.msra.mxu0 0
        %1737 = vmatprep.mubr.bf16.mxu0 0
        %1738 = vmatmul.mubr.bf16.gmra.mrb[0].mxu0 %v1486
        %v1739 = vpop.f32.mrb[0].mxu0
        %v1740 = vadd.f32 %v1532, %v1739
        %v1741 = vpop.f32.mrb[0].mxu0
        %v1742 = vpop.f32.mrb[0].mxu0
        %v1743 = vpop.f32.mrb[0].mxu0
        %1744 = vdwg.mxu0
        %1746 = vrot.lane.b32.xlu0 %v1699, 96
        %v1747 = vpop.permute.xlu0 %1746
        %1749 = vrot.lane.b32.xlu0 %v1699, 64
        %v1750 = vpop.permute.xlu0 %1749
        %1752 = vrot.lane.b32.xlu0 %v1699, 32
        %v1753 = vpop.permute.xlu0 %1752
        %v1755 = vcombine.low %v1699, %v1750
        %v1756 = vcombine.high %v1699, %v1750
        %v1758 = vunpack.c.l.s4 1983009808
        %v1759 = vunpack.c.0.s8 %v1758
        %v1760 = vlaneseq
        %v1761 = vshrl.u32 %v1760, 7
        %v1762 = vsub.s32 %v1759, %v1761
        %v1763 = vrot.slane %v1755, %v1762
        %v1765 = vunpack.c.l.s4 1983009808
        %v1766 = vunpack.c.0.s8 %v1765
        %v1767 = vlaneseq
        %v1768 = vshrl.u32 %v1767, 7
        %v1769 = vsub.s32 %v1766, %v1768
        %v1770 = vrot.slane %v1756, %v1769
        %v1771 = vcombine.low %v1747, %v1753
        %v1772 = vcombine.high %v1747, %v1753
        %v1774 = vunpack.c.l.s4 1983009808
        %v1775 = vunpack.c.0.s8 %v1774
        %v1776 = vlaneseq
        %v1777 = vshrl.u32 %v1776, 7
        %v1778 = vsub.s32 %v1775, %v1777
        %v1779 = vrot.slane %v1771, %v1778
        %v1781 = vunpack.c.l.s4 1983009808
        %v1782 = vunpack.c.0.s8 %v1781
        %v1783 = vlaneseq
        %v1784 = vshrl.u32 %v1783, 7
        %v1785 = vsub.s32 %v1782, %v1784
        %v1786 = vrot.slane %v1772, %v1785
        %v1787 = vcombine.low %v1763, %v1779
        %v1788 = vcombine.high %v1763, %v1779
        %v1790 = vunpack.c.l.s4 1934713408
        %v1791 = vunpack.c.0.s8 %v1790
        %v1792 = vlaneseq
        %v1793 = vshrl.u32 %v1792, 7
        %v1794 = vsub.s32 %v1791, %v1793
        %v1795 = vrot.slane %v1787, %v1794
        %v1797 = vunpack.c.l.s4 1934713408
        %v1798 = vunpack.c.0.s8 %v1797
        %v1799 = vlaneseq
        %v1800 = vshrl.u32 %v1799, 7
        %v1801 = vsub.s32 %v1798, %v1800
        %v1802 = vrot.slane %v1788, %v1801
        %v1803 = vcombine.low %v1770, %v1786
        %v1804 = vcombine.high %v1770, %v1786
        %v1806 = vunpack.c.l.s4 1934713408
        %v1807 = vunpack.c.0.s8 %v1806
        %v1808 = vlaneseq
        %v1809 = vshrl.u32 %v1808, 7
        %v1810 = vsub.s32 %v1807, %v1809
        %v1811 = vrot.slane %v1803, %v1810
        %v1813 = vunpack.c.l.s4 1934713408
        %v1814 = vunpack.c.0.s8 %v1813
        %v1815 = vlaneseq
        %v1816 = vshrl.u32 %v1815, 7
        %v1817 = vsub.s32 %v1814, %v1816
        %v1818 = vrot.slane %v1804, %v1817
        %v1819 = vcombine.high %v1795, 0.0
        %v1820 = vcombine.high %v1802, 0.0
        %v1821 = vcombine.high %v1811, 0.0
        %v1822 = vcombine.high %v1818, 0.0
        %v1823 = vcombine.low %v1795, %v1802
        %v1825 = vunpack.c.l.s4 1983009808
        %v1826 = vunpack.c.0.s8 %v1825
        %v1827 = vlaneseq
        %v1828 = vshrl.u32 %v1827, 7
        %v1829 = vsub.s32 %v1826, %v1828
        %v1830 = vrot.slane %v1823, %v1829
        %v1831 = vcombine.low %v1819, %v1820
        %v1833 = vunpack.c.l.s4 1983009808
        %v1834 = vunpack.c.0.s8 %v1833
        %v1835 = vlaneseq
        %v1836 = vshrl.u32 %v1835, 7
        %v1837 = vsub.s32 %v1834, %v1836
        %v1838 = vrot.slane %v1831, %v1837
        %v1839 = vcombine.low %v1811, %v1818
        %v1841 = vunpack.c.l.s4 1983009808
        %v1842 = vunpack.c.0.s8 %v1841
        %v1843 = vlaneseq
        %v1844 = vshrl.u32 %v1843, 7
        %v1845 = vsub.s32 %v1842, %v1844
        %v1846 = vrot.slane %v1839, %v1845
        %v1847 = vcombine.low %v1821, %v1822
        %v1849 = vunpack.c.l.s4 1983009808
        %v1850 = vunpack.c.0.s8 %v1849
        %v1851 = vlaneseq
        %v1852 = vshrl.u32 %v1851, 7
        %v1853 = vsub.s32 %v1850, %v1852
        %v1854 = vrot.slane %v1847, %v1853
        %v1855 = vcombine.low %v1830, %v1838
        %v1856 = vcombine.high %v1830, %v1838
        %v1858 = vunpack.c.l.s4 1934713408
        %v1859 = vunpack.c.0.s8 %v1858
        %v1860 = vlaneseq
        %v1861 = vshrl.u32 %v1860, 7
        %v1862 = vsub.s32 %v1859, %v1861
        %v1863 = vrot.slane %v1855, %v1862
        %v1865 = vunpack.c.l.s4 1934713408
        %v1866 = vunpack.c.0.s8 %v1865
        %v1867 = vlaneseq
        %v1868 = vshrl.u32 %v1867, 7
        %v1869 = vsub.s32 %v1866, %v1868
        %v1870 = vrot.slane %v1856, %v1869
        %v1871 = vcombine.low %v1846, %v1854
        %v1872 = vcombine.high %v1846, %v1854
        %v1874 = vunpack.c.l.s4 1934713408
        %v1875 = vunpack.c.0.s8 %v1874
        %v1876 = vlaneseq
        %v1877 = vshrl.u32 %v1876, 7
        %v1878 = vsub.s32 %v1875, %v1877
        %v1879 = vrot.slane %v1871, %v1878
        %v1881 = vunpack.c.l.s4 1934713408
        %v1882 = vunpack.c.0.s8 %v1881
        %v1883 = vlaneseq
        %v1884 = vshrl.u32 %v1883, 7
        %v1885 = vsub.s32 %v1882, %v1884
        %v1886 = vrot.slane %v1872, %v1885
        %v1887 = vcombine.low %v1863, %v1879
        %v1888 = vcombine.high %v1863, %v1879
        %v1889 = vcombine.low %v1870, %v1886
        %v1890 = vcombine.high %v1870, %v1886
        %v1891 = vpack.c.bf16 %v1887, %v1887
        %v1892 = vpack.c.bf16 %v1888, %v1888
        %v1893 = vpack.c.bf16 %v1889, %v1889
        %v1894 = vpack.c.bf16 %v1890, %v1890
        %1896 = vrot.lane.b32.xlu0 %v1701, 96
        %v1897 = vpop.permute.xlu0 %1896
        %1899 = vrot.lane.b32.xlu0 %v1701, 64
        %v1900 = vpop.permute.xlu0 %1899
        %1902 = vrot.lane.b32.xlu0 %v1701, 32
        %v1903 = vpop.permute.xlu0 %1902
        %v1905 = vcombine.low %v1701, %v1900
        %v1906 = vcombine.high %v1701, %v1900
        %v1908 = vunpack.c.l.s4 1983009808
        %v1909 = vunpack.c.0.s8 %v1908
        %v1910 = vlaneseq
        %v1911 = vshrl.u32 %v1910, 7
        %v1912 = vsub.s32 %v1909, %v1911
        %v1913 = vrot.slane %v1905, %v1912
        %v1915 = vunpack.c.l.s4 1983009808
        %v1916 = vunpack.c.0.s8 %v1915
        %v1917 = vlaneseq
        %v1918 = vshrl.u32 %v1917, 7
        %v1919 = vsub.s32 %v1916, %v1918
        %v1920 = vrot.slane %v1906, %v1919
        %v1921 = vcombine.low %v1897, %v1903
        %v1922 = vcombine.high %v1897, %v1903
        %v1924 = vunpack.c.l.s4 1983009808
        %v1925 = vunpack.c.0.s8 %v1924
        %v1926 = vlaneseq
        %v1927 = vshrl.u32 %v1926, 7
        %v1928 = vsub.s32 %v1925, %v1927
        %v1929 = vrot.slane %v1921, %v1928
        %v1931 = vunpack.c.l.s4 1983009808
        %v1932 = vunpack.c.0.s8 %v1931
        %v1933 = vlaneseq
        %v1934 = vshrl.u32 %v1933, 7
        %v1935 = vsub.s32 %v1932, %v1934
        %v1936 = vrot.slane %v1922, %v1935
        %v1937 = vcombine.low %v1913, %v1929
        %v1938 = vcombine.high %v1913, %v1929
        %v1940 = vunpack.c.l.s4 1934713408
        %v1941 = vunpack.c.0.s8 %v1940
        %v1942 = vlaneseq
        %v1943 = vshrl.u32 %v1942, 7
        %v1944 = vsub.s32 %v1941, %v1943
        %v1945 = vrot.slane %v1937, %v1944
        %v1947 = vunpack.c.l.s4 1934713408
        %v1948 = vunpack.c.0.s8 %v1947
        %v1949 = vlaneseq
        %v1950 = vshrl.u32 %v1949, 7
        %v1951 = vsub.s32 %v1948, %v1950
        %v1952 = vrot.slane %v1938, %v1951
        %v1953 = vcombine.low %v1920, %v1936
        %v1954 = vcombine.high %v1920, %v1936
        %v1956 = vunpack.c.l.s4 1934713408
        %v1957 = vunpack.c.0.s8 %v1956
        %v1958 = vlaneseq
        %v1959 = vshrl.u32 %v1958, 7
        %v1960 = vsub.s32 %v1957, %v1959
        %v1961 = vrot.slane %v1953, %v1960
        %v1963 = vunpack.c.l.s4 1934713408
        %v1964 = vunpack.c.0.s8 %v1963
        %v1965 = vlaneseq
        %v1966 = vshrl.u32 %v1965, 7
        %v1967 = vsub.s32 %v1964, %v1966
        %v1968 = vrot.slane %v1954, %v1967
        %v1969 = vcombine.high %v1945, 0.0
        %v1970 = vcombine.high %v1952, 0.0
        %v1971 = vcombine.high %v1961, 0.0
        %v1972 = vcombine.high %v1968, 0.0
        %v1973 = vcombine.low %v1945, %v1952
        %v1975 = vunpack.c.l.s4 1983009808
        %v1976 = vunpack.c.0.s8 %v1975
        %v1977 = vlaneseq
        %v1978 = vshrl.u32 %v1977, 7
        %v1979 = vsub.s32 %v1976, %v1978
        %v1980 = vrot.slane %v1973, %v1979
        %v1981 = vcombine.low %v1969, %v1970
        %v1983 = vunpack.c.l.s4 1983009808
        %v1984 = vunpack.c.0.s8 %v1983
        %v1985 = vlaneseq
        %v1986 = vshrl.u32 %v1985, 7
        %v1987 = vsub.s32 %v1984, %v1986
        %v1988 = vrot.slane %v1981, %v1987
        %v1989 = vcombine.low %v1961, %v1968
        %v1991 = vunpack.c.l.s4 1983009808
        %v1992 = vunpack.c.0.s8 %v1991
        %v1993 = vlaneseq
        %v1994 = vshrl.u32 %v1993, 7
        %v1995 = vsub.s32 %v1992, %v1994
        %v1996 = vrot.slane %v1989, %v1995
        %v1997 = vcombine.low %v1971, %v1972
        %v1999 = vunpack.c.l.s4 1983009808
        %v2000 = vunpack.c.0.s8 %v1999
        %v2001 = vlaneseq
        %v2002 = vshrl.u32 %v2001, 7
        %v2003 = vsub.s32 %v2000, %v2002
        %v2004 = vrot.slane %v1997, %v2003
        %v2005 = vcombine.low %v1980, %v1988
        %v2006 = vcombine.high %v1980, %v1988
        %v2008 = vunpack.c.l.s4 1934713408
        %v2009 = vunpack.c.0.s8 %v2008
        %v2010 = vlaneseq
        %v2011 = vshrl.u32 %v2010, 7
        %v2012 = vsub.s32 %v2009, %v2011
        %v2013 = vrot.slane %v2005, %v2012
        %v2015 = vunpack.c.l.s4 1934713408
        %v2016 = vunpack.c.0.s8 %v2015
        %v2017 = vlaneseq
        %v2018 = vshrl.u32 %v2017, 7
        %v2019 = vsub.s32 %v2016, %v2018
        %v2020 = vrot.slane %v2006, %v2019
        %v2021 = vcombine.low %v1996, %v2004
        %v2022 = vcombine.high %v1996, %v2004
        %v2024 = vunpack.c.l.s4 1934713408
        %v2025 = vunpack.c.0.s8 %v2024
        %v2026 = vlaneseq
        %v2027 = vshrl.u32 %v2026, 7
        %v2028 = vsub.s32 %v2025, %v2027
        %v2029 = vrot.slane %v2021, %v2028
        %v2031 = vunpack.c.l.s4 1934713408
        %v2032 = vunpack.c.0.s8 %v2031
        %v2033 = vlaneseq
        %v2034 = vshrl.u32 %v2033, 7
        %v2035 = vsub.s32 %v2032, %v2034
        %v2036 = vrot.slane %v2022, %v2035
        %v2037 = vcombine.low %v2013, %v2029
        %v2038 = vcombine.high %v2013, %v2029
        %v2039 = vcombine.low %v2020, %v2036
        %v2040 = vcombine.high %v2020, %v2036
        %v2041 = vpack.c.bf16 %v2037, %v2037
        %v2042 = vpack.c.bf16 %v2038, %v2038
        %v2043 = vpack.c.bf16 %v2039, %v2039
        %v2044 = vpack.c.bf16 %v2040, %v2040
        %2046 = vrot.lane.b32.xlu0 %v1740, 96
        %v2047 = vpop.permute.xlu0 %2046
        %2049 = vrot.lane.b32.xlu0 %v1740, 64
        %v2050 = vpop.permute.xlu0 %2049
        %2052 = vrot.lane.b32.xlu0 %v1740, 32
        %v2053 = vpop.permute.xlu0 %2052
        %v2055 = vcombine.low %v1740, %v2050
        %v2056 = vcombine.high %v1740, %v2050
        %v2058 = vunpack.c.l.s4 1983009808
        %v2059 = vunpack.c.0.s8 %v2058
        %v2060 = vlaneseq
        %v2061 = vshrl.u32 %v2060, 7
        %v2062 = vsub.s32 %v2059, %v2061
        %v2063 = vrot.slane %v2055, %v2062
        %v2065 = vunpack.c.l.s4 1983009808
        %v2066 = vunpack.c.0.s8 %v2065
        %v2067 = vlaneseq
        %v2068 = vshrl.u32 %v2067, 7
        %v2069 = vsub.s32 %v2066, %v2068
        %v2070 = vrot.slane %v2056, %v2069
        %v2071 = vcombine.low %v2047, %v2053
        %v2072 = vcombine.high %v2047, %v2053
        %v2074 = vunpack.c.l.s4 1983009808
        %v2075 = vunpack.c.0.s8 %v2074
        %v2076 = vlaneseq
        %v2077 = vshrl.u32 %v2076, 7
        %v2078 = vsub.s32 %v2075, %v2077
        %v2079 = vrot.slane %v2071, %v2078
        %v2081 = vunpack.c.l.s4 1983009808
        %v2082 = vunpack.c.0.s8 %v2081
        %v2083 = vlaneseq
        %v2084 = vshrl.u32 %v2083, 7
        %v2085 = vsub.s32 %v2082, %v2084
        %v2086 = vrot.slane %v2072, %v2085
        %v2087 = vcombine.low %v2063, %v2079
        %v2088 = vcombine.high %v2063, %v2079
        %v2090 = vunpack.c.l.s4 1934713408
        %v2091 = vunpack.c.0.s8 %v2090
        %v2092 = vlaneseq
        %v2093 = vshrl.u32 %v2092, 7
        %v2094 = vsub.s32 %v2091, %v2093
        %v2095 = vrot.slane %v2087, %v2094
        %v2097 = vunpack.c.l.s4 1934713408
        %v2098 = vunpack.c.0.s8 %v2097
        %v2099 = vlaneseq
        %v2100 = vshrl.u32 %v2099, 7
        %v2101 = vsub.s32 %v2098, %v2100
        %v2102 = vrot.slane %v2088, %v2101
        %v2103 = vcombine.low %v2070, %v2086
        %v2104 = vcombine.high %v2070, %v2086
        %v2106 = vunpack.c.l.s4 1934713408
        %v2107 = vunpack.c.0.s8 %v2106
        %v2108 = vlaneseq
        %v2109 = vshrl.u32 %v2108, 7
        %v2110 = vsub.s32 %v2107, %v2109
        %v2111 = vrot.slane %v2103, %v2110
        %v2113 = vunpack.c.l.s4 1934713408
        %v2114 = vunpack.c.0.s8 %v2113
        %v2115 = vlaneseq
        %v2116 = vshrl.u32 %v2115, 7
        %v2117 = vsub.s32 %v2114, %v2116
        %v2118 = vrot.slane %v2104, %v2117
        %v2119 = vcombine.high %v2095, 0.0
        %v2120 = vcombine.high %v2102, 0.0
        %v2121 = vcombine.high %v2111, 0.0
        %v2122 = vcombine.high %v2118, 0.0
        %v2123 = vcombine.low %v2095, %v2102
        %v2125 = vunpack.c.l.s4 1983009808
        %v2126 = vunpack.c.0.s8 %v2125
        %v2127 = vlaneseq
        %v2128 = vshrl.u32 %v2127, 7
        %v2129 = vsub.s32 %v2126, %v2128
        %v2130 = vrot.slane %v2123, %v2129
        %v2131 = vcombine.low %v2119, %v2120
        %v2133 = vunpack.c.l.s4 1983009808
        %v2134 = vunpack.c.0.s8 %v2133
        %v2135 = vlaneseq
        %v2136 = vshrl.u32 %v2135, 7
        %v2137 = vsub.s32 %v2134, %v2136
        %v2138 = vrot.slane %v2131, %v2137
        %v2139 = vcombine.low %v2111, %v2118
        %v2141 = vunpack.c.l.s4 1983009808
        %v2142 = vunpack.c.0.s8 %v2141
        %v2143 = vlaneseq
        %v2144 = vshrl.u32 %v2143, 7
        %v2145 = vsub.s32 %v2142, %v2144
        %v2146 = vrot.slane %v2139, %v2145
        %v2147 = vcombine.low %v2121, %v2122
        %v2149 = vunpack.c.l.s4 1983009808
        %v2150 = vunpack.c.0.s8 %v2149
        %v2151 = vlaneseq
        %v2152 = vshrl.u32 %v2151, 7
        %v2153 = vsub.s32 %v2150, %v2152
        %v2154 = vrot.slane %v2147, %v2153
        %v2155 = vcombine.low %v2130, %v2138
        %v2156 = vcombine.high %v2130, %v2138
        %v2158 = vunpack.c.l.s4 1934713408
        %v2159 = vunpack.c.0.s8 %v2158
        %v2160 = vlaneseq
        %v2161 = vshrl.u32 %v2160, 7
        %v2162 = vsub.s32 %v2159, %v2161
        %v2163 = vrot.slane %v2155, %v2162
        %v2165 = vunpack.c.l.s4 1934713408
        %v2166 = vunpack.c.0.s8 %v2165
        %v2167 = vlaneseq
        %v2168 = vshrl.u32 %v2167, 7
        %v2169 = vsub.s32 %v2166, %v2168
        %v2170 = vrot.slane %v2156, %v2169
        %v2171 = vcombine.low %v2146, %v2154
        %v2172 = vcombine.high %v2146, %v2154
        %v2174 = vunpack.c.l.s4 1934713408
        %v2175 = vunpack.c.0.s8 %v2174
        %v2176 = vlaneseq
        %v2177 = vshrl.u32 %v2176, 7
        %v2178 = vsub.s32 %v2175, %v2177
        %v2179 = vrot.slane %v2171, %v2178
        %v2181 = vunpack.c.l.s4 1934713408
        %v2182 = vunpack.c.0.s8 %v2181
        %v2183 = vlaneseq
        %v2184 = vshrl.u32 %v2183, 7
        %v2185 = vsub.s32 %v2182, %v2184
        %v2186 = vrot.slane %v2172, %v2185
        %v2187 = vcombine.low %v2163, %v2179
        %v2188 = vcombine.high %v2163, %v2179
        %v2189 = vcombine.low %v2170, %v2186
        %v2190 = vcombine.high %v2170, %v2186
        %v2191 = vpack.c.bf16 %v2187, %v2187
        %v2192 = vpack.c.bf16 %v2188, %v2188
        %v2193 = vpack.c.bf16 %v2189, %v2189
        %v2194 = vpack.c.bf16 %v2190, %v2190
        %vm2195 = vcmask 261120
        %v2197 = vsel %vm2195, %v1891, 0
        %v2200 = vsel %vm2195, %v2041, 0
        %2202 = vmatprep.subr.bf16.mxu0 0
        %2203 = vmatpush1.bf16.xpose.msra.mxu0 %v2200
        %2204 = vmatprep.subr.bf16.mxu0 0
        %2205 = vmatpush1.bf16.xpose.msra.mxu0 0
        %2206 = vmatprep.subr.bf16.mxu0 0
        %2207 = vmatpush1.bf16.xpose.msra.mxu0 0
        %2208 = vmatprep.subr.bf16.mxu0 0
        %2209 = vmatpush1.bf16.xpose.msra.mxu0 0
        %2210 = vmatprep.subr.bf16.mxu0 0
        %2211 = vmatpush1.bf16.xpose.msra.mxu0 0
        %2212 = vmatprep.subr.bf16.mxu0 0
        %2213 = vmatpush1.bf16.xpose.msra.mxu0 0
        %2214 = vmatprep.subr.bf16.mxu0 0
        %2215 = vmatpush1.bf16.xpose.msra.mxu0 0
        %2216 = vmatprep.subr.bf16.mxu0 0
        %2217 = vmatpush1.bf16.xpose.msra.mxu0 0
        %2218 = vmatprep.subr.bf16.mxu0 0
        %2219 = vmatpush1.bf16.xpose.msra.mxu0 0
        %2220 = vmatprep.subr.bf16.mxu0 0
        %2221 = vmatpush1.bf16.xpose.msra.mxu0 0
        %2222 = vmatprep.subr.bf16.mxu0 0
        %2223 = vmatpush1.bf16.xpose.msra.mxu0 0
        %2224 = vmatprep.subr.bf16.mxu0 0
        %2225 = vmatpush1.bf16.xpose.msra.mxu0 0
        %2226 = vmatprep.subr.bf16.mxu0 0
        %2227 = vmatpush1.bf16.xpose.msra.mxu0 0
        %2228 = vmatprep.subr.bf16.mxu0 0
        %2229 = vmatpush1.bf16.xpose.msra.mxu0 0
        %2230 = vmatprep.subr.bf16.mxu0 0
        %2231 = vmatpush1.bf16.xpose.msra.mxu0 0
        %2232 = vmatprep.subr.bf16.mxu0 0
        %2233 = vmatpush1.bf16.xpose.msra.mxu0 0
        %2234 = vmatprep.mubr.bf16.mxu0 0
        %2235 = vmatmul.mubr.bf16.gmra.mrb[0].mxu0 %v2197
        %v2236 = vpop.f32.mrb[0].mxu0
        %v2237 = vadd.f32 0.0, %v2236
        %v2238 = vpop.f32.mrb[0].mxu0
        %v2239 = vpop.f32.mrb[0].mxu0
        %v2240 = vpop.f32.mrb[0].mxu0
        %2241 = vdwg.mxu0
        %v2243 = vsel %vm2195, %v1892, 0
        %v2246 = vsel %vm2195, %v2042, 0
        %2248 = vmatprep.subr.bf16.mxu0 0
        %2249 = vmatpush1.bf16.xpose.msra.mxu0 %v2246
        %2250 = vmatprep.subr.bf16.mxu0 0
        %2251 = vmatpush1.bf16.xpose.msra.mxu0 0
        %2252 = vmatprep.subr.bf16.mxu0 0
        %2253 = vmatpush1.bf16.xpose.msra.mxu0 0
        %2254 = vmatprep.subr.bf16.mxu0 0
        %2255 = vmatpush1.bf16.xpose.msra.mxu0 0
        %2256 = vmatprep.subr.bf16.mxu0 0
        %2257 = vmatpush1.bf16.xpose.msra.mxu0 0
        %2258 = vmatprep.subr.bf16.mxu0 0
        %2259 = vmatpush1.bf16.xpose.msra.mxu0 0
        %2260 = vmatprep.subr.bf16.mxu0 0
        %2261 = vmatpush1.bf16.xpose.msra.mxu0 0
        %2262 = vmatprep.subr.bf16.mxu0 0
        %2263 = vmatpush1.bf16.xpose.msra.mxu0 0
        %2264 = vmatprep.subr.bf16.mxu0 0
        %2265 = vmatpush1.bf16.xpose.msra.mxu0 0
        %2266 = vmatprep.subr.bf16.mxu0 0
        %2267 = vmatpush1.bf16.xpose.msra.mxu0 0
        %2268 = vmatprep.subr.bf16.mxu0 0
        %2269 = vmatpush1.bf16.xpose.msra.mxu0 0
        %2270 = vmatprep.subr.bf16.mxu0 0
        %2271 = vmatpush1.bf16.xpose.msra.mxu0 0
        %2272 = vmatprep.subr.bf16.mxu0 0
        %2273 = vmatpush1.bf16.xpose.msra.mxu0 0
        %2274 = vmatprep.subr.bf16.mxu0 0
        %2275 = vmatpush1.bf16.xpose.msra.mxu0 0
        %2276 = vmatprep.subr.bf16.mxu0 0
        %2277 = vmatpush1.bf16.xpose.msra.mxu0 0
        %2278 = vmatprep.subr.bf16.mxu0 0
        %2279 = vmatpush1.bf16.xpose.msra.mxu0 0
        %2280 = vmatprep.mubr.bf16.mxu0 0
        %2281 = vmatmul.mubr.bf16.gmra.mrb[0].mxu0 %v2243
        %v2282 = vpop.f32.mrb[0].mxu0
        %v2283 = vadd.f32 0.0, %v2282
        %v2284 = vpop.f32.mrb[0].mxu0
        %v2285 = vpop.f32.mrb[0].mxu0
        %v2286 = vpop.f32.mrb[0].mxu0
        %2287 = vdwg.mxu0
        %v2289 = vsel %vm2195, %v1893, 0
        %v2292 = vsel %vm2195, %v2043, 0
        %2294 = vmatprep.subr.bf16.mxu0 0
        %2295 = vmatpush1.bf16.xpose.msra.mxu0 %v2292
        %2296 = vmatprep.subr.bf16.mxu0 0
        %2297 = vmatpush1.bf16.xpose.msra.mxu0 0
        %2298 = vmatprep.subr.bf16.mxu0 0
        %2299 = vmatpush1.bf16.xpose.msra.mxu0 0
        %2300 = vmatprep.subr.bf16.mxu0 0
        %2301 = vmatpush1.bf16.xpose.msra.mxu0 0
        %2302 = vmatprep.subr.bf16.mxu0 0
        %2303 = vmatpush1.bf16.xpose.msra.mxu0 0
        %2304 = vmatprep.subr.bf16.mxu0 0
        %2305 = vmatpush1.bf16.xpose.msra.mxu0 0
        %2306 = vmatprep.subr.bf16.mxu0 0
        %2307 = vmatpush1.bf16.xpose.msra.mxu0 0
        %2308 = vmatprep.subr.bf16.mxu0 0
        %2309 = vmatpush1.bf16.xpose.msra.mxu0 0
        %2310 = vmatprep.subr.bf16.mxu0 0
        %2311 = vmatpush1.bf16.xpose.msra.mxu0 0
        %2312 = vmatprep.subr.bf16.mxu0 0
        %2313 = vmatpush1.bf16.xpose.msra.mxu0 0
        %2314 = vmatprep.subr.bf16.mxu0 0
        %2315 = vmatpush1.bf16.xpose.msra.mxu0 0
        %2316 = vmatprep.subr.bf16.mxu0 0
        %2317 = vmatpush1.bf16.xpose.msra.mxu0 0
        %2318 = vmatprep.subr.bf16.mxu0 0
        %2319 = vmatpush1.bf16.xpose.msra.mxu0 0
        %2320 = vmatprep.subr.bf16.mxu0 0
        %2321 = vmatpush1.bf16.xpose.msra.mxu0 0
        %2322 = vmatprep.subr.bf16.mxu0 0
        %2323 = vmatpush1.bf16.xpose.msra.mxu0 0
        %2324 = vmatprep.subr.bf16.mxu0 0
        %2325 = vmatpush1.bf16.xpose.msra.mxu0 0
        %2326 = vmatprep.mubr.bf16.mxu0 0
        %2327 = vmatmul.mubr.bf16.gmra.mrb[0].mxu0 %v2289
        %v2328 = vpop.f32.mrb[0].mxu0
        %v2329 = vadd.f32 0.0, %v2328
        %v2330 = vpop.f32.mrb[0].mxu0
        %v2331 = vpop.f32.mrb[0].mxu0
        %v2332 = vpop.f32.mrb[0].mxu0
        %2333 = vdwg.mxu0
        %v2335 = vsel %vm2195, %v1894, 0
        %v2338 = vsel %vm2195, %v2044, 0
        %2340 = vmatprep.subr.bf16.mxu0 0
        %2341 = vmatpush1.bf16.xpose.msra.mxu0 %v2338
        %2342 = vmatprep.subr.bf16.mxu0 0
        %2343 = vmatpush1.bf16.xpose.msra.mxu0 0
        %2344 = vmatprep.subr.bf16.mxu0 0
        %2345 = vmatpush1.bf16.xpose.msra.mxu0 0
        %2346 = vmatprep.subr.bf16.mxu0 0
        %2347 = vmatpush1.bf16.xpose.msra.mxu0 0
        %2348 = vmatprep.subr.bf16.mxu0 0
        %2349 = vmatpush1.bf16.xpose.msra.mxu0 0
        %2350 = vmatprep.subr.bf16.mxu0 0
        %2351 = vmatpush1.bf16.xpose.msra.mxu0 0
        %2352 = vmatprep.subr.bf16.mxu0 0
        %2353 = vmatpush1.bf16.xpose.msra.mxu0 0
        %2354 = vmatprep.subr.bf16.mxu0 0
        %2355 = vmatpush1.bf16.xpose.msra.mxu0 0
        %2356 = vmatprep.subr.bf16.mxu0 0
        %2357 = vmatpush1.bf16.xpose.msra.mxu0 0
        %2358 = vmatprep.subr.bf16.mxu0 0
        %2359 = vmatpush1.bf16.xpose.msra.mxu0 0
        %2360 = vmatprep.subr.bf16.mxu0 0
        %2361 = vmatpush1.bf16.xpose.msra.mxu0 0
        %2362 = vmatprep.subr.bf16.mxu0 0
        %2363 = vmatpush1.bf16.xpose.msra.mxu0 0
        %2364 = vmatprep.subr.bf16.mxu0 0
        %2365 = vmatpush1.bf16.xpose.msra.mxu0 0
        %2366 = vmatprep.subr.bf16.mxu0 0
        %2367 = vmatpush1.bf16.xpose.msra.mxu0 0
        %2368 = vmatprep.subr.bf16.mxu0 0
        %2369 = vmatpush1.bf16.xpose.msra.mxu0 0
        %2370 = vmatprep.subr.bf16.mxu0 0
        %2371 = vmatpush1.bf16.xpose.msra.mxu0 0
        %2372 = vmatprep.mubr.bf16.mxu0 0
        %2373 = vmatmul.mubr.bf16.gmra.mrb[0].mxu0 %v2335
        %v2374 = vpop.f32.mrb[0].mxu0
        %v2375 = vadd.f32 0.0, %v2374
        %v2376 = vpop.f32.mrb[0].mxu0
        %v2377 = vpop.f32.mrb[0].mxu0
        %v2378 = vpop.f32.mrb[0].mxu0
        %2379 = vdwg.mxu0
        %vm2380 = vcmask 64512
        %v2381 = vsel %vm2380, %v2237, -inf
        %2382 = vmax.xlane.f32.xlu0 %v2381
        %v2383 = vpop.xlane.xlu0 %2382
        %v2384 = vsel %vm2380, %v2283, -inf
        %2385 = vmax.xlane.f32.xlu0 %v2384
        %v2386 = vpop.xlane.xlu0 %2385
        %v2387 = vsel %vm2380, %v2329, -inf
        %2388 = vmax.xlane.f32.xlu0 %v2387
        %v2389 = vpop.xlane.xlu0 %2388
        %v2390 = vsel %vm2380, %v2375, -inf
        %2391 = vmax.xlane.f32.xlu0 %v2390
        %v2392 = vpop.xlane.xlu0 %2391
        %v2393 = vsub.f32 %v2237, %v2383
        %v2394 = vsub.f32 %v2283, %v2386
        %v2395 = vsub.f32 %v2329, %v2389
        %v2396 = vsub.f32 %v2375, %v2392
        %v2397 = vmul.f32 %v2393, 1.442695
        %v2398 = vpow.pop %v2397
        %v2399 = vmul.f32 %v2394, 1.442695
        %v2400 = vpow.pop %v2399
        %v2401 = vmul.f32 %v2395, 1.442695
        %v2402 = vpow.pop %v2401
        %v2403 = vmul.f32 %v2396, 1.442695
        %v2404 = vpow.pop %v2403
        %v2405 = vsel %vm2380, %v2398, 0.0
        %2406 = vadd.xlane.f32.xlu0 %v2405
        %v2407 = vpop.xlane.xlu0 %2406
        %v2408 = vsel %vm2380, %v2400, 0.0
        %2409 = vadd.xlane.f32.xlu0 %v2408
        %v2410 = vpop.xlane.xlu0 %2409
        %v2411 = vsel %vm2380, %v2402, 0.0
        %2412 = vadd.xlane.f32.xlu0 %v2411
        %v2413 = vpop.xlane.xlu0 %2412
        %v2414 = vsel %vm2380, %v2404, 0.0
        %2415 = vadd.xlane.f32.xlu0 %v2414
        %v2416 = vpop.xlane.xlu0 %2415
        %v2417 = vrcp.pop %v2407
        %v2418 = vrcp.pop %v2410
        %v2419 = vrcp.pop %v2413
        %v2420 = vrcp.pop %v2416
        %v2421 = vmul.f32 %v2398, %v2417
        %v2422 = vmul.f32 %v2400, %v2418
        %v2423 = vmul.f32 %v2402, %v2419
        %v2424 = vmul.f32 %v2404, %v2420
        %v2425 = vpack.c.bf16 %v2421, %v2421
        %v2426 = vpack.c.bf16 %v2422, %v2422
        %v2427 = vpack.c.bf16 %v2423, %v2423
        %v2428 = vpack.c.bf16 %v2424, %v2424
        %v2430 = vsel %vm2380, %v2425, 0
        %vm2432 = vcmask 1043456
        %v2434 = vsel %vm2432, %v2191, 0
        %2436 = vmatprep.subr.bf16.mxu0 0
        %2437 = vmatpush1.bf16.msra.mxu0 %v2434
        %2438 = vmatprep.subr.bf16.mxu0 0
        %2439 = vmatpush1.bf16.msra.mxu0 0
        %2440 = vmatprep.subr.bf16.mxu0 0
        %2441 = vmatpush1.bf16.msra.mxu0 0
        %2442 = vmatprep.subr.bf16.mxu0 0
        %2443 = vmatpush1.bf16.msra.mxu0 0
        %2444 = vmatprep.subr.bf16.mxu0 0
        %2445 = vmatpush1.bf16.msra.mxu0 0
        %2446 = vmatprep.subr.bf16.mxu0 0
        %2447 = vmatpush1.bf16.msra.mxu0 0
        %2448 = vmatprep.subr.bf16.mxu0 0
        %2449 = vmatpush1.bf16.msra.mxu0 0
        %2450 = vmatprep.subr.bf16.mxu0 0
        %2451 = vmatpush1.bf16.msra.mxu0 0
        %2452 = vmatprep.subr.bf16.mxu0 0
        %2453 = vmatpush1.bf16.msra.mxu0 0
        %2454 = vmatprep.subr.bf16.mxu0 0
        %2455 = vmatpush1.bf16.msra.mxu0 0
        %2456 = vmatprep.subr.bf16.mxu0 0
        %2457 = vmatpush1.bf16.msra.mxu0 0
        %2458 = vmatprep.subr.bf16.mxu0 0
        %2459 = vmatpush1.bf16.msra.mxu0 0
        %2460 = vmatprep.subr.bf16.mxu0 0
        %2461 = vmatpush1.bf16.msra.mxu0 0
        %2462 = vmatprep.subr.bf16.mxu0 0
        %2463 = vmatpush1.bf16.msra.mxu0 0
        %2464 = vmatprep.subr.bf16.mxu0 0
        %2465 = vmatpush1.bf16.msra.mxu0 0
        %2466 = vmatprep.subr.bf16.mxu0 0
        %2467 = vmatpush1.bf16.msra.mxu0 0
        %2468 = vmatprep.mubr.bf16.mxu0 0
        %2469 = vmatmul.mubr.bf16.gmra.mrb[0].mxu0 %v2430
        %v2470 = vpop.f32.mrb[0].mxu0
        %v2471 = vadd.f32 0.0, %v2470
        %v2472 = vpop.f32.mrb[0].mxu0
        %v2473 = vpop.f32.mrb[0].mxu0
        %v2474 = vpop.f32.mrb[0].mxu0
        %2475 = vdwg.mxu0
        %v2477 = vsel %vm2380, %v2426, 0
        %v2480 = vsel %vm2432, %v2192, 0
        %2482 = vmatprep.subr.bf16.mxu0 0
        %2483 = vmatpush1.bf16.msra.mxu0 %v2480
        %2484 = vmatprep.subr.bf16.mxu0 0
        %2485 = vmatpush1.bf16.msra.mxu0 0
        %2486 = vmatprep.subr.bf16.mxu0 0
        %2487 = vmatpush1.bf16.msra.mxu0 0
        %2488 = vmatprep.subr.bf16.mxu0 0
        %2489 = vmatpush1.bf16.msra.mxu0 0
        %2490 = vmatprep.subr.bf16.mxu0 0
        %2491 = vmatpush1.bf16.msra.mxu0 0
        %2492 = vmatprep.subr.bf16.mxu0 0
        %2493 = vmatpush1.bf16.msra.mxu0 0
        %2494 = vmatprep.subr.bf16.mxu0 0
        %2495 = vmatpush1.bf16.msra.mxu0 0
        %2496 = vmatprep.subr.bf16.mxu0 0
        %2497 = vmatpush1.bf16.msra.mxu0 0
        %2498 = vmatprep.subr.bf16.mxu0 0
        %2499 = vmatpush1.bf16.msra.mxu0 0
        %2500 = vmatprep.subr.bf16.mxu0 0
        %2501 = vmatpush1.bf16.msra.mxu0 0
        %2502 = vmatprep.subr.bf16.mxu0 0
        %2503 = vmatpush1.bf16.msra.mxu0 0
        %2504 = vmatprep.subr.bf16.mxu0 0
        %2505 = vmatpush1.bf16.msra.mxu0 0
        %2506 = vmatprep.subr.bf16.mxu0 0
        %2507 = vmatpush1.bf16.msra.mxu0 0
        %2508 = vmatprep.subr.bf16.mxu0 0
        %2509 = vmatpush1.bf16.msra.mxu0 0
        %2510 = vmatprep.subr.bf16.mxu0 0
        %2511 = vmatpush1.bf16.msra.mxu0 0
        %2512 = vmatprep.subr.bf16.mxu0 0
        %2513 = vmatpush1.bf16.msra.mxu0 0
        %2514 = vmatprep.mubr.bf16.mxu0 0
        %2515 = vmatmul.mubr.bf16.gmra.mrb[0].mxu0 %v2477
        %v2516 = vpop.f32.mrb[0].mxu0
        %v2517 = vadd.f32 0.0, %v2516
        %v2518 = vpop.f32.mrb[0].mxu0
        %v2519 = vpop.f32.mrb[0].mxu0
        %v2520 = vpop.f32.mrb[0].mxu0
        %2521 = vdwg.mxu0
        %v2523 = vsel %vm2380, %v2427, 0
        %v2526 = vsel %vm2432, %v2193, 0
        %2528 = vmatprep.subr.bf16.mxu0 0
        %2529 = vmatpush1.bf16.msra.mxu0 %v2526
        %2530 = vmatprep.subr.bf16.mxu0 0
        %2531 = vmatpush1.bf16.msra.mxu0 0
        %2532 = vmatprep.subr.bf16.mxu0 0
        %2533 = vmatpush1.bf16.msra.mxu0 0
        %2534 = vmatprep.subr.bf16.mxu0 0
        %2535 = vmatpush1.bf16.msra.mxu0 0
        %2536 = vmatprep.subr.bf16.mxu0 0
        %2537 = vmatpush1.bf16.msra.mxu0 0
        %2538 = vmatprep.subr.bf16.mxu0 0
        %2539 = vmatpush1.bf16.msra.mxu0 0
        %2540 = vmatprep.subr.bf16.mxu0 0
        %2541 = vmatpush1.bf16.msra.mxu0 0
        %2542 = vmatprep.subr.bf16.mxu0 0
        %2543 = vmatpush1.bf16.msra.mxu0 0
        %2544 = vmatprep.subr.bf16.mxu0 0
        %2545 = vmatpush1.bf16.msra.mxu0 0
        %2546 = vmatprep.subr.bf16.mxu0 0
        %2547 = vmatpush1.bf16.msra.mxu0 0
        %2548 = vmatprep.subr.bf16.mxu0 0
        %2549 = vmatpush1.bf16.msra.mxu0 0
        %2550 = vmatprep.subr.bf16.mxu0 0
        %2551 = vmatpush1.bf16.msra.mxu0 0
        %2552 = vmatprep.subr.bf16.mxu0 0
        %2553 = vmatpush1.bf16.msra.mxu0 0
        %2554 = vmatprep.subr.bf16.mxu0 0
        %2555 = vmatpush1.bf16.msra.mxu0 0
        %2556 = vmatprep.subr.bf16.mxu0 0
        %2557 = vmatpush1.bf16.msra.mxu0 0
        %2558 = vmatprep.subr.bf16.mxu0 0
        %2559 = vmatpush1.bf16.msra.mxu0 0
        %2560 = vmatprep.mubr.bf16.mxu0 0
        %2561 = vmatmul.mubr.bf16.gmra.mrb[0].mxu0 %v2523
        %v2562 = vpop.f32.mrb[0].mxu0
        %v2563 = vadd.f32 0.0, %v2562
        %v2564 = vpop.f32.mrb[0].mxu0
        %v2565 = vpop.f32.mrb[0].mxu0
        %v2566 = vpop.f32.mrb[0].mxu0
        %2567 = vdwg.mxu0
        %v2569 = vsel %vm2380, %v2428, 0
        %v2572 = vsel %vm2432, %v2194, 0
        %2574 = vmatprep.subr.bf16.mxu0 0
        %2575 = vmatpush1.bf16.msra.mxu0 %v2572
        %2576 = vmatprep.subr.bf16.mxu0 0
        %2577 = vmatpush1.bf16.msra.mxu0 0
        %2578 = vmatprep.subr.bf16.mxu0 0
        %2579 = vmatpush1.bf16.msra.mxu0 0
        %2580 = vmatprep.subr.bf16.mxu0 0
        %2581 = vmatpush1.bf16.msra.mxu0 0
        %2582 = vmatprep.subr.bf16.mxu0 0
        %2583 = vmatpush1.bf16.msra.mxu0 0
        %2584 = vmatprep.subr.bf16.mxu0 0
        %2585 = vmatpush1.bf16.msra.mxu0 0
        %2586 = vmatprep.subr.bf16.mxu0 0
        %2587 = vmatpush1.bf16.msra.mxu0 0
        %2588 = vmatprep.subr.bf16.mxu0 0
        %2589 = vmatpush1.bf16.msra.mxu0 0
        %2590 = vmatprep.subr.bf16.mxu0 0
        %2591 = vmatpush1.bf16.msra.mxu0 0
        %2592 = vmatprep.subr.bf16.mxu0 0
        %2593 = vmatpush1.bf16.msra.mxu0 0
        %2594 = vmatprep.subr.bf16.mxu0 0
        %2595 = vmatpush1.bf16.msra.mxu0 0
        %2596 = vmatprep.subr.bf16.mxu0 0
        %2597 = vmatpush1.bf16.msra.mxu0 0
        %2598 = vmatprep.subr.bf16.mxu0 0
        %2599 = vmatpush1.bf16.msra.mxu0 0
        %2600 = vmatprep.subr.bf16.mxu0 0
        %2601 = vmatpush1.bf16.msra.mxu0 0
        %2602 = vmatprep.subr.bf16.mxu0 0
        %2603 = vmatpush1.bf16.msra.mxu0 0
        %2604 = vmatprep.subr.bf16.mxu0 0
        %2605 = vmatpush1.bf16.msra.mxu0 0
        %2606 = vmatprep.mubr.bf16.mxu0 0
        %2607 = vmatmul.mubr.bf16.gmra.mrb[0].mxu0 %v2569
        %v2608 = vpop.f32.mrb[0].mxu0
        %v2609 = vadd.f32 0.0, %v2608
        %v2610 = vpop.f32.mrb[0].mxu0
        %v2611 = vpop.f32.mrb[0].mxu0
        %v2612 = vpop.f32.mrb[0].mxu0
        %2613 = vdwg.mxu0
        %v2614 = vcombine.low %v2471, %v2563
        %v2615 = vcombine.high %v2471, %v2563
        %v2617 = vunpack.c.l.s4 1983009808
        %v2618 = vunpack.c.0.s8 %v2617
        %v2619 = vlaneseq
        %v2620 = vshrl.u32 %v2619, 7
        %v2621 = vsub.s32 %v2618, %v2620
        %v2622 = vrot.slane %v2614, %v2621
        %v2624 = vunpack.c.l.s4 1983009808
        %v2625 = vunpack.c.0.s8 %v2624
        %v2626 = vlaneseq
        %v2627 = vshrl.u32 %v2626, 7
        %v2628 = vsub.s32 %v2625, %v2627
        %v2629 = vrot.slane %v2615, %v2628
        %v2630 = vcombine.low %v2517, %v2609
        %v2631 = vcombine.high %v2517, %v2609
        %v2633 = vunpack.c.l.s4 1983009808
        %v2634 = vunpack.c.0.s8 %v2633
        %v2635 = vlaneseq
        %v2636 = vshrl.u32 %v2635, 7
        %v2637 = vsub.s32 %v2634, %v2636
        %v2638 = vrot.slane %v2630, %v2637
        %v2640 = vunpack.c.l.s4 1983009808
        %v2641 = vunpack.c.0.s8 %v2640
        %v2642 = vlaneseq
        %v2643 = vshrl.u32 %v2642, 7
        %v2644 = vsub.s32 %v2641, %v2643
        %v2645 = vrot.slane %v2631, %v2644
        %v2646 = vcombine.low %v2622, %v2638
        %v2647 = vcombine.high %v2622, %v2638
        %v2649 = vunpack.c.l.s4 1934713408
        %v2650 = vunpack.c.0.s8 %v2649
        %v2651 = vlaneseq
        %v2652 = vshrl.u32 %v2651, 7
        %v2653 = vsub.s32 %v2650, %v2652
        %v2654 = vrot.slane %v2646, %v2653
        %v2656 = vunpack.c.l.s4 1934713408
        %v2657 = vunpack.c.0.s8 %v2656
        %v2658 = vlaneseq
        %v2659 = vshrl.u32 %v2658, 7
        %v2660 = vsub.s32 %v2657, %v2659
        %v2661 = vrot.slane %v2647, %v2660
        %v2662 = vcombine.low %v2629, %v2645
        %v2663 = vcombine.high %v2629, %v2645
        %v2665 = vunpack.c.l.s4 1934713408
        %v2666 = vunpack.c.0.s8 %v2665
        %v2667 = vlaneseq
        %v2668 = vshrl.u32 %v2667, 7
        %v2669 = vsub.s32 %v2666, %v2668
        %v2670 = vrot.slane %v2662, %v2669
        %v2672 = vunpack.c.l.s4 1934713408
        %v2673 = vunpack.c.0.s8 %v2672
        %v2674 = vlaneseq
        %v2675 = vshrl.u32 %v2674, 7
        %v2676 = vsub.s32 %v2673, %v2675
        %v2677 = vrot.slane %v2663, %v2676
        %v2678 = vcombine.high %v2654, 0.0
        %v2679 = vcombine.high %v2661, 0.0
        %v2680 = vcombine.high %v2670, 0.0
        %v2681 = vcombine.high %v2677, 0.0
        %v2682 = vcombine.low %v2654, %v2661
        %v2684 = vunpack.c.l.s4 1983009808
        %v2685 = vunpack.c.0.s8 %v2684
        %v2686 = vlaneseq
        %v2687 = vshrl.u32 %v2686, 7
        %v2688 = vsub.s32 %v2685, %v2687
        %v2689 = vrot.slane %v2682, %v2688
        %v2690 = vcombine.low %v2678, %v2679
        %v2692 = vunpack.c.l.s4 1983009808
        %v2693 = vunpack.c.0.s8 %v2692
        %v2694 = vlaneseq
        %v2695 = vshrl.u32 %v2694, 7
        %v2696 = vsub.s32 %v2693, %v2695
        %v2697 = vrot.slane %v2690, %v2696
        %v2698 = vcombine.low %v2670, %v2677
        %v2700 = vunpack.c.l.s4 1983009808
        %v2701 = vunpack.c.0.s8 %v2700
        %v2702 = vlaneseq
        %v2703 = vshrl.u32 %v2702, 7
        %v2704 = vsub.s32 %v2701, %v2703
        %v2705 = vrot.slane %v2698, %v2704
        %v2706 = vcombine.low %v2680, %v2681
        %v2708 = vunpack.c.l.s4 1983009808
        %v2709 = vunpack.c.0.s8 %v2708
        %v2710 = vlaneseq
        %v2711 = vshrl.u32 %v2710, 7
        %v2712 = vsub.s32 %v2709, %v2711
        %v2713 = vrot.slane %v2706, %v2712
        %v2714 = vcombine.low %v2689, %v2697
        %v2715 = vcombine.high %v2689, %v2697
        %v2717 = vunpack.c.l.s4 1934713408
        %v2718 = vunpack.c.0.s8 %v2717
        %v2719 = vlaneseq
        %v2720 = vshrl.u32 %v2719, 7
        %v2721 = vsub.s32 %v2718, %v2720
        %v2722 = vrot.slane %v2714, %v2721
        %v2724 = vunpack.c.l.s4 1934713408
        %v2725 = vunpack.c.0.s8 %v2724
        %v2726 = vlaneseq
        %v2727 = vshrl.u32 %v2726, 7
        %v2728 = vsub.s32 %v2725, %v2727
        %v2729 = vrot.slane %v2715, %v2728
        %v2730 = vcombine.low %v2705, %v2713
        %v2731 = vcombine.high %v2705, %v2713
        %v2733 = vunpack.c.l.s4 1934713408
        %v2734 = vunpack.c.0.s8 %v2733
        %v2735 = vlaneseq
        %v2736 = vshrl.u32 %v2735, 7
        %v2737 = vsub.s32 %v2734, %v2736
        %v2738 = vrot.slane %v2730, %v2737
        %v2740 = vunpack.c.l.s4 1934713408
        %v2741 = vunpack.c.0.s8 %v2740
        %v2742 = vlaneseq
        %v2743 = vshrl.u32 %v2742, 7
        %v2744 = vsub.s32 %v2741, %v2743
        %v2745 = vrot.slane %v2731, %v2744
        %v2746 = vcombine.low %v2722, %v2738
        %v2747 = vcombine.high %v2722, %v2738
        %v2748 = vcombine.low %v2729, %v2745
        %v2749 = vcombine.high %v2729, %v2745
        %2751 = vrot.lane.b32.xlu0 %v2747, 32
        %v2752 = vpop.permute.xlu0 %2751
        %2755 = vrot.lane.b32.xlu0 %v2748, 64
        %v2756 = vpop.permute.xlu0 %2755
        %2759 = vrot.lane.b32.xlu0 %v2749, 96
        %v2760 = vpop.permute.xlu0 %2759
        %v2762 = vsel %vm2195, %v2746, %v2752
        %vm2763 = vcmask 523264
        %v2764 = vsel %vm2763, %v2762, %v2756
        %vm2765 = vcmask 785408
        %v2766 = vsel %vm2765, %v2764, %v2760
        %v2767 = vpack.c.bf16 %v2766, %v2766
        %v2768 = vld [vmem:[%s23] sm:$0xf]
        %v2769 = vld [vmem:[%s23 + $0x4] sm:$0xf]
        %v2770 = vld [vmem:[%s23 + $0x8] sm:$0xf]
        %v2771 = vld [vmem:[%s23 + $0xc] sm:$0xf]
        %v2772 = vld [vmem:[%s23 + $0x10] sm:$0xf]
        %v2773 = vld [vmem:[%s23 + $0x14] sm:$0xf]
        %v2774 = vld [vmem:[%s23 + $0x18] sm:$0xf]
        %v2775 = vld [vmem:[%s23 + $0x1c] sm:$0xf]
        %v2776 = vld [vmem:[%s23 + $0x20] sm:$0xf]
        %v2777 = vld [vmem:[%s23 + $0x24] sm:$0xf]
        %v2778 = vld [vmem:[%s23 + $0x28] sm:$0xf]
        %v2779 = vld [vmem:[%s23 + $0x2c] sm:$0xf]
        %v2780 = vld [vmem:[%s23 + $0x30] sm:$0xf]
        %v2781 = vld [vmem:[%s23 + $0x34] sm:$0xf]
        %v2782 = vld [vmem:[%s23 + $0x38] sm:$0xf]
        %v2783 = vld [vmem:[%s23 + $0x3c] sm:$0xf]
        %v2800 = vunpack.c.l.b16 %v2768
        %v2801 = vunpack.c.l.b16 %v2769
        %v2802 = vunpack.c.l.b16 %v2770
        %v2803 = vunpack.c.l.b16 %v2771
        %v2804 = vunpack.c.l.b16 %v2772
        %v2805 = vunpack.c.l.b16 %v2773
        %v2806 = vunpack.c.l.b16 %v2774
        %v2807 = vunpack.c.l.b16 %v2775
        %v2808 = vunpack.c.l.b16 %v2776
        %v2809 = vunpack.c.l.b16 %v2777
        %v2810 = vunpack.c.l.b16 %v2778
        %v2811 = vunpack.c.l.b16 %v2779
        %v2812 = vunpack.c.l.b16 %v2780
        %v2813 = vunpack.c.l.b16 %v2781
        %v2814 = vunpack.c.l.b16 %v2782
        %v2815 = vunpack.c.l.b16 %v2783
        %v2816 = vpack.c.b16 %v2801, %v2800
        %v2817 = vpack.c.b16 %v2803, %v2802
        %v2818 = vpack.c.b16 %v2805, %v2804
        %v2819 = vpack.c.b16 %v2807, %v2806
        %v2820 = vpack.c.b16 %v2809, %v2808
        %v2821 = vpack.c.b16 %v2811, %v2810
        %v2822 = vpack.c.b16 %v2813, %v2812
        %v2823 = vpack.c.b16 %v2815, %v2814
        %2832 = vmatprep.subr.bf16.mxu0 0
        %2833 = vmatpush1.bf16.msra.mxu0 %v2816
        %2834 = vmatprep.subr.bf16.mxu0 0
        %2835 = vmatpush1.bf16.msra.mxu0 %v2817
        %2836 = vmatprep.subr.bf16.mxu0 0
        %2837 = vmatpush1.bf16.msra.mxu0 %v2818
        %2838 = vmatprep.subr.bf16.mxu0 0
        %2839 = vmatpush1.bf16.msra.mxu0 %v2819
        %2840 = vmatprep.subr.bf16.mxu0 0
        %2841 = vmatpush1.bf16.msra.mxu0 %v2820
        %2842 = vmatprep.subr.bf16.mxu0 0
        %2843 = vmatpush1.bf16.msra.mxu0 %v2821
        %2844 = vmatprep.subr.bf16.mxu0 0
        %2845 = vmatpush1.bf16.msra.mxu0 %v2822
        %2846 = vmatprep.subr.bf16.mxu0 0
        %2847 = vmatpush1.bf16.msra.mxu0 %v2823
        %2848 = vmatprep.subr.bf16.mxu0 0
        %2849 = vmatpush1.bf16.msra.mxu0 0
        %2850 = vmatprep.subr.bf16.mxu0 0
        %2851 = vmatpush1.bf16.msra.mxu0 0
        %2852 = vmatprep.subr.bf16.mxu0 0
        %2853 = vmatpush1.bf16.msra.mxu0 0
        %2854 = vmatprep.subr.bf16.mxu0 0
        %2855 = vmatpush1.bf16.msra.mxu0 0
        %2856 = vmatprep.subr.bf16.mxu0 0
        %2857 = vmatpush1.bf16.msra.mxu0 0
        %2858 = vmatprep.subr.bf16.mxu0 0
        %2859 = vmatpush1.bf16.msra.mxu0 0
        %2860 = vmatprep.subr.bf16.mxu0 0
        %2861 = vmatpush1.bf16.msra.mxu0 0
        %2862 = vmatprep.subr.bf16.mxu0 0
        %2863 = vmatpush1.bf16.msra.mxu0 0
        %2864 = vmatprep.mubr.bf16.mxu0 0
        %2865 = vmatmul.mubr.bf16.gmra.mrb[0].mxu0 %v2767
        %v2866 = vpop.f32.mrb[0].mxu0
        %v2867 = vadd.f32 0.0, %v2866
        %v2868 = vpop.f32.mrb[0].mxu0
        %v2869 = vpop.f32.mrb[0].mxu0
        %v2870 = vpop.f32.mrb[0].mxu0
        %2871 = vdwg.mxu0
        %v2872 = vadd.f32 %v1458, %v2867
        %v2873 = vld [vmem:[#allocation10] sm:$0x1]
        %v2875 = vlaneseq
        %v2876 = vshrl.u32 %v2875, 7
        %v2877 = vsub.s32 0, %v2876
        %v2878 = vrot.slane %v2873, %v2877
        %v2880 = vadd.f32 %v2872, %v2878
        %2881 = vadd.xlane.f32.xlu0 %v2880
        %v2882 = vpop.xlane.xlu0 %2881
        %v2883 = vmul.f32 %v2882, %v1090
        %v2884 = vsub.f32 %v2880, %v2883
        %v2885 = vmul.f32 %v2884, %v2884
        %2886 = vadd.xlane.f32.xlu0 %v2885
        %v2887 = vpop.xlane.xlu0 %2886
        %v2888 = vmul.f32 %v2887, %v1090
        %v2889 = vadd.f32 %v2888, 1e-05
        %v2890 = vrsqrt.pop %v2889
        %v2891 = vmul.f32 %v2884, %v2890
        %v2892 = vld [vmem:[#allocation12] sm:$0x1]
        %v2894 = vlaneseq
        %v2895 = vshrl.u32 %v2894, 7
        %v2896 = vsub.s32 0, %v2895
        %v2897 = vrot.slane %v2892, %v2896
        %v2899 = vmul.f32 %v2891, %v2897
        %v2900 = vld [vmem:[#allocation13] sm:$0x1]
        %v2902 = vlaneseq
        %v2903 = vshrl.u32 %v2902, 7
        %v2904 = vsub.s32 0, %v2903
        %v2905 = vrot.slane %v2900, %v2904
        %v2907 = vadd.f32 %v2899, %v2905
        %v2908 = vpack.c.bf16 %v2907, %v2907
        %v2909 = vld [vmem:[%s31] sm:$0xff]
        %v2910 = vld [vmem:[%s31 + $0x8] sm:$0xff]
        %v2911 = vld [vmem:[%s31 + $0x10] sm:$0xff]
        %v2912 = vld [vmem:[%s31 + $0x18] sm:$0xff]
        %v2913 = vld [vmem:[%s31 + $0x20] sm:$0xff]
        %v2914 = vld [vmem:[%s31 + $0x28] sm:$0xff]
        %v2915 = vld [vmem:[%s31 + $0x30] sm:$0xff]
        %v2916 = vld [vmem:[%s31 + $0x38] sm:$0xff]
        %v2917 = vld [vmem:[%s31 + $0x40] sm:$0xff]
        %v2918 = vld [vmem:[%s31 + $0x48] sm:$0xff]
        %v2919 = vld [vmem:[%s31 + $0x50] sm:$0xff]
        %v2920 = vld [vmem:[%s31 + $0x58] sm:$0xff]
        %v2921 = vld [vmem:[%s31 + $0x60] sm:$0xff]
        %v2922 = vld [vmem:[%s31 + $0x68] sm:$0xff]
        %v2923 = vld [vmem:[%s31 + $0x70] sm:$0xff]
        %v2924 = vld [vmem:[%s31 + $0x78] sm:$0xff]
        %v2925 = vld [vmem:[%s33] sm:$0x3]
        %v2927 = vlaneseq
        %v2928 = vshrl.u32 %v2927, 7
        %v2929 = vsub.s32 0, %v2928
        %v2930 = vrot.slane %v2925, %v2929
        %v2931 = vlaneseq
        %v2932 = vshrl.u32 %v2931, 7
        %v2933 = vsub.s32 1, %v2932
        %v2934 = vrot.slane %v2925, %v2933
        %v2953 = vunpack.c.l.b16 %v2909
        %v2954 = vunpack.c.h.b16 %v2909
        %v2955 = vunpack.c.l.b16 %v2910
        %v2956 = vunpack.c.h.b16 %v2910
        %v2957 = vunpack.c.l.b16 %v2911
        %v2958 = vunpack.c.h.b16 %v2911
        %v2959 = vunpack.c.l.b16 %v2912
        %v2960 = vunpack.c.h.b16 %v2912
        %v2961 = vunpack.c.l.b16 %v2913
        %v2962 = vunpack.c.h.b16 %v2913
        %v2963 = vunpack.c.l.b16 %v2914
        %v2964 = vunpack.c.h.b16 %v2914
        %v2965 = vunpack.c.l.b16 %v2915
        %v2966 = vunpack.c.h.b16 %v2915
        %v2967 = vunpack.c.l.b16 %v2916
        %v2968 = vunpack.c.h.b16 %v2916
        %v2969 = vunpack.c.l.b16 %v2917
        %v2970 = vunpack.c.h.b16 %v2917
        %v2971 = vunpack.c.l.b16 %v2918
        %v2972 = vunpack.c.h.b16 %v2918
        %v2973 = vunpack.c.l.b16 %v2919
        %v2974 = vunpack.c.h.b16 %v2919
        %v2975 = vunpack.c.l.b16 %v2920
        %v2976 = vunpack.c.h.b16 %v2920
        %v2977 = vunpack.c.l.b16 %v2921
        %v2978 = vunpack.c.h.b16 %v2921
        %v2979 = vunpack.c.l.b16 %v2922
        %v2980 = vunpack.c.h.b16 %v2922
        %v2981 = vunpack.c.l.b16 %v2923
        %v2982 = vunpack.c.h.b16 %v2923
        %v2983 = vunpack.c.l.b16 %v2924
        %v2984 = vunpack.c.h.b16 %v2924
        %v2985 = vpack.c.b16 %v2955, %v2953
        %v2986 = vpack.c.b16 %v2956, %v2954
        %v2987 = vpack.c.b16 %v2959, %v2957
        %v2988 = vpack.c.b16 %v2960, %v2958
        %v2989 = vpack.c.b16 %v2963, %v2961
        %v2990 = vpack.c.b16 %v2964, %v2962
        %v2991 = vpack.c.b16 %v2967, %v2965
        %v2992 = vpack.c.b16 %v2968, %v2966
        %v2993 = vpack.c.b16 %v2971, %v2969
        %v2994 = vpack.c.b16 %v2972, %v2970
        %v2995 = vpack.c.b16 %v2975, %v2973
        %v2996 = vpack.c.b16 %v2976, %v2974
        %v2997 = vpack.c.b16 %v2979, %v2977
        %v2998 = vpack.c.b16 %v2980, %v2978
        %v2999 = vpack.c.b16 %v2983, %v2981
        %v3000 = vpack.c.b16 %v2984, %v2982
        %3017 = vmatprep.subr.bf16.mxu0 %v2986
        %3018 = vmatpush1.bf16.msra.mxu0 %v2985
        %3019 = vmatprep.subr.bf16.mxu0 %v2988
        %3020 = vmatpush1.bf16.msra.mxu0 %v2987
        %3021 = vmatprep.subr.bf16.mxu0 %v2990
        %3022 = vmatpush1.bf16.msra.mxu0 %v2989
        %3023 = vmatprep.subr.bf16.mxu0 %v2992
        %3024 = vmatpush1.bf16.msra.mxu0 %v2991
        %3025 = vmatprep.subr.bf16.mxu0 %v2994
        %3026 = vmatpush1.bf16.msra.mxu0 %v2993
        %3027 = vmatprep.subr.bf16.mxu0 %v2996
        %3028 = vmatpush1.bf16.msra.mxu0 %v2995
        %3029 = vmatprep.subr.bf16.mxu0 %v2998
        %3030 = vmatpush1.bf16.msra.mxu0 %v2997
        %3031 = vmatprep.subr.bf16.mxu0 %v3000
        %3032 = vmatpush1.bf16.msra.mxu0 %v2999
        %3033 = vmatprep.subr.bf16.mxu0 0
        %3034 = vmatpush1.bf16.msra.mxu0 0
        %3035 = vmatprep.subr.bf16.mxu0 0
        %3036 = vmatpush1.bf16.msra.mxu0 0
        %3037 = vmatprep.subr.bf16.mxu0 0
        %3038 = vmatpush1.bf16.msra.mxu0 0
        %3039 = vmatprep.subr.bf16.mxu0 0
        %3040 = vmatpush1.bf16.msra.mxu0 0
        %3041 = vmatprep.subr.bf16.mxu0 0
        %3042 = vmatpush1.bf16.msra.mxu0 0
        %3043 = vmatprep.subr.bf16.mxu0 0
        %3044 = vmatpush1.bf16.msra.mxu0 0
        %3045 = vmatprep.subr.bf16.mxu0 0
        %3046 = vmatpush1.bf16.msra.mxu0 0
        %3047 = vmatprep.subr.bf16.mxu0 0
        %3048 = vmatpush1.bf16.msra.mxu0 0
        %3049 = vmatprep.mubr.bf16.mxu0 0
        %3050 = vmatmul.mubr.bf16.gmra.mrb[0].mxu0 %v2908
        %v3051 = vpop.f32.mrb[0].mxu0
        %v3052 = vadd.f32 %v2930, %v3051
        %v3053 = vpop.f32.mrb[0].mxu0
        %v3054 = vadd.f32 %v2934, %v3053
        %v3055 = vpop.f32.mrb[0].mxu0
        %v3056 = vpop.f32.mrb[0].mxu0
        %3057 = vdwg.mxu0
        %v3058 = vxor.u32 %v3054, 2147483648
        %v3059 = vmul.f32 %v3058, 1.442695
        %v3060 = vpow.pop %v3059
        %v3061 = vadd.f32 %v3060, 1.0
        %v3062 = vrcp.pop %v3061
        %v3063 = vmul.f32 1.0, %v3062
        %v3064 = vmul.f32 %v3052, %v3063
        %v3065 = vld [vmem:[%s35] sm:$0x7f]
        %v3066 = vlaneseq
        %v3067 = vshrl.u32 %v3066, 7
        %v3068 = vlaneseq
        %v3069 = vshrl.u32 %v3068, 7
        %v3070 = vsub.s32 3, %v3069
        %v3071 = vrot.slane %v3065, %v3070
        %v3072 = vmul.f32 %v3064, %v3071
        %v3073 = vrot.slane %v3064, 5
        %v3074 = vadd.s32 %v3067, 4294967293
        %vm3075 = vcmp.ge.s32.totalorder %v3074, 0
        %vm3076 = vcmp.lt.s32.totalorder %v3074, 8
        %vm3077 = vmand %vm3075, %vm3076
        %v3078 = vsel %vm3077, 1, 0
        %vm3079 = vcmp.eq.s32.totalorder %v3078, 1
        %v3080 = vsel %vm3079, %v3073, 0.0
        %v3081 = vlaneseq
        %v3082 = vshrl.u32 %v3081, 7
        %v3083 = vsub.s32 0, %v3082
        %v3084 = vrot.slane %v3065, %v3083
        %v3085 = vmul.f32 %v3080, %v3084
        %v3086 = vadd.f32 %v3072, %v3085
        %v3087 = vrot.slane %v3064, 6
        %v3088 = vadd.s32 %v3067, 4294967294
        %vm3089 = vcmp.ge.s32.totalorder %v3088, 0
        %vm3090 = vcmp.lt.s32.totalorder %v3088, 8
        %vm3091 = vmand %vm3089, %vm3090
        %v3092 = vsel %vm3091, 1, 0
        %vm3093 = vcmp.eq.s32.totalorder %v3092, 1
        %v3094 = vsel %vm3093, %v3087, 0.0
        %v3095 = vlaneseq
        %v3096 = vshrl.u32 %v3095, 7
        %v3097 = vsub.s32 1, %v3096
        %v3098 = vrot.slane %v3065, %v3097
        %v3099 = vmul.f32 %v3094, %v3098
        %v3100 = vadd.f32 %v3086, %v3099
        %v3101 = vrot.slane %v3064, 7
        %v3102 = vadd.s32 %v3067, 4294967295
        %vm3103 = vcmp.ge.s32.totalorder %v3102, 0
        %vm3104 = vcmp.lt.s32.totalorder %v3102, 8
        %vm3105 = vmand %vm3103, %vm3104
        %v3106 = vsel %vm3105, 1, 0
        %vm3107 = vcmp.eq.s32.totalorder %v3106, 1
        %v3108 = vsel %vm3107, %v3101, 0.0
        %v3109 = vlaneseq
        %v3110 = vshrl.u32 %v3109, 7
        %v3111 = vsub.s32 2, %v3110
        %v3112 = vrot.slane %v3065, %v3111
        %v3113 = vmul.f32 %v3108, %v3112
        %v3114 = vadd.f32 %v3100, %v3113
        %v3115 = vrot.slane %v3064, 1
        %v3116 = vadd.s32 %v3067, 1
        %vm3117 = vcmp.ge.s32.totalorder %v3116, 0
        %vm3118 = vcmp.lt.s32.totalorder %v3116, 8
        %vm3119 = vmand %vm3117, %vm3118
        %v3120 = vsel %vm3119, 1, 0
        %vm3121 = vcmp.eq.s32.totalorder %v3120, 1
        %v3122 = vsel %vm3121, %v3115, 0.0
        %v3123 = vlaneseq
        %v3124 = vshrl.u32 %v3123, 7
        %v3125 = vsub.s32 4, %v3124
        %v3126 = vrot.slane %v3065, %v3125
        %v3127 = vmul.f32 %v3122, %v3126
        %v3128 = vadd.f32 %v3114, %v3127
        %v3129 = vrot.slane %v3064, 2
        %v3130 = vadd.s32 %v3067, 2
        %vm3131 = vcmp.ge.s32.totalorder %v3130, 0
        %vm3132 = vcmp.lt.s32.totalorder %v3130, 8
        %vm3133 = vmand %vm3131, %vm3132
        %v3134 = vsel %vm3133, 1, 0
        %vm3135 = vcmp.eq.s32.totalorder %v3134, 1
        %v3136 = vsel %vm3135, %v3129, 0.0
        %v3137 = vlaneseq
        %v3138 = vshrl.u32 %v3137, 7
        %v3139 = vsub.s32 5, %v3138
        %v3140 = vrot.slane %v3065, %v3139
        %v3141 = vmul.f32 %v3136, %v3140
        %v3142 = vadd.f32 %v3128, %v3141
        %v3143 = vrot.slane %v3064, 3
        %v3144 = vadd.s32 %v3067, 3
        %vm3145 = vcmp.ge.s32.totalorder %v3144, 0
        %vm3146 = vcmp.lt.s32.totalorder %v3144, 8
        %vm3147 = vmand %vm3145, %vm3146
        %v3148 = vsel %vm3147, 1, 0
        %vm3149 = vcmp.eq.s32.totalorder %v3148, 1
        %v3150 = vsel %vm3149, %v3143, 0.0
        %v3151 = vlaneseq
        %v3152 = vshrl.u32 %v3151, 7
        %v3153 = vsub.s32 6, %v3152
        %v3154 = vrot.slane %v3065, %v3153
        %v3155 = vmul.f32 %v3150, %v3154
        %v3156 = vadd.f32 %v3142, %v3155
        %v3157 = vld [vmem:[#allocation15] sm:$0x1]
        %v3159 = vlaneseq
        %v3160 = vshrl.u32 %v3159, 7
        %v3161 = vsub.s32 0, %v3160
        %v3162 = vrot.slane %v3157, %v3161
        %v3164 = vadd.f32 %v3156, %v3162
        %v3165 = vmul.f32 %v3164, 0.999995
        %v3166 = vxor.u32 %v3165, 2147483648
        %v3167 = vmul.f32 %v3166, 1.442695
        %v3168 = vpow.pop %v3167
        %v3169 = vadd.f32 %v3168, 1.0
        %v3170 = vrcp.pop %v3169
        %v3171 = vmul.f32 1.0, %v3170
        %v3172 = vmul.f32 %v3165, %v3171
        %v3173 = vpack.c.bf16 %v3172, %v3172
        %v3174 = vld [vmem:[%s39] sm:$0xf]
        %v3175 = vld [vmem:[%s39 + $0x4] sm:$0xf]
        %v3176 = vld [vmem:[%s39 + $0x8] sm:$0xf]
        %v3177 = vld [vmem:[%s39 + $0xc] sm:$0xf]
        %v3178 = vld [vmem:[%s39 + $0x10] sm:$0xf]
        %v3179 = vld [vmem:[%s39 + $0x14] sm:$0xf]
        %v3180 = vld [vmem:[%s39 + $0x18] sm:$0xf]
        %v3181 = vld [vmem:[%s39 + $0x1c] sm:$0xf]
        %v3182 = vld [vmem:[%s39 + $0x20] sm:$0xf]
        %v3183 = vld [vmem:[%s39 + $0x24] sm:$0xf]
        %v3184 = vld [vmem:[%s39 + $0x28] sm:$0xf]
        %v3185 = vld [vmem:[%s39 + $0x2c] sm:$0xf]
        %v3186 = vld [vmem:[%s39 + $0x30] sm:$0xf]
        %v3187 = vld [vmem:[%s39 + $0x34] sm:$0xf]
        %v3188 = vld [vmem:[%s39 + $0x38] sm:$0xf]
        %v3189 = vld [vmem:[%s39 + $0x3c] sm:$0xf]
        %v3206 = vunpack.c.l.b16 %v3174
        %v3207 = vunpack.c.l.b16 %v3175
        %v3208 = vunpack.c.l.b16 %v3176
        %v3209 = vunpack.c.l.b16 %v3177
        %v3210 = vunpack.c.l.b16 %v3178
        %v3211 = vunpack.c.l.b16 %v3179
        %v3212 = vunpack.c.l.b16 %v3180
        %v3213 = vunpack.c.l.b16 %v3181
        %v3214 = vunpack.c.l.b16 %v3182
        %v3215 = vunpack.c.l.b16 %v3183
        %v3216 = vunpack.c.l.b16 %v3184
        %v3217 = vunpack.c.l.b16 %v3185
        %v3218 = vunpack.c.l.b16 %v3186
        %v3219 = vunpack.c.l.b16 %v3187
        %v3220 = vunpack.c.l.b16 %v3188
        %v3221 = vunpack.c.l.b16 %v3189
        %v3222 = vpack.c.b16 %v3207, %v3206
        %v3223 = vpack.c.b16 %v3209, %v3208
        %v3224 = vpack.c.b16 %v3211, %v3210
        %v3225 = vpack.c.b16 %v3213, %v3212
        %v3226 = vpack.c.b16 %v3215, %v3214
        %v3227 = vpack.c.b16 %v3217, %v3216
        %v3228 = vpack.c.b16 %v3219, %v3218
        %v3229 = vpack.c.b16 %v3221, %v3220
        %3238 = vmatprep.subr.bf16.mxu0 0
        %3239 = vmatpush1.bf16.msra.mxu0 %v3222
        %3240 = vmatprep.subr.bf16.mxu0 0
        %3241 = vmatpush1.bf16.msra.mxu0 %v3223
        %3242 = vmatprep.subr.bf16.mxu0 0
        %3243 = vmatpush1.bf16.msra.mxu0 %v3224
        %3244 = vmatprep.subr.bf16.mxu0 0
        %3245 = vmatpush1.bf16.msra.mxu0 %v3225
        %3246 = vmatprep.subr.bf16.mxu0 0
        %3247 = vmatpush1.bf16.msra.mxu0 %v3226
        %3248 = vmatprep.subr.bf16.mxu0 0
        %3249 = vmatpush1.bf16.msra.mxu0 %v3227
        %3250 = vmatprep.subr.bf16.mxu0 0
        %3251 = vmatpush1.bf16.msra.mxu0 %v3228
        %3252 = vmatprep.subr.bf16.mxu0 0
        %3253 = vmatpush1.bf16.msra.mxu0 %v3229
        %3254 = vmatprep.subr.bf16.mxu0 0
        %3255 = vmatpush1.bf16.msra.mxu0 0
        %3256 = vmatprep.subr.bf16.mxu0 0
        %3257 = vmatpush1.bf16.msra.mxu0 0
        %3258 = vmatprep.subr.bf16.mxu0 0
        %3259 = vmatpush1.bf16.msra.mxu0 0
        %3260 = vmatprep.subr.bf16.mxu0 0
        %3261 = vmatpush1.bf16.msra.mxu0 0
        %3262 = vmatprep.subr.bf16.mxu0 0
        %3263 = vmatpush1.bf16.msra.mxu0 0
        %3264 = vmatprep.subr.bf16.mxu0 0
        %3265 = vmatpush1.bf16.msra.mxu0 0
        %3266 = vmatprep.subr.bf16.mxu0 0
        %3267 = vmatpush1.bf16.msra.mxu0 0
        %3268 = vmatprep.subr.bf16.mxu0 0
        %3269 = vmatpush1.bf16.msra.mxu0 0
        %3270 = vmatprep.mubr.bf16.mxu0 0
        %3271 = vmatmul.mubr.bf16.gmra.mrb[0].mxu0 %v3173
        %v3272 = vpop.f32.mrb[0].mxu0
        %v3273 = vadd.f32 0.0, %v3272
        %v3274 = vpop.f32.mrb[0].mxu0
        %v3275 = vpop.f32.mrb[0].mxu0
        %v3276 = vpop.f32.mrb[0].mxu0
        %3277 = vdwg.mxu0
        %v3278 = vadd.f32 %v2880, %v3273
        %v3279 = vld [vmem:[#allocation16] sm:$0x1]
        %v3281 = vlaneseq
        %v3282 = vshrl.u32 %v3281, 7
        %v3283 = vsub.s32 0, %v3282
        %v3284 = vrot.slane %v3279, %v3283
        %v3286 = vadd.f32 %v3278, %v3284
        %3287 = vadd.xlane.f32.xlu0 %v3286
        %v3288 = vpop.xlane.xlu0 %3287
        %v3289 = vmul.f32 %v3288, %v1090
        %v3290 = vsub.f32 %v3286, %v3289
        %v3291 = vmul.f32 %v3290, %v3290
        %3292 = vadd.xlane.f32.xlu0 %v3291
        %v3293 = vpop.xlane.xlu0 %3292
        %v3294 = vmul.f32 %v3293, %v1090
        %v3295 = vadd.f32 %v3294, 1e-05
        %v3296 = vrsqrt.pop %v3295
        %v3297 = vmul.f32 %v3290, %v3296
        %v3298 = vld [vmem:[#allocation18] sm:$0x1]
        %v3300 = vlaneseq
        %v3301 = vshrl.u32 %v3300, 7
        %v3302 = vsub.s32 0, %v3301
        %v3303 = vrot.slane %v3298, %v3302
        %v3305 = vmul.f32 %v3297, %v3303
        %v3306 = vld [vmem:[#allocation19] sm:$0x1]
        %v3308 = vlaneseq
        %v3309 = vshrl.u32 %v3308, 7
        %v3310 = vsub.s32 0, %v3309
        %v3311 = vrot.slane %v3306, %v3310
        %v3313 = vadd.f32 %v3305, %v3311
        %v3314 = vpack.c.bf16 %v3313, %v3313
        %v3315 = vld [vmem:[%s47] sm:$0xff]
        %v3316 = vld [vmem:[%s47 + $0x8] sm:$0xff]
        %v3317 = vld [vmem:[%s47 + $0x10] sm:$0xff]
        %v3318 = vld [vmem:[%s47 + $0x18] sm:$0xff]
        %v3319 = vld [vmem:[%s47 + $0x20] sm:$0xff]
        %v3320 = vld [vmem:[%s47 + $0x28] sm:$0xff]
        %v3321 = vld [vmem:[%s47 + $0x30] sm:$0xff]
        %v3322 = vld [vmem:[%s47 + $0x38] sm:$0xff]
        %v3323 = vld [vmem:[%s47 + $0x40] sm:$0xff]
        %v3324 = vld [vmem:[%s47 + $0x48] sm:$0xff]
        %v3325 = vld [vmem:[%s47 + $0x50] sm:$0xff]
        %v3326 = vld [vmem:[%s47 + $0x58] sm:$0xff]
        %v3327 = vld [vmem:[%s47 + $0x60] sm:$0xff]
        %v3328 = vld [vmem:[%s47 + $0x68] sm:$0xff]
        %v3329 = vld [vmem:[%s47 + $0x70] sm:$0xff]
        %v3330 = vld [vmem:[%s47 + $0x78] sm:$0xff]
        %v3331 = vld [vmem:[%s49] sm:$0x3]
        %v3333 = vlaneseq
        %v3334 = vshrl.u32 %v3333, 7
        %v3335 = vsub.s32 0, %v3334
        %v3336 = vrot.slane %v3331, %v3335
        %v3337 = vlaneseq
        %v3338 = vshrl.u32 %v3337, 7
        %v3339 = vsub.s32 1, %v3338
        %v3340 = vrot.slane %v3331, %v3339
        %v3359 = vunpack.c.l.b16 %v3315
        %v3360 = vunpack.c.h.b16 %v3315
        %v3361 = vunpack.c.l.b16 %v3316
        %v3362 = vunpack.c.h.b16 %v3316
        %v3363 = vunpack.c.l.b16 %v3317
        %v3364 = vunpack.c.h.b16 %v3317
        %v3365 = vunpack.c.l.b16 %v3318
        %v3366 = vunpack.c.h.b16 %v3318
        %v3367 = vunpack.c.l.b16 %v3319
        %v3368 = vunpack.c.h.b16 %v3319
        %v3369 = vunpack.c.l.b16 %v3320
        %v3370 = vunpack.c.h.b16 %v3320
        %v3371 = vunpack.c.l.b16 %v3321
        %v3372 = vunpack.c.h.b16 %v3321
        %v3373 = vunpack.c.l.b16 %v3322
        %v3374 = vunpack.c.h.b16 %v3322
        %v3375 = vunpack.c.l.b16 %v3323
        %v3376 = vunpack.c.h.b16 %v3323
        %v3377 = vunpack.c.l.b16 %v3324
        %v3378 = vunpack.c.h.b16 %v3324
        %v3379 = vunpack.c.l.b16 %v3325
        %v3380 = vunpack.c.h.b16 %v3325
        %v3381 = vunpack.c.l.b16 %v3326
        %v3382 = vunpack.c.h.b16 %v3326
        %v3383 = vunpack.c.l.b16 %v3327
        %v3384 = vunpack.c.h.b16 %v3327
        %v3385 = vunpack.c.l.b16 %v3328
        %v3386 = vunpack.c.h.b16 %v3328
        %v3387 = vunpack.c.l.b16 %v3329
        %v3388 = vunpack.c.h.b16 %v3329
        %v3389 = vunpack.c.l.b16 %v3330
        %v3390 = vunpack.c.h.b16 %v3330
        %v3391 = vpack.c.b16 %v3361, %v3359
        %v3392 = vpack.c.b16 %v3362, %v3360
        %v3393 = vpack.c.b16 %v3365, %v3363
        %v3394 = vpack.c.b16 %v3366, %v3364
        %v3395 = vpack.c.b16 %v3369, %v3367
        %v3396 = vpack.c.b16 %v3370, %v3368
        %v3397 = vpack.c.b16 %v3373, %v3371
        %v3398 = vpack.c.b16 %v3374, %v3372
        %v3399 = vpack.c.b16 %v3377, %v3375
        %v3400 = vpack.c.b16 %v3378, %v3376
        %v3401 = vpack.c.b16 %v3381, %v3379
        %v3402 = vpack.c.b16 %v3382, %v3380
        %v3403 = vpack.c.b16 %v3385, %v3383
        %v3404 = vpack.c.b16 %v3386, %v3384
        %v3405 = vpack.c.b16 %v3389, %v3387
        %v3406 = vpack.c.b16 %v3390, %v3388
        %3423 = vmatprep.subr.bf16.mxu0 %v3392
        %3424 = vmatpush1.bf16.msra.mxu0 %v3391
        %3425 = vmatprep.subr.bf16.mxu0 %v3394
        %3426 = vmatpush1.bf16.msra.mxu0 %v3393
        %3427 = vmatprep.subr.bf16.mxu0 %v3396
        %3428 = vmatpush1.bf16.msra.mxu0 %v3395
        %3429 = vmatprep.subr.bf16.mxu0 %v3398
        %3430 = vmatpush1.bf16.msra.mxu0 %v3397
        %3431 = vmatprep.subr.bf16.mxu0 %v3400
        %3432 = vmatpush1.bf16.msra.mxu0 %v3399
        %3433 = vmatprep.subr.bf16.mxu0 %v3402
        %3434 = vmatpush1.bf16.msra.mxu0 %v3401
        %3435 = vmatprep.subr.bf16.mxu0 %v3404
        %3436 = vmatpush1.bf16.msra.mxu0 %v3403
        %3437 = vmatprep.subr.bf16.mxu0 %v3406
        %3438 = vmatpush1.bf16.msra.mxu0 %v3405
        %3439 = vmatprep.subr.bf16.mxu0 0
        %3440 = vmatpush1.bf16.msra.mxu0 0
        %3441 = vmatprep.subr.bf16.mxu0 0
        %3442 = vmatpush1.bf16.msra.mxu0 0
        %3443 = vmatprep.subr.bf16.mxu0 0
        %3444 = vmatpush1.bf16.msra.mxu0 0
        %3445 = vmatprep.subr.bf16.mxu0 0
        %3446 = vmatpush1.bf16.msra.mxu0 0
        %3447 = vmatprep.subr.bf16.mxu0 0
        %3448 = vmatpush1.bf16.msra.mxu0 0
        %3449 = vmatprep.subr.bf16.mxu0 0
        %3450 = vmatpush1.bf16.msra.mxu0 0
        %3451 = vmatprep.subr.bf16.mxu0 0
        %3452 = vmatpush1.bf16.msra.mxu0 0
        %3453 = vmatprep.subr.bf16.mxu0 0
        %3454 = vmatpush1.bf16.msra.mxu0 0
        %3455 = vmatprep.mubr.bf16.mxu0 0
        %3456 = vmatmul.mubr.bf16.gmra.mrb[0].mxu0 %v3314
        %v3457 = vpop.f32.mrb[0].mxu0
        %v3458 = vadd.f32 %v3336, %v3457
        %v3459 = vpop.f32.mrb[0].mxu0
        %v3460 = vadd.f32 %v3340, %v3459
        %v3461 = vpop.f32.mrb[0].mxu0
        %v3462 = vpop.f32.mrb[0].mxu0
        %3463 = vdwg.mxu0
        %v3464 = vxor.u32 %v3458, 2147483648
        %v3465 = vxor.u32 %v3460, 2147483648
        %v3466 = vmul.f32 %v3464, 1.442695
        %v3467 = vpow.pop %v3466
        %v3468 = vmul.f32 %v3465, 1.442695
        %v3469 = vpow.pop %v3468
        %v3470 = vadd.f32 %v3467, 1.0
        %v3471 = vadd.f32 %v3469, 1.0
        %v3472 = vrcp.pop %v3470
        %v3473 = vmul.f32 1.0, %v3472
        %v3474 = vrcp.pop %v3471
        %v3475 = vmul.f32 1.0, %v3474
        %v3476 = vmul.f32 %v3458, %v3473
        %v3477 = vmul.f32 %v3460, %v3475
        %v3478 = vpack.c.bf16 %v3476, %v3476
        %v3479 = vpack.c.bf16 %v3477, %v3477
        %v3480 = vld [vmem:[%s51] sm:$0xf]
        %v3481 = vld [vmem:[%s51 + $0x4] sm:$0xf]
        %v3482 = vld [vmem:[%s51 + $0x8] sm:$0xf]
        %v3483 = vld [vmem:[%s51 + $0xc] sm:$0xf]
        %v3484 = vld [vmem:[%s51 + $0x10] sm:$0xf]
        %v3485 = vld [vmem:[%s51 + $0x14] sm:$0xf]
        %v3486 = vld [vmem:[%s51 + $0x18] sm:$0xf]
        %v3487 = vld [vmem:[%s51 + $0x1c] sm:$0xf]
        %v3488 = vld [vmem:[%s51 + $0x20] sm:$0xf]
        %v3489 = vld [vmem:[%s51 + $0x24] sm:$0xf]
        %v3490 = vld [vmem:[%s51 + $0x28] sm:$0xf]
        %v3491 = vld [vmem:[%s51 + $0x2c] sm:$0xf]
        %v3492 = vld [vmem:[%s51 + $0x30] sm:$0xf]
        %v3493 = vld [vmem:[%s51 + $0x34] sm:$0xf]
        %v3494 = vld [vmem:[%s51 + $0x38] sm:$0xf]
        %v3495 = vld [vmem:[%s51 + $0x3c] sm:$0xf]
        %v3496 = vld [vmem:[%s51 + $0x40] sm:$0xf]
        %v3497 = vld [vmem:[%s51 + $0x44] sm:$0xf]
        %v3498 = vld [vmem:[%s51 + $0x48] sm:$0xf]
        %v3499 = vld [vmem:[%s51 + $0x4c] sm:$0xf]
        %v3500 = vld [vmem:[%s51 + $0x50] sm:$0xf]
        %v3501 = vld [vmem:[%s51 + $0x54] sm:$0xf]
        %v3502 = vld [vmem:[%s51 + $0x58] sm:$0xf]
        %v3503 = vld [vmem:[%s51 + $0x5c] sm:$0xf]
        %v3504 = vld [vmem:[%s51 + $0x60] sm:$0xf]
        %v3505 = vld [vmem:[%s51 + $0x64] sm:$0xf]
        %v3506 = vld [vmem:[%s51 + $0x68] sm:$0xf]
        %v3507 = vld [vmem:[%s51 + $0x6c] sm:$0xf]
        %v3508 = vld [vmem:[%s51 + $0x70] sm:$0xf]
        %v3509 = vld [vmem:[%s51 + $0x74] sm:$0xf]
        %v3510 = vld [vmem:[%s51 + $0x78] sm:$0xf]
        %v3511 = vld [vmem:[%s51 + $0x7c] sm:$0xf]
        %v3512 = vld [vmem:[#allocation21] sm:$0x1]
        %v3514 = vlaneseq
        %v3515 = vshrl.u32 %v3514, 7
        %v3516 = vsub.s32 0, %v3515
        %v3517 = vrot.slane %v3512, %v3516
        %v3551 = vunpack.c.l.b16 %v3480
        %v3552 = vunpack.c.l.b16 %v3481
        %v3553 = vunpack.c.l.b16 %v3482
        %v3554 = vunpack.c.l.b16 %v3483
        %v3555 = vunpack.c.l.b16 %v3484
        %v3556 = vunpack.c.l.b16 %v3485
        %v3557 = vunpack.c.l.b16 %v3486
        %v3558 = vunpack.c.l.b16 %v3487
        %v3559 = vunpack.c.l.b16 %v3488
        %v3560 = vunpack.c.l.b16 %v3489
        %v3561 = vunpack.c.l.b16 %v3490
        %v3562 = vunpack.c.l.b16 %v3491
        %v3563 = vunpack.c.l.b16 %v3492
        %v3564 = vunpack.c.l.b16 %v3493
        %v3565 = vunpack.c.l.b16 %v3494
        %v3566 = vunpack.c.l.b16 %v3495
        %v3567 = vunpack.c.l.b16 %v3496
        %v3568 = vunpack.c.l.b16 %v3497
        %v3569 = vunpack.c.l.b16 %v3498
        %v3570 = vunpack.c.l.b16 %v3499
        %v3571 = vunpack.c.l.b16 %v3500
        %v3572 = vunpack.c.l.b16 %v3501
        %v3573 = vunpack.c.l.b16 %v3502
        %v3574 = vunpack.c.l.b16 %v3503
        %v3575 = vunpack.c.l.b16 %v3504
        %v3576 = vunpack.c.l.b16 %v3505
        %v3577 = vunpack.c.l.b16 %v3506
        %v3578 = vunpack.c.l.b16 %v3507
        %v3579 = vunpack.c.l.b16 %v3508
        %v3580 = vunpack.c.l.b16 %v3509
        %v3581 = vunpack.c.l.b16 %v3510
        %v3582 = vunpack.c.l.b16 %v3511
        %v3583 = vpack.c.b16 %v3552, %v3551
        %v3584 = vpack.c.b16 %v3554, %v3553
        %v3585 = vpack.c.b16 %v3556, %v3555
        %v3586 = vpack.c.b16 %v3558, %v3557
        %v3587 = vpack.c.b16 %v3560, %v3559
        %v3588 = vpack.c.b16 %v3562, %v3561
        %v3589 = vpack.c.b16 %v3564, %v3563
        %v3590 = vpack.c.b16 %v3566, %v3565
        %v3591 = vpack.c.b16 %v3568, %v3567
        %v3592 = vpack.c.b16 %v3570, %v3569
        %v3593 = vpack.c.b16 %v3572, %v3571
        %v3594 = vpack.c.b16 %v3574, %v3573
        %v3595 = vpack.c.b16 %v3576, %v3575
        %v3596 = vpack.c.b16 %v3578, %v3577
        %v3597 = vpack.c.b16 %v3580, %v3579
        %v3598 = vpack.c.b16 %v3582, %v3581
        %3615 = vmatprep.subr.bf16.mxu0 0
        %3616 = vmatpush1.bf16.msra.mxu0 %v3583
        %3617 = vmatprep.subr.bf16.mxu0 0
        %3618 = vmatpush1.bf16.msra.mxu0 %v3584
        %3619 = vmatprep.subr.bf16.mxu0 0
        %3620 = vmatpush1.bf16.msra.mxu0 %v3585
        %3621 = vmatprep.subr.bf16.mxu0 0
        %3622 = vmatpush1.bf16.msra.mxu0 %v3586
        %3623 = vmatprep.subr.bf16.mxu0 0
        %3624 = vmatpush1.bf16.msra.mxu0 %v3587
        %3625 = vmatprep.subr.bf16.mxu0 0
        %3626 = vmatpush1.bf16.msra.mxu0 %v3588
        %3627 = vmatprep.subr.bf16.mxu0 0
        %3628 = vmatpush1.bf16.msra.mxu0 %v3589
        %3629 = vmatprep.subr.bf16.mxu0 0
        %3630 = vmatpush1.bf16.msra.mxu0 %v3590
        %3631 = vmatprep.subr.bf16.mxu0 0
        %3632 = vmatpush1.bf16.msra.mxu0 %v3591
        %3633 = vmatprep.subr.bf16.mxu0 0
        %3634 = vmatpush1.bf16.msra.mxu0 %v3592
        %3635 = vmatprep.subr.bf16.mxu0 0
        %3636 = vmatpush1.bf16.msra.mxu0 %v3593
        %3637 = vmatprep.subr.bf16.mxu0 0
        %3638 = vmatpush1.bf16.msra.mxu0 %v3594
        %3639 = vmatprep.subr.bf16.mxu0 0
        %3640 = vmatpush1.bf16.msra.mxu0 %v3595
        %3641 = vmatprep.subr.bf16.mxu0 0
        %3642 = vmatpush1.bf16.msra.mxu0 %v3596
        %3643 = vmatprep.subr.bf16.mxu0 0
        %3644 = vmatpush1.bf16.msra.mxu0 %v3597
        %3645 = vmatprep.subr.bf16.mxu0 0
        %3646 = vmatpush1.bf16.msra.mxu0 %v3598
        %3647 = vmatprep.mubr.bf16.mxu0 %v3479
        %3648 = vmatmul.mubr.bf16.gmra.mrb[0].mxu0 %v3478
        %v3649 = vpop.f32.mrb[0].mxu0
        %v3650 = vadd.f32 %v3517, %v3649
        %v3651 = vpop.f32.mrb[0].mxu0
        %v3652 = vpop.f32.mrb[0].mxu0
        %v3653 = vpop.f32.mrb[0].mxu0
        %3654 = vdwg.mxu0
        %v3655 = vmul.f32 %v3650, 0.5
        %v3656 = vadd.f32 %v3286, %v3655
        %3657 = vadd.xlane.f32.xlu0 %v3656
        %v3658 = vpop.xlane.xlu0 %3657
        %v3659 = vmul.f32 %v3658, %v1090
        %v3660 = vsub.f32 %v3656, %v3659
        %v3661 = vmul.f32 %v3660, %v3660
        %3662 = vadd.xlane.f32.xlu0 %v3661
        %v3663 = vpop.xlane.xlu0 %3662
        %v3664 = vmul.f32 %v3663, %v1090
        %v3665 = vadd.f32 %v3664, 1e-05
        %v3666 = vrsqrt.pop %v3665
        %v3667 = vmul.f32 %v3660, %v3666
        %v3668 = vld [vmem:[#allocation22] sm:$0x1]
        %v3670 = vlaneseq
        %v3671 = vshrl.u32 %v3670, 7
        %v3672 = vsub.s32 0, %v3671
        %v3673 = vrot.slane %v3668, %v3672
        %v3675 = vmul.f32 %v3667, %v3673
        %v3676 = vld [vmem:[#allocation24] sm:$0x1]
        %v3678 = vlaneseq
        %v3679 = vshrl.u32 %v3678, 7
        %v3680 = vsub.s32 0, %v3679
        %v3681 = vrot.slane %v3676, %v3680
        %v3683 = vadd.f32 %v3675, %v3681
        %3684 = vst [vmem:[%s1085] sm:$0xff] %v3683
        %p3685 = scmp.lt.s32.totalorder %s78, 1
        %s3686 = scalar_select %p3685, %s78, 1
        %s3687 = smul.addr %s3686, 8
        %s3688 = scalar_lea.vmem %s59, %s3687
        // Predicated region
        $region197: #{base_ctc_forward.12} parent=135 // pred_check
          %p3689 = pneg %p710
        $region198: #{base_ctc_forward.12} parent=135 // pred_check_branch
          %3691 = sbr.rel (%p3689) target = $region200
        $region199: #{base_ctc_forward.12} parent=135 // pred_region
          _
        $region200: #{base_ctc_forward.12} parent=135 // pred_fallthru
          _
      $region136: #{base_ctc_forward.12} parent=5 // pred_fallthru
        _
      %p3692 = scmp.le.s32.totalorder 2, %s73
      // Predicated region
      $region201: #{base_ctc_forward.12} parent=5 // pred_check
        %p3693 = pneg %p3692
      $region202: #{base_ctc_forward.12} parent=5 // pred_check_branch
        %3695 = sbr.rel (%p3693) target = $region204
      $region203: #{base_ctc_forward.12} parent=5 // pred_region
        %s3696 = ssub.s32 %s73, 2
        // Predicated region
        $region205: #{base_ctc_forward.12} parent=203 // pred_check
          %p3697 = pneg %p716
        $region206: #{base_ctc_forward.12} parent=203 // pred_check_branch
          %3699 = sbr.rel (%p3697) target = $region208
        $region207: #{base_ctc_forward.12} parent=203 // pred_region
          %p3700 = scmp.lt.s32.totalorder %s79, 1
          %s3701 = scalar_select %p3700, %s79, 1
          %s3702 = smul.addr %s3701, 8
          %s3703 = scalar_lea.vmem %s59, %s3702
        $region208: #{base_ctc_forward.12} parent=203 // pred_fallthru
          _
      $region204: #{base_ctc_forward.12} parent=5 // pred_fallthru
        _
    $region6: #{base_ctc_forward.12} parent=1 // loop_footer
      %s77 = sadd.s32 1, %s73
    $region7: #{base_ctc_forward.12} parent=1 // loop_footer_branch
      %72 = sbr.rel target = $region3
    $region8: #{base_ctc_forward.12} parent=1 // loop_exit
      _
    %3704 = vsyncpa [#allocation3], 1
    %s3705 = scalar_lea.sflag [#allocation3], 1
    %3706 = vsyncpa %s3705, 1
    %3707 = vsyncpa [#allocation5], 1
    %3708 = vsyncpa [#allocation8], 1
    %3709 = vsyncpa [#allocation11], 1
    %3710 = vsyncpa [#allocation14], 1
    %3711 = vsyncpa [#allocation17], 1
    %3712 = vsyncpa [#allocation20], 1
    %3713 = vsyncpa [#allocation23], 1

</llo_original>
